<compile_context>
chip_gen: v6e
topology: v6e:2x2x1
jax: 0.10.0
libtpu: 0.0.40
codegen_flags: <defaults>
</compile_context>

<pallas_src>
import jax
import jax.numpy as jnp
from jax.experimental import pallas as pl
from jax.experimental.pallas import tpu as pltpu

OUT_CH = 64          # conv out_channels (fixed by the module)
HIDDEN = 100         # fc1 hidden size (fixed by the module)
HIDDEN_PAD = 128     # lane-dense padded hidden size
KERNEL_SIZES = (3, 5, 11)


# ----------------------------------------------------------------------------
# The single fused kernel: conv x3 + bias + maxpool + fc1 + relu + fc2
# ----------------------------------------------------------------------------
def _fused_cnn_kernel(xe_ref, xo_ref,
                      w1_ref, b1_ref, w2_ref, b2_ref, w3_ref, b3_ref,
                      fw1_ref, fw2_ref, fw3_ref, f1b_ref,
                      f2w_ref, f2b_ref, o_ref):
    xe = xe_ref[...]            # (TB, S//2, C): input positions 0, 2, 4, ...
    xo = xo_ref[...]            # (TB, S//2, C): input positions 1, 3, 5, ...
    tb = xe.shape[0]
    c_in = xe.shape[2]

    fc1_acc = jnp.zeros((tb, f1b_ref.shape[1]), jnp.float32)   # (TB, 128)

    branches = ((w1_ref, b1_ref, fw1_ref),
                (w2_ref, b2_ref, fw2_ref),
                (w3_ref, b3_ref, fw3_ref))
    for w_ref, b_ref, fw_ref in branches:
        w2d = w_ref[...]                       # (K*C, 64), row = k*C + c
        ksz = w2d.shape[0] // c_in             # conv kernel size
        p_len = fw_ref.shape[0]                # pooled length = (S-K+1)//2

        # conv output at even positions (2p) and odd positions (2p+1)
        acc_e = jnp.zeros((tb, p_len, OUT_CH), jnp.float32)
        acc_o = jnp.zeros((tb, p_len, OUT_CH), jnp.float32)
        for k in range(ksz):
            # even output 2p reads x[2p + k]; odd output 2p+1 reads x[2p+1+k]
            if k % 2 == 0:
                xs_e = xe[:, k // 2:k // 2 + p_len, :]          # (TB, P, C)
                xs_o = xo[:, k // 2:k // 2 + p_len, :]
            else:
                xs_e = xo[:, (k - 1) // 2:(k - 1) // 2 + p_len, :]
                xs_o = xe[:, (k + 1) // 2:(k + 1) // 2 + p_len, :]
            for c in range(c_in):
                wrow = w2d[k * c_in + c:k * c_in + c + 1, :]    # (1, 64)
                acc_e = acc_e + xs_e[:, :, c:c + 1] * wrow
                acc_o = acc_o + xs_o[:, :, c:c + 1] * wrow

        # MaxPool1d(2) fully in registers; bias commutes with the max.
        pooled = jnp.maximum(acc_e, acc_o) + b_ref[...]         # (TB, P, 64)

        # fc1 partial: sum_p pooled[:, p, :] @ fw[p]  (batched over p)
        part = jax.lax.dot_general(
            pooled, fw_ref[...],
            dimension_numbers=(((2,), (1,)), ((1,), (0,))),
            preferred_element_type=jnp.float32)                 # (P, TB, 128)
        fc1_acc = fc1_acc + jnp.sum(part, axis=0)

    hidden = jnp.maximum(fc1_acc + f1b_ref[...], 0.0)           # (TB, 128)
    o_ref[...] = (jnp.dot(hidden, f2w_ref[...],
                          preferred_element_type=jnp.float32)
                  + f2b_ref[...])


def _full_spec(shape):
    return pl.BlockSpec(shape, lambda i, _nd=len(shape): (0,) * _nd)


def cnn_forward(x, kp):
    """x: (B, seq_len, enc_in) float32 -- same input as the PyTorch forward."""
    B, S, C = x.shape
    if S % 2 != 0:
        raise ValueError("seq_len must be even (matches default config)")

    TB = B if B <= 8 else 8
    pad = (-B) % TB
    if pad:
        x = jnp.concatenate([x, jnp.zeros((pad, S, C), x.dtype)], axis=0)
    Bp = B + pad
    Sh = S // 2

    # One-time de-interleave so the in-kernel pooling needs no strided access.
    xe = x[:, 0::2, :]          # (Bp, S//2, C)
    xo = x[:, 1::2, :]

    NC = kp["f2b"].shape[1]
    weights = (kp["w1"], kp["b1"], kp["w2"], kp["b2"], kp["w3"], kp["b3"],
               kp["fw1"], kp["fw2"], kp["fw3"], kp["f1b"],
               kp["f2w"], kp["f2b"])

    out = pl.pallas_call(
        _fused_cnn_kernel,
        out_shape=jax.ShapeDtypeStruct((Bp, NC), jnp.float32),
        grid=(Bp // TB,),
        in_specs=[
            pl.BlockSpec((TB, Sh, C), lambda i: (i, 0, 0)),
            pl.BlockSpec((TB, Sh, C), lambda i: (i, 0, 0)),
        ] + [_full_spec(w.shape) for w in weights],
        out_specs=pl.BlockSpec((TB, NC), lambda i: (i, 0)),
        compiler_params=pltpu.CompilerParams(
            dimension_semantics=("parallel",)),
    )(xe, xo, *weights)
    return out[:B]


# ----------------------------------------------------------------------------
# One-time host-side parameter preparation (from PyTorch-layout params)
# ----------------------------------------------------------------------------
def prepare_kernel_params(tp, seq_len):
    c_in = tp["conv1_w"].shape[1]
    kp = {}
    pooled_lens = []
    for idx, ksz in enumerate(KERNEL_SIZES, start=1):
        w = tp[f"conv{idx}_w"]                                    # (64, C, K)
        # kernel layout (K*C, 64), row k*C + c  ->  w2d[k*C+c, o] = w[o, c, k]
        kp[f"w{idx}"] = jnp.transpose(w, (2, 1, 0)).reshape(ksz * c_in, OUT_CH)
        kp[f"b{idx}"] = tp[f"conv{idx}_b"].reshape(1, OUT_CH)
        pooled_lens.append((seq_len - ksz + 1) // 2)

    # fc1: PyTorch weight (100, flat_dim); columns within a branch are
    # channel-major (o*P + p).  Reorder rows so the kernel can contract the
    # pooled (p, c) layout directly, and zero-pad hidden 100 -> 128.
    fc1_w = tp["fc1_w"]
    off = 0
    for idx, plen in enumerate(pooled_lens, start=1):
        blk = fc1_w[:, off:off + OUT_CH * plen]                   # (100, 64*P)
        blk = blk.reshape(HIDDEN, OUT_CH, plen)                   # [h, o, p]
        blk = jnp.transpose(blk, (2, 1, 0))                       # [p, o, h]
        blk = jnp.pad(blk, ((0, 0), (0, 0), (0, HIDDEN_PAD - HIDDEN)))
        kp[f"fw{idx}"] = blk.astype(jnp.float32)
        off += OUT_CH * plen

    kp["f1b"] = jnp.pad(tp["fc1_b"],
                        (0, HIDDEN_PAD - HIDDEN)).reshape(1, HIDDEN_PAD)
    f2w = jnp.transpose(tp["fc2_w"], (1, 0))                      # (100, NC)
    kp["f2w"] = jnp.pad(f2w, ((0, HIDDEN_PAD - HIDDEN), (0, 0)))
    kp["f2b"] = tp["fc2_b"].reshape(1, -1)
    return kp


def init_torch_params(key, enc_in, seq_len, num_class):
    ks = jax.random.split(key, 10)
    flat_dim = OUT_CH * sum((seq_len - k + 1) // 2 for k in KERNEL_SIZES)
    return {
        "conv1_w": jax.random.normal(ks[0], (OUT_CH, enc_in, 3), jnp.float32) * 0.1,
        "conv1_b": jax.random.normal(ks[1], (OUT_CH,), jnp.float32) * 0.1,
        "conv2_w": jax.random.normal(ks[2], (OUT_CH, enc_in, 5), jnp.float32) * 0.1,
        "conv2_b": jax.random.normal(ks[3], (OUT_CH,), jnp.float32) * 0.1,
        "conv3_w": jax.random.normal(ks[4], (OUT_CH, enc_in, 11), jnp.float32) * 0.1,
        "conv3_b": jax.random.normal(ks[5], (OUT_CH,), jnp.float32) * 0.1,
        "fc1_w": jax.random.normal(ks[6], (HIDDEN, flat_dim), jnp.float32) * 0.02,
        "fc1_b": jax.random.normal(ks[7], (HIDDEN,), jnp.float32) * 0.02,
        "fc2_w": jax.random.normal(ks[8], (num_class, HIDDEN), jnp.float32) * 0.1,
        "fc2_b": jax.random.normal(ks[9], (num_class,), jnp.float32) * 0.1,
    }


# Pure-JAX reference with the original PyTorch layout/semantics.
def reference_forward(x, tp):
    B, S, _ = x.shape
    feats = []
    for idx, ksz in enumerate(KERNEL_SIZES, start=1):
        w = tp[f"conv{idx}_w"]                                    # (64, C, K)
        b = tp[f"conv{idx}_b"]
        L = S - ksz + 1
        P = L // 2
        conv = sum(jnp.einsum("bsc,oc->bso", x[:, k:k + L, :], w[:, :, k])
                   for k in range(ksz)) + b[None, None, :]        # (B, L, 64)
        pooled = jnp.maximum(conv[:, 0:2 * P:2, :], conv[:, 1:2 * P:2, :])
        feats.append(jnp.transpose(pooled, (0, 2, 1)).reshape(B, -1))
    f = jnp.concatenate(feats, axis=1)
    h = jnp.maximum(f @ tp["fc1_w"].T + tp["fc1_b"], 0.0)
    return h @ tp["fc2_w"].T + tp["fc2_b"]


if __name__ == "__main__":
    # configs.enc_in=4, configs.seq_len=32, configs.num_class=5 (dropout eval)
    B, SEQ_LEN, ENC_IN, NUM_CLASS = 2, 32, 4, 5

    key = jax.random.PRNGKey(0)
    pkey, xkey = jax.random.split(key)
    torch_params = init_torch_params(pkey, ENC_IN, SEQ_LEN, NUM_CLASS)
    kernel_params = prepare_kernel_params(torch_params, SEQ_LEN)
    x = jax.random.normal(xkey, (B, SEQ_LEN, ENC_IN), jnp.float32)

    fwd = jax.jit(cnn_forward)
    out = jax.block_until_ready(fwd(x, kernel_params))
    ref = reference_forward(x, torch_params)

    assert out.shape == (B, NUM_CLASS), out.shape
    assert bool(jnp.all(jnp.isfinite(out)))
    assert bool(jnp.allclose(out, ref, rtol=2e-3, atol=2e-3)), (out, ref)

    print("KERNEL_OK")
</pallas_src>

<mosaic_0001>
module attributes {stable_mosaic.version = 11 : i64} {
  func.func @_fused_cnn_kernel(%arg0: i32, %arg1: memref<2x16x4xf32, #tpu.memory_space<vmem>>, %arg2: memref<2x16x4xf32, #tpu.memory_space<vmem>>, %arg3: memref<12x64xf32, #tpu.memory_space<vmem>>, %arg4: memref<1x64xf32, #tpu.memory_space<vmem>>, %arg5: memref<20x64xf32, #tpu.memory_space<vmem>>, %arg6: memref<1x64xf32, #tpu.memory_space<vmem>>, %arg7: memref<44x64xf32, #tpu.memory_space<vmem>>, %arg8: memref<1x64xf32, #tpu.memory_space<vmem>>, %arg9: memref<15x64x128xf32, #tpu.memory_space<vmem>>, %arg10: memref<14x64x128xf32, #tpu.memory_space<vmem>>, %arg11: memref<11x64x128xf32, #tpu.memory_space<vmem>>, %arg12: memref<1x128xf32, #tpu.memory_space<vmem>>, %arg13: memref<128x5xf32, #tpu.memory_space<vmem>>, %arg14: memref<1x5xf32, #tpu.memory_space<vmem>>, %arg15: memref<2x5xf32, #tpu.memory_space<vmem>>) attributes {dimension_semantics = [#tpu.dimension_semantics<parallel>], iteration_bounds = array<i64: 1>, scalar_prefetch = 0 : i64, scratch_operands = 0 : i64, tpu.core_type = #tpu.core_type<tc>, window_params = [{transform_indices = @transform_0, window_bounds = array<i64: 2, 16, 4>}, {transform_indices = @transform_1, window_bounds = array<i64: 2, 16, 4>}, {pipeline_mode = #tpu.pipeline_mode<synchronous>, transform_indices = @transform_2, window_bounds = array<i64: 12, 64>}, {pipeline_mode = #tpu.pipeline_mode<synchronous>, transform_indices = @transform_3, window_bounds = array<i64: 1, 64>}, {pipeline_mode = #tpu.pipeline_mode<synchronous>, transform_indices = @transform_4, window_bounds = array<i64: 20, 64>}, {pipeline_mode = #tpu.pipeline_mode<synchronous>, transform_indices = @transform_5, window_bounds = array<i64: 1, 64>}, {pipeline_mode = #tpu.pipeline_mode<synchronous>, transform_indices = @transform_6, window_bounds = array<i64: 44, 64>}, {pipeline_mode = #tpu.pipeline_mode<synchronous>, transform_indices = @transform_7, window_bounds = array<i64: 1, 64>}, {pipeline_mode = #tpu.pipeline_mode<synchronous>, transform_indices = @transform_8, window_bounds = array<i64: 15, 64, 128>}, {pipeline_mode = #tpu.pipeline_mode<synchronous>, transform_indices = @transform_9, window_bounds = array<i64: 14, 64, 128>}, {pipeline_mode = #tpu.pipeline_mode<synchronous>, transform_indices = @transform_10, window_bounds = array<i64: 11, 64, 128>}, {pipeline_mode = #tpu.pipeline_mode<synchronous>, transform_indices = @transform_11, window_bounds = array<i64: 1, 128>}, {pipeline_mode = #tpu.pipeline_mode<synchronous>, transform_indices = @transform_12, window_bounds = array<i64: 128, 5>}, {pipeline_mode = #tpu.pipeline_mode<synchronous>, transform_indices = @transform_13, window_bounds = array<i64: 1, 5>}, {transform_indices = @transform_14, window_bounds = array<i64: 2, 5>}]} {
    %c0 = arith.constant 0 : index
    %c0_0 = arith.constant 0 : index
    %c0_1 = arith.constant 0 : index
    %0 = vector.load %arg1[%c0, %c0_0, %c0_1] : memref<2x16x4xf32, #tpu.memory_space<vmem>>, vector<2x16x4xf32>
    %c0_2 = arith.constant 0 : index
    %c0_3 = arith.constant 0 : index
    %c0_4 = arith.constant 0 : index
    %1 = vector.load %arg2[%c0_2, %c0_3, %c0_4] : memref<2x16x4xf32, #tpu.memory_space<vmem>>, vector<2x16x4xf32>
    %cst = arith.constant 0.000000e+00 : f32
    %2 = vector.broadcast %cst : f32 to vector<2x128xf32>
    %c0_5 = arith.constant 0 : index
    %c0_6 = arith.constant 0 : index
    %3 = vector.load %arg3[%c0_5, %c0_6] : memref<12x64xf32, #tpu.memory_space<vmem>>, vector<12x64xf32>
    %cst_7 = arith.constant 0.000000e+00 : f32
    %4 = vector.broadcast %cst_7 : f32 to vector<2x15x64xf32>
    %cst_8 = arith.constant 0.000000e+00 : f32
    %5 = vector.broadcast %cst_8 : f32 to vector<2x15x64xf32>
    %6 = vector.extract_strided_slice %0 {offsets = [0, 0, 0], sizes = [2, 15, 4], strides = [1, 1, 1]} : vector<2x16x4xf32> to vector<2x15x4xf32>
    %7 = vector.extract_strided_slice %1 {offsets = [0, 0, 0], sizes = [2, 15, 4], strides = [1, 1, 1]} : vector<2x16x4xf32> to vector<2x15x4xf32>
    %8 = vector.extract_strided_slice %3 {offsets = [0, 0], sizes = [1, 64], strides = [1, 1]} : vector<12x64xf32> to vector<1x64xf32>
    %9 = vector.extract_strided_slice %6 {offsets = [0, 0, 0], sizes = [2, 15, 1], strides = [1, 1, 1]} : vector<2x15x4xf32> to vector<2x15x1xf32>
    %10 = vector.shape_cast %8 : vector<1x64xf32> to vector<1x1x64xf32>
    %11 = vector.broadcast %9 : vector<2x15x1xf32> to vector<2x15x64xf32>
    %12 = vector.broadcast %10 : vector<1x1x64xf32> to vector<2x15x64xf32>
    %13 = arith.mulf %11, %12 : vector<2x15x64xf32>
    %14 = arith.addf %4, %13 : vector<2x15x64xf32>
    %15 = vector.extract_strided_slice %7 {offsets = [0, 0, 0], sizes = [2, 15, 1], strides = [1, 1, 1]} : vector<2x15x4xf32> to vector<2x15x1xf32>
    %16 = vector.shape_cast %8 : vector<1x64xf32> to vector<1x1x64xf32>
    %17 = vector.broadcast %15 : vector<2x15x1xf32> to vector<2x15x64xf32>
    %18 = vector.broadcast %16 : vector<1x1x64xf32> to vector<2x15x64xf32>
    %19 = arith.mulf %17, %18 : vector<2x15x64xf32>
    %20 = arith.addf %5, %19 : vector<2x15x64xf32>
    %21 = vector.extract_strided_slice %3 {offsets = [1, 0], sizes = [1, 64], strides = [1, 1]} : vector<12x64xf32> to vector<1x64xf32>
    %22 = vector.extract_strided_slice %6 {offsets = [0, 0, 1], sizes = [2, 15, 1], strides = [1, 1, 1]} : vector<2x15x4xf32> to vector<2x15x1xf32>
    %23 = vector.shape_cast %21 : vector<1x64xf32> to vector<1x1x64xf32>
    %24 = vector.broadcast %22 : vector<2x15x1xf32> to vector<2x15x64xf32>
    %25 = vector.broadcast %23 : vector<1x1x64xf32> to vector<2x15x64xf32>
    %26 = arith.mulf %24, %25 : vector<2x15x64xf32>
    %27 = arith.addf %14, %26 : vector<2x15x64xf32>
    %28 = vector.extract_strided_slice %7 {offsets = [0, 0, 1], sizes = [2, 15, 1], strides = [1, 1, 1]} : vector<2x15x4xf32> to vector<2x15x1xf32>
    %29 = vector.shape_cast %21 : vector<1x64xf32> to vector<1x1x64xf32>
    %30 = vector.broadcast %28 : vector<2x15x1xf32> to vector<2x15x64xf32>
    %31 = vector.broadcast %29 : vector<1x1x64xf32> to vector<2x15x64xf32>
    %32 = arith.mulf %30, %31 : vector<2x15x64xf32>
    %33 = arith.addf %20, %32 : vector<2x15x64xf32>
    %34 = vector.extract_strided_slice %3 {offsets = [2, 0], sizes = [1, 64], strides = [1, 1]} : vector<12x64xf32> to vector<1x64xf32>
    %35 = vector.extract_strided_slice %6 {offsets = [0, 0, 2], sizes = [2, 15, 1], strides = [1, 1, 1]} : vector<2x15x4xf32> to vector<2x15x1xf32>
    %36 = vector.shape_cast %34 : vector<1x64xf32> to vector<1x1x64xf32>
    %37 = vector.broadcast %35 : vector<2x15x1xf32> to vector<2x15x64xf32>
    %38 = vector.broadcast %36 : vector<1x1x64xf32> to vector<2x15x64xf32>
    %39 = arith.mulf %37, %38 : vector<2x15x64xf32>
    %40 = arith.addf %27, %39 : vector<2x15x64xf32>
    %41 = vector.extract_strided_slice %7 {offsets = [0, 0, 2], sizes = [2, 15, 1], strides = [1, 1, 1]} : vector<2x15x4xf32> to vector<2x15x1xf32>
    %42 = vector.shape_cast %34 : vector<1x64xf32> to vector<1x1x64xf32>
    %43 = vector.broadcast %41 : vector<2x15x1xf32> to vector<2x15x64xf32>
    %44 = vector.broadcast %42 : vector<1x1x64xf32> to vector<2x15x64xf32>
    %45 = arith.mulf %43, %44 : vector<2x15x64xf32>
    %46 = arith.addf %33, %45 : vector<2x15x64xf32>
    %47 = vector.extract_strided_slice %3 {offsets = [3, 0], sizes = [1, 64], strides = [1, 1]} : vector<12x64xf32> to vector<1x64xf32>
    %48 = vector.extract_strided_slice %6 {offsets = [0, 0, 3], sizes = [2, 15, 1], strides = [1, 1, 1]} : vector<2x15x4xf32> to vector<2x15x1xf32>
    %49 = vector.shape_cast %47 : vector<1x64xf32> to vector<1x1x64xf32>
    %50 = vector.broadcast %48 : vector<2x15x1xf32> to vector<2x15x64xf32>
    %51 = vector.broadcast %49 : vector<1x1x64xf32> to vector<2x15x64xf32>
    %52 = arith.mulf %50, %51 : vector<2x15x64xf32>
    %53 = arith.addf %40, %52 : vector<2x15x64xf32>
    %54 = vector.extract_strided_slice %7 {offsets = [0, 0, 3], sizes = [2, 15, 1], strides = [1, 1, 1]} : vector<2x15x4xf32> to vector<2x15x1xf32>
    %55 = vector.shape_cast %47 : vector<1x64xf32> to vector<1x1x64xf32>
    %56 = vector.broadcast %54 : vector<2x15x1xf32> to vector<2x15x64xf32>
    %57 = vector.broadcast %55 : vector<1x1x64xf32> to vector<2x15x64xf32>
    %58 = arith.mulf %56, %57 : vector<2x15x64xf32>
    %59 = arith.addf %46, %58 : vector<2x15x64xf32>
    %60 = vector.extract_strided_slice %1 {offsets = [0, 0, 0], sizes = [2, 15, 4], strides = [1, 1, 1]} : vector<2x16x4xf32> to vector<2x15x4xf32>
    %61 = vector.extract_strided_slice %0 {offsets = [0, 1, 0], sizes = [2, 15, 4], strides = [1, 1, 1]} : vector<2x16x4xf32> to vector<2x15x4xf32>
    %62 = vector.extract_strided_slice %3 {offsets = [4, 0], sizes = [1, 64], strides = [1, 1]} : vector<12x64xf32> to vector<1x64xf32>
    %63 = vector.extract_strided_slice %60 {offsets = [0, 0, 0], sizes = [2, 15, 1], strides = [1, 1, 1]} : vector<2x15x4xf32> to vector<2x15x1xf32>
    %64 = vector.shape_cast %62 : vector<1x64xf32> to vector<1x1x64xf32>
    %65 = vector.broadcast %63 : vector<2x15x1xf32> to vector<2x15x64xf32>
    %66 = vector.broadcast %64 : vector<1x1x64xf32> to vector<2x15x64xf32>
    %67 = arith.mulf %65, %66 : vector<2x15x64xf32>
    %68 = arith.addf %53, %67 : vector<2x15x64xf32>
    %69 = vector.extract_strided_slice %61 {offsets = [0, 0, 0], sizes = [2, 15, 1], strides = [1, 1, 1]} : vector<2x15x4xf32> to vector<2x15x1xf32>
    %70 = vector.shape_cast %62 : vector<1x64xf32> to vector<1x1x64xf32>
    %71 = vector.broadcast %69 : vector<2x15x1xf32> to vector<2x15x64xf32>
    %72 = vector.broadcast %70 : vector<1x1x64xf32> to vector<2x15x64xf32>
    %73 = arith.mulf %71, %72 : vector<2x15x64xf32>
    %74 = arith.addf %59, %73 : vector<2x15x64xf32>
    %75 = vector.extract_strided_slice %3 {offsets = [5, 0], sizes = [1, 64], strides = [1, 1]} : vector<12x64xf32> to vector<1x64xf32>
    %76 = vector.extract_strided_slice %60 {offsets = [0, 0, 1], sizes = [2, 15, 1], strides = [1, 1, 1]} : vector<2x15x4xf32> to vector<2x15x1xf32>
    %77 = vector.shape_cast %75 : vector<1x64xf32> to vector<1x1x64xf32>
    %78 = vector.broadcast %76 : vector<2x15x1xf32> to vector<2x15x64xf32>
    %79 = vector.broadcast %77 : vector<1x1x64xf32> to vector<2x15x64xf32>
    %80 = arith.mulf %78, %79 : vector<2x15x64xf32>
    %81 = arith.addf %68, %80 : vector<2x15x64xf32>
    %82 = vector.extract_strided_slice %61 {offsets = [0, 0, 1], sizes = [2, 15, 1], strides = [1, 1, 1]} : vector<2x15x4xf32> to vector<2x15x1xf32>
    %83 = vector.shape_cast %75 : vector<1x64xf32> to vector<1x1x64xf32>
    %84 = vector.broadcast %82 : vector<2x15x1xf32> to vector<2x15x64xf32>
    %85 = vector.broadcast %83 : vector<1x1x64xf32> to vector<2x15x64xf32>
    %86 = arith.mulf %84, %85 : vector<2x15x64xf32>
    %87 = arith.addf %74, %86 : vector<2x15x64xf32>
    %88 = vector.extract_strided_slice %3 {offsets = [6, 0], sizes = [1, 64], strides = [1, 1]} : vector<12x64xf32> to vector<1x64xf32>
    %89 = vector.extract_strided_slice %60 {offsets = [0, 0, 2], sizes = [2, 15, 1], strides = [1, 1, 1]} : vector<2x15x4xf32> to vector<2x15x1xf32>
    %90 = vector.shape_cast %88 : vector<1x64xf32> to vector<1x1x64xf32>
    %91 = vector.broadcast %89 : vector<2x15x1xf32> to vector<2x15x64xf32>
    %92 = vector.broadcast %90 : vector<1x1x64xf32> to vector<2x15x64xf32>
    %93 = arith.mulf %91, %92 : vector<2x15x64xf32>
    %94 = arith.addf %81, %93 : vector<2x15x64xf32>
    %95 = vector.extract_strided_slice %61 {offsets = [0, 0, 2], sizes = [2, 15, 1], strides = [1, 1, 1]} : vector<2x15x4xf32> to vector<2x15x1xf32>
    %96 = vector.shape_cast %88 : vector<1x64xf32> to vector<1x1x64xf32>
    %97 = vector.broadcast %95 : vector<2x15x1xf32> to vector<2x15x64xf32>
    %98 = vector.broadcast %96 : vector<1x1x64xf32> to vector<2x15x64xf32>
    %99 = arith.mulf %97, %98 : vector<2x15x64xf32>
    %100 = arith.addf %87, %99 : vector<2x15x64xf32>
    %101 = vector.extract_strided_slice %3 {offsets = [7, 0], sizes = [1, 64], strides = [1, 1]} : vector<12x64xf32> to vector<1x64xf32>
    %102 = vector.extract_strided_slice %60 {offsets = [0, 0, 3], sizes = [2, 15, 1], strides = [1, 1, 1]} : vector<2x15x4xf32> to vector<2x15x1xf32>
    %103 = vector.shape_cast %101 : vector<1x64xf32> to vector<1x1x64xf32>
    %104 = vector.broadcast %102 : vector<2x15x1xf32> to vector<2x15x64xf32>
    %105 = vector.broadcast %103 : vector<1x1x64xf32> to vector<2x15x64xf32>
    %106 = arith.mulf %104, %105 : vector<2x15x64xf32>
    %107 = arith.addf %94, %106 : vector<2x15x64xf32>
    %108 = vector.extract_strided_slice %61 {offsets = [0, 0, 3], sizes = [2, 15, 1], strides = [1, 1, 1]} : vector<2x15x4xf32> to vector<2x15x1xf32>
    %109 = vector.shape_cast %101 : vector<1x64xf32> to vector<1x1x64xf32>
    %110 = vector.broadcast %108 : vector<2x15x1xf32> to vector<2x15x64xf32>
    %111 = vector.broadcast %109 : vector<1x1x64xf32> to vector<2x15x64xf32>
    %112 = arith.mulf %110, %111 : vector<2x15x64xf32>
    %113 = arith.addf %100, %112 : vector<2x15x64xf32>
    %114 = vector.extract_strided_slice %0 {offsets = [0, 1, 0], sizes = [2, 15, 4], strides = [1, 1, 1]} : vector<2x16x4xf32> to vector<2x15x4xf32>
    %115 = vector.extract_strided_slice %1 {offsets = [0, 1, 0], sizes = [2, 15, 4], strides = [1, 1, 1]} : vector<2x16x4xf32> to vector<2x15x4xf32>
    %116 = vector.extract_strided_slice %3 {offsets = [8, 0], sizes = [1, 64], strides = [1, 1]} : vector<12x64xf32> to vector<1x64xf32>
    %117 = vector.extract_strided_slice %114 {offsets = [0, 0, 0], sizes = [2, 15, 1], strides = [1, 1, 1]} : vector<2x15x4xf32> to vector<2x15x1xf32>
    %118 = vector.shape_cast %116 : vector<1x64xf32> to vector<1x1x64xf32>
    %119 = vector.broadcast %117 : vector<2x15x1xf32> to vector<2x15x64xf32>
    %120 = vector.broadcast %118 : vector<1x1x64xf32> to vector<2x15x64xf32>
    %121 = arith.mulf %119, %120 : vector<2x15x64xf32>
    %122 = arith.addf %107, %121 : vector<2x15x64xf32>
    %123 = vector.extract_strided_slice %115 {offsets = [0, 0, 0], sizes = [2, 15, 1], strides = [1, 1, 1]} : vector<2x15x4xf32> to vector<2x15x1xf32>
    %124 = vector.shape_cast %116 : vector<1x64xf32> to vector<1x1x64xf32>
    %125 = vector.broadcast %123 : vector<2x15x1xf32> to vector<2x15x64xf32>
    %126 = vector.broadcast %124 : vector<1x1x64xf32> to vector<2x15x64xf32>
    %127 = arith.mulf %125, %126 : vector<2x15x64xf32>
    %128 = arith.addf %113, %127 : vector<2x15x64xf32>
    %129 = vector.extract_strided_slice %3 {offsets = [9, 0], sizes = [1, 64], strides = [1, 1]} : vector<12x64xf32> to vector<1x64xf32>
    %130 = vector.extract_strided_slice %114 {offsets = [0, 0, 1], sizes = [2, 15, 1], strides = [1, 1, 1]} : vector<2x15x4xf32> to vector<2x15x1xf32>
    %131 = vector.shape_cast %129 : vector<1x64xf32> to vector<1x1x64xf32>
    %132 = vector.broadcast %130 : vector<2x15x1xf32> to vector<2x15x64xf32>
    %133 = vector.broadcast %131 : vector<1x1x64xf32> to vector<2x15x64xf32>
    %134 = arith.mulf %132, %133 : vector<2x15x64xf32>
    %135 = arith.addf %122, %134 : vector<2x15x64xf32>
    %136 = vector.extract_strided_slice %115 {offsets = [0, 0, 1], sizes = [2, 15, 1], strides = [1, 1, 1]} : vector<2x15x4xf32> to vector<2x15x1xf32>
    %137 = vector.shape_cast %129 : vector<1x64xf32> to vector<1x1x64xf32>
    %138 = vector.broadcast %136 : vector<2x15x1xf32> to vector<2x15x64xf32>
    %139 = vector.broadcast %137 : vector<1x1x64xf32> to vector<2x15x64xf32>
    %140 = arith.mulf %138, %139 : vector<2x15x64xf32>
    %141 = arith.addf %128, %140 : vector<2x15x64xf32>
    %142 = vector.extract_strided_slice %3 {offsets = [10, 0], sizes = [1, 64], strides = [1, 1]} : vector<12x64xf32> to vector<1x64xf32>
    %143 = vector.extract_strided_slice %114 {offsets = [0, 0, 2], sizes = [2, 15, 1], strides = [1, 1, 1]} : vector<2x15x4xf32> to vector<2x15x1xf32>
    %144 = vector.shape_cast %142 : vector<1x64xf32> to vector<1x1x64xf32>
    %145 = vector.broadcast %143 : vector<2x15x1xf32> to vector<2x15x64xf32>
    %146 = vector.broadcast %144 : vector<1x1x64xf32> to vector<2x15x64xf32>
    %147 = arith.mulf %145, %146 : vector<2x15x64xf32>
    %148 = arith.addf %135, %147 : vector<2x15x64xf32>
    %149 = vector.extract_strided_slice %115 {offsets = [0, 0, 2], sizes = [2, 15, 1], strides = [1, 1, 1]} : vector<2x15x4xf32> to vector<2x15x1xf32>
    %150 = vector.shape_cast %142 : vector<1x64xf32> to vector<1x1x64xf32>
    %151 = vector.broadcast %149 : vector<2x15x1xf32> to vector<2x15x64xf32>
    %152 = vector.broadcast %150 : vector<1x1x64xf32> to vector<2x15x64xf32>
    %153 = arith.mulf %151, %152 : vector<2x15x64xf32>
    %154 = arith.addf %141, %153 : vector<2x15x64xf32>
    %155 = vector.extract_strided_slice %3 {offsets = [11, 0], sizes = [1, 64], strides = [1, 1]} : vector<12x64xf32> to vector<1x64xf32>
    %156 = vector.extract_strided_slice %114 {offsets = [0, 0, 3], sizes = [2, 15, 1], strides = [1, 1, 1]} : vector<2x15x4xf32> to vector<2x15x1xf32>
    %157 = vector.shape_cast %155 : vector<1x64xf32> to vector<1x1x64xf32>
    %158 = vector.broadcast %156 : vector<2x15x1xf32> to vector<2x15x64xf32>
    %159 = vector.broadcast %157 : vector<1x1x64xf32> to vector<2x15x64xf32>
    %160 = arith.mulf %158, %159 : vector<2x15x64xf32>
    %161 = arith.addf %148, %160 : vector<2x15x64xf32>
    %162 = vector.extract_strided_slice %115 {offsets = [0, 0, 3], sizes = [2, 15, 1], strides = [1, 1, 1]} : vector<2x15x4xf32> to vector<2x15x1xf32>
    %163 = vector.shape_cast %155 : vector<1x64xf32> to vector<1x1x64xf32>
    %164 = vector.broadcast %162 : vector<2x15x1xf32> to vector<2x15x64xf32>
    %165 = vector.broadcast %163 : vector<1x1x64xf32> to vector<2x15x64xf32>
    %166 = arith.mulf %164, %165 : vector<2x15x64xf32>
    %167 = arith.addf %154, %166 : vector<2x15x64xf32>
    %168 = arith.maximumf %161, %167 : vector<2x15x64xf32>
    %c0_9 = arith.constant 0 : index
    %c0_10 = arith.constant 0 : index
    %169 = vector.load %arg4[%c0_9, %c0_10] : memref<1x64xf32, #tpu.memory_space<vmem>>, vector<1x64xf32>
    %170 = vector.shape_cast %169 : vector<1x64xf32> to vector<1x1x64xf32>
    %171 = vector.broadcast %170 : vector<1x1x64xf32> to vector<2x15x64xf32>
    %172 = arith.addf %168, %171 : vector<2x15x64xf32>
    %c0_11 = arith.constant 0 : index
    %c0_12 = arith.constant 0 : index
    %c0_13 = arith.constant 0 : index
    %173 = vector.load %arg9[%c0_11, %c0_12, %c0_13] : memref<15x64x128xf32, #tpu.memory_space<vmem>>, vector<15x64x128xf32>
    %cst_14 = arith.constant dense<0.000000e+00> : vector<15x2x128xf32>
    %174 = tpu.matmul %172, %173, %cst_14 {dimension_numbers = #tpu.dot_dimension_numbers<[2], [1], [0], [2], [0, 1, 0, 0, 1, 2], [1], [0]>} : vector<2x15x64xf32>, vector<15x64x128xf32>, vector<15x2x128xf32> -> vector<15x2x128xf32>
    %cst_15 = arith.constant dense<0.000000e+00> : vector<2x128xf32>
    %175 = vector.multi_reduction <add>, %174, %cst_15 [0] : vector<15x2x128xf32> to vector<2x128xf32>
    %176 = arith.addf %2, %175 : vector<2x128xf32>
    %c0_16 = arith.constant 0 : index
    %c0_17 = arith.constant 0 : index
    %177 = vector.load %arg5[%c0_16, %c0_17] : memref<20x64xf32, #tpu.memory_space<vmem>>, vector<20x64xf32>
    %cst_18 = arith.constant 0.000000e+00 : f32
    %178 = vector.broadcast %cst_18 : f32 to vector<2x14x64xf32>
    %cst_19 = arith.constant 0.000000e+00 : f32
    %179 = vector.broadcast %cst_19 : f32 to vector<2x14x64xf32>
    %180 = vector.extract_strided_slice %0 {offsets = [0, 0, 0], sizes = [2, 14, 4], strides = [1, 1, 1]} : vector<2x16x4xf32> to vector<2x14x4xf32>
    %181 = vector.extract_strided_slice %1 {offsets = [0, 0, 0], sizes = [2, 14, 4], strides = [1, 1, 1]} : vector<2x16x4xf32> to vector<2x14x4xf32>
    %182 = vector.extract_strided_slice %177 {offsets = [0, 0], sizes = [1, 64], strides = [1, 1]} : vector<20x64xf32> to vector<1x64xf32>
    %183 = vector.extract_strided_slice %180 {offsets = [0, 0, 0], sizes = [2, 14, 1], strides = [1, 1, 1]} : vector<2x14x4xf32> to vector<2x14x1xf32>
    %184 = vector.shape_cast %182 : vector<1x64xf32> to vector<1x1x64xf32>
    %185 = vector.broadcast %183 : vector<2x14x1xf32> to vector<2x14x64xf32>
    %186 = vector.broadcast %184 : vector<1x1x64xf32> to vector<2x14x64xf32>
    %187 = arith.mulf %185, %186 : vector<2x14x64xf32>
    %188 = arith.addf %178, %187 : vector<2x14x64xf32>
    %189 = vector.extract_strided_slice %181 {offsets = [0, 0, 0], sizes = [2, 14, 1], strides = [1, 1, 1]} : vector<2x14x4xf32> to vector<2x14x1xf32>
    %190 = vector.shape_cast %182 : vector<1x64xf32> to vector<1x1x64xf32>
    %191 = vector.broadcast %189 : vector<2x14x1xf32> to vector<2x14x64xf32>
    %192 = vector.broadcast %190 : vector<1x1x64xf32> to vector<2x14x64xf32>
    %193 = arith.mulf %191, %192 : vector<2x14x64xf32>
    %194 = arith.addf %179, %193 : vector<2x14x64xf32>
    %195 = vector.extract_strided_slice %177 {offsets = [1, 0], sizes = [1, 64], strides = [1, 1]} : vector<20x64xf32> to vector<1x64xf32>
    %196 = vector.extract_strided_slice %180 {offsets = [0, 0, 1], sizes = [2, 14, 1], strides = [1, 1, 1]} : vector<2x14x4xf32> to vector<2x14x1xf32>
    %197 = vector.shape_cast %195 : vector<1x64xf32> to vector<1x1x64xf32>
    %198 = vector.broadcast %196 : vector<2x14x1xf32> to vector<2x14x64xf32>
    %199 = vector.broadcast %197 : vector<1x1x64xf32> to vector<2x14x64xf32>
    %200 = arith.mulf %198, %199 : vector<2x14x64xf32>
    %201 = arith.addf %188, %200 : vector<2x14x64xf32>
    %202 = vector.extract_strided_slice %181 {offsets = [0, 0, 1], sizes = [2, 14, 1], strides = [1, 1, 1]} : vector<2x14x4xf32> to vector<2x14x1xf32>
    %203 = vector.shape_cast %195 : vector<1x64xf32> to vector<1x1x64xf32>
    %204 = vector.broadcast %202 : vector<2x14x1xf32> to vector<2x14x64xf32>
    %205 = vector.broadcast %203 : vector<1x1x64xf32> to vector<2x14x64xf32>
    %206 = arith.mulf %204, %205 : vector<2x14x64xf32>
    %207 = arith.addf %194, %206 : vector<2x14x64xf32>
    %208 = vector.extract_strided_slice %177 {offsets = [2, 0], sizes = [1, 64], strides = [1, 1]} : vector<20x64xf32> to vector<1x64xf32>
    %209 = vector.extract_strided_slice %180 {offsets = [0, 0, 2], sizes = [2, 14, 1], strides = [1, 1, 1]} : vector<2x14x4xf32> to vector<2x14x1xf32>
    %210 = vector.shape_cast %208 : vector<1x64xf32> to vector<1x1x64xf32>
    %211 = vector.broadcast %209 : vector<2x14x1xf32> to vector<2x14x64xf32>
    %212 = vector.broadcast %210 : vector<1x1x64xf32> to vector<2x14x64xf32>
    %213 = arith.mulf %211, %212 : vector<2x14x64xf32>
    %214 = arith.addf %201, %213 : vector<2x14x64xf32>
    %215 = vector.extract_strided_slice %181 {offsets = [0, 0, 2], sizes = [2, 14, 1], strides = [1, 1, 1]} : vector<2x14x4xf32> to vector<2x14x1xf32>
    %216 = vector.shape_cast %208 : vector<1x64xf32> to vector<1x1x64xf32>
    %217 = vector.broadcast %215 : vector<2x14x1xf32> to vector<2x14x64xf32>
    %218 = vector.broadcast %216 : vector<1x1x64xf32> to vector<2x14x64xf32>
    %219 = arith.mulf %217, %218 : vector<2x14x64xf32>
    %220 = arith.addf %207, %219 : vector<2x14x64xf32>
    %221 = vector.extract_strided_slice %177 {offsets = [3, 0], sizes = [1, 64], strides = [1, 1]} : vector<20x64xf32> to vector<1x64xf32>
    %222 = vector.extract_strided_slice %180 {offsets = [0, 0, 3], sizes = [2, 14, 1], strides = [1, 1, 1]} : vector<2x14x4xf32> to vector<2x14x1xf32>
    %223 = vector.shape_cast %221 : vector<1x64xf32> to vector<1x1x64xf32>
    %224 = vector.broadcast %222 : vector<2x14x1xf32> to vector<2x14x64xf32>
    %225 = vector.broadcast %223 : vector<1x1x64xf32> to vector<2x14x64xf32>
    %226 = arith.mulf %224, %225 : vector<2x14x64xf32>
    %227 = arith.addf %214, %226 : vector<2x14x64xf32>
    %228 = vector.extract_strided_slice %181 {offsets = [0, 0, 3], sizes = [2, 14, 1], strides = [1, 1, 1]} : vector<2x14x4xf32> to vector<2x14x1xf32>
    %229 = vector.shape_cast %221 : vector<1x64xf32> to vector<1x1x64xf32>
    %230 = vector.broadcast %228 : vector<2x14x1xf32> to vector<2x14x64xf32>
    %231 = vector.broadcast %229 : vector<1x1x64xf32> to vector<2x14x64xf32>
    %232 = arith.mulf %230, %231 : vector<2x14x64xf32>
    %233 = arith.addf %220, %232 : vector<2x14x64xf32>
    %234 = vector.extract_strided_slice %1 {offsets = [0, 0, 0], sizes = [2, 14, 4], strides = [1, 1, 1]} : vector<2x16x4xf32> to vector<2x14x4xf32>
    %235 = vector.extract_strided_slice %0 {offsets = [0, 1, 0], sizes = [2, 14, 4], strides = [1, 1, 1]} : vector<2x16x4xf32> to vector<2x14x4xf32>
    %236 = vector.extract_strided_slice %177 {offsets = [4, 0], sizes = [1, 64], strides = [1, 1]} : vector<20x64xf32> to vector<1x64xf32>
    %237 = vector.extract_strided_slice %234 {offsets = [0, 0, 0], sizes = [2, 14, 1], strides = [1, 1, 1]} : vector<2x14x4xf32> to vector<2x14x1xf32>
    %238 = vector.shape_cast %236 : vector<1x64xf32> to vector<1x1x64xf32>
    %239 = vector.broadcast %237 : vector<2x14x1xf32> to vector<2x14x64xf32>
    %240 = vector.broadcast %238 : vector<1x1x64xf32> to vector<2x14x64xf32>
    %241 = arith.mulf %239, %240 : vector<2x14x64xf32>
    %242 = arith.addf %227, %241 : vector<2x14x64xf32>
    %243 = vector.extract_strided_slice %235 {offsets = [0, 0, 0], sizes = [2, 14, 1], strides = [1, 1, 1]} : vector<2x14x4xf32> to vector<2x14x1xf32>
    %244 = vector.shape_cast %236 : vector<1x64xf32> to vector<1x1x64xf32>
    %245 = vector.broadcast %243 : vector<2x14x1xf32> to vector<2x14x64xf32>
    %246 = vector.broadcast %244 : vector<1x1x64xf32> to vector<2x14x64xf32>
    %247 = arith.mulf %245, %246 : vector<2x14x64xf32>
    %248 = arith.addf %233, %247 : vector<2x14x64xf32>
    %249 = vector.extract_strided_slice %177 {offsets = [5, 0], sizes = [1, 64], strides = [1, 1]} : vector<20x64xf32> to vector<1x64xf32>
    %250 = vector.extract_strided_slice %234 {offsets = [0, 0, 1], sizes = [2, 14, 1], strides = [1, 1, 1]} : vector<2x14x4xf32> to vector<2x14x1xf32>
    %251 = vector.shape_cast %249 : vector<1x64xf32> to vector<1x1x64xf32>
    %252 = vector.broadcast %250 : vector<2x14x1xf32> to vector<2x14x64xf32>
    %253 = vector.broadcast %251 : vector<1x1x64xf32> to vector<2x14x64xf32>
    %254 = arith.mulf %252, %253 : vector<2x14x64xf32>
    %255 = arith.addf %242, %254 : vector<2x14x64xf32>
    %256 = vector.extract_strided_slice %235 {offsets = [0, 0, 1], sizes = [2, 14, 1], strides = [1, 1, 1]} : vector<2x14x4xf32> to vector<2x14x1xf32>
    %257 = vector.shape_cast %249 : vector<1x64xf32> to vector<1x1x64xf32>
    %258 = vector.broadcast %256 : vector<2x14x1xf32> to vector<2x14x64xf32>
    %259 = vector.broadcast %257 : vector<1x1x64xf32> to vector<2x14x64xf32>
    %260 = arith.mulf %258, %259 : vector<2x14x64xf32>
    %261 = arith.addf %248, %260 : vector<2x14x64xf32>
    %262 = vector.extract_strided_slice %177 {offsets = [6, 0], sizes = [1, 64], strides = [1, 1]} : vector<20x64xf32> to vector<1x64xf32>
    %263 = vector.extract_strided_slice %234 {offsets = [0, 0, 2], sizes = [2, 14, 1], strides = [1, 1, 1]} : vector<2x14x4xf32> to vector<2x14x1xf32>
    %264 = vector.shape_cast %262 : vector<1x64xf32> to vector<1x1x64xf32>
    %265 = vector.broadcast %263 : vector<2x14x1xf32> to vector<2x14x64xf32>
    %266 = vector.broadcast %264 : vector<1x1x64xf32> to vector<2x14x64xf32>
    %267 = arith.mulf %265, %266 : vector<2x14x64xf32>
    %268 = arith.addf %255, %267 : vector<2x14x64xf32>
    %269 = vector.extract_strided_slice %235 {offsets = [0, 0, 2], sizes = [2, 14, 1], strides = [1, 1, 1]} : vector<2x14x4xf32> to vector<2x14x1xf32>
    %270 = vector.shape_cast %262 : vector<1x64xf32> to vector<1x1x64xf32>
    %271 = vector.broadcast %269 : vector<2x14x1xf32> to vector<2x14x64xf32>
    %272 = vector.broadcast %270 : vector<1x1x64xf32> to vector<2x14x64xf32>
    %273 = arith.mulf %271, %272 : vector<2x14x64xf32>
    %274 = arith.addf %261, %273 : vector<2x14x64xf32>
    %275 = vector.extract_strided_slice %177 {offsets = [7, 0], sizes = [1, 64], strides = [1, 1]} : vector<20x64xf32> to vector<1x64xf32>
    %276 = vector.extract_strided_slice %234 {offsets = [0, 0, 3], sizes = [2, 14, 1], strides = [1, 1, 1]} : vector<2x14x4xf32> to vector<2x14x1xf32>
    %277 = vector.shape_cast %275 : vector<1x64xf32> to vector<1x1x64xf32>
    %278 = vector.broadcast %276 : vector<2x14x1xf32> to vector<2x14x64xf32>
    %279 = vector.broadcast %277 : vector<1x1x64xf32> to vector<2x14x64xf32>
    %280 = arith.mulf %278, %279 : vector<2x14x64xf32>
    %281 = arith.addf %268, %280 : vector<2x14x64xf32>
    %282 = vector.extract_strided_slice %235 {offsets = [0, 0, 3], sizes = [2, 14, 1], strides = [1, 1, 1]} : vector<2x14x4xf32> to vector<2x14x1xf32>
    %283 = vector.shape_cast %275 : vector<1x64xf32> to vector<1x1x64xf32>
    %284 = vector.broadcast %282 : vector<2x14x1xf32> to vector<2x14x64xf32>
    %285 = vector.broadcast %283 : vector<1x1x64xf32> to vector<2x14x64xf32>
    %286 = arith.mulf %284, %285 : vector<2x14x64xf32>
    %287 = arith.addf %274, %286 : vector<2x14x64xf32>
    %288 = vector.extract_strided_slice %0 {offsets = [0, 1, 0], sizes = [2, 14, 4], strides = [1, 1, 1]} : vector<2x16x4xf32> to vector<2x14x4xf32>
    %289 = vector.extract_strided_slice %1 {offsets = [0, 1, 0], sizes = [2, 14, 4], strides = [1, 1, 1]} : vector<2x16x4xf32> to vector<2x14x4xf32>
    %290 = vector.extract_strided_slice %177 {offsets = [8, 0], sizes = [1, 64], strides = [1, 1]} : vector<20x64xf32> to vector<1x64xf32>
    %291 = vector.extract_strided_slice %288 {offsets = [0, 0, 0], sizes = [2, 14, 1], strides = [1, 1, 1]} : vector<2x14x4xf32> to vector<2x14x1xf32>
    %292 = vector.shape_cast %290 : vector<1x64xf32> to vector<1x1x64xf32>
    %293 = vector.broadcast %291 : vector<2x14x1xf32> to vector<2x14x64xf32>
    %294 = vector.broadcast %292 : vector<1x1x64xf32> to vector<2x14x64xf32>
    %295 = arith.mulf %293, %294 : vector<2x14x64xf32>
    %296 = arith.addf %281, %295 : vector<2x14x64xf32>
    %297 = vector.extract_strided_slice %289 {offsets = [0, 0, 0], sizes = [2, 14, 1], strides = [1, 1, 1]} : vector<2x14x4xf32> to vector<2x14x1xf32>
    %298 = vector.shape_cast %290 : vector<1x64xf32> to vector<1x1x64xf32>
    %299 = vector.broadcast %297 : vector<2x14x1xf32> to vector<2x14x64xf32>
    %300 = vector.broadcast %298 : vector<1x1x64xf32> to vector<2x14x64xf32>
    %301 = arith.mulf %299, %300 : vector<2x14x64xf32>
    %302 = arith.addf %287, %301 : vector<2x14x64xf32>
    %303 = vector.extract_strided_slice %177 {offsets = [9, 0], sizes = [1, 64], strides = [1, 1]} : vector<20x64xf32> to vector<1x64xf32>
    %304 = vector.extract_strided_slice %288 {offsets = [0, 0, 1], sizes = [2, 14, 1], strides = [1, 1, 1]} : vector<2x14x4xf32> to vector<2x14x1xf32>
    %305 = vector.shape_cast %303 : vector<1x64xf32> to vector<1x1x64xf32>
    %306 = vector.broadcast %304 : vector<2x14x1xf32> to vector<2x14x64xf32>
    %307 = vector.broadcast %305 : vector<1x1x64xf32> to vector<2x14x64xf32>
    %308 = arith.mulf %306, %307 : vector<2x14x64xf32>
    %309 = arith.addf %296, %308 : vector<2x14x64xf32>
    %310 = vector.extract_strided_slice %289 {offsets = [0, 0, 1], sizes = [2, 14, 1], strides = [1, 1, 1]} : vector<2x14x4xf32> to vector<2x14x1xf32>
    %311 = vector.shape_cast %303 : vector<1x64xf32> to vector<1x1x64xf32>
    %312 = vector.broadcast %310 : vector<2x14x1xf32> to vector<2x14x64xf32>
    %313 = vector.broadcast %311 : vector<1x1x64xf32> to vector<2x14x64xf32>
    %314 = arith.mulf %312, %313 : vector<2x14x64xf32>
    %315 = arith.addf %302, %314 : vector<2x14x64xf32>
    %316 = vector.extract_strided_slice %177 {offsets = [10, 0], sizes = [1, 64], strides = [1, 1]} : vector<20x64xf32> to vector<1x64xf32>
    %317 = vector.extract_strided_slice %288 {offsets = [0, 0, 2], sizes = [2, 14, 1], strides = [1, 1, 1]} : vector<2x14x4xf32> to vector<2x14x1xf32>
    %318 = vector.shape_cast %316 : vector<1x64xf32> to vector<1x1x64xf32>
    %319 = vector.broadcast %317 : vector<2x14x1xf32> to vector<2x14x64xf32>
    %320 = vector.broadcast %318 : vector<1x1x64xf32> to vector<2x14x64xf32>
    %321 = arith.mulf %319, %320 : vector<2x14x64xf32>
    %322 = arith.addf %309, %321 : vector<2x14x64xf32>
    %323 = vector.extract_strided_slice %289 {offsets = [0, 0, 2], sizes = [2, 14, 1], strides = [1, 1, 1]} : vector<2x14x4xf32> to vector<2x14x1xf32>
    %324 = vector.shape_cast %316 : vector<1x64xf32> to vector<1x1x64xf32>
    %325 = vector.broadcast %323 : vector<2x14x1xf32> to vector<2x14x64xf32>
    %326 = vector.broadcast %324 : vector<1x1x64xf32> to vector<2x14x64xf32>
    %327 = arith.mulf %325, %326 : vector<2x14x64xf32>
    %328 = arith.addf %315, %327 : vector<2x14x64xf32>
    %329 = vector.extract_strided_slice %177 {offsets = [11, 0], sizes = [1, 64], strides = [1, 1]} : vector<20x64xf32> to vector<1x64xf32>
    %330 = vector.extract_strided_slice %288 {offsets = [0, 0, 3], sizes = [2, 14, 1], strides = [1, 1, 1]} : vector<2x14x4xf32> to vector<2x14x1xf32>
    %331 = vector.shape_cast %329 : vector<1x64xf32> to vector<1x1x64xf32>
    %332 = vector.broadcast %330 : vector<2x14x1xf32> to vector<2x14x64xf32>
    %333 = vector.broadcast %331 : vector<1x1x64xf32> to vector<2x14x64xf32>
    %334 = arith.mulf %332, %333 : vector<2x14x64xf32>
    %335 = arith.addf %322, %334 : vector<2x14x64xf32>
    %336 = vector.extract_strided_slice %289 {offsets = [0, 0, 3], sizes = [2, 14, 1], strides = [1, 1, 1]} : vector<2x14x4xf32> to vector<2x14x1xf32>
    %337 = vector.shape_cast %329 : vector<1x64xf32> to vector<1x1x64xf32>
    %338 = vector.broadcast %336 : vector<2x14x1xf32> to vector<2x14x64xf32>
    %339 = vector.broadcast %337 : vector<1x1x64xf32> to vector<2x14x64xf32>
    %340 = arith.mulf %338, %339 : vector<2x14x64xf32>
    %341 = arith.addf %328, %340 : vector<2x14x64xf32>
    %342 = vector.extract_strided_slice %1 {offsets = [0, 1, 0], sizes = [2, 14, 4], strides = [1, 1, 1]} : vector<2x16x4xf32> to vector<2x14x4xf32>
    %343 = vector.extract_strided_slice %0 {offsets = [0, 2, 0], sizes = [2, 14, 4], strides = [1, 1, 1]} : vector<2x16x4xf32> to vector<2x14x4xf32>
    %344 = vector.extract_strided_slice %177 {offsets = [12, 0], sizes = [1, 64], strides = [1, 1]} : vector<20x64xf32> to vector<1x64xf32>
    %345 = vector.extract_strided_slice %342 {offsets = [0, 0, 0], sizes = [2, 14, 1], strides = [1, 1, 1]} : vector<2x14x4xf32> to vector<2x14x1xf32>
    %346 = vector.shape_cast %344 : vector<1x64xf32> to vector<1x1x64xf32>
    %347 = vector.broadcast %345 : vector<2x14x1xf32> to vector<2x14x64xf32>
    %348 = vector.broadcast %346 : vector<1x1x64xf32> to vector<2x14x64xf32>
    %349 = arith.mulf %347, %348 : vector<2x14x64xf32>
    %350 = arith.addf %335, %349 : vector<2x14x64xf32>
    %351 = vector.extract_strided_slice %343 {offsets = [0, 0, 0], sizes = [2, 14, 1], strides = [1, 1, 1]} : vector<2x14x4xf32> to vector<2x14x1xf32>
    %352 = vector.shape_cast %344 : vector<1x64xf32> to vector<1x1x64xf32>
    %353 = vector.broadcast %351 : vector<2x14x1xf32> to vector<2x14x64xf32>
    %354 = vector.broadcast %352 : vector<1x1x64xf32> to vector<2x14x64xf32>
    %355 = arith.mulf %353, %354 : vector<2x14x64xf32>
    %356 = arith.addf %341, %355 : vector<2x14x64xf32>
    %357 = vector.extract_strided_slice %177 {offsets = [13, 0], sizes = [1, 64], strides = [1, 1]} : vector<20x64xf32> to vector<1x64xf32>
    %358 = vector.extract_strided_slice %342 {offsets = [0, 0, 1], sizes = [2, 14, 1], strides = [1, 1, 1]} : vector<2x14x4xf32> to vector<2x14x1xf32>
    %359 = vector.shape_cast %357 : vector<1x64xf32> to vector<1x1x64xf32>
    %360 = vector.broadcast %358 : vector<2x14x1xf32> to vector<2x14x64xf32>
    %361 = vector.broadcast %359 : vector<1x1x64xf32> to vector<2x14x64xf32>
    %362 = arith.mulf %360, %361 : vector<2x14x64xf32>
    %363 = arith.addf %350, %362 : vector<2x14x64xf32>
    %364 = vector.extract_strided_slice %343 {offsets = [0, 0, 1], sizes = [2, 14, 1], strides = [1, 1, 1]} : vector<2x14x4xf32> to vector<2x14x1xf32>
    %365 = vector.shape_cast %357 : vector<1x64xf32> to vector<1x1x64xf32>
    %366 = vector.broadcast %364 : vector<2x14x1xf32> to vector<2x14x64xf32>
    %367 = vector.broadcast %365 : vector<1x1x64xf32> to vector<2x14x64xf32>
    %368 = arith.mulf %366, %367 : vector<2x14x64xf32>
    %369 = arith.addf %356, %368 : vector<2x14x64xf32>
    %370 = vector.extract_strided_slice %177 {offsets = [14, 0], sizes = [1, 64], strides = [1, 1]} : vector<20x64xf32> to vector<1x64xf32>
    %371 = vector.extract_strided_slice %342 {offsets = [0, 0, 2], sizes = [2, 14, 1], strides = [1, 1, 1]} : vector<2x14x4xf32> to vector<2x14x1xf32>
    %372 = vector.shape_cast %370 : vector<1x64xf32> to vector<1x1x64xf32>
    %373 = vector.broadcast %371 : vector<2x14x1xf32> to vector<2x14x64xf32>
    %374 = vector.broadcast %372 : vector<1x1x64xf32> to vector<2x14x64xf32>
    %375 = arith.mulf %373, %374 : vector<2x14x64xf32>
    %376 = arith.addf %363, %375 : vector<2x14x64xf32>
    %377 = vector.extract_strided_slice %343 {offsets = [0, 0, 2], sizes = [2, 14, 1], strides = [1, 1, 1]} : vector<2x14x4xf32> to vector<2x14x1xf32>
    %378 = vector.shape_cast %370 : vector<1x64xf32> to vector<1x1x64xf32>
    %379 = vector.broadcast %377 : vector<2x14x1xf32> to vector<2x14x64xf32>
    %380 = vector.broadcast %378 : vector<1x1x64xf32> to vector<2x14x64xf32>
    %381 = arith.mulf %379, %380 : vector<2x14x64xf32>
    %382 = arith.addf %369, %381 : vector<2x14x64xf32>
    %383 = vector.extract_strided_slice %177 {offsets = [15, 0], sizes = [1, 64], strides = [1, 1]} : vector<20x64xf32> to vector<1x64xf32>
    %384 = vector.extract_strided_slice %342 {offsets = [0, 0, 3], sizes = [2, 14, 1], strides = [1, 1, 1]} : vector<2x14x4xf32> to vector<2x14x1xf32>
    %385 = vector.shape_cast %383 : vector<1x64xf32> to vector<1x1x64xf32>
    %386 = vector.broadcast %384 : vector<2x14x1xf32> to vector<2x14x64xf32>
    %387 = vector.broadcast %385 : vector<1x1x64xf32> to vector<2x14x64xf32>
    %388 = arith.mulf %386, %387 : vector<2x14x64xf32>
    %389 = arith.addf %376, %388 : vector<2x14x64xf32>
    %390 = vector.extract_strided_slice %343 {offsets = [0, 0, 3], sizes = [2, 14, 1], strides = [1, 1, 1]} : vector<2x14x4xf32> to vector<2x14x1xf32>
    %391 = vector.shape_cast %383 : vector<1x64xf32> to vector<1x1x64xf32>
    %392 = vector.broadcast %390 : vector<2x14x1xf32> to vector<2x14x64xf32>
    %393 = vector.broadcast %391 : vector<1x1x64xf32> to vector<2x14x64xf32>
    %394 = arith.mulf %392, %393 : vector<2x14x64xf32>
    %395 = arith.addf %382, %394 : vector<2x14x64xf32>
    %396 = vector.extract_strided_slice %0 {offsets = [0, 2, 0], sizes = [2, 14, 4], strides = [1, 1, 1]} : vector<2x16x4xf32> to vector<2x14x4xf32>
    %397 = vector.extract_strided_slice %1 {offsets = [0, 2, 0], sizes = [2, 14, 4], strides = [1, 1, 1]} : vector<2x16x4xf32> to vector<2x14x4xf32>
    %398 = vector.extract_strided_slice %177 {offsets = [16, 0], sizes = [1, 64], strides = [1, 1]} : vector<20x64xf32> to vector<1x64xf32>
    %399 = vector.extract_strided_slice %396 {offsets = [0, 0, 0], sizes = [2, 14, 1], strides = [1, 1, 1]} : vector<2x14x4xf32> to vector<2x14x1xf32>
    %400 = vector.shape_cast %398 : vector<1x64xf32> to vector<1x1x64xf32>
    %401 = vector.broadcast %399 : vector<2x14x1xf32> to vector<2x14x64xf32>
    %402 = vector.broadcast %400 : vector<1x1x64xf32> to vector<2x14x64xf32>
    %403 = arith.mulf %401, %402 : vector<2x14x64xf32>
    %404 = arith.addf %389, %403 : vector<2x14x64xf32>
    %405 = vector.extract_strided_slice %397 {offsets = [0, 0, 0], sizes = [2, 14, 1], strides = [1, 1, 1]} : vector<2x14x4xf32> to vector<2x14x1xf32>
    %406 = vector.shape_cast %398 : vector<1x64xf32> to vector<1x1x64xf32>
    %407 = vector.broadcast %405 : vector<2x14x1xf32> to vector<2x14x64xf32>
    %408 = vector.broadcast %406 : vector<1x1x64xf32> to vector<2x14x64xf32>
    %409 = arith.mulf %407, %408 : vector<2x14x64xf32>
    %410 = arith.addf %395, %409 : vector<2x14x64xf32>
    %411 = vector.extract_strided_slice %177 {offsets = [17, 0], sizes = [1, 64], strides = [1, 1]} : vector<20x64xf32> to vector<1x64xf32>
    %412 = vector.extract_strided_slice %396 {offsets = [0, 0, 1], sizes = [2, 14, 1], strides = [1, 1, 1]} : vector<2x14x4xf32> to vector<2x14x1xf32>
    %413 = vector.shape_cast %411 : vector<1x64xf32> to vector<1x1x64xf32>
    %414 = vector.broadcast %412 : vector<2x14x1xf32> to vector<2x14x64xf32>
    %415 = vector.broadcast %413 : vector<1x1x64xf32> to vector<2x14x64xf32>
    %416 = arith.mulf %414, %415 : vector<2x14x64xf32>
    %417 = arith.addf %404, %416 : vector<2x14x64xf32>
    %418 = vector.extract_strided_slice %397 {offsets = [0, 0, 1], sizes = [2, 14, 1], strides = [1, 1, 1]} : vector<2x14x4xf32> to vector<2x14x1xf32>
    %419 = vector.shape_cast %411 : vector<1x64xf32> to vector<1x1x64xf32>
    %420 = vector.broadcast %418 : vector<2x14x1xf32> to vector<2x14x64xf32>
    %421 = vector.broadcast %419 : vector<1x1x64xf32> to vector<2x14x64xf32>
    %422 = arith.mulf %420, %421 : vector<2x14x64xf32>
    %423 = arith.addf %410, %422 : vector<2x14x64xf32>
    %424 = vector.extract_strided_slice %177 {offsets = [18, 0], sizes = [1, 64], strides = [1, 1]} : vector<20x64xf32> to vector<1x64xf32>
    %425 = vector.extract_strided_slice %396 {offsets = [0, 0, 2], sizes = [2, 14, 1], strides = [1, 1, 1]} : vector<2x14x4xf32> to vector<2x14x1xf32>
    %426 = vector.shape_cast %424 : vector<1x64xf32> to vector<1x1x64xf32>
    %427 = vector.broadcast %425 : vector<2x14x1xf32> to vector<2x14x64xf32>
    %428 = vector.broadcast %426 : vector<1x1x64xf32> to vector<2x14x64xf32>
    %429 = arith.mulf %427, %428 : vector<2x14x64xf32>
    %430 = arith.addf %417, %429 : vector<2x14x64xf32>
    %431 = vector.extract_strided_slice %397 {offsets = [0, 0, 2], sizes = [2, 14, 1], strides = [1, 1, 1]} : vector<2x14x4xf32> to vector<2x14x1xf32>
    %432 = vector.shape_cast %424 : vector<1x64xf32> to vector<1x1x64xf32>
    %433 = vector.broadcast %431 : vector<2x14x1xf32> to vector<2x14x64xf32>
    %434 = vector.broadcast %432 : vector<1x1x64xf32> to vector<2x14x64xf32>
    %435 = arith.mulf %433, %434 : vector<2x14x64xf32>
    %436 = arith.addf %423, %435 : vector<2x14x64xf32>
    %437 = vector.extract_strided_slice %177 {offsets = [19, 0], sizes = [1, 64], strides = [1, 1]} : vector<20x64xf32> to vector<1x64xf32>
    %438 = vector.extract_strided_slice %396 {offsets = [0, 0, 3], sizes = [2, 14, 1], strides = [1, 1, 1]} : vector<2x14x4xf32> to vector<2x14x1xf32>
    %439 = vector.shape_cast %437 : vector<1x64xf32> to vector<1x1x64xf32>
    %440 = vector.broadcast %438 : vector<2x14x1xf32> to vector<2x14x64xf32>
    %441 = vector.broadcast %439 : vector<1x1x64xf32> to vector<2x14x64xf32>
    %442 = arith.mulf %440, %441 : vector<2x14x64xf32>
    %443 = arith.addf %430, %442 : vector<2x14x64xf32>
    %444 = vector.extract_strided_slice %397 {offsets = [0, 0, 3], sizes = [2, 14, 1], strides = [1, 1, 1]} : vector<2x14x4xf32> to vector<2x14x1xf32>
    %445 = vector.shape_cast %437 : vector<1x64xf32> to vector<1x1x64xf32>
    %446 = vector.broadcast %444 : vector<2x14x1xf32> to vector<2x14x64xf32>
    %447 = vector.broadcast %445 : vector<1x1x64xf32> to vector<2x14x64xf32>
    %448 = arith.mulf %446, %447 : vector<2x14x64xf32>
    %449 = arith.addf %436, %448 : vector<2x14x64xf32>
    %450 = arith.maximumf %443, %449 : vector<2x14x64xf32>
    %c0_20 = arith.constant 0 : index
    %c0_21 = arith.constant 0 : index
    %451 = vector.load %arg6[%c0_20, %c0_21] : memref<1x64xf32, #tpu.memory_space<vmem>>, vector<1x64xf32>
    %452 = vector.shape_cast %451 : vector<1x64xf32> to vector<1x1x64xf32>
    %453 = vector.broadcast %452 : vector<1x1x64xf32> to vector<2x14x64xf32>
    %454 = arith.addf %450, %453 : vector<2x14x64xf32>
    %c0_22 = arith.constant 0 : index
    %c0_23 = arith.constant 0 : index
    %c0_24 = arith.constant 0 : index
    %455 = vector.load %arg10[%c0_22, %c0_23, %c0_24] : memref<14x64x128xf32, #tpu.memory_space<vmem>>, vector<14x64x128xf32>
    %cst_25 = arith.constant dense<0.000000e+00> : vector<14x2x128xf32>
    %456 = tpu.matmul %454, %455, %cst_25 {dimension_numbers = #tpu.dot_dimension_numbers<[2], [1], [0], [2], [0, 1, 0, 0, 1, 2], [1], [0]>} : vector<2x14x64xf32>, vector<14x64x128xf32>, vector<14x2x128xf32> -> vector<14x2x128xf32>
    %cst_26 = arith.constant dense<0.000000e+00> : vector<2x128xf32>
    %457 = vector.multi_reduction <add>, %456, %cst_26 [0] : vector<14x2x128xf32> to vector<2x128xf32>
    %458 = arith.addf %176, %457 : vector<2x128xf32>
    %c0_27 = arith.constant 0 : index
    %c0_28 = arith.constant 0 : index
    %459 = vector.load %arg7[%c0_27, %c0_28] : memref<44x64xf32, #tpu.memory_space<vmem>>, vector<44x64xf32>
    %cst_29 = arith.constant 0.000000e+00 : f32
    %460 = vector.broadcast %cst_29 : f32 to vector<2x11x64xf32>
    %cst_30 = arith.constant 0.000000e+00 : f32
    %461 = vector.broadcast %cst_30 : f32 to vector<2x11x64xf32>
    %462 = vector.extract_strided_slice %0 {offsets = [0, 0, 0], sizes = [2, 11, 4], strides = [1, 1, 1]} : vector<2x16x4xf32> to vector<2x11x4xf32>
    %463 = vector.extract_strided_slice %1 {offsets = [0, 0, 0], sizes = [2, 11, 4], strides = [1, 1, 1]} : vector<2x16x4xf32> to vector<2x11x4xf32>
    %464 = vector.extract_strided_slice %459 {offsets = [0, 0], sizes = [1, 64], strides = [1, 1]} : vector<44x64xf32> to vector<1x64xf32>
    %465 = vector.extract_strided_slice %462 {offsets = [0, 0, 0], sizes = [2, 11, 1], strides = [1, 1, 1]} : vector<2x11x4xf32> to vector<2x11x1xf32>
    %466 = vector.shape_cast %464 : vector<1x64xf32> to vector<1x1x64xf32>
    %467 = vector.broadcast %465 : vector<2x11x1xf32> to vector<2x11x64xf32>
    %468 = vector.broadcast %466 : vector<1x1x64xf32> to vector<2x11x64xf32>
    %469 = arith.mulf %467, %468 : vector<2x11x64xf32>
    %470 = arith.addf %460, %469 : vector<2x11x64xf32>
    %471 = vector.extract_strided_slice %463 {offsets = [0, 0, 0], sizes = [2, 11, 1], strides = [1, 1, 1]} : vector<2x11x4xf32> to vector<2x11x1xf32>
    %472 = vector.shape_cast %464 : vector<1x64xf32> to vector<1x1x64xf32>
    %473 = vector.broadcast %471 : vector<2x11x1xf32> to vector<2x11x64xf32>
    %474 = vector.broadcast %472 : vector<1x1x64xf32> to vector<2x11x64xf32>
    %475 = arith.mulf %473, %474 : vector<2x11x64xf32>
    %476 = arith.addf %461, %475 : vector<2x11x64xf32>
    %477 = vector.extract_strided_slice %459 {offsets = [1, 0], sizes = [1, 64], strides = [1, 1]} : vector<44x64xf32> to vector<1x64xf32>
    %478 = vector.extract_strided_slice %462 {offsets = [0, 0, 1], sizes = [2, 11, 1], strides = [1, 1, 1]} : vector<2x11x4xf32> to vector<2x11x1xf32>
    %479 = vector.shape_cast %477 : vector<1x64xf32> to vector<1x1x64xf32>
    %480 = vector.broadcast %478 : vector<2x11x1xf32> to vector<2x11x64xf32>
    %481 = vector.broadcast %479 : vector<1x1x64xf32> to vector<2x11x64xf32>
    %482 = arith.mulf %480, %481 : vector<2x11x64xf32>
    %483 = arith.addf %470, %482 : vector<2x11x64xf32>
    %484 = vector.extract_strided_slice %463 {offsets = [0, 0, 1], sizes = [2, 11, 1], strides = [1, 1, 1]} : vector<2x11x4xf32> to vector<2x11x1xf32>
    %485 = vector.shape_cast %477 : vector<1x64xf32> to vector<1x1x64xf32>
    %486 = vector.broadcast %484 : vector<2x11x1xf32> to vector<2x11x64xf32>
    %487 = vector.broadcast %485 : vector<1x1x64xf32> to vector<2x11x64xf32>
    %488 = arith.mulf %486, %487 : vector<2x11x64xf32>
    %489 = arith.addf %476, %488 : vector<2x11x64xf32>
    %490 = vector.extract_strided_slice %459 {offsets = [2, 0], sizes = [1, 64], strides = [1, 1]} : vector<44x64xf32> to vector<1x64xf32>
    %491 = vector.extract_strided_slice %462 {offsets = [0, 0, 2], sizes = [2, 11, 1], strides = [1, 1, 1]} : vector<2x11x4xf32> to vector<2x11x1xf32>
    %492 = vector.shape_cast %490 : vector<1x64xf32> to vector<1x1x64xf32>
    %493 = vector.broadcast %491 : vector<2x11x1xf32> to vector<2x11x64xf32>
    %494 = vector.broadcast %492 : vector<1x1x64xf32> to vector<2x11x64xf32>
    %495 = arith.mulf %493, %494 : vector<2x11x64xf32>
    %496 = arith.addf %483, %495 : vector<2x11x64xf32>
    %497 = vector.extract_strided_slice %463 {offsets = [0, 0, 2], sizes = [2, 11, 1], strides = [1, 1, 1]} : vector<2x11x4xf32> to vector<2x11x1xf32>
    %498 = vector.shape_cast %490 : vector<1x64xf32> to vector<1x1x64xf32>
    %499 = vector.broadcast %497 : vector<2x11x1xf32> to vector<2x11x64xf32>
    %500 = vector.broadcast %498 : vector<1x1x64xf32> to vector<2x11x64xf32>
    %501 = arith.mulf %499, %500 : vector<2x11x64xf32>
    %502 = arith.addf %489, %501 : vector<2x11x64xf32>
    %503 = vector.extract_strided_slice %459 {offsets = [3, 0], sizes = [1, 64], strides = [1, 1]} : vector<44x64xf32> to vector<1x64xf32>
    %504 = vector.extract_strided_slice %462 {offsets = [0, 0, 3], sizes = [2, 11, 1], strides = [1, 1, 1]} : vector<2x11x4xf32> to vector<2x11x1xf32>
    %505 = vector.shape_cast %503 : vector<1x64xf32> to vector<1x1x64xf32>
    %506 = vector.broadcast %504 : vector<2x11x1xf32> to vector<2x11x64xf32>
    %507 = vector.broadcast %505 : vector<1x1x64xf32> to vector<2x11x64xf32>
    %508 = arith.mulf %506, %507 : vector<2x11x64xf32>
    %509 = arith.addf %496, %508 : vector<2x11x64xf32>
    %510 = vector.extract_strided_slice %463 {offsets = [0, 0, 3], sizes = [2, 11, 1], strides = [1, 1, 1]} : vector<2x11x4xf32> to vector<2x11x1xf32>
    %511 = vector.shape_cast %503 : vector<1x64xf32> to vector<1x1x64xf32>
    %512 = vector.broadcast %510 : vector<2x11x1xf32> to vector<2x11x64xf32>
    %513 = vector.broadcast %511 : vector<1x1x64xf32> to vector<2x11x64xf32>
    %514 = arith.mulf %512, %513 : vector<2x11x64xf32>
    %515 = arith.addf %502, %514 : vector<2x11x64xf32>
    %516 = vector.extract_strided_slice %1 {offsets = [0, 0, 0], sizes = [2, 11, 4], strides = [1, 1, 1]} : vector<2x16x4xf32> to vector<2x11x4xf32>
    %517 = vector.extract_strided_slice %0 {offsets = [0, 1, 0], sizes = [2, 11, 4], strides = [1, 1, 1]} : vector<2x16x4xf32> to vector<2x11x4xf32>
    %518 = vector.extract_strided_slice %459 {offsets = [4, 0], sizes = [1, 64], strides = [1, 1]} : vector<44x64xf32> to vector<1x64xf32>
    %519 = vector.extract_strided_slice %516 {offsets = [0, 0, 0], sizes = [2, 11, 1], strides = [1, 1, 1]} : vector<2x11x4xf32> to vector<2x11x1xf32>
    %520 = vector.shape_cast %518 : vector<1x64xf32> to vector<1x1x64xf32>
    %521 = vector.broadcast %519 : vector<2x11x1xf32> to vector<2x11x64xf32>
    %522 = vector.broadcast %520 : vector<1x1x64xf32> to vector<2x11x64xf32>
    %523 = arith.mulf %521, %522 : vector<2x11x64xf32>
    %524 = arith.addf %509, %523 : vector<2x11x64xf32>
    %525 = vector.extract_strided_slice %517 {offsets = [0, 0, 0], sizes = [2, 11, 1], strides = [1, 1, 1]} : vector<2x11x4xf32> to vector<2x11x1xf32>
    %526 = vector.shape_cast %518 : vector<1x64xf32> to vector<1x1x64xf32>
    %527 = vector.broadcast %525 : vector<2x11x1xf32> to vector<2x11x64xf32>
    %528 = vector.broadcast %526 : vector<1x1x64xf32> to vector<2x11x64xf32>
    %529 = arith.mulf %527, %528 : vector<2x11x64xf32>
    %530 = arith.addf %515, %529 : vector<2x11x64xf32>
    %531 = vector.extract_strided_slice %459 {offsets = [5, 0], sizes = [1, 64], strides = [1, 1]} : vector<44x64xf32> to vector<1x64xf32>
    %532 = vector.extract_strided_slice %516 {offsets = [0, 0, 1], sizes = [2, 11, 1], strides = [1, 1, 1]} : vector<2x11x4xf32> to vector<2x11x1xf32>
    %533 = vector.shape_cast %531 : vector<1x64xf32> to vector<1x1x64xf32>
    %534 = vector.broadcast %532 : vector<2x11x1xf32> to vector<2x11x64xf32>
    %535 = vector.broadcast %533 : vector<1x1x64xf32> to vector<2x11x64xf32>
    %536 = arith.mulf %534, %535 : vector<2x11x64xf32>
    %537 = arith.addf %524, %536 : vector<2x11x64xf32>
    %538 = vector.extract_strided_slice %517 {offsets = [0, 0, 1], sizes = [2, 11, 1], strides = [1, 1, 1]} : vector<2x11x4xf32> to vector<2x11x1xf32>
    %539 = vector.shape_cast %531 : vector<1x64xf32> to vector<1x1x64xf32>
    %540 = vector.broadcast %538 : vector<2x11x1xf32> to vector<2x11x64xf32>
    %541 = vector.broadcast %539 : vector<1x1x64xf32> to vector<2x11x64xf32>
    %542 = arith.mulf %540, %541 : vector<2x11x64xf32>
    %543 = arith.addf %530, %542 : vector<2x11x64xf32>
    %544 = vector.extract_strided_slice %459 {offsets = [6, 0], sizes = [1, 64], strides = [1, 1]} : vector<44x64xf32> to vector<1x64xf32>
    %545 = vector.extract_strided_slice %516 {offsets = [0, 0, 2], sizes = [2, 11, 1], strides = [1, 1, 1]} : vector<2x11x4xf32> to vector<2x11x1xf32>
    %546 = vector.shape_cast %544 : vector<1x64xf32> to vector<1x1x64xf32>
    %547 = vector.broadcast %545 : vector<2x11x1xf32> to vector<2x11x64xf32>
    %548 = vector.broadcast %546 : vector<1x1x64xf32> to vector<2x11x64xf32>
    %549 = arith.mulf %547, %548 : vector<2x11x64xf32>
    %550 = arith.addf %537, %549 : vector<2x11x64xf32>
    %551 = vector.extract_strided_slice %517 {offsets = [0, 0, 2], sizes = [2, 11, 1], strides = [1, 1, 1]} : vector<2x11x4xf32> to vector<2x11x1xf32>
    %552 = vector.shape_cast %544 : vector<1x64xf32> to vector<1x1x64xf32>
    %553 = vector.broadcast %551 : vector<2x11x1xf32> to vector<2x11x64xf32>
    %554 = vector.broadcast %552 : vector<1x1x64xf32> to vector<2x11x64xf32>
    %555 = arith.mulf %553, %554 : vector<2x11x64xf32>
    %556 = arith.addf %543, %555 : vector<2x11x64xf32>
    %557 = vector.extract_strided_slice %459 {offsets = [7, 0], sizes = [1, 64], strides = [1, 1]} : vector<44x64xf32> to vector<1x64xf32>
    %558 = vector.extract_strided_slice %516 {offsets = [0, 0, 3], sizes = [2, 11, 1], strides = [1, 1, 1]} : vector<2x11x4xf32> to vector<2x11x1xf32>
    %559 = vector.shape_cast %557 : vector<1x64xf32> to vector<1x1x64xf32>
    %560 = vector.broadcast %558 : vector<2x11x1xf32> to vector<2x11x64xf32>
    %561 = vector.broadcast %559 : vector<1x1x64xf32> to vector<2x11x64xf32>
    %562 = arith.mulf %560, %561 : vector<2x11x64xf32>
    %563 = arith.addf %550, %562 : vector<2x11x64xf32>
    %564 = vector.extract_strided_slice %517 {offsets = [0, 0, 3], sizes = [2, 11, 1], strides = [1, 1, 1]} : vector<2x11x4xf32> to vector<2x11x1xf32>
    %565 = vector.shape_cast %557 : vector<1x64xf32> to vector<1x1x64xf32>
    %566 = vector.broadcast %564 : vector<2x11x1xf32> to vector<2x11x64xf32>
    %567 = vector.broadcast %565 : vector<1x1x64xf32> to vector<2x11x64xf32>
    %568 = arith.mulf %566, %567 : vector<2x11x64xf32>
    %569 = arith.addf %556, %568 : vector<2x11x64xf32>
    %570 = vector.extract_strided_slice %0 {offsets = [0, 1, 0], sizes = [2, 11, 4], strides = [1, 1, 1]} : vector<2x16x4xf32> to vector<2x11x4xf32>
    %571 = vector.extract_strided_slice %1 {offsets = [0, 1, 0], sizes = [2, 11, 4], strides = [1, 1, 1]} : vector<2x16x4xf32> to vector<2x11x4xf32>
    %572 = vector.extract_strided_slice %459 {offsets = [8, 0], sizes = [1, 64], strides = [1, 1]} : vector<44x64xf32> to vector<1x64xf32>
    %573 = vector.extract_strided_slice %570 {offsets = [0, 0, 0], sizes = [2, 11, 1], strides = [1, 1, 1]} : vector<2x11x4xf32> to vector<2x11x1xf32>
    %574 = vector.shape_cast %572 : vector<1x64xf32> to vector<1x1x64xf32>
    %575 = vector.broadcast %573 : vector<2x11x1xf32> to vector<2x11x64xf32>
    %576 = vector.broadcast %574 : vector<1x1x64xf32> to vector<2x11x64xf32>
    %577 = arith.mulf %575, %576 : vector<2x11x64xf32>
    %578 = arith.addf %563, %577 : vector<2x11x64xf32>
    %579 = vector.extract_strided_slice %571 {offsets = [0, 0, 0], sizes = [2, 11, 1], strides = [1, 1, 1]} : vector<2x11x4xf32> to vector<2x11x1xf32>
    %580 = vector.shape_cast %572 : vector<1x64xf32> to vector<1x1x64xf32>
    %581 = vector.broadcast %579 : vector<2x11x1xf32> to vector<2x11x64xf32>
    %582 = vector.broadcast %580 : vector<1x1x64xf32> to vector<2x11x64xf32>
    %583 = arith.mulf %581, %582 : vector<2x11x64xf32>
    %584 = arith.addf %569, %583 : vector<2x11x64xf32>
    %585 = vector.extract_strided_slice %459 {offsets = [9, 0], sizes = [1, 64], strides = [1, 1]} : vector<44x64xf32> to vector<1x64xf32>
    %586 = vector.extract_strided_slice %570 {offsets = [0, 0, 1], sizes = [2, 11, 1], strides = [1, 1, 1]} : vector<2x11x4xf32> to vector<2x11x1xf32>
    %587 = vector.shape_cast %585 : vector<1x64xf32> to vector<1x1x64xf32>
    %588 = vector.broadcast %586 : vector<2x11x1xf32> to vector<2x11x64xf32>
    %589 = vector.broadcast %587 : vector<1x1x64xf32> to vector<2x11x64xf32>
    %590 = arith.mulf %588, %589 : vector<2x11x64xf32>
    %591 = arith.addf %578, %590 : vector<2x11x64xf32>
    %592 = vector.extract_strided_slice %571 {offsets = [0, 0, 1], sizes = [2, 11, 1], strides = [1, 1, 1]} : vector<2x11x4xf32> to vector<2x11x1xf32>
    %593 = vector.shape_cast %585 : vector<1x64xf32> to vector<1x1x64xf32>
    %594 = vector.broadcast %592 : vector<2x11x1xf32> to vector<2x11x64xf32>
    %595 = vector.broadcast %593 : vector<1x1x64xf32> to vector<2x11x64xf32>
    %596 = arith.mulf %594, %595 : vector<2x11x64xf32>
    %597 = arith.addf %584, %596 : vector<2x11x64xf32>
    %598 = vector.extract_strided_slice %459 {offsets = [10, 0], sizes = [1, 64], strides = [1, 1]} : vector<44x64xf32> to vector<1x64xf32>
    %599 = vector.extract_strided_slice %570 {offsets = [0, 0, 2], sizes = [2, 11, 1], strides = [1, 1, 1]} : vector<2x11x4xf32> to vector<2x11x1xf32>
    %600 = vector.shape_cast %598 : vector<1x64xf32> to vector<1x1x64xf32>
    %601 = vector.broadcast %599 : vector<2x11x1xf32> to vector<2x11x64xf32>
    %602 = vector.broadcast %600 : vector<1x1x64xf32> to vector<2x11x64xf32>
    %603 = arith.mulf %601, %602 : vector<2x11x64xf32>
    %604 = arith.addf %591, %603 : vector<2x11x64xf32>
    %605 = vector.extract_strided_slice %571 {offsets = [0, 0, 2], sizes = [2, 11, 1], strides = [1, 1, 1]} : vector<2x11x4xf32> to vector<2x11x1xf32>
    %606 = vector.shape_cast %598 : vector<1x64xf32> to vector<1x1x64xf32>
    %607 = vector.broadcast %605 : vector<2x11x1xf32> to vector<2x11x64xf32>
    %608 = vector.broadcast %606 : vector<1x1x64xf32> to vector<2x11x64xf32>
    %609 = arith.mulf %607, %608 : vector<2x11x64xf32>
    %610 = arith.addf %597, %609 : vector<2x11x64xf32>
    %611 = vector.extract_strided_slice %459 {offsets = [11, 0], sizes = [1, 64], strides = [1, 1]} : vector<44x64xf32> to vector<1x64xf32>
    %612 = vector.extract_strided_slice %570 {offsets = [0, 0, 3], sizes = [2, 11, 1], strides = [1, 1, 1]} : vector<2x11x4xf32> to vector<2x11x1xf32>
    %613 = vector.shape_cast %611 : vector<1x64xf32> to vector<1x1x64xf32>
    %614 = vector.broadcast %612 : vector<2x11x1xf32> to vector<2x11x64xf32>
    %615 = vector.broadcast %613 : vector<1x1x64xf32> to vector<2x11x64xf32>
    %616 = arith.mulf %614, %615 : vector<2x11x64xf32>
    %617 = arith.addf %604, %616 : vector<2x11x64xf32>
    %618 = vector.extract_strided_slice %571 {offsets = [0, 0, 3], sizes = [2, 11, 1], strides = [1, 1, 1]} : vector<2x11x4xf32> to vector<2x11x1xf32>
    %619 = vector.shape_cast %611 : vector<1x64xf32> to vector<1x1x64xf32>
    %620 = vector.broadcast %618 : vector<2x11x1xf32> to vector<2x11x64xf32>
    %621 = vector.broadcast %619 : vector<1x1x64xf32> to vector<2x11x64xf32>
    %622 = arith.mulf %620, %621 : vector<2x11x64xf32>
    %623 = arith.addf %610, %622 : vector<2x11x64xf32>
    %624 = vector.extract_strided_slice %1 {offsets = [0, 1, 0], sizes = [2, 11, 4], strides = [1, 1, 1]} : vector<2x16x4xf32> to vector<2x11x4xf32>
    %625 = vector.extract_strided_slice %0 {offsets = [0, 2, 0], sizes = [2, 11, 4], strides = [1, 1, 1]} : vector<2x16x4xf32> to vector<2x11x4xf32>
    %626 = vector.extract_strided_slice %459 {offsets = [12, 0], sizes = [1, 64], strides = [1, 1]} : vector<44x64xf32> to vector<1x64xf32>
    %627 = vector.extract_strided_slice %624 {offsets = [0, 0, 0], sizes = [2, 11, 1], strides = [1, 1, 1]} : vector<2x11x4xf32> to vector<2x11x1xf32>
    %628 = vector.shape_cast %626 : vector<1x64xf32> to vector<1x1x64xf32>
    %629 = vector.broadcast %627 : vector<2x11x1xf32> to vector<2x11x64xf32>
    %630 = vector.broadcast %628 : vector<1x1x64xf32> to vector<2x11x64xf32>
    %631 = arith.mulf %629, %630 : vector<2x11x64xf32>
    %632 = arith.addf %617, %631 : vector<2x11x64xf32>
    %633 = vector.extract_strided_slice %625 {offsets = [0, 0, 0], sizes = [2, 11, 1], strides = [1, 1, 1]} : vector<2x11x4xf32> to vector<2x11x1xf32>
    %634 = vector.shape_cast %626 : vector<1x64xf32> to vector<1x1x64xf32>
    %635 = vector.broadcast %633 : vector<2x11x1xf32> to vector<2x11x64xf32>
    %636 = vector.broadcast %634 : vector<1x1x64xf32> to vector<2x11x64xf32>
    %637 = arith.mulf %635, %636 : vector<2x11x64xf32>
    %638 = arith.addf %623, %637 : vector<2x11x64xf32>
    %639 = vector.extract_strided_slice %459 {offsets = [13, 0], sizes = [1, 64], strides = [1, 1]} : vector<44x64xf32> to vector<1x64xf32>
    %640 = vector.extract_strided_slice %624 {offsets = [0, 0, 1], sizes = [2, 11, 1], strides = [1, 1, 1]} : vector<2x11x4xf32> to vector<2x11x1xf32>
    %641 = vector.shape_cast %639 : vector<1x64xf32> to vector<1x1x64xf32>
    %642 = vector.broadcast %640 : vector<2x11x1xf32> to vector<2x11x64xf32>
    %643 = vector.broadcast %641 : vector<1x1x64xf32> to vector<2x11x64xf32>
    %644 = arith.mulf %642, %643 : vector<2x11x64xf32>
    %645 = arith.addf %632, %644 : vector<2x11x64xf32>
    %646 = vector.extract_strided_slice %625 {offsets = [0, 0, 1], sizes = [2, 11, 1], strides = [1, 1, 1]} : vector<2x11x4xf32> to vector<2x11x1xf32>
    %647 = vector.shape_cast %639 : vector<1x64xf32> to vector<1x1x64xf32>
    %648 = vector.broadcast %646 : vector<2x11x1xf32> to vector<2x11x64xf32>
    %649 = vector.broadcast %647 : vector<1x1x64xf32> to vector<2x11x64xf32>
    %650 = arith.mulf %648, %649 : vector<2x11x64xf32>
    %651 = arith.addf %638, %650 : vector<2x11x64xf32>
    %652 = vector.extract_strided_slice %459 {offsets = [14, 0], sizes = [1, 64], strides = [1, 1]} : vector<44x64xf32> to vector<1x64xf32>
    %653 = vector.extract_strided_slice %624 {offsets = [0, 0, 2], sizes = [2, 11, 1], strides = [1, 1, 1]} : vector<2x11x4xf32> to vector<2x11x1xf32>
    %654 = vector.shape_cast %652 : vector<1x64xf32> to vector<1x1x64xf32>
    %655 = vector.broadcast %653 : vector<2x11x1xf32> to vector<2x11x64xf32>
    %656 = vector.broadcast %654 : vector<1x1x64xf32> to vector<2x11x64xf32>
    %657 = arith.mulf %655, %656 : vector<2x11x64xf32>
    %658 = arith.addf %645, %657 : vector<2x11x64xf32>
    %659 = vector.extract_strided_slice %625 {offsets = [0, 0, 2], sizes = [2, 11, 1], strides = [1, 1, 1]} : vector<2x11x4xf32> to vector<2x11x1xf32>
    %660 = vector.shape_cast %652 : vector<1x64xf32> to vector<1x1x64xf32>
    %661 = vector.broadcast %659 : vector<2x11x1xf32> to vector<2x11x64xf32>
    %662 = vector.broadcast %660 : vector<1x1x64xf32> to vector<2x11x64xf32>
    %663 = arith.mulf %661, %662 : vector<2x11x64xf32>
    %664 = arith.addf %651, %663 : vector<2x11x64xf32>
    %665 = vector.extract_strided_slice %459 {offsets = [15, 0], sizes = [1, 64], strides = [1, 1]} : vector<44x64xf32> to vector<1x64xf32>
    %666 = vector.extract_strided_slice %624 {offsets = [0, 0, 3], sizes = [2, 11, 1], strides = [1, 1, 1]} : vector<2x11x4xf32> to vector<2x11x1xf32>
    %667 = vector.shape_cast %665 : vector<1x64xf32> to vector<1x1x64xf32>
    %668 = vector.broadcast %666 : vector<2x11x1xf32> to vector<2x11x64xf32>
    %669 = vector.broadcast %667 : vector<1x1x64xf32> to vector<2x11x64xf32>
    %670 = arith.mulf %668, %669 : vector<2x11x64xf32>
    %671 = arith.addf %658, %670 : vector<2x11x64xf32>
    %672 = vector.extract_strided_slice %625 {offsets = [0, 0, 3], sizes = [2, 11, 1], strides = [1, 1, 1]} : vector<2x11x4xf32> to vector<2x11x1xf32>
    %673 = vector.shape_cast %665 : vector<1x64xf32> to vector<1x1x64xf32>
    %674 = vector.broadcast %672 : vector<2x11x1xf32> to vector<2x11x64xf32>
    %675 = vector.broadcast %673 : vector<1x1x64xf32> to vector<2x11x64xf32>
    %676 = arith.mulf %674, %675 : vector<2x11x64xf32>
    %677 = arith.addf %664, %676 : vector<2x11x64xf32>
    %678 = vector.extract_strided_slice %0 {offsets = [0, 2, 0], sizes = [2, 11, 4], strides = [1, 1, 1]} : vector<2x16x4xf32> to vector<2x11x4xf32>
    %679 = vector.extract_strided_slice %1 {offsets = [0, 2, 0], sizes = [2, 11, 4], strides = [1, 1, 1]} : vector<2x16x4xf32> to vector<2x11x4xf32>
    %680 = vector.extract_strided_slice %459 {offsets = [16, 0], sizes = [1, 64], strides = [1, 1]} : vector<44x64xf32> to vector<1x64xf32>
    %681 = vector.extract_strided_slice %678 {offsets = [0, 0, 0], sizes = [2, 11, 1], strides = [1, 1, 1]} : vector<2x11x4xf32> to vector<2x11x1xf32>
    %682 = vector.shape_cast %680 : vector<1x64xf32> to vector<1x1x64xf32>
    %683 = vector.broadcast %681 : vector<2x11x1xf32> to vector<2x11x64xf32>
    %684 = vector.broadcast %682 : vector<1x1x64xf32> to vector<2x11x64xf32>
    %685 = arith.mulf %683, %684 : vector<2x11x64xf32>
    %686 = arith.addf %671, %685 : vector<2x11x64xf32>
    %687 = vector.extract_strided_slice %679 {offsets = [0, 0, 0], sizes = [2, 11, 1], strides = [1, 1, 1]} : vector<2x11x4xf32> to vector<2x11x1xf32>
    %688 = vector.shape_cast %680 : vector<1x64xf32> to vector<1x1x64xf32>
    %689 = vector.broadcast %687 : vector<2x11x1xf32> to vector<2x11x64xf32>
    %690 = vector.broadcast %688 : vector<1x1x64xf32> to vector<2x11x64xf32>
    %691 = arith.mulf %689, %690 : vector<2x11x64xf32>
    %692 = arith.addf %677, %691 : vector<2x11x64xf32>
    %693 = vector.extract_strided_slice %459 {offsets = [17, 0], sizes = [1, 64], strides = [1, 1]} : vector<44x64xf32> to vector<1x64xf32>
    %694 = vector.extract_strided_slice %678 {offsets = [0, 0, 1], sizes = [2, 11, 1], strides = [1, 1, 1]} : vector<2x11x4xf32> to vector<2x11x1xf32>
    %695 = vector.shape_cast %693 : vector<1x64xf32> to vector<1x1x64xf32>
    %696 = vector.broadcast %694 : vector<2x11x1xf32> to vector<2x11x64xf32>
    %697 = vector.broadcast %695 : vector<1x1x64xf32> to vector<2x11x64xf32>
    %698 = arith.mulf %696, %697 : vector<2x11x64xf32>
    %699 = arith.addf %686, %698 : vector<2x11x64xf32>
    %700 = vector.extract_strided_slice %679 {offsets = [0, 0, 1], sizes = [2, 11, 1], strides = [1, 1, 1]} : vector<2x11x4xf32> to vector<2x11x1xf32>
    %701 = vector.shape_cast %693 : vector<1x64xf32> to vector<1x1x64xf32>
    %702 = vector.broadcast %700 : vector<2x11x1xf32> to vector<2x11x64xf32>
    %703 = vector.broadcast %701 : vector<1x1x64xf32> to vector<2x11x64xf32>
    %704 = arith.mulf %702, %703 : vector<2x11x64xf32>
    %705 = arith.addf %692, %704 : vector<2x11x64xf32>
    %706 = vector.extract_strided_slice %459 {offsets = [18, 0], sizes = [1, 64], strides = [1, 1]} : vector<44x64xf32> to vector<1x64xf32>
    %707 = vector.extract_strided_slice %678 {offsets = [0, 0, 2], sizes = [2, 11, 1], strides = [1, 1, 1]} : vector<2x11x4xf32> to vector<2x11x1xf32>
    %708 = vector.shape_cast %706 : vector<1x64xf32> to vector<1x1x64xf32>
    %709 = vector.broadcast %707 : vector<2x11x1xf32> to vector<2x11x64xf32>
    %710 = vector.broadcast %708 : vector<1x1x64xf32> to vector<2x11x64xf32>
    %711 = arith.mulf %709, %710 : vector<2x11x64xf32>
    %712 = arith.addf %699, %711 : vector<2x11x64xf32>
    %713 = vector.extract_strided_slice %679 {offsets = [0, 0, 2], sizes = [2, 11, 1], strides = [1, 1, 1]} : vector<2x11x4xf32> to vector<2x11x1xf32>
    %714 = vector.shape_cast %706 : vector<1x64xf32> to vector<1x1x64xf32>
    %715 = vector.broadcast %713 : vector<2x11x1xf32> to vector<2x11x64xf32>
    %716 = vector.broadcast %714 : vector<1x1x64xf32> to vector<2x11x64xf32>
    %717 = arith.mulf %715, %716 : vector<2x11x64xf32>
    %718 = arith.addf %705, %717 : vector<2x11x64xf32>
    %719 = vector.extract_strided_slice %459 {offsets = [19, 0], sizes = [1, 64], strides = [1, 1]} : vector<44x64xf32> to vector<1x64xf32>
    %720 = vector.extract_strided_slice %678 {offsets = [0, 0, 3], sizes = [2, 11, 1], strides = [1, 1, 1]} : vector<2x11x4xf32> to vector<2x11x1xf32>
    %721 = vector.shape_cast %719 : vector<1x64xf32> to vector<1x1x64xf32>
    %722 = vector.broadcast %720 : vector<2x11x1xf32> to vector<2x11x64xf32>
    %723 = vector.broadcast %721 : vector<1x1x64xf32> to vector<2x11x64xf32>
    %724 = arith.mulf %722, %723 : vector<2x11x64xf32>
    %725 = arith.addf %712, %724 : vector<2x11x64xf32>
    %726 = vector.extract_strided_slice %679 {offsets = [0, 0, 3], sizes = [2, 11, 1], strides = [1, 1, 1]} : vector<2x11x4xf32> to vector<2x11x1xf32>
    %727 = vector.shape_cast %719 : vector<1x64xf32> to vector<1x1x64xf32>
    %728 = vector.broadcast %726 : vector<2x11x1xf32> to vector<2x11x64xf32>
    %729 = vector.broadcast %727 : vector<1x1x64xf32> to vector<2x11x64xf32>
    %730 = arith.mulf %728, %729 : vector<2x11x64xf32>
    %731 = arith.addf %718, %730 : vector<2x11x64xf32>
    %732 = vector.extract_strided_slice %1 {offsets = [0, 2, 0], sizes = [2, 11, 4], strides = [1, 1, 1]} : vector<2x16x4xf32> to vector<2x11x4xf32>
    %733 = vector.extract_strided_slice %0 {offsets = [0, 3, 0], sizes = [2, 11, 4], strides = [1, 1, 1]} : vector<2x16x4xf32> to vector<2x11x4xf32>
    %734 = vector.extract_strided_slice %459 {offsets = [20, 0], sizes = [1, 64], strides = [1, 1]} : vector<44x64xf32> to vector<1x64xf32>
    %735 = vector.extract_strided_slice %732 {offsets = [0, 0, 0], sizes = [2, 11, 1], strides = [1, 1, 1]} : vector<2x11x4xf32> to vector<2x11x1xf32>
    %736 = vector.shape_cast %734 : vector<1x64xf32> to vector<1x1x64xf32>
    %737 = vector.broadcast %735 : vector<2x11x1xf32> to vector<2x11x64xf32>
    %738 = vector.broadcast %736 : vector<1x1x64xf32> to vector<2x11x64xf32>
    %739 = arith.mulf %737, %738 : vector<2x11x64xf32>
    %740 = arith.addf %725, %739 : vector<2x11x64xf32>
    %741 = vector.extract_strided_slice %733 {offsets = [0, 0, 0], sizes = [2, 11, 1], strides = [1, 1, 1]} : vector<2x11x4xf32> to vector<2x11x1xf32>
    %742 = vector.shape_cast %734 : vector<1x64xf32> to vector<1x1x64xf32>
    %743 = vector.broadcast %741 : vector<2x11x1xf32> to vector<2x11x64xf32>
    %744 = vector.broadcast %742 : vector<1x1x64xf32> to vector<2x11x64xf32>
    %745 = arith.mulf %743, %744 : vector<2x11x64xf32>
    %746 = arith.addf %731, %745 : vector<2x11x64xf32>
    %747 = vector.extract_strided_slice %459 {offsets = [21, 0], sizes = [1, 64], strides = [1, 1]} : vector<44x64xf32> to vector<1x64xf32>
    %748 = vector.extract_strided_slice %732 {offsets = [0, 0, 1], sizes = [2, 11, 1], strides = [1, 1, 1]} : vector<2x11x4xf32> to vector<2x11x1xf32>
    %749 = vector.shape_cast %747 : vector<1x64xf32> to vector<1x1x64xf32>
    %750 = vector.broadcast %748 : vector<2x11x1xf32> to vector<2x11x64xf32>
    %751 = vector.broadcast %749 : vector<1x1x64xf32> to vector<2x11x64xf32>
    %752 = arith.mulf %750, %751 : vector<2x11x64xf32>
    %753 = arith.addf %740, %752 : vector<2x11x64xf32>
    %754 = vector.extract_strided_slice %733 {offsets = [0, 0, 1], sizes = [2, 11, 1], strides = [1, 1, 1]} : vector<2x11x4xf32> to vector<2x11x1xf32>
    %755 = vector.shape_cast %747 : vector<1x64xf32> to vector<1x1x64xf32>
    %756 = vector.broadcast %754 : vector<2x11x1xf32> to vector<2x11x64xf32>
    %757 = vector.broadcast %755 : vector<1x1x64xf32> to vector<2x11x64xf32>
    %758 = arith.mulf %756, %757 : vector<2x11x64xf32>
    %759 = arith.addf %746, %758 : vector<2x11x64xf32>
    %760 = vector.extract_strided_slice %459 {offsets = [22, 0], sizes = [1, 64], strides = [1, 1]} : vector<44x64xf32> to vector<1x64xf32>
    %761 = vector.extract_strided_slice %732 {offsets = [0, 0, 2], sizes = [2, 11, 1], strides = [1, 1, 1]} : vector<2x11x4xf32> to vector<2x11x1xf32>
    %762 = vector.shape_cast %760 : vector<1x64xf32> to vector<1x1x64xf32>
    %763 = vector.broadcast %761 : vector<2x11x1xf32> to vector<2x11x64xf32>
    %764 = vector.broadcast %762 : vector<1x1x64xf32> to vector<2x11x64xf32>
    %765 = arith.mulf %763, %764 : vector<2x11x64xf32>
    %766 = arith.addf %753, %765 : vector<2x11x64xf32>
    %767 = vector.extract_strided_slice %733 {offsets = [0, 0, 2], sizes = [2, 11, 1], strides = [1, 1, 1]} : vector<2x11x4xf32> to vector<2x11x1xf32>
    %768 = vector.shape_cast %760 : vector<1x64xf32> to vector<1x1x64xf32>
    %769 = vector.broadcast %767 : vector<2x11x1xf32> to vector<2x11x64xf32>
    %770 = vector.broadcast %768 : vector<1x1x64xf32> to vector<2x11x64xf32>
    %771 = arith.mulf %769, %770 : vector<2x11x64xf32>
    %772 = arith.addf %759, %771 : vector<2x11x64xf32>
    %773 = vector.extract_strided_slice %459 {offsets = [23, 0], sizes = [1, 64], strides = [1, 1]} : vector<44x64xf32> to vector<1x64xf32>
    %774 = vector.extract_strided_slice %732 {offsets = [0, 0, 3], sizes = [2, 11, 1], strides = [1, 1, 1]} : vector<2x11x4xf32> to vector<2x11x1xf32>
    %775 = vector.shape_cast %773 : vector<1x64xf32> to vector<1x1x64xf32>
    %776 = vector.broadcast %774 : vector<2x11x1xf32> to vector<2x11x64xf32>
    %777 = vector.broadcast %775 : vector<1x1x64xf32> to vector<2x11x64xf32>
    %778 = arith.mulf %776, %777 : vector<2x11x64xf32>
    %779 = arith.addf %766, %778 : vector<2x11x64xf32>
    %780 = vector.extract_strided_slice %733 {offsets = [0, 0, 3], sizes = [2, 11, 1], strides = [1, 1, 1]} : vector<2x11x4xf32> to vector<2x11x1xf32>
    %781 = vector.shape_cast %773 : vector<1x64xf32> to vector<1x1x64xf32>
    %782 = vector.broadcast %780 : vector<2x11x1xf32> to vector<2x11x64xf32>
    %783 = vector.broadcast %781 : vector<1x1x64xf32> to vector<2x11x64xf32>
    %784 = arith.mulf %782, %783 : vector<2x11x64xf32>
    %785 = arith.addf %772, %784 : vector<2x11x64xf32>
    %786 = vector.extract_strided_slice %0 {offsets = [0, 3, 0], sizes = [2, 11, 4], strides = [1, 1, 1]} : vector<2x16x4xf32> to vector<2x11x4xf32>
    %787 = vector.extract_strided_slice %1 {offsets = [0, 3, 0], sizes = [2, 11, 4], strides = [1, 1, 1]} : vector<2x16x4xf32> to vector<2x11x4xf32>
    %788 = vector.extract_strided_slice %459 {offsets = [24, 0], sizes = [1, 64], strides = [1, 1]} : vector<44x64xf32> to vector<1x64xf32>
    %789 = vector.extract_strided_slice %786 {offsets = [0, 0, 0], sizes = [2, 11, 1], strides = [1, 1, 1]} : vector<2x11x4xf32> to vector<2x11x1xf32>
    %790 = vector.shape_cast %788 : vector<1x64xf32> to vector<1x1x64xf32>
    %791 = vector.broadcast %789 : vector<2x11x1xf32> to vector<2x11x64xf32>
    %792 = vector.broadcast %790 : vector<1x1x64xf32> to vector<2x11x64xf32>
    %793 = arith.mulf %791, %792 : vector<2x11x64xf32>
    %794 = arith.addf %779, %793 : vector<2x11x64xf32>
    %795 = vector.extract_strided_slice %787 {offsets = [0, 0, 0], sizes = [2, 11, 1], strides = [1, 1, 1]} : vector<2x11x4xf32> to vector<2x11x1xf32>
    %796 = vector.shape_cast %788 : vector<1x64xf32> to vector<1x1x64xf32>
    %797 = vector.broadcast %795 : vector<2x11x1xf32> to vector<2x11x64xf32>
    %798 = vector.broadcast %796 : vector<1x1x64xf32> to vector<2x11x64xf32>
    %799 = arith.mulf %797, %798 : vector<2x11x64xf32>
    %800 = arith.addf %785, %799 : vector<2x11x64xf32>
    %801 = vector.extract_strided_slice %459 {offsets = [25, 0], sizes = [1, 64], strides = [1, 1]} : vector<44x64xf32> to vector<1x64xf32>
    %802 = vector.extract_strided_slice %786 {offsets = [0, 0, 1], sizes = [2, 11, 1], strides = [1, 1, 1]} : vector<2x11x4xf32> to vector<2x11x1xf32>
    %803 = vector.shape_cast %801 : vector<1x64xf32> to vector<1x1x64xf32>
    %804 = vector.broadcast %802 : vector<2x11x1xf32> to vector<2x11x64xf32>
    %805 = vector.broadcast %803 : vector<1x1x64xf32> to vector<2x11x64xf32>
    %806 = arith.mulf %804, %805 : vector<2x11x64xf32>
    %807 = arith.addf %794, %806 : vector<2x11x64xf32>
    %808 = vector.extract_strided_slice %787 {offsets = [0, 0, 1], sizes = [2, 11, 1], strides = [1, 1, 1]} : vector<2x11x4xf32> to vector<2x11x1xf32>
    %809 = vector.shape_cast %801 : vector<1x64xf32> to vector<1x1x64xf32>
    %810 = vector.broadcast %808 : vector<2x11x1xf32> to vector<2x11x64xf32>
    %811 = vector.broadcast %809 : vector<1x1x64xf32> to vector<2x11x64xf32>
    %812 = arith.mulf %810, %811 : vector<2x11x64xf32>
    %813 = arith.addf %800, %812 : vector<2x11x64xf32>
    %814 = vector.extract_strided_slice %459 {offsets = [26, 0], sizes = [1, 64], strides = [1, 1]} : vector<44x64xf32> to vector<1x64xf32>
    %815 = vector.extract_strided_slice %786 {offsets = [0, 0, 2], sizes = [2, 11, 1], strides = [1, 1, 1]} : vector<2x11x4xf32> to vector<2x11x1xf32>
    %816 = vector.shape_cast %814 : vector<1x64xf32> to vector<1x1x64xf32>
    %817 = vector.broadcast %815 : vector<2x11x1xf32> to vector<2x11x64xf32>
    %818 = vector.broadcast %816 : vector<1x1x64xf32> to vector<2x11x64xf32>
    %819 = arith.mulf %817, %818 : vector<2x11x64xf32>
    %820 = arith.addf %807, %819 : vector<2x11x64xf32>
    %821 = vector.extract_strided_slice %787 {offsets = [0, 0, 2], sizes = [2, 11, 1], strides = [1, 1, 1]} : vector<2x11x4xf32> to vector<2x11x1xf32>
    %822 = vector.shape_cast %814 : vector<1x64xf32> to vector<1x1x64xf32>
    %823 = vector.broadcast %821 : vector<2x11x1xf32> to vector<2x11x64xf32>
    %824 = vector.broadcast %822 : vector<1x1x64xf32> to vector<2x11x64xf32>
    %825 = arith.mulf %823, %824 : vector<2x11x64xf32>
    %826 = arith.addf %813, %825 : vector<2x11x64xf32>
    %827 = vector.extract_strided_slice %459 {offsets = [27, 0], sizes = [1, 64], strides = [1, 1]} : vector<44x64xf32> to vector<1x64xf32>
    %828 = vector.extract_strided_slice %786 {offsets = [0, 0, 3], sizes = [2, 11, 1], strides = [1, 1, 1]} : vector<2x11x4xf32> to vector<2x11x1xf32>
    %829 = vector.shape_cast %827 : vector<1x64xf32> to vector<1x1x64xf32>
    %830 = vector.broadcast %828 : vector<2x11x1xf32> to vector<2x11x64xf32>
    %831 = vector.broadcast %829 : vector<1x1x64xf32> to vector<2x11x64xf32>
    %832 = arith.mulf %830, %831 : vector<2x11x64xf32>
    %833 = arith.addf %820, %832 : vector<2x11x64xf32>
    %834 = vector.extract_strided_slice %787 {offsets = [0, 0, 3], sizes = [2, 11, 1], strides = [1, 1, 1]} : vector<2x11x4xf32> to vector<2x11x1xf32>
    %835 = vector.shape_cast %827 : vector<1x64xf32> to vector<1x1x64xf32>
    %836 = vector.broadcast %834 : vector<2x11x1xf32> to vector<2x11x64xf32>
    %837 = vector.broadcast %835 : vector<1x1x64xf32> to vector<2x11x64xf32>
    %838 = arith.mulf %836, %837 : vector<2x11x64xf32>
    %839 = arith.addf %826, %838 : vector<2x11x64xf32>
    %840 = vector.extract_strided_slice %1 {offsets = [0, 3, 0], sizes = [2, 11, 4], strides = [1, 1, 1]} : vector<2x16x4xf32> to vector<2x11x4xf32>
    %841 = vector.extract_strided_slice %0 {offsets = [0, 4, 0], sizes = [2, 11, 4], strides = [1, 1, 1]} : vector<2x16x4xf32> to vector<2x11x4xf32>
    %842 = vector.extract_strided_slice %459 {offsets = [28, 0], sizes = [1, 64], strides = [1, 1]} : vector<44x64xf32> to vector<1x64xf32>
    %843 = vector.extract_strided_slice %840 {offsets = [0, 0, 0], sizes = [2, 11, 1], strides = [1, 1, 1]} : vector<2x11x4xf32> to vector<2x11x1xf32>
    %844 = vector.shape_cast %842 : vector<1x64xf32> to vector<1x1x64xf32>
    %845 = vector.broadcast %843 : vector<2x11x1xf32> to vector<2x11x64xf32>
    %846 = vector.broadcast %844 : vector<1x1x64xf32> to vector<2x11x64xf32>
    %847 = arith.mulf %845, %846 : vector<2x11x64xf32>
    %848 = arith.addf %833, %847 : vector<2x11x64xf32>
    %849 = vector.extract_strided_slice %841 {offsets = [0, 0, 0], sizes = [2, 11, 1], strides = [1, 1, 1]} : vector<2x11x4xf32> to vector<2x11x1xf32>
    %850 = vector.shape_cast %842 : vector<1x64xf32> to vector<1x1x64xf32>
    %851 = vector.broadcast %849 : vector<2x11x1xf32> to vector<2x11x64xf32>
    %852 = vector.broadcast %850 : vector<1x1x64xf32> to vector<2x11x64xf32>
    %853 = arith.mulf %851, %852 : vector<2x11x64xf32>
    %854 = arith.addf %839, %853 : vector<2x11x64xf32>
    %855 = vector.extract_strided_slice %459 {offsets = [29, 0], sizes = [1, 64], strides = [1, 1]} : vector<44x64xf32> to vector<1x64xf32>
    %856 = vector.extract_strided_slice %840 {offsets = [0, 0, 1], sizes = [2, 11, 1], strides = [1, 1, 1]} : vector<2x11x4xf32> to vector<2x11x1xf32>
    %857 = vector.shape_cast %855 : vector<1x64xf32> to vector<1x1x64xf32>
    %858 = vector.broadcast %856 : vector<2x11x1xf32> to vector<2x11x64xf32>
    %859 = vector.broadcast %857 : vector<1x1x64xf32> to vector<2x11x64xf32>
    %860 = arith.mulf %858, %859 : vector<2x11x64xf32>
    %861 = arith.addf %848, %860 : vector<2x11x64xf32>
    %862 = vector.extract_strided_slice %841 {offsets = [0, 0, 1], sizes = [2, 11, 1], strides = [1, 1, 1]} : vector<2x11x4xf32> to vector<2x11x1xf32>
    %863 = vector.shape_cast %855 : vector<1x64xf32> to vector<1x1x64xf32>
    %864 = vector.broadcast %862 : vector<2x11x1xf32> to vector<2x11x64xf32>
    %865 = vector.broadcast %863 : vector<1x1x64xf32> to vector<2x11x64xf32>
    %866 = arith.mulf %864, %865 : vector<2x11x64xf32>
    %867 = arith.addf %854, %866 : vector<2x11x64xf32>
    %868 = vector.extract_strided_slice %459 {offsets = [30, 0], sizes = [1, 64], strides = [1, 1]} : vector<44x64xf32> to vector<1x64xf32>
    %869 = vector.extract_strided_slice %840 {offsets = [0, 0, 2], sizes = [2, 11, 1], strides = [1, 1, 1]} : vector<2x11x4xf32> to vector<2x11x1xf32>
    %870 = vector.shape_cast %868 : vector<1x64xf32> to vector<1x1x64xf32>
    %871 = vector.broadcast %869 : vector<2x11x1xf32> to vector<2x11x64xf32>
    %872 = vector.broadcast %870 : vector<1x1x64xf32> to vector<2x11x64xf32>
    %873 = arith.mulf %871, %872 : vector<2x11x64xf32>
    %874 = arith.addf %861, %873 : vector<2x11x64xf32>
    %875 = vector.extract_strided_slice %841 {offsets = [0, 0, 2], sizes = [2, 11, 1], strides = [1, 1, 1]} : vector<2x11x4xf32> to vector<2x11x1xf32>
    %876 = vector.shape_cast %868 : vector<1x64xf32> to vector<1x1x64xf32>
    %877 = vector.broadcast %875 : vector<2x11x1xf32> to vector<2x11x64xf32>
    %878 = vector.broadcast %876 : vector<1x1x64xf32> to vector<2x11x64xf32>
    %879 = arith.mulf %877, %878 : vector<2x11x64xf32>
    %880 = arith.addf %867, %879 : vector<2x11x64xf32>
    %881 = vector.extract_strided_slice %459 {offsets = [31, 0], sizes = [1, 64], strides = [1, 1]} : vector<44x64xf32> to vector<1x64xf32>
    %882 = vector.extract_strided_slice %840 {offsets = [0, 0, 3], sizes = [2, 11, 1], strides = [1, 1, 1]} : vector<2x11x4xf32> to vector<2x11x1xf32>
    %883 = vector.shape_cast %881 : vector<1x64xf32> to vector<1x1x64xf32>
    %884 = vector.broadcast %882 : vector<2x11x1xf32> to vector<2x11x64xf32>
    %885 = vector.broadcast %883 : vector<1x1x64xf32> to vector<2x11x64xf32>
    %886 = arith.mulf %884, %885 : vector<2x11x64xf32>
    %887 = arith.addf %874, %886 : vector<2x11x64xf32>
    %888 = vector.extract_strided_slice %841 {offsets = [0, 0, 3], sizes = [2, 11, 1], strides = [1, 1, 1]} : vector<2x11x4xf32> to vector<2x11x1xf32>
    %889 = vector.shape_cast %881 : vector<1x64xf32> to vector<1x1x64xf32>
    %890 = vector.broadcast %888 : vector<2x11x1xf32> to vector<2x11x64xf32>
    %891 = vector.broadcast %889 : vector<1x1x64xf32> to vector<2x11x64xf32>
    %892 = arith.mulf %890, %891 : vector<2x11x64xf32>
    %893 = arith.addf %880, %892 : vector<2x11x64xf32>
    %894 = vector.extract_strided_slice %0 {offsets = [0, 4, 0], sizes = [2, 11, 4], strides = [1, 1, 1]} : vector<2x16x4xf32> to vector<2x11x4xf32>
    %895 = vector.extract_strided_slice %1 {offsets = [0, 4, 0], sizes = [2, 11, 4], strides = [1, 1, 1]} : vector<2x16x4xf32> to vector<2x11x4xf32>
    %896 = vector.extract_strided_slice %459 {offsets = [32, 0], sizes = [1, 64], strides = [1, 1]} : vector<44x64xf32> to vector<1x64xf32>
    %897 = vector.extract_strided_slice %894 {offsets = [0, 0, 0], sizes = [2, 11, 1], strides = [1, 1, 1]} : vector<2x11x4xf32> to vector<2x11x1xf32>
    %898 = vector.shape_cast %896 : vector<1x64xf32> to vector<1x1x64xf32>
    %899 = vector.broadcast %897 : vector<2x11x1xf32> to vector<2x11x64xf32>
    %900 = vector.broadcast %898 : vector<1x1x64xf32> to vector<2x11x64xf32>
    %901 = arith.mulf %899, %900 : vector<2x11x64xf32>
    %902 = arith.addf %887, %901 : vector<2x11x64xf32>
    %903 = vector.extract_strided_slice %895 {offsets = [0, 0, 0], sizes = [2, 11, 1], strides = [1, 1, 1]} : vector<2x11x4xf32> to vector<2x11x1xf32>
    %904 = vector.shape_cast %896 : vector<1x64xf32> to vector<1x1x64xf32>
    %905 = vector.broadcast %903 : vector<2x11x1xf32> to vector<2x11x64xf32>
    %906 = vector.broadcast %904 : vector<1x1x64xf32> to vector<2x11x64xf32>
    %907 = arith.mulf %905, %906 : vector<2x11x64xf32>
    %908 = arith.addf %893, %907 : vector<2x11x64xf32>
    %909 = vector.extract_strided_slice %459 {offsets = [33, 0], sizes = [1, 64], strides = [1, 1]} : vector<44x64xf32> to vector<1x64xf32>
    %910 = vector.extract_strided_slice %894 {offsets = [0, 0, 1], sizes = [2, 11, 1], strides = [1, 1, 1]} : vector<2x11x4xf32> to vector<2x11x1xf32>
    %911 = vector.shape_cast %909 : vector<1x64xf32> to vector<1x1x64xf32>
    %912 = vector.broadcast %910 : vector<2x11x1xf32> to vector<2x11x64xf32>
    %913 = vector.broadcast %911 : vector<1x1x64xf32> to vector<2x11x64xf32>
    %914 = arith.mulf %912, %913 : vector<2x11x64xf32>
    %915 = arith.addf %902, %914 : vector<2x11x64xf32>
    %916 = vector.extract_strided_slice %895 {offsets = [0, 0, 1], sizes = [2, 11, 1], strides = [1, 1, 1]} : vector<2x11x4xf32> to vector<2x11x1xf32>
    %917 = vector.shape_cast %909 : vector<1x64xf32> to vector<1x1x64xf32>
    %918 = vector.broadcast %916 : vector<2x11x1xf32> to vector<2x11x64xf32>
    %919 = vector.broadcast %917 : vector<1x1x64xf32> to vector<2x11x64xf32>
    %920 = arith.mulf %918, %919 : vector<2x11x64xf32>
    %921 = arith.addf %908, %920 : vector<2x11x64xf32>
    %922 = vector.extract_strided_slice %459 {offsets = [34, 0], sizes = [1, 64], strides = [1, 1]} : vector<44x64xf32> to vector<1x64xf32>
    %923 = vector.extract_strided_slice %894 {offsets = [0, 0, 2], sizes = [2, 11, 1], strides = [1, 1, 1]} : vector<2x11x4xf32> to vector<2x11x1xf32>
    %924 = vector.shape_cast %922 : vector<1x64xf32> to vector<1x1x64xf32>
    %925 = vector.broadcast %923 : vector<2x11x1xf32> to vector<2x11x64xf32>
    %926 = vector.broadcast %924 : vector<1x1x64xf32> to vector<2x11x64xf32>
    %927 = arith.mulf %925, %926 : vector<2x11x64xf32>
    %928 = arith.addf %915, %927 : vector<2x11x64xf32>
    %929 = vector.extract_strided_slice %895 {offsets = [0, 0, 2], sizes = [2, 11, 1], strides = [1, 1, 1]} : vector<2x11x4xf32> to vector<2x11x1xf32>
    %930 = vector.shape_cast %922 : vector<1x64xf32> to vector<1x1x64xf32>
    %931 = vector.broadcast %929 : vector<2x11x1xf32> to vector<2x11x64xf32>
    %932 = vector.broadcast %930 : vector<1x1x64xf32> to vector<2x11x64xf32>
    %933 = arith.mulf %931, %932 : vector<2x11x64xf32>
    %934 = arith.addf %921, %933 : vector<2x11x64xf32>
    %935 = vector.extract_strided_slice %459 {offsets = [35, 0], sizes = [1, 64], strides = [1, 1]} : vector<44x64xf32> to vector<1x64xf32>
    %936 = vector.extract_strided_slice %894 {offsets = [0, 0, 3], sizes = [2, 11, 1], strides = [1, 1, 1]} : vector<2x11x4xf32> to vector<2x11x1xf32>
    %937 = vector.shape_cast %935 : vector<1x64xf32> to vector<1x1x64xf32>
    %938 = vector.broadcast %936 : vector<2x11x1xf32> to vector<2x11x64xf32>
    %939 = vector.broadcast %937 : vector<1x1x64xf32> to vector<2x11x64xf32>
    %940 = arith.mulf %938, %939 : vector<2x11x64xf32>
    %941 = arith.addf %928, %940 : vector<2x11x64xf32>
    %942 = vector.extract_strided_slice %895 {offsets = [0, 0, 3], sizes = [2, 11, 1], strides = [1, 1, 1]} : vector<2x11x4xf32> to vector<2x11x1xf32>
    %943 = vector.shape_cast %935 : vector<1x64xf32> to vector<1x1x64xf32>
    %944 = vector.broadcast %942 : vector<2x11x1xf32> to vector<2x11x64xf32>
    %945 = vector.broadcast %943 : vector<1x1x64xf32> to vector<2x11x64xf32>
    %946 = arith.mulf %944, %945 : vector<2x11x64xf32>
    %947 = arith.addf %934, %946 : vector<2x11x64xf32>
    %948 = vector.extract_strided_slice %1 {offsets = [0, 4, 0], sizes = [2, 11, 4], strides = [1, 1, 1]} : vector<2x16x4xf32> to vector<2x11x4xf32>
    %949 = vector.extract_strided_slice %0 {offsets = [0, 5, 0], sizes = [2, 11, 4], strides = [1, 1, 1]} : vector<2x16x4xf32> to vector<2x11x4xf32>
    %950 = vector.extract_strided_slice %459 {offsets = [36, 0], sizes = [1, 64], strides = [1, 1]} : vector<44x64xf32> to vector<1x64xf32>
    %951 = vector.extract_strided_slice %948 {offsets = [0, 0, 0], sizes = [2, 11, 1], strides = [1, 1, 1]} : vector<2x11x4xf32> to vector<2x11x1xf32>
    %952 = vector.shape_cast %950 : vector<1x64xf32> to vector<1x1x64xf32>
    %953 = vector.broadcast %951 : vector<2x11x1xf32> to vector<2x11x64xf32>
    %954 = vector.broadcast %952 : vector<1x1x64xf32> to vector<2x11x64xf32>
    %955 = arith.mulf %953, %954 : vector<2x11x64xf32>
    %956 = arith.addf %941, %955 : vector<2x11x64xf32>
    %957 = vector.extract_strided_slice %949 {offsets = [0, 0, 0], sizes = [2, 11, 1], strides = [1, 1, 1]} : vector<2x11x4xf32> to vector<2x11x1xf32>
    %958 = vector.shape_cast %950 : vector<1x64xf32> to vector<1x1x64xf32>
    %959 = vector.broadcast %957 : vector<2x11x1xf32> to vector<2x11x64xf32>
    %960 = vector.broadcast %958 : vector<1x1x64xf32> to vector<2x11x64xf32>
    %961 = arith.mulf %959, %960 : vector<2x11x64xf32>
    %962 = arith.addf %947, %961 : vector<2x11x64xf32>
    %963 = vector.extract_strided_slice %459 {offsets = [37, 0], sizes = [1, 64], strides = [1, 1]} : vector<44x64xf32> to vector<1x64xf32>
    %964 = vector.extract_strided_slice %948 {offsets = [0, 0, 1], sizes = [2, 11, 1], strides = [1, 1, 1]} : vector<2x11x4xf32> to vector<2x11x1xf32>
    %965 = vector.shape_cast %963 : vector<1x64xf32> to vector<1x1x64xf32>
    %966 = vector.broadcast %964 : vector<2x11x1xf32> to vector<2x11x64xf32>
    %967 = vector.broadcast %965 : vector<1x1x64xf32> to vector<2x11x64xf32>
    %968 = arith.mulf %966, %967 : vector<2x11x64xf32>
    %969 = arith.addf %956, %968 : vector<2x11x64xf32>
    %970 = vector.extract_strided_slice %949 {offsets = [0, 0, 1], sizes = [2, 11, 1], strides = [1, 1, 1]} : vector<2x11x4xf32> to vector<2x11x1xf32>
    %971 = vector.shape_cast %963 : vector<1x64xf32> to vector<1x1x64xf32>
    %972 = vector.broadcast %970 : vector<2x11x1xf32> to vector<2x11x64xf32>
    %973 = vector.broadcast %971 : vector<1x1x64xf32> to vector<2x11x64xf32>
    %974 = arith.mulf %972, %973 : vector<2x11x64xf32>
    %975 = arith.addf %962, %974 : vector<2x11x64xf32>
    %976 = vector.extract_strided_slice %459 {offsets = [38, 0], sizes = [1, 64], strides = [1, 1]} : vector<44x64xf32> to vector<1x64xf32>
    %977 = vector.extract_strided_slice %948 {offsets = [0, 0, 2], sizes = [2, 11, 1], strides = [1, 1, 1]} : vector<2x11x4xf32> to vector<2x11x1xf32>
    %978 = vector.shape_cast %976 : vector<1x64xf32> to vector<1x1x64xf32>
    %979 = vector.broadcast %977 : vector<2x11x1xf32> to vector<2x11x64xf32>
    %980 = vector.broadcast %978 : vector<1x1x64xf32> to vector<2x11x64xf32>
    %981 = arith.mulf %979, %980 : vector<2x11x64xf32>
    %982 = arith.addf %969, %981 : vector<2x11x64xf32>
    %983 = vector.extract_strided_slice %949 {offsets = [0, 0, 2], sizes = [2, 11, 1], strides = [1, 1, 1]} : vector<2x11x4xf32> to vector<2x11x1xf32>
    %984 = vector.shape_cast %976 : vector<1x64xf32> to vector<1x1x64xf32>
    %985 = vector.broadcast %983 : vector<2x11x1xf32> to vector<2x11x64xf32>
    %986 = vector.broadcast %984 : vector<1x1x64xf32> to vector<2x11x64xf32>
    %987 = arith.mulf %985, %986 : vector<2x11x64xf32>
    %988 = arith.addf %975, %987 : vector<2x11x64xf32>
    %989 = vector.extract_strided_slice %459 {offsets = [39, 0], sizes = [1, 64], strides = [1, 1]} : vector<44x64xf32> to vector<1x64xf32>
    %990 = vector.extract_strided_slice %948 {offsets = [0, 0, 3], sizes = [2, 11, 1], strides = [1, 1, 1]} : vector<2x11x4xf32> to vector<2x11x1xf32>
    %991 = vector.shape_cast %989 : vector<1x64xf32> to vector<1x1x64xf32>
    %992 = vector.broadcast %990 : vector<2x11x1xf32> to vector<2x11x64xf32>
    %993 = vector.broadcast %991 : vector<1x1x64xf32> to vector<2x11x64xf32>
    %994 = arith.mulf %992, %993 : vector<2x11x64xf32>
    %995 = arith.addf %982, %994 : vector<2x11x64xf32>
    %996 = vector.extract_strided_slice %949 {offsets = [0, 0, 3], sizes = [2, 11, 1], strides = [1, 1, 1]} : vector<2x11x4xf32> to vector<2x11x1xf32>
    %997 = vector.shape_cast %989 : vector<1x64xf32> to vector<1x1x64xf32>
    %998 = vector.broadcast %996 : vector<2x11x1xf32> to vector<2x11x64xf32>
    %999 = vector.broadcast %997 : vector<1x1x64xf32> to vector<2x11x64xf32>
    %1000 = arith.mulf %998, %999 : vector<2x11x64xf32>
    %1001 = arith.addf %988, %1000 : vector<2x11x64xf32>
    %1002 = vector.extract_strided_slice %0 {offsets = [0, 5, 0], sizes = [2, 11, 4], strides = [1, 1, 1]} : vector<2x16x4xf32> to vector<2x11x4xf32>
    %1003 = vector.extract_strided_slice %1 {offsets = [0, 5, 0], sizes = [2, 11, 4], strides = [1, 1, 1]} : vector<2x16x4xf32> to vector<2x11x4xf32>
    %1004 = vector.extract_strided_slice %459 {offsets = [40, 0], sizes = [1, 64], strides = [1, 1]} : vector<44x64xf32> to vector<1x64xf32>
    %1005 = vector.extract_strided_slice %1002 {offsets = [0, 0, 0], sizes = [2, 11, 1], strides = [1, 1, 1]} : vector<2x11x4xf32> to vector<2x11x1xf32>
    %1006 = vector.shape_cast %1004 : vector<1x64xf32> to vector<1x1x64xf32>
    %1007 = vector.broadcast %1005 : vector<2x11x1xf32> to vector<2x11x64xf32>
    %1008 = vector.broadcast %1006 : vector<1x1x64xf32> to vector<2x11x64xf32>
    %1009 = arith.mulf %1007, %1008 : vector<2x11x64xf32>
    %1010 = arith.addf %995, %1009 : vector<2x11x64xf32>
    %1011 = vector.extract_strided_slice %1003 {offsets = [0, 0, 0], sizes = [2, 11, 1], strides = [1, 1, 1]} : vector<2x11x4xf32> to vector<2x11x1xf32>
    %1012 = vector.shape_cast %1004 : vector<1x64xf32> to vector<1x1x64xf32>
    %1013 = vector.broadcast %1011 : vector<2x11x1xf32> to vector<2x11x64xf32>
    %1014 = vector.broadcast %1012 : vector<1x1x64xf32> to vector<2x11x64xf32>
    %1015 = arith.mulf %1013, %1014 : vector<2x11x64xf32>
    %1016 = arith.addf %1001, %1015 : vector<2x11x64xf32>
    %1017 = vector.extract_strided_slice %459 {offsets = [41, 0], sizes = [1, 64], strides = [1, 1]} : vector<44x64xf32> to vector<1x64xf32>
    %1018 = vector.extract_strided_slice %1002 {offsets = [0, 0, 1], sizes = [2, 11, 1], strides = [1, 1, 1]} : vector<2x11x4xf32> to vector<2x11x1xf32>
    %1019 = vector.shape_cast %1017 : vector<1x64xf32> to vector<1x1x64xf32>
    %1020 = vector.broadcast %1018 : vector<2x11x1xf32> to vector<2x11x64xf32>
    %1021 = vector.broadcast %1019 : vector<1x1x64xf32> to vector<2x11x64xf32>
    %1022 = arith.mulf %1020, %1021 : vector<2x11x64xf32>
    %1023 = arith.addf %1010, %1022 : vector<2x11x64xf32>
    %1024 = vector.extract_strided_slice %1003 {offsets = [0, 0, 1], sizes = [2, 11, 1], strides = [1, 1, 1]} : vector<2x11x4xf32> to vector<2x11x1xf32>
    %1025 = vector.shape_cast %1017 : vector<1x64xf32> to vector<1x1x64xf32>
    %1026 = vector.broadcast %1024 : vector<2x11x1xf32> to vector<2x11x64xf32>
    %1027 = vector.broadcast %1025 : vector<1x1x64xf32> to vector<2x11x64xf32>
    %1028 = arith.mulf %1026, %1027 : vector<2x11x64xf32>
    %1029 = arith.addf %1016, %1028 : vector<2x11x64xf32>
    %1030 = vector.extract_strided_slice %459 {offsets = [42, 0], sizes = [1, 64], strides = [1, 1]} : vector<44x64xf32> to vector<1x64xf32>
    %1031 = vector.extract_strided_slice %1002 {offsets = [0, 0, 2], sizes = [2, 11, 1], strides = [1, 1, 1]} : vector<2x11x4xf32> to vector<2x11x1xf32>
    %1032 = vector.shape_cast %1030 : vector<1x64xf32> to vector<1x1x64xf32>
    %1033 = vector.broadcast %1031 : vector<2x11x1xf32> to vector<2x11x64xf32>
    %1034 = vector.broadcast %1032 : vector<1x1x64xf32> to vector<2x11x64xf32>
    %1035 = arith.mulf %1033, %1034 : vector<2x11x64xf32>
    %1036 = arith.addf %1023, %1035 : vector<2x11x64xf32>
    %1037 = vector.extract_strided_slice %1003 {offsets = [0, 0, 2], sizes = [2, 11, 1], strides = [1, 1, 1]} : vector<2x11x4xf32> to vector<2x11x1xf32>
    %1038 = vector.shape_cast %1030 : vector<1x64xf32> to vector<1x1x64xf32>
    %1039 = vector.broadcast %1037 : vector<2x11x1xf32> to vector<2x11x64xf32>
    %1040 = vector.broadcast %1038 : vector<1x1x64xf32> to vector<2x11x64xf32>
    %1041 = arith.mulf %1039, %1040 : vector<2x11x64xf32>
    %1042 = arith.addf %1029, %1041 : vector<2x11x64xf32>
    %1043 = vector.extract_strided_slice %459 {offsets = [43, 0], sizes = [1, 64], strides = [1, 1]} : vector<44x64xf32> to vector<1x64xf32>
    %1044 = vector.extract_strided_slice %1002 {offsets = [0, 0, 3], sizes = [2, 11, 1], strides = [1, 1, 1]} : vector<2x11x4xf32> to vector<2x11x1xf32>
    %1045 = vector.shape_cast %1043 : vector<1x64xf32> to vector<1x1x64xf32>
    %1046 = vector.broadcast %1044 : vector<2x11x1xf32> to vector<2x11x64xf32>
    %1047 = vector.broadcast %1045 : vector<1x1x64xf32> to vector<2x11x64xf32>
    %1048 = arith.mulf %1046, %1047 : vector<2x11x64xf32>
    %1049 = arith.addf %1036, %1048 : vector<2x11x64xf32>
    %1050 = vector.extract_strided_slice %1003 {offsets = [0, 0, 3], sizes = [2, 11, 1], strides = [1, 1, 1]} : vector<2x11x4xf32> to vector<2x11x1xf32>
    %1051 = vector.shape_cast %1043 : vector<1x64xf32> to vector<1x1x64xf32>
    %1052 = vector.broadcast %1050 : vector<2x11x1xf32> to vector<2x11x64xf32>
    %1053 = vector.broadcast %1051 : vector<1x1x64xf32> to vector<2x11x64xf32>
    %1054 = arith.mulf %1052, %1053 : vector<2x11x64xf32>
    %1055 = arith.addf %1042, %1054 : vector<2x11x64xf32>
    %1056 = arith.maximumf %1049, %1055 : vector<2x11x64xf32>
    %c0_31 = arith.constant 0 : index
    %c0_32 = arith.constant 0 : index
    %1057 = vector.load %arg8[%c0_31, %c0_32] : memref<1x64xf32, #tpu.memory_space<vmem>>, vector<1x64xf32>
    %1058 = vector.shape_cast %1057 : vector<1x64xf32> to vector<1x1x64xf32>
    %1059 = vector.broadcast %1058 : vector<1x1x64xf32> to vector<2x11x64xf32>
    %1060 = arith.addf %1056, %1059 : vector<2x11x64xf32>
    %c0_33 = arith.constant 0 : index
    %c0_34 = arith.constant 0 : index
    %c0_35 = arith.constant 0 : index
    %1061 = vector.load %arg11[%c0_33, %c0_34, %c0_35] : memref<11x64x128xf32, #tpu.memory_space<vmem>>, vector<11x64x128xf32>
    %cst_36 = arith.constant dense<0.000000e+00> : vector<11x2x128xf32>
    %1062 = tpu.matmul %1060, %1061, %cst_36 {dimension_numbers = #tpu.dot_dimension_numbers<[2], [1], [0], [2], [0, 1, 0, 0, 1, 2], [1], [0]>} : vector<2x11x64xf32>, vector<11x64x128xf32>, vector<11x2x128xf32> -> vector<11x2x128xf32>
    %cst_37 = arith.constant dense<0.000000e+00> : vector<2x128xf32>
    %1063 = vector.multi_reduction <add>, %1062, %cst_37 [0] : vector<11x2x128xf32> to vector<2x128xf32>
    %1064 = arith.addf %458, %1063 : vector<2x128xf32>
    %c0_38 = arith.constant 0 : index
    %c0_39 = arith.constant 0 : index
    %1065 = vector.load %arg12[%c0_38, %c0_39] : memref<1x128xf32, #tpu.memory_space<vmem>>, vector<1x128xf32>
    %1066 = vector.broadcast %1065 : vector<1x128xf32> to vector<2x128xf32>
    %1067 = arith.addf %1064, %1066 : vector<2x128xf32>
    %cst_40 = arith.constant 0.000000e+00 : f32
    %1068 = vector.broadcast %cst_40 : f32 to vector<2x128xf32>
    %1069 = arith.maximumf %1067, %1068 : vector<2x128xf32>
    %c0_41 = arith.constant 0 : index
    %c0_42 = arith.constant 0 : index
    %1070 = vector.load %arg13[%c0_41, %c0_42] : memref<128x5xf32, #tpu.memory_space<vmem>>, vector<128x5xf32>
    %cst_43 = arith.constant dense<0.000000e+00> : vector<2x5xf32>
    %1071 = tpu.matmul %1069, %1070, %cst_43 {dimension_numbers = #tpu.dot_dimension_numbers<[1], [0], [0], [1], [0, 0, 1, 1], [], []>} : vector<2x128xf32>, vector<128x5xf32>, vector<2x5xf32> -> vector<2x5xf32>
    %c0_44 = arith.constant 0 : index
    %c0_45 = arith.constant 0 : index
    %1072 = vector.load %arg14[%c0_44, %c0_45] : memref<1x5xf32, #tpu.memory_space<vmem>>, vector<1x5xf32>
    %1073 = vector.broadcast %1072 : vector<1x5xf32> to vector<2x5xf32>
    %1074 = arith.addf %1071, %1073 : vector<2x5xf32>
    %c0_46 = arith.constant 0 : index
    %c0_47 = arith.constant 0 : index
    %1075 = vector.load %arg15[%c0_46, %c0_47] : memref<2x5xf32, #tpu.memory_space<vmem>>, vector<2x5xf32>
    tpu.vector_store %arg15[%c0_46, %c0_47], %1074 {strides = array<i32>} : memref<2x5xf32, #tpu.memory_space<vmem>>, vector<2x5xf32>,
    return
  }
  func.func @transform_0(%arg0: i32) -> (i32, i32, i32) {
    %c0_i32 = arith.constant 0 : i32
    %c0_i32_0 = arith.constant 0 : i32
    %c0_i32_1 = arith.constant 0 : i32
    return %arg0, %c0_i32, %c0_i32_0 : i32, i32, i32
  }
  func.func @transform_1(%arg0: i32) -> (i32, i32, i32) {
    %c0_i32 = arith.constant 0 : i32
    %c0_i32_0 = arith.constant 0 : i32
    %c0_i32_1 = arith.constant 0 : i32
    return %arg0, %c0_i32, %c0_i32_0 : i32, i32, i32
  }
  func.func @transform_2(%arg0: i32) -> (i32, i32) {
    %c0_i32 = arith.constant 0 : i32
    %c0_i32_0 = arith.constant 0 : i32
    %c0_i32_1 = arith.constant 0 : i32
    return %c0_i32, %c0_i32_0 : i32, i32
  }
  func.func @transform_3(%arg0: i32) -> (i32, i32) {
    %c0_i32 = arith.constant 0 : i32
    %c0_i32_0 = arith.constant 0 : i32
    %c0_i32_1 = arith.constant 0 : i32
    return %c0_i32, %c0_i32_0 : i32, i32
  }
  func.func @transform_4(%arg0: i32) -> (i32, i32) {
    %c0_i32 = arith.constant 0 : i32
    %c0_i32_0 = arith.constant 0 : i32
    %c0_i32_1 = arith.constant 0 : i32
    return %c0_i32, %c0_i32_0 : i32, i32
  }
  func.func @transform_5(%arg0: i32) -> (i32, i32) {
    %c0_i32 = arith.constant 0 : i32
    %c0_i32_0 = arith.constant 0 : i32
    %c0_i32_1 = arith.constant 0 : i32
    return %c0_i32, %c0_i32_0 : i32, i32
  }
  func.func @transform_6(%arg0: i32) -> (i32, i32) {
    %c0_i32 = arith.constant 0 : i32
    %c0_i32_0 = arith.constant 0 : i32
    %c0_i32_1 = arith.constant 0 : i32
    return %c0_i32, %c0_i32_0 : i32, i32
  }
  func.func @transform_7(%arg0: i32) -> (i32, i32) {
    %c0_i32 = arith.constant 0 : i32
    %c0_i32_0 = arith.constant 0 : i32
    %c0_i32_1 = arith.constant 0 : i32
    return %c0_i32, %c0_i32_0 : i32, i32
  }
  func.func @transform_8(%arg0: i32) -> (i32, i32, i32) {
    %c0_i32 = arith.constant 0 : i32
    %c0_i32_0 = arith.constant 0 : i32
    %c0_i32_1 = arith.constant 0 : i32
    %c0_i32_2 = arith.constant 0 : i32
    return %c0_i32, %c0_i32_0, %c0_i32_1 : i32, i32, i32
  }
  func.func @transform_9(%arg0: i32) -> (i32, i32, i32) {
    %c0_i32 = arith.constant 0 : i32
    %c0_i32_0 = arith.constant 0 : i32
    %c0_i32_1 = arith.constant 0 : i32
    %c0_i32_2 = arith.constant 0 : i32
    return %c0_i32, %c0_i32_0, %c0_i32_1 : i32, i32, i32
  }
  func.func @transform_10(%arg0: i32) -> (i32, i32, i32) {
    %c0_i32 = arith.constant 0 : i32
    %c0_i32_0 = arith.constant 0 : i32
    %c0_i32_1 = arith.constant 0 : i32
    %c0_i32_2 = arith.constant 0 : i32
    return %c0_i32, %c0_i32_0, %c0_i32_1 : i32, i32, i32
  }
  func.func @transform_11(%arg0: i32) -> (i32, i32) {
    %c0_i32 = arith.constant 0 : i32
    %c0_i32_0 = arith.constant 0 : i32
    %c0_i32_1 = arith.constant 0 : i32
    return %c0_i32, %c0_i32_0 : i32, i32
  }
  func.func @transform_12(%arg0: i32) -> (i32, i32) {
    %c0_i32 = arith.constant 0 : i32
    %c0_i32_0 = arith.constant 0 : i32
    %c0_i32_1 = arith.constant 0 : i32
    return %c0_i32, %c0_i32_0 : i32, i32
  }
  func.func @transform_13(%arg0: i32) -> (i32, i32) {
    %c0_i32 = arith.constant 0 : i32
    %c0_i32_0 = arith.constant 0 : i32
    %c0_i32_1 = arith.constant 0 : i32
    return %c0_i32, %c0_i32_0 : i32, i32
  }
  func.func @transform_14(%arg0: i32) -> (i32, i32) {
    %c0_i32 = arith.constant 0 : i32
    %c0_i32_0 = arith.constant 0 : i32
    return %arg0, %c0_i32 : i32, i32
  }
}

</mosaic_0001>

<llo_original>
// kernel: cnn_forward.1
$region0: #{cnn_forward.1}
  #allocation0 [shape = 'u32[]', space=smem, size = 0x4, offset = 0x4, fixed_abs, tag = 'smem constant byte address 0x4 - core index']
  #allocation1 [shape = 'u32[144,128]{1,0:T(1,128)}', space=vmem, size = 0x12000, scoped, tag = 'internal scratch']
  %s0 = inlined_call_operand.vmem [shape: f32[2,16,4], index: 0, kind: input, shape index: {}]
  %s1 = inlined_call_operand.vmem [shape: f32[2,16,4], index: 1, kind: input, shape index: {}]
  %s2 = inlined_call_operand.vmem [shape: f32[12,64], index: 2, kind: input, shape index: {}]
  %s3 = inlined_call_operand.vmem [shape: f32[1,64], index: 3, kind: input, shape index: {}]
  %s4 = inlined_call_operand.vmem [shape: f32[20,64], index: 4, kind: input, shape index: {}]
  %s5 = inlined_call_operand.vmem [shape: f32[1,64], index: 5, kind: input, shape index: {}]
  %s6 = inlined_call_operand.vmem [shape: f32[44,64], index: 6, kind: input, shape index: {}]
  %s7 = inlined_call_operand.vmem [shape: f32[1,64], index: 7, kind: input, shape index: {}]
  %s8 = inlined_call_operand.hbm [shape: f32[15,64,128], index: 8, kind: input, shape index: {}]
  %s9 = inlined_call_operand.hbm [shape: f32[14,64,128], index: 9, kind: input, shape index: {}]
  %s10 = inlined_call_operand.hbm [shape: f32[11,64,128], index: 10, kind: input, shape index: {}]
  %s11 = inlined_call_operand.vmem [shape: f32[1,128], index: 11, kind: input, shape index: {}]
  %s12 = inlined_call_operand.vmem [shape: f32[128,5], index: 12, kind: input, shape index: {}]
  %s13 = inlined_call_operand.vmem [shape: f32[1,5], index: 13, kind: input, shape index: {}]
  %s14 = inlined_call_operand.hbm [shape: f32[2,5], index: 14, kind: output, shape index: {}]
  %s15 = sld [smem:[#allocation0]]
  $region78: #{cnn_forward.1} parent=0
    _
  %s17 = ssub.s32 1, %s15
  %s18 = scalar_select 0, %s17, %s15
  $region1: #{cnn_forward.1} parent=0
    #allocation2 [shape = 'u8[491520]{0}', space=vmem, size = 0x78000, scoped, tag = 'input window, operand 8, single buffered']
    #allocation3 [shape = 's32[1]{0}', space=sflag, size = 0x4, scoped, tag = 'scoped memory for cnn_forward.1']
    #allocation4 [shape = 's32[1]{0}', space=sflag, size = 0x4, scoped, tag = 'scoped memory for cnn_forward.1']
    #allocation5 [shape = 'u8[458752]{0}', space=vmem, size = 0x70000, scoped, tag = 'input window, operand 9, single buffered']
    #allocation6 [shape = 's32[1]{0}', space=sflag, size = 0x4, scoped, tag = 'scoped memory for cnn_forward.1']
    #allocation7 [shape = 'u8[360448]{0}', space=vmem, size = 0x58000, scoped, tag = 'input window, operand 10, single buffered']
    #allocation8 [shape = 'u8[1024]{0}', space=vmem, size = 0x400, scoped, tag = 'output window, operand 0, single buffered']
    %19 = vsyncpa [#allocation3], 0
    %20 = vsyncpa [#allocation6], 0
    %21 = vsyncpa [#allocation4], 0
    // Predicated region
    $region2: #{cnn_forward.1} parent=1 // pred_check
      _
    $region3: #{cnn_forward.1} parent=1 // pred_check_branch
      %23 = sbr.rel (0) target = $region5
    $region4: #{cnn_forward.1} parent=1 // pred_region
      _
    $region5: #{cnn_forward.1} parent=1 // pred_fallthru
      _
    // Predicated region
    $region6: #{cnn_forward.1} parent=1 // pred_check
      _
    $region7: #{cnn_forward.1} parent=1 // pred_check_branch
      %25 = sbr.rel (0) target = $region9
    $region8: #{cnn_forward.1} parent=1 // pred_region
      _
    $region9: #{cnn_forward.1} parent=1 // pred_fallthru
      _
    // Predicated region
    $region10: #{cnn_forward.1} parent=1 // pred_check
      _
    $region11: #{cnn_forward.1} parent=1 // pred_check_branch
      %27 = sbr.rel (0) target = $region13
    $region12: #{cnn_forward.1} parent=1 // pred_region
      _
    $region13: #{cnn_forward.1} parent=1 // pred_fallthru
      _
    // Predicated region
    $region14: #{cnn_forward.1} parent=1 // pred_check
      _
    $region15: #{cnn_forward.1} parent=1 // pred_check_branch
      %29 = sbr.rel (0) target = $region17
    $region16: #{cnn_forward.1} parent=1 // pred_region
      _
    $region17: #{cnn_forward.1} parent=1 // pred_fallthru
      _
    // Predicated region
    $region18: #{cnn_forward.1} parent=1 // pred_check
      _
    $region19: #{cnn_forward.1} parent=1 // pred_check_branch
      %31 = sbr.rel (0) target = $region21
    $region20: #{cnn_forward.1} parent=1 // pred_region
      _
    $region21: #{cnn_forward.1} parent=1 // pred_fallthru
      _
    // Predicated region
    $region22: #{cnn_forward.1} parent=1 // pred_check
      _
    $region23: #{cnn_forward.1} parent=1 // pred_check_branch
      %33 = sbr.rel (0) target = $region25
    $region24: #{cnn_forward.1} parent=1 // pred_region
      _
    $region25: #{cnn_forward.1} parent=1 // pred_fallthru
      _
    // Predicated region
    $region26: #{cnn_forward.1} parent=1 // pred_check
      _
    $region27: #{cnn_forward.1} parent=1 // pred_check_branch
      %35 = sbr.rel (0) target = $region29
    $region28: #{cnn_forward.1} parent=1 // pred_region
      _
    $region29: #{cnn_forward.1} parent=1 // pred_fallthru
      _
    // Predicated region
    $region30: #{cnn_forward.1} parent=1 // pred_check
      _
    $region31: #{cnn_forward.1} parent=1 // pred_check_branch
      %37 = sbr.rel (0) target = $region33
    $region32: #{cnn_forward.1} parent=1 // pred_region
      _
    $region33: #{cnn_forward.1} parent=1 // pred_fallthru
      _
    // Predicated region
    $region34: #{cnn_forward.1} parent=1 // pred_check
      _
    $region35: #{cnn_forward.1} parent=1 // pred_check_branch
      %39 = sbr.rel (0) target = $region37
    $region36: #{cnn_forward.1} parent=1 // pred_region
      %s41 = ssub.s32 15360, 15360
      %42 = vsyncadd [#allocation3], %s41
      %s43 = sshll.u32 [#allocation2], 4
      %s44 = int_to_ptr.vmem [resolvable:$true] %s43
      %49 = dma.hbm_to_vmem [thread:$0]  %s8, 15360, %s44, [#allocation3], 128, 128, 8
    $region37: #{cnn_forward.1} parent=1 // pred_fallthru
      _
    // Predicated region
    $region38: #{cnn_forward.1} parent=1 // pred_check
      _
    $region39: #{cnn_forward.1} parent=1 // pred_check_branch
      %51 = sbr.rel (0) target = $region41
    $region40: #{cnn_forward.1} parent=1 // pred_region
      %s53 = ssub.s32 14336, 14336
      %54 = vsyncadd [#allocation6], %s53
      %s55 = sshll.u32 [#allocation5], 4
      %s56 = int_to_ptr.vmem [resolvable:$true] %s55
      %61 = dma.hbm_to_vmem [thread:$0]  %s9, 14336, %s56, [#allocation6], 128, 128, 8
    $region41: #{cnn_forward.1} parent=1 // pred_fallthru
      _
    // Predicated region
    $region42: #{cnn_forward.1} parent=1 // pred_check
      _
    $region43: #{cnn_forward.1} parent=1 // pred_check_branch
      %63 = sbr.rel (0) target = $region45
    $region44: #{cnn_forward.1} parent=1 // pred_region
      %s65 = ssub.s32 11264, 11264
      %66 = vsyncadd [#allocation6], %s65
      %s67 = sshll.u32 [#allocation7], 4
      %s68 = int_to_ptr.vmem [resolvable:$true] %s67
      %73 = dma.hbm_to_vmem [thread:$0]  %s10, 11264, %s68, [#allocation6], 128, 128, 8
    $region45: #{cnn_forward.1} parent=1 // pred_fallthru
      _
    // Predicated region
    $region46: #{cnn_forward.1} parent=1 // pred_check
      _
    $region47: #{cnn_forward.1} parent=1 // pred_check_branch
      %75 = sbr.rel (0) target = $region49
    $region48: #{cnn_forward.1} parent=1 // pred_region
      _
    $region49: #{cnn_forward.1} parent=1 // pred_fallthru
      _
    // Predicated region
    $region50: #{cnn_forward.1} parent=1 // pred_check
      _
    $region51: #{cnn_forward.1} parent=1 // pred_check_branch
      %77 = sbr.rel (0) target = $region53
    $region52: #{cnn_forward.1} parent=1 // pred_region
      _
    $region53: #{cnn_forward.1} parent=1 // pred_fallthru
      _
    // Predicated region
    $region54: #{cnn_forward.1} parent=1 // pred_check
      _
    $region55: #{cnn_forward.1} parent=1 // pred_check_branch
      %79 = sbr.rel (0) target = $region57
    $region56: #{cnn_forward.1} parent=1 // pred_region
      _
    $region57: #{cnn_forward.1} parent=1 // pred_fallthru
      _
    // Predicated region
    $region58: #{cnn_forward.1} parent=1 // pred_check
      _
    $region59: #{cnn_forward.1} parent=1 // pred_check_branch
      %81 = sbr.rel (0) target = $region61
    $region60: #{cnn_forward.1} parent=1 // pred_region
      %82 = dma.done [#allocation3], 15360
    $region61: #{cnn_forward.1} parent=1 // pred_fallthru
      _
    // Predicated region
    $region62: #{cnn_forward.1} parent=1 // pred_check
      _
    $region63: #{cnn_forward.1} parent=1 // pred_check_branch
      %84 = sbr.rel (0) target = $region65
    $region64: #{cnn_forward.1} parent=1 // pred_region
      %85 = dma.done [#allocation6], 14336
    $region65: #{cnn_forward.1} parent=1 // pred_fallthru
      _
    // Predicated region
    $region66: #{cnn_forward.1} parent=1 // pred_check
      _
    $region67: #{cnn_forward.1} parent=1 // pred_check_branch
      %87 = sbr.rel (0) target = $region69
    $region68: #{cnn_forward.1} parent=1 // pred_region
      %88 = dma.done [#allocation6], 11264
    $region69: #{cnn_forward.1} parent=1 // pred_fallthru
      _
    %v89 = vld [vmem:[%s0] sm:$0xff]
    %v90 = vld [vmem:[%s0 + $0x8] sm:$0xff]
    %v91 = vld [vmem:[%s0 + $0x10] sm:$0xff]
    %v92 = vld [vmem:[%s0 + $0x18] sm:$0xff]
    %v93 = vld [vmem:[%s1] sm:$0xff]
    %v94 = vld [vmem:[%s1 + $0x8] sm:$0xff]
    %v95 = vld [vmem:[%s1 + $0x10] sm:$0xff]
    %v96 = vld [vmem:[%s1 + $0x18] sm:$0xff]
    %v97 = vld [vmem:[%s2] sm:$0xff]
    %v98 = vld [vmem:[%s2 + $0x8] sm:$0xf]
    %100 = vset.pattern.permute.xlu0 0
    %101 = vperm.xlu0 %100, %v89
    %v102 = vpop.permute.xlu0 %101
    %105 = vset.pattern.permute.xlu0 0
    %106 = vperm.xlu0 %105, %v90
    %v107 = vpop.permute.xlu0 %106
    %110 = vset.pattern.permute.xlu0 0
    %111 = vperm.xlu0 %110, %v91
    %v112 = vpop.permute.xlu0 %111
    %115 = vset.pattern.permute.xlu0 0
    %116 = vperm.xlu0 %115, %v92
    %v117 = vpop.permute.xlu0 %116
    %v119 = vlaneseq
    %v120 = vshrl.u32 %v119, 7
    %v121 = vsub.s32 0, %v120
    %v122 = vrot.slane %v97, %v121
    %v123 = vmul.f32 %v102, %v122
    %v124 = vmul.f32 %v107, %v122
    %v125 = vmul.f32 %v112, %v122
    %v126 = vmul.f32 %v117, %v122
    %v127 = vadd.f32 %v123, 0.0
    %v128 = vadd.f32 %v124, 0.0
    %v129 = vadd.f32 %v125, 0.0
    %v130 = vadd.f32 %v126, 0.0
    %132 = vset.pattern.permute.xlu0 0
    %133 = vperm.xlu0 %132, %v93
    %v134 = vpop.permute.xlu0 %133
    %137 = vset.pattern.permute.xlu0 0
    %138 = vperm.xlu0 %137, %v94
    %v139 = vpop.permute.xlu0 %138
    %142 = vset.pattern.permute.xlu0 0
    %143 = vperm.xlu0 %142, %v95
    %v144 = vpop.permute.xlu0 %143
    %147 = vset.pattern.permute.xlu0 0
    %148 = vperm.xlu0 %147, %v96
    %v149 = vpop.permute.xlu0 %148
    %v151 = vmul.f32 %v134, %v122
    %v152 = vmul.f32 %v139, %v122
    %v153 = vmul.f32 %v144, %v122
    %v154 = vmul.f32 %v149, %v122
    %v155 = vadd.f32 %v151, 0.0
    %v156 = vadd.f32 %v152, 0.0
    %v157 = vadd.f32 %v153, 0.0
    %v158 = vadd.f32 %v154, 0.0
    %159 = vset.pattern.permute.xlu0 1
    %160 = vperm.xlu0 %159, %v89
    %v161 = vpop.permute.xlu0 %160
    %163 = vset.pattern.permute.xlu0 1
    %164 = vperm.xlu0 %163, %v90
    %v165 = vpop.permute.xlu0 %164
    %167 = vset.pattern.permute.xlu0 1
    %168 = vperm.xlu0 %167, %v91
    %v169 = vpop.permute.xlu0 %168
    %171 = vset.pattern.permute.xlu0 1
    %172 = vperm.xlu0 %171, %v92
    %v173 = vpop.permute.xlu0 %172
    %v175 = vlaneseq
    %v176 = vshrl.u32 %v175, 7
    %v177 = vsub.s32 1, %v176
    %v178 = vrot.slane %v97, %v177
    %v179 = vmul.f32 %v161, %v178
    %v180 = vmul.f32 %v165, %v178
    %v181 = vmul.f32 %v169, %v178
    %v182 = vmul.f32 %v173, %v178
    %v183 = vadd.f32 %v127, %v179
    %v184 = vadd.f32 %v128, %v180
    %v185 = vadd.f32 %v129, %v181
    %v186 = vadd.f32 %v130, %v182
    %187 = vset.pattern.permute.xlu0 1
    %188 = vperm.xlu0 %187, %v93
    %v189 = vpop.permute.xlu0 %188
    %191 = vset.pattern.permute.xlu0 1
    %192 = vperm.xlu0 %191, %v94
    %v193 = vpop.permute.xlu0 %192
    %195 = vset.pattern.permute.xlu0 1
    %196 = vperm.xlu0 %195, %v95
    %v197 = vpop.permute.xlu0 %196
    %199 = vset.pattern.permute.xlu0 1
    %200 = vperm.xlu0 %199, %v96
    %v201 = vpop.permute.xlu0 %200
    %v203 = vmul.f32 %v189, %v178
    %v204 = vmul.f32 %v193, %v178
    %v205 = vmul.f32 %v197, %v178
    %v206 = vmul.f32 %v201, %v178
    %v207 = vadd.f32 %v155, %v203
    %v208 = vadd.f32 %v156, %v204
    %v209 = vadd.f32 %v157, %v205
    %v210 = vadd.f32 %v158, %v206
    %211 = vset.pattern.permute.xlu0 2
    %212 = vperm.xlu0 %211, %v89
    %v213 = vpop.permute.xlu0 %212
    %215 = vset.pattern.permute.xlu0 2
    %216 = vperm.xlu0 %215, %v90
    %v217 = vpop.permute.xlu0 %216
    %219 = vset.pattern.permute.xlu0 2
    %220 = vperm.xlu0 %219, %v91
    %v221 = vpop.permute.xlu0 %220
    %223 = vset.pattern.permute.xlu0 2
    %224 = vperm.xlu0 %223, %v92
    %v225 = vpop.permute.xlu0 %224
    %v227 = vlaneseq
    %v228 = vshrl.u32 %v227, 7
    %v229 = vsub.s32 2, %v228
    %v230 = vrot.slane %v97, %v229
    %v231 = vmul.f32 %v213, %v230
    %v232 = vmul.f32 %v217, %v230
    %v233 = vmul.f32 %v221, %v230
    %v234 = vmul.f32 %v225, %v230
    %v235 = vadd.f32 %v183, %v231
    %v236 = vadd.f32 %v184, %v232
    %v237 = vadd.f32 %v185, %v233
    %v238 = vadd.f32 %v186, %v234
    %239 = vset.pattern.permute.xlu0 2
    %240 = vperm.xlu0 %239, %v93
    %v241 = vpop.permute.xlu0 %240
    %243 = vset.pattern.permute.xlu0 2
    %244 = vperm.xlu0 %243, %v94
    %v245 = vpop.permute.xlu0 %244
    %247 = vset.pattern.permute.xlu0 2
    %248 = vperm.xlu0 %247, %v95
    %v249 = vpop.permute.xlu0 %248
    %251 = vset.pattern.permute.xlu0 2
    %252 = vperm.xlu0 %251, %v96
    %v253 = vpop.permute.xlu0 %252
    %v255 = vmul.f32 %v241, %v230
    %v256 = vmul.f32 %v245, %v230
    %v257 = vmul.f32 %v249, %v230
    %v258 = vmul.f32 %v253, %v230
    %v259 = vadd.f32 %v207, %v255
    %v260 = vadd.f32 %v208, %v256
    %v261 = vadd.f32 %v209, %v257
    %v262 = vadd.f32 %v210, %v258
    %263 = vset.pattern.permute.xlu0 3
    %264 = vperm.xlu0 %263, %v89
    %v265 = vpop.permute.xlu0 %264
    %267 = vset.pattern.permute.xlu0 3
    %268 = vperm.xlu0 %267, %v90
    %v269 = vpop.permute.xlu0 %268
    %271 = vset.pattern.permute.xlu0 3
    %272 = vperm.xlu0 %271, %v91
    %v273 = vpop.permute.xlu0 %272
    %275 = vset.pattern.permute.xlu0 3
    %276 = vperm.xlu0 %275, %v92
    %v277 = vpop.permute.xlu0 %276
    %v279 = vlaneseq
    %v280 = vshrl.u32 %v279, 7
    %v281 = vsub.s32 3, %v280
    %v282 = vrot.slane %v97, %v281
    %v283 = vmul.f32 %v265, %v282
    %v284 = vmul.f32 %v269, %v282
    %v285 = vmul.f32 %v273, %v282
    %v286 = vmul.f32 %v277, %v282
    %v287 = vadd.f32 %v235, %v283
    %v288 = vadd.f32 %v236, %v284
    %v289 = vadd.f32 %v237, %v285
    %v290 = vadd.f32 %v238, %v286
    %291 = vset.pattern.permute.xlu0 3
    %292 = vperm.xlu0 %291, %v93
    %v293 = vpop.permute.xlu0 %292
    %295 = vset.pattern.permute.xlu0 3
    %296 = vperm.xlu0 %295, %v94
    %v297 = vpop.permute.xlu0 %296
    %299 = vset.pattern.permute.xlu0 3
    %300 = vperm.xlu0 %299, %v95
    %v301 = vpop.permute.xlu0 %300
    %303 = vset.pattern.permute.xlu0 3
    %304 = vperm.xlu0 %303, %v96
    %v305 = vpop.permute.xlu0 %304
    %v307 = vmul.f32 %v293, %v282
    %v308 = vmul.f32 %v297, %v282
    %v309 = vmul.f32 %v301, %v282
    %v310 = vmul.f32 %v305, %v282
    %v311 = vadd.f32 %v259, %v307
    %v312 = vadd.f32 %v260, %v308
    %v313 = vadd.f32 %v261, %v309
    %v314 = vadd.f32 %v262, %v310
    %v315 = vlaneseq
    %v316 = vshrl.u32 %v315, 7
    %v317 = vsub.s32 4, %v316
    %v318 = vrot.slane %v97, %v317
    %v319 = vmul.f32 %v134, %v318
    %v320 = vmul.f32 %v139, %v318
    %v321 = vmul.f32 %v144, %v318
    %v322 = vmul.f32 %v149, %v318
    %v323 = vadd.f32 %v287, %v319
    %v324 = vadd.f32 %v288, %v320
    %v325 = vadd.f32 %v289, %v321
    %v326 = vadd.f32 %v290, %v322
    %v327 = vmul.f32 %v102, %v318
    %v328 = vmul.f32 %v107, %v318
    %v329 = vmul.f32 %v112, %v318
    %v330 = vmul.f32 %v117, %v318
    %vm335 = vcmask 1046528
    %v336 = vrot.slane %v327, 1
    %v337 = vrot.slane %v328, 1
    %v338 = vsel %vm335, %v336, %v337
    %v339 = vrot.slane %v329, 1
    %v340 = vrot.slane %v330, 1
    %v341 = vsel %vm335, %v339, %v340
    %v346 = vadd.f32 %v311, %v338
    %v347 = vadd.f32 %v312, %v337
    %v348 = vadd.f32 %v313, %v341
    %v349 = vadd.f32 %v314, %v340
    %v350 = vlaneseq
    %v351 = vshrl.u32 %v350, 7
    %v352 = vsub.s32 5, %v351
    %v353 = vrot.slane %v97, %v352
    %v354 = vmul.f32 %v189, %v353
    %v355 = vmul.f32 %v193, %v353
    %v356 = vmul.f32 %v197, %v353
    %v357 = vmul.f32 %v201, %v353
    %v358 = vadd.f32 %v323, %v354
    %v359 = vadd.f32 %v324, %v355
    %v360 = vadd.f32 %v325, %v356
    %v361 = vadd.f32 %v326, %v357
    %v362 = vmul.f32 %v161, %v353
    %v363 = vmul.f32 %v165, %v353
    %v364 = vmul.f32 %v169, %v353
    %v365 = vmul.f32 %v173, %v353
    %v370 = vrot.slane %v362, 1
    %v371 = vrot.slane %v363, 1
    %v372 = vsel %vm335, %v370, %v371
    %v373 = vrot.slane %v364, 1
    %v374 = vrot.slane %v365, 1
    %v375 = vsel %vm335, %v373, %v374
    %v380 = vadd.f32 %v346, %v372
    %v381 = vadd.f32 %v347, %v371
    %v382 = vadd.f32 %v348, %v375
    %v383 = vadd.f32 %v349, %v374
    %v384 = vlaneseq
    %v385 = vshrl.u32 %v384, 7
    %v386 = vsub.s32 6, %v385
    %v387 = vrot.slane %v97, %v386
    %v388 = vmul.f32 %v241, %v387
    %v389 = vmul.f32 %v245, %v387
    %v390 = vmul.f32 %v249, %v387
    %v391 = vmul.f32 %v253, %v387
    %v392 = vadd.f32 %v358, %v388
    %v393 = vadd.f32 %v359, %v389
    %v394 = vadd.f32 %v360, %v390
    %v395 = vadd.f32 %v361, %v391
    %v396 = vmul.f32 %v213, %v387
    %v397 = vmul.f32 %v217, %v387
    %v398 = vmul.f32 %v221, %v387
    %v399 = vmul.f32 %v225, %v387
    %v404 = vrot.slane %v396, 1
    %v405 = vrot.slane %v397, 1
    %v406 = vsel %vm335, %v404, %v405
    %v407 = vrot.slane %v398, 1
    %v408 = vrot.slane %v399, 1
    %v409 = vsel %vm335, %v407, %v408
    %v414 = vadd.f32 %v380, %v406
    %v415 = vadd.f32 %v381, %v405
    %v416 = vadd.f32 %v382, %v409
    %v417 = vadd.f32 %v383, %v408
    %v418 = vlaneseq
    %v419 = vshrl.u32 %v418, 7
    %v420 = vsub.s32 7, %v419
    %v421 = vrot.slane %v97, %v420
    %v422 = vmul.f32 %v293, %v421
    %v423 = vmul.f32 %v297, %v421
    %v424 = vmul.f32 %v301, %v421
    %v425 = vmul.f32 %v305, %v421
    %v426 = vadd.f32 %v392, %v422
    %v427 = vadd.f32 %v393, %v423
    %v428 = vadd.f32 %v394, %v424
    %v429 = vadd.f32 %v395, %v425
    %v430 = vmul.f32 %v265, %v421
    %v431 = vmul.f32 %v269, %v421
    %v432 = vmul.f32 %v273, %v421
    %v433 = vmul.f32 %v277, %v421
    %v438 = vrot.slane %v430, 1
    %v439 = vrot.slane %v431, 1
    %v440 = vsel %vm335, %v438, %v439
    %v441 = vrot.slane %v432, 1
    %v442 = vrot.slane %v433, 1
    %v443 = vsel %vm335, %v441, %v442
    %v448 = vadd.f32 %v414, %v440
    %v449 = vadd.f32 %v415, %v439
    %v450 = vadd.f32 %v416, %v443
    %v451 = vadd.f32 %v417, %v442
    %v452 = vlaneseq
    %v453 = vshrl.u32 %v452, 7
    %v454 = vsub.s32 0, %v453
    %v455 = vrot.slane %v98, %v454
    %v456 = vmul.f32 %v102, %v455
    %v457 = vmul.f32 %v107, %v455
    %v458 = vmul.f32 %v112, %v455
    %v459 = vmul.f32 %v117, %v455
    %v464 = vrot.slane %v456, 1
    %v465 = vrot.slane %v457, 1
    %v466 = vsel %vm335, %v464, %v465
    %v467 = vrot.slane %v458, 1
    %v468 = vrot.slane %v459, 1
    %v469 = vsel %vm335, %v467, %v468
    %v474 = vadd.f32 %v426, %v466
    %v475 = vadd.f32 %v427, %v465
    %v476 = vadd.f32 %v428, %v469
    %v477 = vadd.f32 %v429, %v468
    %v478 = vmul.f32 %v134, %v455
    %v479 = vmul.f32 %v139, %v455
    %v480 = vmul.f32 %v144, %v455
    %v481 = vmul.f32 %v149, %v455
    %v486 = vrot.slane %v478, 1
    %v487 = vrot.slane %v479, 1
    %v488 = vsel %vm335, %v486, %v487
    %v489 = vrot.slane %v480, 1
    %v490 = vrot.slane %v481, 1
    %v491 = vsel %vm335, %v489, %v490
    %v496 = vadd.f32 %v448, %v488
    %v497 = vadd.f32 %v449, %v487
    %v498 = vadd.f32 %v450, %v491
    %v499 = vadd.f32 %v451, %v490
    %v500 = vlaneseq
    %v501 = vshrl.u32 %v500, 7
    %v502 = vsub.s32 1, %v501
    %v503 = vrot.slane %v98, %v502
    %v504 = vmul.f32 %v161, %v503
    %v505 = vmul.f32 %v165, %v503
    %v506 = vmul.f32 %v169, %v503
    %v507 = vmul.f32 %v173, %v503
    %v512 = vrot.slane %v504, 1
    %v513 = vrot.slane %v505, 1
    %v514 = vsel %vm335, %v512, %v513
    %v515 = vrot.slane %v506, 1
    %v516 = vrot.slane %v507, 1
    %v517 = vsel %vm335, %v515, %v516
    %v522 = vadd.f32 %v474, %v514
    %v523 = vadd.f32 %v475, %v513
    %v524 = vadd.f32 %v476, %v517
    %v525 = vadd.f32 %v477, %v516
    %v526 = vmul.f32 %v189, %v503
    %v527 = vmul.f32 %v193, %v503
    %v528 = vmul.f32 %v197, %v503
    %v529 = vmul.f32 %v201, %v503
    %v534 = vrot.slane %v526, 1
    %v535 = vrot.slane %v527, 1
    %v536 = vsel %vm335, %v534, %v535
    %v537 = vrot.slane %v528, 1
    %v538 = vrot.slane %v529, 1
    %v539 = vsel %vm335, %v537, %v538
    %v544 = vadd.f32 %v496, %v536
    %v545 = vadd.f32 %v497, %v535
    %v546 = vadd.f32 %v498, %v539
    %v547 = vadd.f32 %v499, %v538
    %v548 = vlaneseq
    %v549 = vshrl.u32 %v548, 7
    %v550 = vsub.s32 2, %v549
    %v551 = vrot.slane %v98, %v550
    %v552 = vmul.f32 %v213, %v551
    %v553 = vmul.f32 %v217, %v551
    %v554 = vmul.f32 %v221, %v551
    %v555 = vmul.f32 %v225, %v551
    %v560 = vrot.slane %v552, 1
    %v561 = vrot.slane %v553, 1
    %v562 = vsel %vm335, %v560, %v561
    %v563 = vrot.slane %v554, 1
    %v564 = vrot.slane %v555, 1
    %v565 = vsel %vm335, %v563, %v564
    %v570 = vadd.f32 %v522, %v562
    %v571 = vadd.f32 %v523, %v561
    %v572 = vadd.f32 %v524, %v565
    %v573 = vadd.f32 %v525, %v564
    %v574 = vmul.f32 %v241, %v551
    %v575 = vmul.f32 %v245, %v551
    %v576 = vmul.f32 %v249, %v551
    %v577 = vmul.f32 %v253, %v551
    %v582 = vrot.slane %v574, 1
    %v583 = vrot.slane %v575, 1
    %v584 = vsel %vm335, %v582, %v583
    %v585 = vrot.slane %v576, 1
    %v586 = vrot.slane %v577, 1
    %v587 = vsel %vm335, %v585, %v586
    %v592 = vadd.f32 %v544, %v584
    %v593 = vadd.f32 %v545, %v583
    %v594 = vadd.f32 %v546, %v587
    %v595 = vadd.f32 %v547, %v586
    %v596 = vlaneseq
    %v597 = vshrl.u32 %v596, 7
    %v598 = vsub.s32 3, %v597
    %v599 = vrot.slane %v98, %v598
    %v600 = vmul.f32 %v265, %v599
    %v601 = vmul.f32 %v269, %v599
    %v602 = vmul.f32 %v273, %v599
    %v603 = vmul.f32 %v277, %v599
    %v608 = vrot.slane %v600, 1
    %v609 = vrot.slane %v601, 1
    %v610 = vsel %vm335, %v608, %v609
    %v611 = vrot.slane %v602, 1
    %v612 = vrot.slane %v603, 1
    %v613 = vsel %vm335, %v611, %v612
    %v618 = vadd.f32 %v570, %v610
    %v619 = vadd.f32 %v571, %v609
    %v620 = vadd.f32 %v572, %v613
    %v621 = vadd.f32 %v573, %v612
    %v622 = vmul.f32 %v293, %v599
    %v623 = vmul.f32 %v297, %v599
    %v624 = vmul.f32 %v301, %v599
    %v625 = vmul.f32 %v305, %v599
    %v630 = vrot.slane %v622, 1
    %v631 = vrot.slane %v623, 1
    %v632 = vsel %vm335, %v630, %v631
    %v633 = vrot.slane %v624, 1
    %v634 = vrot.slane %v625, 1
    %v635 = vsel %vm335, %v633, %v634
    %v640 = vadd.f32 %v592, %v632
    %v641 = vadd.f32 %v593, %v631
    %v642 = vadd.f32 %v594, %v635
    %v643 = vadd.f32 %v595, %v634
    %v644 = vmax.f32 %v618, %v640
    %v645 = vmax.f32 %v619, %v641
    %v646 = vmax.f32 %v620, %v642
    %v647 = vmax.f32 %v621, %v643
    %v648 = vld [vmem:[%s3] sm:$0x1]
    %v650 = vlaneseq
    %v651 = vshrl.u32 %v650, 7
    %v652 = vsub.s32 0, %v651
    %v653 = vrot.slane %v648, %v652
    %v655 = vadd.f32 %v644, %v653
    %v656 = vadd.f32 %v645, %v653
    %v657 = vadd.f32 %v646, %v653
    %v658 = vadd.f32 %v647, %v653
    %v659 = vld [vmem:[#allocation2] sm:$0xff]
    %v660 = vld [vmem:[#allocation2 + $0x8] sm:$0xff]
    %v661 = vld [vmem:[#allocation2 + $0x10] sm:$0xff]
    %v662 = vld [vmem:[#allocation2 + $0x18] sm:$0xff]
    %v663 = vld [vmem:[#allocation2 + $0x20] sm:$0xff]
    %v664 = vld [vmem:[#allocation2 + $0x28] sm:$0xff]
    %v665 = vld [vmem:[#allocation2 + $0x30] sm:$0xff]
    %v666 = vld [vmem:[#allocation2 + $0x38] sm:$0xff]
    %v667 = vld [vmem:[#allocation2 + $0x40] sm:$0xff]
    %v668 = vld [vmem:[#allocation2 + $0x48] sm:$0xff]
    %v669 = vld [vmem:[#allocation2 + $0x50] sm:$0xff]
    %v670 = vld [vmem:[#allocation2 + $0x58] sm:$0xff]
    %v671 = vld [vmem:[#allocation2 + $0x60] sm:$0xff]
    %v672 = vld [vmem:[#allocation2 + $0x68] sm:$0xff]
    %v673 = vld [vmem:[#allocation2 + $0x70] sm:$0xff]
    %v674 = vld [vmem:[#allocation2 + $0x78] sm:$0xff]
    %v675 = vld [vmem:[#allocation2 + $0x80] sm:$0xff]
    %v676 = vld [vmem:[#allocation2 + $0x88] sm:$0xff]
    %v677 = vld [vmem:[#allocation2 + $0x90] sm:$0xff]
    %v678 = vld [vmem:[#allocation2 + $0x98] sm:$0xff]
    %v679 = vld [vmem:[#allocation2 + $0xa0] sm:$0xff]
    %v680 = vld [vmem:[#allocation2 + $0xa8] sm:$0xff]
    %v681 = vld [vmem:[#allocation2 + $0xb0] sm:$0xff]
    %v682 = vld [vmem:[#allocation2 + $0xb8] sm:$0xff]
    %v683 = vld [vmem:[#allocation2 + $0xc0] sm:$0xff]
    %v684 = vld [vmem:[#allocation2 + $0xc8] sm:$0xff]
    %v685 = vld [vmem:[#allocation2 + $0xd0] sm:$0xff]
    %v686 = vld [vmem:[#allocation2 + $0xd8] sm:$0xff]
    %v687 = vld [vmem:[#allocation2 + $0xe0] sm:$0xff]
    %v688 = vld [vmem:[#allocation2 + $0xe8] sm:$0xff]
    %v689 = vld [vmem:[#allocation2 + $0xf0] sm:$0xff]
    %v690 = vld [vmem:[#allocation2 + $0xf8] sm:$0xff]
    %v691 = vld [vmem:[#allocation2 + $0x100] sm:$0xff]
    %v692 = vld [vmem:[#allocation2 + $0x108] sm:$0xff]
    %v693 = vld [vmem:[#allocation2 + $0x110] sm:$0xff]
    %v694 = vld [vmem:[#allocation2 + $0x118] sm:$0xff]
    %v695 = vld [vmem:[#allocation2 + $0x120] sm:$0xff]
    %v696 = vld [vmem:[#allocation2 + $0x128] sm:$0xff]
    %v697 = vld [vmem:[#allocation2 + $0x130] sm:$0xff]
    %v698 = vld [vmem:[#allocation2 + $0x138] sm:$0xff]
    %v699 = vld [vmem:[#allocation2 + $0x140] sm:$0xff]
    %v700 = vld [vmem:[#allocation2 + $0x148] sm:$0xff]
    %v701 = vld [vmem:[#allocation2 + $0x150] sm:$0xff]
    %v702 = vld [vmem:[#allocation2 + $0x158] sm:$0xff]
    %v703 = vld [vmem:[#allocation2 + $0x160] sm:$0xff]
    %v704 = vld [vmem:[#allocation2 + $0x168] sm:$0xff]
    %v705 = vld [vmem:[#allocation2 + $0x170] sm:$0xff]
    %v706 = vld [vmem:[#allocation2 + $0x178] sm:$0xff]
    %v707 = vld [vmem:[#allocation2 + $0x180] sm:$0xff]
    %v708 = vld [vmem:[#allocation2 + $0x188] sm:$0xff]
    %v709 = vld [vmem:[#allocation2 + $0x190] sm:$0xff]
    %v710 = vld [vmem:[#allocation2 + $0x198] sm:$0xff]
    %v711 = vld [vmem:[#allocation2 + $0x1a0] sm:$0xff]
    %v712 = vld [vmem:[#allocation2 + $0x1a8] sm:$0xff]
    %v713 = vld [vmem:[#allocation2 + $0x1b0] sm:$0xff]
    %v714 = vld [vmem:[#allocation2 + $0x1b8] sm:$0xff]
    %v715 = vld [vmem:[#allocation2 + $0x1c0] sm:$0xff]
    %v716 = vld [vmem:[#allocation2 + $0x1c8] sm:$0xff]
    %v717 = vld [vmem:[#allocation2 + $0x1d0] sm:$0xff]
    %v718 = vld [vmem:[#allocation2 + $0x1d8] sm:$0xff]
    %v719 = vld [vmem:[#allocation2 + $0x1e0] sm:$0xff]
    %v720 = vld [vmem:[#allocation2 + $0x1e8] sm:$0xff]
    %v721 = vld [vmem:[#allocation2 + $0x1f0] sm:$0xff]
    %v722 = vld [vmem:[#allocation2 + $0x1f8] sm:$0xff]
    %v723 = vld [vmem:[#allocation2 + $0x200] sm:$0xff]
    %v724 = vld [vmem:[#allocation2 + $0x208] sm:$0xff]
    %v725 = vld [vmem:[#allocation2 + $0x210] sm:$0xff]
    %v726 = vld [vmem:[#allocation2 + $0x218] sm:$0xff]
    %v727 = vld [vmem:[#allocation2 + $0x220] sm:$0xff]
    %v728 = vld [vmem:[#allocation2 + $0x228] sm:$0xff]
    %v729 = vld [vmem:[#allocation2 + $0x230] sm:$0xff]
    %v730 = vld [vmem:[#allocation2 + $0x238] sm:$0xff]
    %v731 = vld [vmem:[#allocation2 + $0x240] sm:$0xff]
    %v732 = vld [vmem:[#allocation2 + $0x248] sm:$0xff]
    %v733 = vld [vmem:[#allocation2 + $0x250] sm:$0xff]
    %v734 = vld [vmem:[#allocation2 + $0x258] sm:$0xff]
    %v735 = vld [vmem:[#allocation2 + $0x260] sm:$0xff]
    %v736 = vld [vmem:[#allocation2 + $0x268] sm:$0xff]
    %v737 = vld [vmem:[#allocation2 + $0x270] sm:$0xff]
    %v738 = vld [vmem:[#allocation2 + $0x278] sm:$0xff]
    %v739 = vld [vmem:[#allocation2 + $0x280] sm:$0xff]
    %v740 = vld [vmem:[#allocation2 + $0x288] sm:$0xff]
    %v741 = vld [vmem:[#allocation2 + $0x290] sm:$0xff]
    %v742 = vld [vmem:[#allocation2 + $0x298] sm:$0xff]
    %v743 = vld [vmem:[#allocation2 + $0x2a0] sm:$0xff]
    %v744 = vld [vmem:[#allocation2 + $0x2a8] sm:$0xff]
    %v745 = vld [vmem:[#allocation2 + $0x2b0] sm:$0xff]
    %v746 = vld [vmem:[#allocation2 + $0x2b8] sm:$0xff]
    %v747 = vld [vmem:[#allocation2 + $0x2c0] sm:$0xff]
    %v748 = vld [vmem:[#allocation2 + $0x2c8] sm:$0xff]
    %v749 = vld [vmem:[#allocation2 + $0x2d0] sm:$0xff]
    %v750 = vld [vmem:[#allocation2 + $0x2d8] sm:$0xff]
    %v751 = vld [vmem:[#allocation2 + $0x2e0] sm:$0xff]
    %v752 = vld [vmem:[#allocation2 + $0x2e8] sm:$0xff]
    %v753 = vld [vmem:[#allocation2 + $0x2f0] sm:$0xff]
    %v754 = vld [vmem:[#allocation2 + $0x2f8] sm:$0xff]
    %v755 = vld [vmem:[#allocation2 + $0x300] sm:$0xff]
    %v756 = vld [vmem:[#allocation2 + $0x308] sm:$0xff]
    %v757 = vld [vmem:[#allocation2 + $0x310] sm:$0xff]
    %v758 = vld [vmem:[#allocation2 + $0x318] sm:$0xff]
    %v759 = vld [vmem:[#allocation2 + $0x320] sm:$0xff]
    %v760 = vld [vmem:[#allocation2 + $0x328] sm:$0xff]
    %v761 = vld [vmem:[#allocation2 + $0x330] sm:$0xff]
    %v762 = vld [vmem:[#allocation2 + $0x338] sm:$0xff]
    %v763 = vld [vmem:[#allocation2 + $0x340] sm:$0xff]
    %v764 = vld [vmem:[#allocation2 + $0x348] sm:$0xff]
    %v765 = vld [vmem:[#allocation2 + $0x350] sm:$0xff]
    %v766 = vld [vmem:[#allocation2 + $0x358] sm:$0xff]
    %v767 = vld [vmem:[#allocation2 + $0x360] sm:$0xff]
    %v768 = vld [vmem:[#allocation2 + $0x368] sm:$0xff]
    %v769 = vld [vmem:[#allocation2 + $0x370] sm:$0xff]
    %v770 = vld [vmem:[#allocation2 + $0x378] sm:$0xff]
    %v771 = vld [vmem:[#allocation2 + $0x380] sm:$0xff]
    %v772 = vld [vmem:[#allocation2 + $0x388] sm:$0xff]
    %v773 = vld [vmem:[#allocation2 + $0x390] sm:$0xff]
    %v774 = vld [vmem:[#allocation2 + $0x398] sm:$0xff]
    %v775 = vld [vmem:[#allocation2 + $0x3a0] sm:$0xff]
    %v776 = vld [vmem:[#allocation2 + $0x3a8] sm:$0xff]
    %v777 = vld [vmem:[#allocation2 + $0x3b0] sm:$0xff]
    %v778 = vld [vmem:[#allocation2 + $0x3b8] sm:$0xff]
    %v779 = vcombine.high %v655, 0.0
    %v781 = vunpack.c.l.s4 1983009808
    %v782 = vunpack.c.0.s8 %v781
    %v783 = vlaneseq
    %v784 = vshrl.u32 %v783, 7
    %v785 = vsub.s32 %v782, %v784
    %v786 = vrot.slane %v655, %v785
    %v788 = vunpack.c.l.s4 1983009808
    %v789 = vunpack.c.0.s8 %v788
    %v790 = vlaneseq
    %v791 = vshrl.u32 %v790, 7
    %v792 = vsub.s32 %v789, %v791
    %v793 = vrot.slane %v779, %v792
    %v794 = vcombine.high %v657, 0.0
    %v796 = vunpack.c.l.s4 1983009808
    %v797 = vunpack.c.0.s8 %v796
    %v798 = vlaneseq
    %v799 = vshrl.u32 %v798, 7
    %v800 = vsub.s32 %v797, %v799
    %v801 = vrot.slane %v657, %v800
    %v803 = vunpack.c.l.s4 1983009808
    %v804 = vunpack.c.0.s8 %v803
    %v805 = vlaneseq
    %v806 = vshrl.u32 %v805, 7
    %v807 = vsub.s32 %v804, %v806
    %v808 = vrot.slane %v794, %v807
    %v809 = vcombine.low %v786, %v801
    %v810 = vcombine.high %v786, %v801
    %v812 = vunpack.c.l.s4 1934713408
    %v813 = vunpack.c.0.s8 %v812
    %v814 = vlaneseq
    %v815 = vshrl.u32 %v814, 7
    %v816 = vsub.s32 %v813, %v815
    %v817 = vrot.slane %v809, %v816
    %v819 = vunpack.c.l.s4 1934713408
    %v820 = vunpack.c.0.s8 %v819
    %v821 = vlaneseq
    %v822 = vshrl.u32 %v821, 7
    %v823 = vsub.s32 %v820, %v822
    %v824 = vrot.slane %v810, %v823
    %v825 = vcombine.low %v793, %v808
    %v826 = vcombine.high %v793, %v808
    %v828 = vunpack.c.l.s4 1934713408
    %v829 = vunpack.c.0.s8 %v828
    %v830 = vlaneseq
    %v831 = vshrl.u32 %v830, 7
    %v832 = vsub.s32 %v829, %v831
    %v833 = vrot.slane %v825, %v832
    %v835 = vunpack.c.l.s4 1934713408
    %v836 = vunpack.c.0.s8 %v835
    %v837 = vlaneseq
    %v838 = vshrl.u32 %v837, 7
    %v839 = vsub.s32 %v836, %v838
    %v840 = vrot.slane %v826, %v839
    %v841 = vcombine.high %v817, 0.0
    %v842 = vcombine.high %v824, 0.0
    %v843 = vcombine.high %v833, 0.0
    %v844 = vcombine.high %v840, 0.0
    %v845 = vcombine.high %v656, 0.0
    %v847 = vunpack.c.l.s4 1983009808
    %v848 = vunpack.c.0.s8 %v847
    %v849 = vlaneseq
    %v850 = vshrl.u32 %v849, 7
    %v851 = vsub.s32 %v848, %v850
    %v852 = vrot.slane %v656, %v851
    %v854 = vunpack.c.l.s4 1983009808
    %v855 = vunpack.c.0.s8 %v854
    %v856 = vlaneseq
    %v857 = vshrl.u32 %v856, 7
    %v858 = vsub.s32 %v855, %v857
    %v859 = vrot.slane %v845, %v858
    %v860 = vcombine.high %v658, 0.0
    %v862 = vunpack.c.l.s4 1983009808
    %v863 = vunpack.c.0.s8 %v862
    %v864 = vlaneseq
    %v865 = vshrl.u32 %v864, 7
    %v866 = vsub.s32 %v863, %v865
    %v867 = vrot.slane %v658, %v866
    %v869 = vunpack.c.l.s4 1983009808
    %v870 = vunpack.c.0.s8 %v869
    %v871 = vlaneseq
    %v872 = vshrl.u32 %v871, 7
    %v873 = vsub.s32 %v870, %v872
    %v874 = vrot.slane %v860, %v873
    %v875 = vcombine.low %v852, %v867
    %v876 = vcombine.high %v852, %v867
    %v878 = vunpack.c.l.s4 1934713408
    %v879 = vunpack.c.0.s8 %v878
    %v880 = vlaneseq
    %v881 = vshrl.u32 %v880, 7
    %v882 = vsub.s32 %v879, %v881
    %v883 = vrot.slane %v875, %v882
    %v885 = vunpack.c.l.s4 1934713408
    %v886 = vunpack.c.0.s8 %v885
    %v887 = vlaneseq
    %v888 = vshrl.u32 %v887, 7
    %v889 = vsub.s32 %v886, %v888
    %v890 = vrot.slane %v876, %v889
    %v891 = vcombine.low %v859, %v874
    %v892 = vcombine.high %v859, %v874
    %v894 = vunpack.c.l.s4 1934713408
    %v895 = vunpack.c.0.s8 %v894
    %v896 = vlaneseq
    %v897 = vshrl.u32 %v896, 7
    %v898 = vsub.s32 %v895, %v897
    %v899 = vrot.slane %v891, %v898
    %v900 = vcombine.high %v883, 0.0
    %v901 = vcombine.high %v890, 0.0
    %v902 = vcombine.high %v899, 0.0
    %v904 = vunpack.c.l.s4 1934713408
    %v905 = vunpack.c.0.s8 %v904
    %v906 = vlaneseq
    %v907 = vshrl.u32 %v906, 7
    %v908 = vsub.s32 %v905, %v907
    %v909 = vrot.slane %v892, %v908
    %vm910 = vcmask 523264
    %v912 = vsel %vm910, %v817, 0
    %914 = vmatprep.subr.mxu0 0.0
    %915 = vmatpush1.msra.mxu0 0.0
    %916 = vmatprep.subr.mxu0 0.0
    %917 = vmatpush1.msra.mxu0 0.0
    %918 = vmatprep.subr.mxu0 0.0
    %919 = vmatpush1.msra.mxu0 0.0
    %920 = vmatprep.subr.mxu0 0.0
    %921 = vmatpush1.msra.mxu0 0.0
    %922 = vmatprep.subr.mxu0 0.0
    %923 = vmatpush1.msra.mxu0 0.0
    %924 = vmatprep.subr.mxu0 0.0
    %925 = vmatpush1.msra.mxu0 0.0
    %926 = vmatprep.subr.mxu0 0.0
    %927 = vmatpush1.msra.mxu0 0.0
    %928 = vmatprep.subr.mxu0 0.0
    %929 = vmatpush1.msra.mxu0 0.0
    %930 = vmatprep.subr.mxu0 0.0
    %931 = vmatpush1.msra.mxu0 %v666
    %932 = vmatprep.subr.mxu0 0.0
    %933 = vmatpush1.msra.mxu0 %v665
    %934 = vmatprep.subr.mxu0 0.0
    %935 = vmatpush1.msra.mxu0 %v664
    %936 = vmatprep.subr.mxu0 0.0
    %937 = vmatpush1.msra.mxu0 %v663
    %938 = vmatprep.subr.mxu0 0.0
    %939 = vmatpush1.msra.mxu0 %v662
    %940 = vmatprep.subr.mxu0 0.0
    %941 = vmatpush1.msra.mxu0 %v661
    %942 = vmatprep.subr.mxu0 0.0
    %943 = vmatpush1.msra.mxu0 %v660
    %944 = vmatprep.subr.mxu0 0.0
    %945 = vmatpush1.msra.mxu0 %v659
    %946 = vmatprep.subr.mxu0 0.0
    %947 = vmatpush2.msra.mxu0 0.0
    %948 = vmatprep.subr.mxu0 0.0
    %949 = vmatpush2.msra.mxu0 0.0
    %950 = vmatprep.subr.mxu0 0.0
    %951 = vmatpush2.msra.mxu0 0.0
    %952 = vmatprep.subr.mxu0 0.0
    %953 = vmatpush2.msra.mxu0 0.0
    %954 = vmatprep.subr.mxu0 0.0
    %955 = vmatpush2.msra.mxu0 0.0
    %956 = vmatprep.subr.mxu0 0.0
    %957 = vmatpush2.msra.mxu0 0.0
    %958 = vmatprep.subr.mxu0 0.0
    %959 = vmatpush2.msra.mxu0 0.0
    %960 = vmatprep.subr.mxu0 0.0
    %961 = vmatpush2.msra.mxu0 0.0
    %962 = vmatprep.subr.mxu0 0.0
    %963 = vmatpush2.msra.mxu0 0.0
    %964 = vmatprep.subr.mxu0 0.0
    %965 = vmatpush2.msra.mxu0 0.0
    %966 = vmatprep.subr.mxu0 0.0
    %967 = vmatpush2.msra.mxu0 0.0
    %968 = vmatprep.subr.mxu0 0.0
    %969 = vmatpush2.msra.mxu0 0.0
    %970 = vmatprep.subr.mxu0 0.0
    %971 = vmatpush2.msra.mxu0 0.0
    %972 = vmatprep.subr.mxu0 0.0
    %973 = vmatpush2.msra.mxu0 0.0
    %974 = vmatprep.subr.mxu0 0.0
    %975 = vmatpush2.msra.mxu0 0.0
    %976 = vmatprep.subr.mxu0 0.0
    %977 = vmatpush2.msra.mxu0 0.0
    %978 = vmatprep.mubr.f32.mxu0 0.0
    %979 = vmatmul.mubr.f32.gmra.mxu0 %v912
    %v980 = vpop.f32.mrf.mxu0
    %v981 = vadd.f32 0.0, %v980
    %v982 = vpop.f32.mrf.mxu0
    %983 = vdwg.mxu0
    %v985 = vsel %vm910, %v841, 0
    %987 = vmatprep.subr.mxu0 0.0
    %988 = vmatpush1.msra.mxu0 0.0
    %989 = vmatprep.subr.mxu0 0.0
    %990 = vmatpush1.msra.mxu0 0.0
    %991 = vmatprep.subr.mxu0 0.0
    %992 = vmatpush1.msra.mxu0 0.0
    %993 = vmatprep.subr.mxu0 0.0
    %994 = vmatpush1.msra.mxu0 0.0
    %995 = vmatprep.subr.mxu0 0.0
    %996 = vmatpush1.msra.mxu0 0.0
    %997 = vmatprep.subr.mxu0 0.0
    %998 = vmatpush1.msra.mxu0 0.0
    %999 = vmatprep.subr.mxu0 0.0
    %1000 = vmatpush1.msra.mxu0 0.0
    %1001 = vmatprep.subr.mxu0 0.0
    %1002 = vmatpush1.msra.mxu0 0.0
    %1003 = vmatprep.subr.mxu0 0.0
    %1004 = vmatpush1.msra.mxu0 %v674
    %1005 = vmatprep.subr.mxu0 0.0
    %1006 = vmatpush1.msra.mxu0 %v673
    %1007 = vmatprep.subr.mxu0 0.0
    %1008 = vmatpush1.msra.mxu0 %v672
    %1009 = vmatprep.subr.mxu0 0.0
    %1010 = vmatpush1.msra.mxu0 %v671
    %1011 = vmatprep.subr.mxu0 0.0
    %1012 = vmatpush1.msra.mxu0 %v670
    %1013 = vmatprep.subr.mxu0 0.0
    %1014 = vmatpush1.msra.mxu0 %v669
    %1015 = vmatprep.subr.mxu0 0.0
    %1016 = vmatpush1.msra.mxu0 %v668
    %1017 = vmatprep.subr.mxu0 0.0
    %1018 = vmatpush1.msra.mxu0 %v667
    %1019 = vmatprep.subr.mxu0 0.0
    %1020 = vmatpush2.msra.mxu0 0.0
    %1021 = vmatprep.subr.mxu0 0.0
    %1022 = vmatpush2.msra.mxu0 0.0
    %1023 = vmatprep.subr.mxu0 0.0
    %1024 = vmatpush2.msra.mxu0 0.0
    %1025 = vmatprep.subr.mxu0 0.0
    %1026 = vmatpush2.msra.mxu0 0.0
    %1027 = vmatprep.subr.mxu0 0.0
    %1028 = vmatpush2.msra.mxu0 0.0
    %1029 = vmatprep.subr.mxu0 0.0
    %1030 = vmatpush2.msra.mxu0 0.0
    %1031 = vmatprep.subr.mxu0 0.0
    %1032 = vmatpush2.msra.mxu0 0.0
    %1033 = vmatprep.subr.mxu0 0.0
    %1034 = vmatpush2.msra.mxu0 0.0
    %1035 = vmatprep.subr.mxu0 0.0
    %1036 = vmatpush2.msra.mxu0 0.0
    %1037 = vmatprep.subr.mxu0 0.0
    %1038 = vmatpush2.msra.mxu0 0.0
    %1039 = vmatprep.subr.mxu0 0.0
    %1040 = vmatpush2.msra.mxu0 0.0
    %1041 = vmatprep.subr.mxu0 0.0
    %1042 = vmatpush2.msra.mxu0 0.0
    %1043 = vmatprep.subr.mxu0 0.0
    %1044 = vmatpush2.msra.mxu0 0.0
    %1045 = vmatprep.subr.mxu0 0.0
    %1046 = vmatpush2.msra.mxu0 0.0
    %1047 = vmatprep.subr.mxu0 0.0
    %1048 = vmatpush2.msra.mxu0 0.0
    %1049 = vmatprep.subr.mxu0 0.0
    %1050 = vmatpush2.msra.mxu0 0.0
    %1051 = vmatprep.mubr.f32.mxu0 0.0
    %1052 = vmatmul.mubr.f32.gmra.mxu0 %v985
    %v1053 = vpop.f32.mrf.mxu0
    %v1054 = vadd.f32 0.0, %v1053
    %v1055 = vpop.f32.mrf.mxu0
    %1056 = vdwg.mxu0
    %v1058 = vsel %vm910, %v824, 0
    %1060 = vmatprep.subr.mxu0 0.0
    %1061 = vmatpush1.msra.mxu0 0.0
    %1062 = vmatprep.subr.mxu0 0.0
    %1063 = vmatpush1.msra.mxu0 0.0
    %1064 = vmatprep.subr.mxu0 0.0
    %1065 = vmatpush1.msra.mxu0 0.0
    %1066 = vmatprep.subr.mxu0 0.0
    %1067 = vmatpush1.msra.mxu0 0.0
    %1068 = vmatprep.subr.mxu0 0.0
    %1069 = vmatpush1.msra.mxu0 0.0
    %1070 = vmatprep.subr.mxu0 0.0
    %1071 = vmatpush1.msra.mxu0 0.0
    %1072 = vmatprep.subr.mxu0 0.0
    %1073 = vmatpush1.msra.mxu0 0.0
    %1074 = vmatprep.subr.mxu0 0.0
    %1075 = vmatpush1.msra.mxu0 0.0
    %1076 = vmatprep.subr.mxu0 0.0
    %1077 = vmatpush1.msra.mxu0 %v682
    %1078 = vmatprep.subr.mxu0 0.0
    %1079 = vmatpush1.msra.mxu0 %v681
    %1080 = vmatprep.subr.mxu0 0.0
    %1081 = vmatpush1.msra.mxu0 %v680
    %1082 = vmatprep.subr.mxu0 0.0
    %1083 = vmatpush1.msra.mxu0 %v679
    %1084 = vmatprep.subr.mxu0 0.0
    %1085 = vmatpush1.msra.mxu0 %v678
    %1086 = vmatprep.subr.mxu0 0.0
    %1087 = vmatpush1.msra.mxu0 %v677
    %1088 = vmatprep.subr.mxu0 0.0
    %1089 = vmatpush1.msra.mxu0 %v676
    %1090 = vmatprep.subr.mxu0 0.0
    %1091 = vmatpush1.msra.mxu0 %v675
    %1092 = vmatprep.subr.mxu0 0.0
    %1093 = vmatpush2.msra.mxu0 0.0
    %1094 = vmatprep.subr.mxu0 0.0
    %1095 = vmatpush2.msra.mxu0 0.0
    %1096 = vmatprep.subr.mxu0 0.0
    %1097 = vmatpush2.msra.mxu0 0.0
    %1098 = vmatprep.subr.mxu0 0.0
    %1099 = vmatpush2.msra.mxu0 0.0
    %1100 = vmatprep.subr.mxu0 0.0
    %1101 = vmatpush2.msra.mxu0 0.0
    %1102 = vmatprep.subr.mxu0 0.0
    %1103 = vmatpush2.msra.mxu0 0.0
    %1104 = vmatprep.subr.mxu0 0.0
    %1105 = vmatpush2.msra.mxu0 0.0
    %1106 = vmatprep.subr.mxu0 0.0
    %1107 = vmatpush2.msra.mxu0 0.0
    %1108 = vmatprep.subr.mxu0 0.0
    %1109 = vmatpush2.msra.mxu0 0.0
    %1110 = vmatprep.subr.mxu0 0.0
    %1111 = vmatpush2.msra.mxu0 0.0
    %1112 = vmatprep.subr.mxu0 0.0
    %1113 = vmatpush2.msra.mxu0 0.0
    %1114 = vmatprep.subr.mxu0 0.0
    %1115 = vmatpush2.msra.mxu0 0.0
    %1116 = vmatprep.subr.mxu0 0.0
    %1117 = vmatpush2.msra.mxu0 0.0
    %1118 = vmatprep.subr.mxu0 0.0
    %1119 = vmatpush2.msra.mxu0 0.0
    %1120 = vmatprep.subr.mxu0 0.0
    %1121 = vmatpush2.msra.mxu0 0.0
    %1122 = vmatprep.subr.mxu0 0.0
    %1123 = vmatpush2.msra.mxu0 0.0
    %1124 = vmatprep.mubr.f32.mxu0 0.0
    %1125 = vmatmul.mubr.f32.gmra.mxu0 %v1058
    %v1126 = vpop.f32.mrf.mxu0
    %v1127 = vadd.f32 0.0, %v1126
    %v1128 = vpop.f32.mrf.mxu0
    %1129 = vdwg.mxu0
    %v1131 = vsel %vm910, %v842, 0
    %1133 = vmatprep.subr.mxu0 0.0
    %1134 = vmatpush1.msra.mxu0 0.0
    %1135 = vmatprep.subr.mxu0 0.0
    %1136 = vmatpush1.msra.mxu0 0.0
    %1137 = vmatprep.subr.mxu0 0.0
    %1138 = vmatpush1.msra.mxu0 0.0
    %1139 = vmatprep.subr.mxu0 0.0
    %1140 = vmatpush1.msra.mxu0 0.0
    %1141 = vmatprep.subr.mxu0 0.0
    %1142 = vmatpush1.msra.mxu0 0.0
    %1143 = vmatprep.subr.mxu0 0.0
    %1144 = vmatpush1.msra.mxu0 0.0
    %1145 = vmatprep.subr.mxu0 0.0
    %1146 = vmatpush1.msra.mxu0 0.0
    %1147 = vmatprep.subr.mxu0 0.0
    %1148 = vmatpush1.msra.mxu0 0.0
    %1149 = vmatprep.subr.mxu0 0.0
    %1150 = vmatpush1.msra.mxu0 %v690
    %1151 = vmatprep.subr.mxu0 0.0
    %1152 = vmatpush1.msra.mxu0 %v689
    %1153 = vmatprep.subr.mxu0 0.0
    %1154 = vmatpush1.msra.mxu0 %v688
    %1155 = vmatprep.subr.mxu0 0.0
    %1156 = vmatpush1.msra.mxu0 %v687
    %1157 = vmatprep.subr.mxu0 0.0
    %1158 = vmatpush1.msra.mxu0 %v686
    %1159 = vmatprep.subr.mxu0 0.0
    %1160 = vmatpush1.msra.mxu0 %v685
    %1161 = vmatprep.subr.mxu0 0.0
    %1162 = vmatpush1.msra.mxu0 %v684
    %1163 = vmatprep.subr.mxu0 0.0
    %1164 = vmatpush1.msra.mxu0 %v683
    %1165 = vmatprep.subr.mxu0 0.0
    %1166 = vmatpush2.msra.mxu0 0.0
    %1167 = vmatprep.subr.mxu0 0.0
    %1168 = vmatpush2.msra.mxu0 0.0
    %1169 = vmatprep.subr.mxu0 0.0
    %1170 = vmatpush2.msra.mxu0 0.0
    %1171 = vmatprep.subr.mxu0 0.0
    %1172 = vmatpush2.msra.mxu0 0.0
    %1173 = vmatprep.subr.mxu0 0.0
    %1174 = vmatpush2.msra.mxu0 0.0
    %1175 = vmatprep.subr.mxu0 0.0
    %1176 = vmatpush2.msra.mxu0 0.0
    %1177 = vmatprep.subr.mxu0 0.0
    %1178 = vmatpush2.msra.mxu0 0.0
    %1179 = vmatprep.subr.mxu0 0.0
    %1180 = vmatpush2.msra.mxu0 0.0
    %1181 = vmatprep.subr.mxu0 0.0
    %1182 = vmatpush2.msra.mxu0 0.0
    %1183 = vmatprep.subr.mxu0 0.0
    %1184 = vmatpush2.msra.mxu0 0.0
    %1185 = vmatprep.subr.mxu0 0.0
    %1186 = vmatpush2.msra.mxu0 0.0
    %1187 = vmatprep.subr.mxu0 0.0
    %1188 = vmatpush2.msra.mxu0 0.0
    %1189 = vmatprep.subr.mxu0 0.0
    %1190 = vmatpush2.msra.mxu0 0.0
    %1191 = vmatprep.subr.mxu0 0.0
    %1192 = vmatpush2.msra.mxu0 0.0
    %1193 = vmatprep.subr.mxu0 0.0
    %1194 = vmatpush2.msra.mxu0 0.0
    %1195 = vmatprep.subr.mxu0 0.0
    %1196 = vmatpush2.msra.mxu0 0.0
    %1197 = vmatprep.mubr.f32.mxu0 0.0
    %1198 = vmatmul.mubr.f32.gmra.mxu0 %v1131
    %v1199 = vpop.f32.mrf.mxu0
    %v1200 = vadd.f32 0.0, %v1199
    %v1201 = vpop.f32.mrf.mxu0
    %1202 = vdwg.mxu0
    %v1204 = vsel %vm910, %v833, 0
    %1206 = vmatprep.subr.mxu0 0.0
    %1207 = vmatpush1.msra.mxu0 0.0
    %1208 = vmatprep.subr.mxu0 0.0
    %1209 = vmatpush1.msra.mxu0 0.0
    %1210 = vmatprep.subr.mxu0 0.0
    %1211 = vmatpush1.msra.mxu0 0.0
    %1212 = vmatprep.subr.mxu0 0.0
    %1213 = vmatpush1.msra.mxu0 0.0
    %1214 = vmatprep.subr.mxu0 0.0
    %1215 = vmatpush1.msra.mxu0 0.0
    %1216 = vmatprep.subr.mxu0 0.0
    %1217 = vmatpush1.msra.mxu0 0.0
    %1218 = vmatprep.subr.mxu0 0.0
    %1219 = vmatpush1.msra.mxu0 0.0
    %1220 = vmatprep.subr.mxu0 0.0
    %1221 = vmatpush1.msra.mxu0 0.0
    %1222 = vmatprep.subr.mxu0 0.0
    %1223 = vmatpush1.msra.mxu0 %v698
    %1224 = vmatprep.subr.mxu0 0.0
    %1225 = vmatpush1.msra.mxu0 %v697
    %1226 = vmatprep.subr.mxu0 0.0
    %1227 = vmatpush1.msra.mxu0 %v696
    %1228 = vmatprep.subr.mxu0 0.0
    %1229 = vmatpush1.msra.mxu0 %v695
    %1230 = vmatprep.subr.mxu0 0.0
    %1231 = vmatpush1.msra.mxu0 %v694
    %1232 = vmatprep.subr.mxu0 0.0
    %1233 = vmatpush1.msra.mxu0 %v693
    %1234 = vmatprep.subr.mxu0 0.0
    %1235 = vmatpush1.msra.mxu0 %v692
    %1236 = vmatprep.subr.mxu0 0.0
    %1237 = vmatpush1.msra.mxu0 %v691
    %1238 = vmatprep.subr.mxu0 0.0
    %1239 = vmatpush2.msra.mxu0 0.0
    %1240 = vmatprep.subr.mxu0 0.0
    %1241 = vmatpush2.msra.mxu0 0.0
    %1242 = vmatprep.subr.mxu0 0.0
    %1243 = vmatpush2.msra.mxu0 0.0
    %1244 = vmatprep.subr.mxu0 0.0
    %1245 = vmatpush2.msra.mxu0 0.0
    %1246 = vmatprep.subr.mxu0 0.0
    %1247 = vmatpush2.msra.mxu0 0.0
    %1248 = vmatprep.subr.mxu0 0.0
    %1249 = vmatpush2.msra.mxu0 0.0
    %1250 = vmatprep.subr.mxu0 0.0
    %1251 = vmatpush2.msra.mxu0 0.0
    %1252 = vmatprep.subr.mxu0 0.0
    %1253 = vmatpush2.msra.mxu0 0.0
    %1254 = vmatprep.subr.mxu0 0.0
    %1255 = vmatpush2.msra.mxu0 0.0
    %1256 = vmatprep.subr.mxu0 0.0
    %1257 = vmatpush2.msra.mxu0 0.0
    %1258 = vmatprep.subr.mxu0 0.0
    %1259 = vmatpush2.msra.mxu0 0.0
    %1260 = vmatprep.subr.mxu0 0.0
    %1261 = vmatpush2.msra.mxu0 0.0
    %1262 = vmatprep.subr.mxu0 0.0
    %1263 = vmatpush2.msra.mxu0 0.0
    %1264 = vmatprep.subr.mxu0 0.0
    %1265 = vmatpush2.msra.mxu0 0.0
    %1266 = vmatprep.subr.mxu0 0.0
    %1267 = vmatpush2.msra.mxu0 0.0
    %1268 = vmatprep.subr.mxu0 0.0
    %1269 = vmatpush2.msra.mxu0 0.0
    %1270 = vmatprep.mubr.f32.mxu0 0.0
    %1271 = vmatmul.mubr.f32.gmra.mxu0 %v1204
    %v1272 = vpop.f32.mrf.mxu0
    %v1273 = vadd.f32 0.0, %v1272
    %v1274 = vpop.f32.mrf.mxu0
    %1275 = vdwg.mxu0
    %v1277 = vsel %vm910, %v843, 0
    %1279 = vmatprep.subr.mxu0 0.0
    %1280 = vmatpush1.msra.mxu0 0.0
    %1281 = vmatprep.subr.mxu0 0.0
    %1282 = vmatpush1.msra.mxu0 0.0
    %1283 = vmatprep.subr.mxu0 0.0
    %1284 = vmatpush1.msra.mxu0 0.0
    %1285 = vmatprep.subr.mxu0 0.0
    %1286 = vmatpush1.msra.mxu0 0.0
    %1287 = vmatprep.subr.mxu0 0.0
    %1288 = vmatpush1.msra.mxu0 0.0
    %1289 = vmatprep.subr.mxu0 0.0
    %1290 = vmatpush1.msra.mxu0 0.0
    %1291 = vmatprep.subr.mxu0 0.0
    %1292 = vmatpush1.msra.mxu0 0.0
    %1293 = vmatprep.subr.mxu0 0.0
    %1294 = vmatpush1.msra.mxu0 0.0
    %1295 = vmatprep.subr.mxu0 0.0
    %1296 = vmatpush1.msra.mxu0 %v706
    %1297 = vmatprep.subr.mxu0 0.0
    %1298 = vmatpush1.msra.mxu0 %v705
    %1299 = vmatprep.subr.mxu0 0.0
    %1300 = vmatpush1.msra.mxu0 %v704
    %1301 = vmatprep.subr.mxu0 0.0
    %1302 = vmatpush1.msra.mxu0 %v703
    %1303 = vmatprep.subr.mxu0 0.0
    %1304 = vmatpush1.msra.mxu0 %v702
    %1305 = vmatprep.subr.mxu0 0.0
    %1306 = vmatpush1.msra.mxu0 %v701
    %1307 = vmatprep.subr.mxu0 0.0
    %1308 = vmatpush1.msra.mxu0 %v700
    %1309 = vmatprep.subr.mxu0 0.0
    %1310 = vmatpush1.msra.mxu0 %v699
    %1311 = vmatprep.subr.mxu0 0.0
    %1312 = vmatpush2.msra.mxu0 0.0
    %1313 = vmatprep.subr.mxu0 0.0
    %1314 = vmatpush2.msra.mxu0 0.0
    %1315 = vmatprep.subr.mxu0 0.0
    %1316 = vmatpush2.msra.mxu0 0.0
    %1317 = vmatprep.subr.mxu0 0.0
    %1318 = vmatpush2.msra.mxu0 0.0
    %1319 = vmatprep.subr.mxu0 0.0
    %1320 = vmatpush2.msra.mxu0 0.0
    %1321 = vmatprep.subr.mxu0 0.0
    %1322 = vmatpush2.msra.mxu0 0.0
    %1323 = vmatprep.subr.mxu0 0.0
    %1324 = vmatpush2.msra.mxu0 0.0
    %1325 = vmatprep.subr.mxu0 0.0
    %1326 = vmatpush2.msra.mxu0 0.0
    %1327 = vmatprep.subr.mxu0 0.0
    %1328 = vmatpush2.msra.mxu0 0.0
    %1329 = vmatprep.subr.mxu0 0.0
    %1330 = vmatpush2.msra.mxu0 0.0
    %1331 = vmatprep.subr.mxu0 0.0
    %1332 = vmatpush2.msra.mxu0 0.0
    %1333 = vmatprep.subr.mxu0 0.0
    %1334 = vmatpush2.msra.mxu0 0.0
    %1335 = vmatprep.subr.mxu0 0.0
    %1336 = vmatpush2.msra.mxu0 0.0
    %1337 = vmatprep.subr.mxu0 0.0
    %1338 = vmatpush2.msra.mxu0 0.0
    %1339 = vmatprep.subr.mxu0 0.0
    %1340 = vmatpush2.msra.mxu0 0.0
    %1341 = vmatprep.subr.mxu0 0.0
    %1342 = vmatpush2.msra.mxu0 0.0
    %1343 = vmatprep.mubr.f32.mxu0 0.0
    %1344 = vmatmul.mubr.f32.gmra.mxu0 %v1277
    %v1345 = vpop.f32.mrf.mxu0
    %v1346 = vadd.f32 0.0, %v1345
    %v1347 = vpop.f32.mrf.mxu0
    %1348 = vdwg.mxu0
    %v1350 = vsel %vm910, %v840, 0
    %1352 = vmatprep.subr.mxu0 0.0
    %1353 = vmatpush1.msra.mxu0 0.0
    %1354 = vmatprep.subr.mxu0 0.0
    %1355 = vmatpush1.msra.mxu0 0.0
    %1356 = vmatprep.subr.mxu0 0.0
    %1357 = vmatpush1.msra.mxu0 0.0
    %1358 = vmatprep.subr.mxu0 0.0
    %1359 = vmatpush1.msra.mxu0 0.0
    %1360 = vmatprep.subr.mxu0 0.0
    %1361 = vmatpush1.msra.mxu0 0.0
    %1362 = vmatprep.subr.mxu0 0.0
    %1363 = vmatpush1.msra.mxu0 0.0
    %1364 = vmatprep.subr.mxu0 0.0
    %1365 = vmatpush1.msra.mxu0 0.0
    %1366 = vmatprep.subr.mxu0 0.0
    %1367 = vmatpush1.msra.mxu0 0.0
    %1368 = vmatprep.subr.mxu0 0.0
    %1369 = vmatpush1.msra.mxu0 %v714
    %1370 = vmatprep.subr.mxu0 0.0
    %1371 = vmatpush1.msra.mxu0 %v713
    %1372 = vmatprep.subr.mxu0 0.0
    %1373 = vmatpush1.msra.mxu0 %v712
    %1374 = vmatprep.subr.mxu0 0.0
    %1375 = vmatpush1.msra.mxu0 %v711
    %1376 = vmatprep.subr.mxu0 0.0
    %1377 = vmatpush1.msra.mxu0 %v710
    %1378 = vmatprep.subr.mxu0 0.0
    %1379 = vmatpush1.msra.mxu0 %v709
    %1380 = vmatprep.subr.mxu0 0.0
    %1381 = vmatpush1.msra.mxu0 %v708
    %1382 = vmatprep.subr.mxu0 0.0
    %1383 = vmatpush1.msra.mxu0 %v707
    %1384 = vmatprep.subr.mxu0 0.0
    %1385 = vmatpush2.msra.mxu0 0.0
    %1386 = vmatprep.subr.mxu0 0.0
    %1387 = vmatpush2.msra.mxu0 0.0
    %1388 = vmatprep.subr.mxu0 0.0
    %1389 = vmatpush2.msra.mxu0 0.0
    %1390 = vmatprep.subr.mxu0 0.0
    %1391 = vmatpush2.msra.mxu0 0.0
    %1392 = vmatprep.subr.mxu0 0.0
    %1393 = vmatpush2.msra.mxu0 0.0
    %1394 = vmatprep.subr.mxu0 0.0
    %1395 = vmatpush2.msra.mxu0 0.0
    %1396 = vmatprep.subr.mxu0 0.0
    %1397 = vmatpush2.msra.mxu0 0.0
    %1398 = vmatprep.subr.mxu0 0.0
    %1399 = vmatpush2.msra.mxu0 0.0
    %1400 = vmatprep.subr.mxu0 0.0
    %1401 = vmatpush2.msra.mxu0 0.0
    %1402 = vmatprep.subr.mxu0 0.0
    %1403 = vmatpush2.msra.mxu0 0.0
    %1404 = vmatprep.subr.mxu0 0.0
    %1405 = vmatpush2.msra.mxu0 0.0
    %1406 = vmatprep.subr.mxu0 0.0
    %1407 = vmatpush2.msra.mxu0 0.0
    %1408 = vmatprep.subr.mxu0 0.0
    %1409 = vmatpush2.msra.mxu0 0.0
    %1410 = vmatprep.subr.mxu0 0.0
    %1411 = vmatpush2.msra.mxu0 0.0
    %1412 = vmatprep.subr.mxu0 0.0
    %1413 = vmatpush2.msra.mxu0 0.0
    %1414 = vmatprep.subr.mxu0 0.0
    %1415 = vmatpush2.msra.mxu0 0.0
    %1416 = vmatprep.mubr.f32.mxu0 0.0
    %1417 = vmatmul.mubr.f32.gmra.mxu0 %v1350
    %v1418 = vpop.f32.mrf.mxu0
    %v1419 = vadd.f32 0.0, %v1418
    %v1420 = vpop.f32.mrf.mxu0
    %1421 = vdwg.mxu0
    %v1423 = vsel %vm910, %v844, 0
    %1425 = vmatprep.subr.mxu0 0.0
    %1426 = vmatpush1.msra.mxu0 0.0
    %1427 = vmatprep.subr.mxu0 0.0
    %1428 = vmatpush1.msra.mxu0 0.0
    %1429 = vmatprep.subr.mxu0 0.0
    %1430 = vmatpush1.msra.mxu0 0.0
    %1431 = vmatprep.subr.mxu0 0.0
    %1432 = vmatpush1.msra.mxu0 0.0
    %1433 = vmatprep.subr.mxu0 0.0
    %1434 = vmatpush1.msra.mxu0 0.0
    %1435 = vmatprep.subr.mxu0 0.0
    %1436 = vmatpush1.msra.mxu0 0.0
    %1437 = vmatprep.subr.mxu0 0.0
    %1438 = vmatpush1.msra.mxu0 0.0
    %1439 = vmatprep.subr.mxu0 0.0
    %1440 = vmatpush1.msra.mxu0 0.0
    %1441 = vmatprep.subr.mxu0 0.0
    %1442 = vmatpush1.msra.mxu0 %v722
    %1443 = vmatprep.subr.mxu0 0.0
    %1444 = vmatpush1.msra.mxu0 %v721
    %1445 = vmatprep.subr.mxu0 0.0
    %1446 = vmatpush1.msra.mxu0 %v720
    %1447 = vmatprep.subr.mxu0 0.0
    %1448 = vmatpush1.msra.mxu0 %v719
    %1449 = vmatprep.subr.mxu0 0.0
    %1450 = vmatpush1.msra.mxu0 %v718
    %1451 = vmatprep.subr.mxu0 0.0
    %1452 = vmatpush1.msra.mxu0 %v717
    %1453 = vmatprep.subr.mxu0 0.0
    %1454 = vmatpush1.msra.mxu0 %v716
    %1455 = vmatprep.subr.mxu0 0.0
    %1456 = vmatpush1.msra.mxu0 %v715
    %1457 = vmatprep.subr.mxu0 0.0
    %1458 = vmatpush2.msra.mxu0 0.0
    %1459 = vmatprep.subr.mxu0 0.0
    %1460 = vmatpush2.msra.mxu0 0.0
    %1461 = vmatprep.subr.mxu0 0.0
    %1462 = vmatpush2.msra.mxu0 0.0
    %1463 = vmatprep.subr.mxu0 0.0
    %1464 = vmatpush2.msra.mxu0 0.0
    %1465 = vmatprep.subr.mxu0 0.0
    %1466 = vmatpush2.msra.mxu0 0.0
    %1467 = vmatprep.subr.mxu0 0.0
    %1468 = vmatpush2.msra.mxu0 0.0
    %1469 = vmatprep.subr.mxu0 0.0
    %1470 = vmatpush2.msra.mxu0 0.0
    %1471 = vmatprep.subr.mxu0 0.0
    %1472 = vmatpush2.msra.mxu0 0.0
    %1473 = vmatprep.subr.mxu0 0.0
    %1474 = vmatpush2.msra.mxu0 0.0
    %1475 = vmatprep.subr.mxu0 0.0
    %1476 = vmatpush2.msra.mxu0 0.0
    %1477 = vmatprep.subr.mxu0 0.0
    %1478 = vmatpush2.msra.mxu0 0.0
    %1479 = vmatprep.subr.mxu0 0.0
    %1480 = vmatpush2.msra.mxu0 0.0
    %1481 = vmatprep.subr.mxu0 0.0
    %1482 = vmatpush2.msra.mxu0 0.0
    %1483 = vmatprep.subr.mxu0 0.0
    %1484 = vmatpush2.msra.mxu0 0.0
    %1485 = vmatprep.subr.mxu0 0.0
    %1486 = vmatpush2.msra.mxu0 0.0
    %1487 = vmatprep.subr.mxu0 0.0
    %1488 = vmatpush2.msra.mxu0 0.0
    %1489 = vmatprep.mubr.f32.mxu0 0.0
    %1490 = vmatmul.mubr.f32.gmra.mxu0 %v1423
    %v1491 = vpop.f32.mrf.mxu0
    %v1492 = vadd.f32 0.0, %v1491
    %v1493 = vpop.f32.mrf.mxu0
    %1494 = vdwg.mxu0
    %v1496 = vsel %vm910, %v883, 0
    %1498 = vmatprep.subr.mxu0 0.0
    %1499 = vmatpush1.msra.mxu0 0.0
    %1500 = vmatprep.subr.mxu0 0.0
    %1501 = vmatpush1.msra.mxu0 0.0
    %1502 = vmatprep.subr.mxu0 0.0
    %1503 = vmatpush1.msra.mxu0 0.0
    %1504 = vmatprep.subr.mxu0 0.0
    %1505 = vmatpush1.msra.mxu0 0.0
    %1506 = vmatprep.subr.mxu0 0.0
    %1507 = vmatpush1.msra.mxu0 0.0
    %1508 = vmatprep.subr.mxu0 0.0
    %1509 = vmatpush1.msra.mxu0 0.0
    %1510 = vmatprep.subr.mxu0 0.0
    %1511 = vmatpush1.msra.mxu0 0.0
    %1512 = vmatprep.subr.mxu0 0.0
    %1513 = vmatpush1.msra.mxu0 0.0
    %1514 = vmatprep.subr.mxu0 0.0
    %1515 = vmatpush1.msra.mxu0 %v730
    %1516 = vmatprep.subr.mxu0 0.0
    %1517 = vmatpush1.msra.mxu0 %v729
    %1518 = vmatprep.subr.mxu0 0.0
    %1519 = vmatpush1.msra.mxu0 %v728
    %1520 = vmatprep.subr.mxu0 0.0
    %1521 = vmatpush1.msra.mxu0 %v727
    %1522 = vmatprep.subr.mxu0 0.0
    %1523 = vmatpush1.msra.mxu0 %v726
    %1524 = vmatprep.subr.mxu0 0.0
    %1525 = vmatpush1.msra.mxu0 %v725
    %1526 = vmatprep.subr.mxu0 0.0
    %1527 = vmatpush1.msra.mxu0 %v724
    %1528 = vmatprep.subr.mxu0 0.0
    %1529 = vmatpush1.msra.mxu0 %v723
    %1530 = vmatprep.subr.mxu0 0.0
    %1531 = vmatpush2.msra.mxu0 0.0
    %1532 = vmatprep.subr.mxu0 0.0
    %1533 = vmatpush2.msra.mxu0 0.0
    %1534 = vmatprep.subr.mxu0 0.0
    %1535 = vmatpush2.msra.mxu0 0.0
    %1536 = vmatprep.subr.mxu0 0.0
    %1537 = vmatpush2.msra.mxu0 0.0
    %1538 = vmatprep.subr.mxu0 0.0
    %1539 = vmatpush2.msra.mxu0 0.0
    %1540 = vmatprep.subr.mxu0 0.0
    %1541 = vmatpush2.msra.mxu0 0.0
    %1542 = vmatprep.subr.mxu0 0.0
    %1543 = vmatpush2.msra.mxu0 0.0
    %1544 = vmatprep.subr.mxu0 0.0
    %1545 = vmatpush2.msra.mxu0 0.0
    %1546 = vmatprep.subr.mxu0 0.0
    %1547 = vmatpush2.msra.mxu0 0.0
    %1548 = vmatprep.subr.mxu0 0.0
    %1549 = vmatpush2.msra.mxu0 0.0
    %1550 = vmatprep.subr.mxu0 0.0
    %1551 = vmatpush2.msra.mxu0 0.0
    %1552 = vmatprep.subr.mxu0 0.0
    %1553 = vmatpush2.msra.mxu0 0.0
    %1554 = vmatprep.subr.mxu0 0.0
    %1555 = vmatpush2.msra.mxu0 0.0
    %1556 = vmatprep.subr.mxu0 0.0
    %1557 = vmatpush2.msra.mxu0 0.0
    %1558 = vmatprep.subr.mxu0 0.0
    %1559 = vmatpush2.msra.mxu0 0.0
    %1560 = vmatprep.subr.mxu0 0.0
    %1561 = vmatpush2.msra.mxu0 0.0
    %1562 = vmatprep.mubr.f32.mxu0 0.0
    %1563 = vmatmul.mubr.f32.gmra.mxu0 %v1496
    %v1564 = vpop.f32.mrf.mxu0
    %v1565 = vadd.f32 0.0, %v1564
    %v1566 = vpop.f32.mrf.mxu0
    %1567 = vdwg.mxu0
    %v1569 = vsel %vm910, %v900, 0
    %1571 = vmatprep.subr.mxu0 0.0
    %1572 = vmatpush1.msra.mxu0 0.0
    %1573 = vmatprep.subr.mxu0 0.0
    %1574 = vmatpush1.msra.mxu0 0.0
    %1575 = vmatprep.subr.mxu0 0.0
    %1576 = vmatpush1.msra.mxu0 0.0
    %1577 = vmatprep.subr.mxu0 0.0
    %1578 = vmatpush1.msra.mxu0 0.0
    %1579 = vmatprep.subr.mxu0 0.0
    %1580 = vmatpush1.msra.mxu0 0.0
    %1581 = vmatprep.subr.mxu0 0.0
    %1582 = vmatpush1.msra.mxu0 0.0
    %1583 = vmatprep.subr.mxu0 0.0
    %1584 = vmatpush1.msra.mxu0 0.0
    %1585 = vmatprep.subr.mxu0 0.0
    %1586 = vmatpush1.msra.mxu0 0.0
    %1587 = vmatprep.subr.mxu0 0.0
    %1588 = vmatpush1.msra.mxu0 %v738
    %1589 = vmatprep.subr.mxu0 0.0
    %1590 = vmatpush1.msra.mxu0 %v737
    %1591 = vmatprep.subr.mxu0 0.0
    %1592 = vmatpush1.msra.mxu0 %v736
    %1593 = vmatprep.subr.mxu0 0.0
    %1594 = vmatpush1.msra.mxu0 %v735
    %1595 = vmatprep.subr.mxu0 0.0
    %1596 = vmatpush1.msra.mxu0 %v734
    %1597 = vmatprep.subr.mxu0 0.0
    %1598 = vmatpush1.msra.mxu0 %v733
    %1599 = vmatprep.subr.mxu0 0.0
    %1600 = vmatpush1.msra.mxu0 %v732
    %1601 = vmatprep.subr.mxu0 0.0
    %1602 = vmatpush1.msra.mxu0 %v731
    %1603 = vmatprep.subr.mxu0 0.0
    %1604 = vmatpush2.msra.mxu0 0.0
    %1605 = vmatprep.subr.mxu0 0.0
    %1606 = vmatpush2.msra.mxu0 0.0
    %1607 = vmatprep.subr.mxu0 0.0
    %1608 = vmatpush2.msra.mxu0 0.0
    %1609 = vmatprep.subr.mxu0 0.0
    %1610 = vmatpush2.msra.mxu0 0.0
    %1611 = vmatprep.subr.mxu0 0.0
    %1612 = vmatpush2.msra.mxu0 0.0
    %1613 = vmatprep.subr.mxu0 0.0
    %1614 = vmatpush2.msra.mxu0 0.0
    %1615 = vmatprep.subr.mxu0 0.0
    %1616 = vmatpush2.msra.mxu0 0.0
    %1617 = vmatprep.subr.mxu0 0.0
    %1618 = vmatpush2.msra.mxu0 0.0
    %1619 = vmatprep.subr.mxu0 0.0
    %1620 = vmatpush2.msra.mxu0 0.0
    %1621 = vmatprep.subr.mxu0 0.0
    %1622 = vmatpush2.msra.mxu0 0.0
    %1623 = vmatprep.subr.mxu0 0.0
    %1624 = vmatpush2.msra.mxu0 0.0
    %1625 = vmatprep.subr.mxu0 0.0
    %1626 = vmatpush2.msra.mxu0 0.0
    %1627 = vmatprep.subr.mxu0 0.0
    %1628 = vmatpush2.msra.mxu0 0.0
    %1629 = vmatprep.subr.mxu0 0.0
    %1630 = vmatpush2.msra.mxu0 0.0
    %1631 = vmatprep.subr.mxu0 0.0
    %1632 = vmatpush2.msra.mxu0 0.0
    %1633 = vmatprep.subr.mxu0 0.0
    %1634 = vmatpush2.msra.mxu0 0.0
    %1635 = vmatprep.mubr.f32.mxu0 0.0
    %1636 = vmatmul.mubr.f32.gmra.mxu0 %v1569
    %v1637 = vpop.f32.mrf.mxu0
    %v1638 = vadd.f32 0.0, %v1637
    %v1639 = vpop.f32.mrf.mxu0
    %1640 = vdwg.mxu0
    %v1642 = vsel %vm910, %v890, 0
    %1644 = vmatprep.subr.mxu0 0.0
    %1645 = vmatpush1.msra.mxu0 0.0
    %1646 = vmatprep.subr.mxu0 0.0
    %1647 = vmatpush1.msra.mxu0 0.0
    %1648 = vmatprep.subr.mxu0 0.0
    %1649 = vmatpush1.msra.mxu0 0.0
    %1650 = vmatprep.subr.mxu0 0.0
    %1651 = vmatpush1.msra.mxu0 0.0
    %1652 = vmatprep.subr.mxu0 0.0
    %1653 = vmatpush1.msra.mxu0 0.0
    %1654 = vmatprep.subr.mxu0 0.0
    %1655 = vmatpush1.msra.mxu0 0.0
    %1656 = vmatprep.subr.mxu0 0.0
    %1657 = vmatpush1.msra.mxu0 0.0
    %1658 = vmatprep.subr.mxu0 0.0
    %1659 = vmatpush1.msra.mxu0 0.0
    %1660 = vmatprep.subr.mxu0 0.0
    %1661 = vmatpush1.msra.mxu0 %v746
    %1662 = vmatprep.subr.mxu0 0.0
    %1663 = vmatpush1.msra.mxu0 %v745
    %1664 = vmatprep.subr.mxu0 0.0
    %1665 = vmatpush1.msra.mxu0 %v744
    %1666 = vmatprep.subr.mxu0 0.0
    %1667 = vmatpush1.msra.mxu0 %v743
    %1668 = vmatprep.subr.mxu0 0.0
    %1669 = vmatpush1.msra.mxu0 %v742
    %1670 = vmatprep.subr.mxu0 0.0
    %1671 = vmatpush1.msra.mxu0 %v741
    %1672 = vmatprep.subr.mxu0 0.0
    %1673 = vmatpush1.msra.mxu0 %v740
    %1674 = vmatprep.subr.mxu0 0.0
    %1675 = vmatpush1.msra.mxu0 %v739
    %1676 = vmatprep.subr.mxu0 0.0
    %1677 = vmatpush2.msra.mxu0 0.0
    %1678 = vmatprep.subr.mxu0 0.0
    %1679 = vmatpush2.msra.mxu0 0.0
    %1680 = vmatprep.subr.mxu0 0.0
    %1681 = vmatpush2.msra.mxu0 0.0
    %1682 = vmatprep.subr.mxu0 0.0
    %1683 = vmatpush2.msra.mxu0 0.0
    %1684 = vmatprep.subr.mxu0 0.0
    %1685 = vmatpush2.msra.mxu0 0.0
    %1686 = vmatprep.subr.mxu0 0.0
    %1687 = vmatpush2.msra.mxu0 0.0
    %1688 = vmatprep.subr.mxu0 0.0
    %1689 = vmatpush2.msra.mxu0 0.0
    %1690 = vmatprep.subr.mxu0 0.0
    %1691 = vmatpush2.msra.mxu0 0.0
    %1692 = vmatprep.subr.mxu0 0.0
    %1693 = vmatpush2.msra.mxu0 0.0
    %1694 = vmatprep.subr.mxu0 0.0
    %1695 = vmatpush2.msra.mxu0 0.0
    %1696 = vmatprep.subr.mxu0 0.0
    %1697 = vmatpush2.msra.mxu0 0.0
    %1698 = vmatprep.subr.mxu0 0.0
    %1699 = vmatpush2.msra.mxu0 0.0
    %1700 = vmatprep.subr.mxu0 0.0
    %1701 = vmatpush2.msra.mxu0 0.0
    %1702 = vmatprep.subr.mxu0 0.0
    %1703 = vmatpush2.msra.mxu0 0.0
    %1704 = vmatprep.subr.mxu0 0.0
    %1705 = vmatpush2.msra.mxu0 0.0
    %1706 = vmatprep.subr.mxu0 0.0
    %1707 = vmatpush2.msra.mxu0 0.0
    %1708 = vmatprep.mubr.f32.mxu0 0.0
    %1709 = vmatmul.mubr.f32.gmra.mxu0 %v1642
    %v1710 = vpop.f32.mrf.mxu0
    %v1711 = vadd.f32 0.0, %v1710
    %v1712 = vpop.f32.mrf.mxu0
    %1713 = vdwg.mxu0
    %v1715 = vsel %vm910, %v901, 0
    %1717 = vmatprep.subr.mxu0 0.0
    %1718 = vmatpush1.msra.mxu0 0.0
    %1719 = vmatprep.subr.mxu0 0.0
    %1720 = vmatpush1.msra.mxu0 0.0
    %1721 = vmatprep.subr.mxu0 0.0
    %1722 = vmatpush1.msra.mxu0 0.0
    %1723 = vmatprep.subr.mxu0 0.0
    %1724 = vmatpush1.msra.mxu0 0.0
    %1725 = vmatprep.subr.mxu0 0.0
    %1726 = vmatpush1.msra.mxu0 0.0
    %1727 = vmatprep.subr.mxu0 0.0
    %1728 = vmatpush1.msra.mxu0 0.0
    %1729 = vmatprep.subr.mxu0 0.0
    %1730 = vmatpush1.msra.mxu0 0.0
    %1731 = vmatprep.subr.mxu0 0.0
    %1732 = vmatpush1.msra.mxu0 0.0
    %1733 = vmatprep.subr.mxu0 0.0
    %1734 = vmatpush1.msra.mxu0 %v754
    %1735 = vmatprep.subr.mxu0 0.0
    %1736 = vmatpush1.msra.mxu0 %v753
    %1737 = vmatprep.subr.mxu0 0.0
    %1738 = vmatpush1.msra.mxu0 %v752
    %1739 = vmatprep.subr.mxu0 0.0
    %1740 = vmatpush1.msra.mxu0 %v751
    %1741 = vmatprep.subr.mxu0 0.0
    %1742 = vmatpush1.msra.mxu0 %v750
    %1743 = vmatprep.subr.mxu0 0.0
    %1744 = vmatpush1.msra.mxu0 %v749
    %1745 = vmatprep.subr.mxu0 0.0
    %1746 = vmatpush1.msra.mxu0 %v748
    %1747 = vmatprep.subr.mxu0 0.0
    %1748 = vmatpush1.msra.mxu0 %v747
    %1749 = vmatprep.subr.mxu0 0.0
    %1750 = vmatpush2.msra.mxu0 0.0
    %1751 = vmatprep.subr.mxu0 0.0
    %1752 = vmatpush2.msra.mxu0 0.0
    %1753 = vmatprep.subr.mxu0 0.0
    %1754 = vmatpush2.msra.mxu0 0.0
    %1755 = vmatprep.subr.mxu0 0.0
    %1756 = vmatpush2.msra.mxu0 0.0
    %1757 = vmatprep.subr.mxu0 0.0
    %1758 = vmatpush2.msra.mxu0 0.0
    %1759 = vmatprep.subr.mxu0 0.0
    %1760 = vmatpush2.msra.mxu0 0.0
    %1761 = vmatprep.subr.mxu0 0.0
    %1762 = vmatpush2.msra.mxu0 0.0
    %1763 = vmatprep.subr.mxu0 0.0
    %1764 = vmatpush2.msra.mxu0 0.0
    %1765 = vmatprep.subr.mxu0 0.0
    %1766 = vmatpush2.msra.mxu0 0.0
    %1767 = vmatprep.subr.mxu0 0.0
    %1768 = vmatpush2.msra.mxu0 0.0
    %1769 = vmatprep.subr.mxu0 0.0
    %1770 = vmatpush2.msra.mxu0 0.0
    %1771 = vmatprep.subr.mxu0 0.0
    %1772 = vmatpush2.msra.mxu0 0.0
    %1773 = vmatprep.subr.mxu0 0.0
    %1774 = vmatpush2.msra.mxu0 0.0
    %1775 = vmatprep.subr.mxu0 0.0
    %1776 = vmatpush2.msra.mxu0 0.0
    %1777 = vmatprep.subr.mxu0 0.0
    %1778 = vmatpush2.msra.mxu0 0.0
    %1779 = vmatprep.subr.mxu0 0.0
    %1780 = vmatpush2.msra.mxu0 0.0
    %1781 = vmatprep.mubr.f32.mxu0 0.0
    %1782 = vmatmul.mubr.f32.gmra.mxu0 %v1715
    %v1783 = vpop.f32.mrf.mxu0
    %v1784 = vadd.f32 0.0, %v1783
    %v1785 = vpop.f32.mrf.mxu0
    %1786 = vdwg.mxu0
    %v1788 = vsel %vm910, %v899, 0
    %1790 = vmatprep.subr.mxu0 0.0
    %1791 = vmatpush1.msra.mxu0 0.0
    %1792 = vmatprep.subr.mxu0 0.0
    %1793 = vmatpush1.msra.mxu0 0.0
    %1794 = vmatprep.subr.mxu0 0.0
    %1795 = vmatpush1.msra.mxu0 0.0
    %1796 = vmatprep.subr.mxu0 0.0
    %1797 = vmatpush1.msra.mxu0 0.0
    %1798 = vmatprep.subr.mxu0 0.0
    %1799 = vmatpush1.msra.mxu0 0.0
    %1800 = vmatprep.subr.mxu0 0.0
    %1801 = vmatpush1.msra.mxu0 0.0
    %1802 = vmatprep.subr.mxu0 0.0
    %1803 = vmatpush1.msra.mxu0 0.0
    %1804 = vmatprep.subr.mxu0 0.0
    %1805 = vmatpush1.msra.mxu0 0.0
    %1806 = vmatprep.subr.mxu0 0.0
    %1807 = vmatpush1.msra.mxu0 %v762
    %1808 = vmatprep.subr.mxu0 0.0
    %1809 = vmatpush1.msra.mxu0 %v761
    %1810 = vmatprep.subr.mxu0 0.0
    %1811 = vmatpush1.msra.mxu0 %v760
    %1812 = vmatprep.subr.mxu0 0.0
    %1813 = vmatpush1.msra.mxu0 %v759
    %1814 = vmatprep.subr.mxu0 0.0
    %1815 = vmatpush1.msra.mxu0 %v758
    %1816 = vmatprep.subr.mxu0 0.0
    %1817 = vmatpush1.msra.mxu0 %v757
    %1818 = vmatprep.subr.mxu0 0.0
    %1819 = vmatpush1.msra.mxu0 %v756
    %1820 = vmatprep.subr.mxu0 0.0
    %1821 = vmatpush1.msra.mxu0 %v755
    %1822 = vmatprep.subr.mxu0 0.0
    %1823 = vmatpush2.msra.mxu0 0.0
    %1824 = vmatprep.subr.mxu0 0.0
    %1825 = vmatpush2.msra.mxu0 0.0
    %1826 = vmatprep.subr.mxu0 0.0
    %1827 = vmatpush2.msra.mxu0 0.0
    %1828 = vmatprep.subr.mxu0 0.0
    %1829 = vmatpush2.msra.mxu0 0.0
    %1830 = vmatprep.subr.mxu0 0.0
    %1831 = vmatpush2.msra.mxu0 0.0
    %1832 = vmatprep.subr.mxu0 0.0
    %1833 = vmatpush2.msra.mxu0 0.0
    %1834 = vmatprep.subr.mxu0 0.0
    %1835 = vmatpush2.msra.mxu0 0.0
    %1836 = vmatprep.subr.mxu0 0.0
    %1837 = vmatpush2.msra.mxu0 0.0
    %1838 = vmatprep.subr.mxu0 0.0
    %1839 = vmatpush2.msra.mxu0 0.0
    %1840 = vmatprep.subr.mxu0 0.0
    %1841 = vmatpush2.msra.mxu0 0.0
    %1842 = vmatprep.subr.mxu0 0.0
    %1843 = vmatpush2.msra.mxu0 0.0
    %1844 = vmatprep.subr.mxu0 0.0
    %1845 = vmatpush2.msra.mxu0 0.0
    %1846 = vmatprep.subr.mxu0 0.0
    %1847 = vmatpush2.msra.mxu0 0.0
    %1848 = vmatprep.subr.mxu0 0.0
    %1849 = vmatpush2.msra.mxu0 0.0
    %1850 = vmatprep.subr.mxu0 0.0
    %1851 = vmatpush2.msra.mxu0 0.0
    %1852 = vmatprep.subr.mxu0 0.0
    %1853 = vmatpush2.msra.mxu0 0.0
    %1854 = vmatprep.mubr.f32.mxu0 0.0
    %1855 = vmatmul.mubr.f32.gmra.mxu0 %v1788
    %v1856 = vpop.f32.mrf.mxu0
    %v1857 = vadd.f32 0.0, %v1856
    %v1858 = vpop.f32.mrf.mxu0
    %1859 = vdwg.mxu0
    %v1861 = vsel %vm910, %v902, 0
    %1863 = vmatprep.subr.mxu0 0.0
    %1864 = vmatpush1.msra.mxu0 0.0
    %1865 = vmatprep.subr.mxu0 0.0
    %1866 = vmatpush1.msra.mxu0 0.0
    %1867 = vmatprep.subr.mxu0 0.0
    %1868 = vmatpush1.msra.mxu0 0.0
    %1869 = vmatprep.subr.mxu0 0.0
    %1870 = vmatpush1.msra.mxu0 0.0
    %1871 = vmatprep.subr.mxu0 0.0
    %1872 = vmatpush1.msra.mxu0 0.0
    %1873 = vmatprep.subr.mxu0 0.0
    %1874 = vmatpush1.msra.mxu0 0.0
    %1875 = vmatprep.subr.mxu0 0.0
    %1876 = vmatpush1.msra.mxu0 0.0
    %1877 = vmatprep.subr.mxu0 0.0
    %1878 = vmatpush1.msra.mxu0 0.0
    %1879 = vmatprep.subr.mxu0 0.0
    %1880 = vmatpush1.msra.mxu0 %v770
    %1881 = vmatprep.subr.mxu0 0.0
    %1882 = vmatpush1.msra.mxu0 %v769
    %1883 = vmatprep.subr.mxu0 0.0
    %1884 = vmatpush1.msra.mxu0 %v768
    %1885 = vmatprep.subr.mxu0 0.0
    %1886 = vmatpush1.msra.mxu0 %v767
    %1887 = vmatprep.subr.mxu0 0.0
    %1888 = vmatpush1.msra.mxu0 %v766
    %1889 = vmatprep.subr.mxu0 0.0
    %1890 = vmatpush1.msra.mxu0 %v765
    %1891 = vmatprep.subr.mxu0 0.0
    %1892 = vmatpush1.msra.mxu0 %v764
    %1893 = vmatprep.subr.mxu0 0.0
    %1894 = vmatpush1.msra.mxu0 %v763
    %1895 = vmatprep.subr.mxu0 0.0
    %1896 = vmatpush2.msra.mxu0 0.0
    %1897 = vmatprep.subr.mxu0 0.0
    %1898 = vmatpush2.msra.mxu0 0.0
    %1899 = vmatprep.subr.mxu0 0.0
    %1900 = vmatpush2.msra.mxu0 0.0
    %1901 = vmatprep.subr.mxu0 0.0
    %1902 = vmatpush2.msra.mxu0 0.0
    %1903 = vmatprep.subr.mxu0 0.0
    %1904 = vmatpush2.msra.mxu0 0.0
    %1905 = vmatprep.subr.mxu0 0.0
    %1906 = vmatpush2.msra.mxu0 0.0
    %1907 = vmatprep.subr.mxu0 0.0
    %1908 = vmatpush2.msra.mxu0 0.0
    %1909 = vmatprep.subr.mxu0 0.0
    %1910 = vmatpush2.msra.mxu0 0.0
    %1911 = vmatprep.subr.mxu0 0.0
    %1912 = vmatpush2.msra.mxu0 0.0
    %1913 = vmatprep.subr.mxu0 0.0
    %1914 = vmatpush2.msra.mxu0 0.0
    %1915 = vmatprep.subr.mxu0 0.0
    %1916 = vmatpush2.msra.mxu0 0.0
    %1917 = vmatprep.subr.mxu0 0.0
    %1918 = vmatpush2.msra.mxu0 0.0
    %1919 = vmatprep.subr.mxu0 0.0
    %1920 = vmatpush2.msra.mxu0 0.0
    %1921 = vmatprep.subr.mxu0 0.0
    %1922 = vmatpush2.msra.mxu0 0.0
    %1923 = vmatprep.subr.mxu0 0.0
    %1924 = vmatpush2.msra.mxu0 0.0
    %1925 = vmatprep.subr.mxu0 0.0
    %1926 = vmatpush2.msra.mxu0 0.0
    %1927 = vmatprep.mubr.f32.mxu0 0.0
    %1928 = vmatmul.mubr.f32.gmra.mxu0 %v1861
    %v1929 = vpop.f32.mrf.mxu0
    %v1930 = vadd.f32 0.0, %v1929
    %v1931 = vpop.f32.mrf.mxu0
    %1932 = vdwg.mxu0
    %v1934 = vsel %vm910, %v909, 0
    %1936 = vmatprep.subr.mxu0 0.0
    %1937 = vmatpush1.msra.mxu0 0.0
    %1938 = vmatprep.subr.mxu0 0.0
    %1939 = vmatpush1.msra.mxu0 0.0
    %1940 = vmatprep.subr.mxu0 0.0
    %1941 = vmatpush1.msra.mxu0 0.0
    %1942 = vmatprep.subr.mxu0 0.0
    %1943 = vmatpush1.msra.mxu0 0.0
    %1944 = vmatprep.subr.mxu0 0.0
    %1945 = vmatpush1.msra.mxu0 0.0
    %1946 = vmatprep.subr.mxu0 0.0
    %1947 = vmatpush1.msra.mxu0 0.0
    %1948 = vmatprep.subr.mxu0 0.0
    %1949 = vmatpush1.msra.mxu0 0.0
    %1950 = vmatprep.subr.mxu0 0.0
    %1951 = vmatpush1.msra.mxu0 0.0
    %1952 = vmatprep.subr.mxu0 0.0
    %1953 = vmatpush1.msra.mxu0 %v778
    %1954 = vmatprep.subr.mxu0 0.0
    %1955 = vmatpush1.msra.mxu0 %v777
    %1956 = vmatprep.subr.mxu0 0.0
    %1957 = vmatpush1.msra.mxu0 %v776
    %1958 = vmatprep.subr.mxu0 0.0
    %1959 = vmatpush1.msra.mxu0 %v775
    %1960 = vmatprep.subr.mxu0 0.0
    %1961 = vmatpush1.msra.mxu0 %v774
    %1962 = vmatprep.subr.mxu0 0.0
    %1963 = vmatpush1.msra.mxu0 %v773
    %1964 = vmatprep.subr.mxu0 0.0
    %1965 = vmatpush1.msra.mxu0 %v772
    %1966 = vmatprep.subr.mxu0 0.0
    %1967 = vmatpush1.msra.mxu0 %v771
    %1968 = vmatprep.subr.mxu0 0.0
    %1969 = vmatpush2.msra.mxu0 0.0
    %1970 = vmatprep.subr.mxu0 0.0
    %1971 = vmatpush2.msra.mxu0 0.0
    %1972 = vmatprep.subr.mxu0 0.0
    %1973 = vmatpush2.msra.mxu0 0.0
    %1974 = vmatprep.subr.mxu0 0.0
    %1975 = vmatpush2.msra.mxu0 0.0
    %1976 = vmatprep.subr.mxu0 0.0
    %1977 = vmatpush2.msra.mxu0 0.0
    %1978 = vmatprep.subr.mxu0 0.0
    %1979 = vmatpush2.msra.mxu0 0.0
    %1980 = vmatprep.subr.mxu0 0.0
    %1981 = vmatpush2.msra.mxu0 0.0
    %1982 = vmatprep.subr.mxu0 0.0
    %1983 = vmatpush2.msra.mxu0 0.0
    %1984 = vmatprep.subr.mxu0 0.0
    %1985 = vmatpush2.msra.mxu0 0.0
    %1986 = vmatprep.subr.mxu0 0.0
    %1987 = vmatpush2.msra.mxu0 0.0
    %1988 = vmatprep.subr.mxu0 0.0
    %1989 = vmatpush2.msra.mxu0 0.0
    %1990 = vmatprep.subr.mxu0 0.0
    %1991 = vmatpush2.msra.mxu0 0.0
    %1992 = vmatprep.subr.mxu0 0.0
    %1993 = vmatpush2.msra.mxu0 0.0
    %1994 = vmatprep.subr.mxu0 0.0
    %1995 = vmatpush2.msra.mxu0 0.0
    %1996 = vmatprep.subr.mxu0 0.0
    %1997 = vmatpush2.msra.mxu0 0.0
    %1998 = vmatprep.subr.mxu0 0.0
    %1999 = vmatpush2.msra.mxu0 0.0
    %2000 = vmatprep.mubr.f32.mxu0 0.0
    %2001 = vmatmul.mubr.f32.gmra.mxu0 %v1934
    %v2002 = vpop.f32.mrf.mxu0
    %v2003 = vadd.f32 0.0, %v2002
    %v2004 = vpop.f32.mrf.mxu0
    %2005 = vdwg.mxu0
    %vm2006 = vcmask 1041408
    %v2007 = vsel %vm2006, %v981, 0.0
    %v2008 = vsel %vm2006, %v1054, 0.0
    %v2009 = vadd.f32 %v2007, %v2008
    %v2010 = vsel %vm2006, %v1127, 0.0
    %v2011 = vadd.f32 %v2009, %v2010
    %v2012 = vsel %vm2006, %v1200, 0.0
    %v2013 = vadd.f32 %v2011, %v2012
    %v2014 = vsel %vm2006, %v1273, 0.0
    %v2015 = vadd.f32 %v2013, %v2014
    %v2016 = vsel %vm2006, %v1346, 0.0
    %v2017 = vadd.f32 %v2015, %v2016
    %v2018 = vsel %vm2006, %v1419, 0.0
    %v2019 = vadd.f32 %v2017, %v2018
    %v2020 = vsel %vm2006, %v1492, 0.0
    %v2021 = vadd.f32 %v2019, %v2020
    %v2022 = vsel %vm2006, %v1565, 0.0
    %v2023 = vadd.f32 %v2021, %v2022
    %v2024 = vsel %vm2006, %v1638, 0.0
    %v2025 = vadd.f32 %v2023, %v2024
    %v2026 = vsel %vm2006, %v1711, 0.0
    %v2027 = vadd.f32 %v2025, %v2026
    %v2028 = vsel %vm2006, %v1784, 0.0
    %v2029 = vadd.f32 %v2027, %v2028
    %v2030 = vsel %vm2006, %v1857, 0.0
    %v2031 = vadd.f32 %v2029, %v2030
    %v2032 = vsel %vm2006, %v1930, 0.0
    %v2033 = vadd.f32 %v2031, %v2032
    %v2034 = vsel %vm2006, %v2003, 0.0
    %v2035 = vadd.f32 %v2033, %v2034
    %v2036 = vadd.f32 %v2035, 0.0
    %v2037 = vld [vmem:[%s4] sm:$0xff]
    %v2038 = vld [vmem:[%s4 + $0x8] sm:$0xff]
    %v2039 = vld [vmem:[%s4 + $0x10] sm:$0xf]
    %v2040 = vlaneseq
    %v2041 = vshrl.u32 %v2040, 7
    %v2042 = vsub.s32 0, %v2041
    %v2043 = vrot.slane %v2037, %v2042
    %v2044 = vmul.f32 %v102, %v2043
    %v2045 = vmul.f32 %v107, %v2043
    %v2046 = vmul.f32 %v112, %v2043
    %v2047 = vmul.f32 %v117, %v2043
    %v2048 = vadd.f32 %v2044, 0.0
    %v2049 = vadd.f32 %v2045, 0.0
    %v2050 = vadd.f32 %v2046, 0.0
    %v2051 = vadd.f32 %v2047, 0.0
    %v2052 = vmul.f32 %v134, %v2043
    %v2053 = vmul.f32 %v139, %v2043
    %v2054 = vmul.f32 %v144, %v2043
    %v2055 = vmul.f32 %v149, %v2043
    %v2056 = vadd.f32 %v2052, 0.0
    %v2057 = vadd.f32 %v2053, 0.0
    %v2058 = vadd.f32 %v2054, 0.0
    %v2059 = vadd.f32 %v2055, 0.0
    %v2060 = vlaneseq
    %v2061 = vshrl.u32 %v2060, 7
    %v2062 = vsub.s32 1, %v2061
    %v2063 = vrot.slane %v2037, %v2062
    %v2064 = vmul.f32 %v161, %v2063
    %v2065 = vmul.f32 %v165, %v2063
    %v2066 = vmul.f32 %v169, %v2063
    %v2067 = vmul.f32 %v173, %v2063
    %v2068 = vadd.f32 %v2048, %v2064
    %v2069 = vadd.f32 %v2049, %v2065
    %v2070 = vadd.f32 %v2050, %v2066
    %v2071 = vadd.f32 %v2051, %v2067
    %v2072 = vmul.f32 %v189, %v2063
    %v2073 = vmul.f32 %v193, %v2063
    %v2074 = vmul.f32 %v197, %v2063
    %v2075 = vmul.f32 %v201, %v2063
    %v2076 = vadd.f32 %v2056, %v2072
    %v2077 = vadd.f32 %v2057, %v2073
    %v2078 = vadd.f32 %v2058, %v2074
    %v2079 = vadd.f32 %v2059, %v2075
    %v2080 = vlaneseq
    %v2081 = vshrl.u32 %v2080, 7
    %v2082 = vsub.s32 2, %v2081
    %v2083 = vrot.slane %v2037, %v2082
    %v2084 = vmul.f32 %v213, %v2083
    %v2085 = vmul.f32 %v217, %v2083
    %v2086 = vmul.f32 %v221, %v2083
    %v2087 = vmul.f32 %v225, %v2083
    %v2088 = vadd.f32 %v2068, %v2084
    %v2089 = vadd.f32 %v2069, %v2085
    %v2090 = vadd.f32 %v2070, %v2086
    %v2091 = vadd.f32 %v2071, %v2087
    %v2092 = vmul.f32 %v241, %v2083
    %v2093 = vmul.f32 %v245, %v2083
    %v2094 = vmul.f32 %v249, %v2083
    %v2095 = vmul.f32 %v253, %v2083
    %v2096 = vadd.f32 %v2076, %v2092
    %v2097 = vadd.f32 %v2077, %v2093
    %v2098 = vadd.f32 %v2078, %v2094
    %v2099 = vadd.f32 %v2079, %v2095
    %v2100 = vlaneseq
    %v2101 = vshrl.u32 %v2100, 7
    %v2102 = vsub.s32 3, %v2101
    %v2103 = vrot.slane %v2037, %v2102
    %v2104 = vmul.f32 %v265, %v2103
    %v2105 = vmul.f32 %v269, %v2103
    %v2106 = vmul.f32 %v273, %v2103
    %v2107 = vmul.f32 %v277, %v2103
    %v2108 = vadd.f32 %v2088, %v2104
    %v2109 = vadd.f32 %v2089, %v2105
    %v2110 = vadd.f32 %v2090, %v2106
    %v2111 = vadd.f32 %v2091, %v2107
    %v2112 = vmul.f32 %v293, %v2103
    %v2113 = vmul.f32 %v297, %v2103
    %v2114 = vmul.f32 %v301, %v2103
    %v2115 = vmul.f32 %v305, %v2103
    %v2116 = vadd.f32 %v2096, %v2112
    %v2117 = vadd.f32 %v2097, %v2113
    %v2118 = vadd.f32 %v2098, %v2114
    %v2119 = vadd.f32 %v2099, %v2115
    %v2120 = vlaneseq
    %v2121 = vshrl.u32 %v2120, 7
    %v2122 = vsub.s32 4, %v2121
    %v2123 = vrot.slane %v2037, %v2122
    %v2124 = vmul.f32 %v134, %v2123
    %v2125 = vmul.f32 %v139, %v2123
    %v2126 = vmul.f32 %v144, %v2123
    %v2127 = vmul.f32 %v149, %v2123
    %v2128 = vadd.f32 %v2108, %v2124
    %v2129 = vadd.f32 %v2109, %v2125
    %v2130 = vadd.f32 %v2110, %v2126
    %v2131 = vadd.f32 %v2111, %v2127
    %v2132 = vmul.f32 %v102, %v2123
    %v2133 = vmul.f32 %v107, %v2123
    %v2134 = vmul.f32 %v112, %v2123
    %v2135 = vmul.f32 %v117, %v2123
    %v2140 = vrot.slane %v2132, 1
    %v2141 = vrot.slane %v2133, 1
    %v2142 = vsel %vm335, %v2140, %v2141
    %v2143 = vrot.slane %v2134, 1
    %v2144 = vrot.slane %v2135, 1
    %v2145 = vsel %vm335, %v2143, %v2144
    %v2150 = vadd.f32 %v2116, %v2142
    %v2151 = vadd.f32 %v2117, %v2141
    %v2152 = vadd.f32 %v2118, %v2145
    %v2153 = vadd.f32 %v2119, %v2144
    %v2154 = vlaneseq
    %v2155 = vshrl.u32 %v2154, 7
    %v2156 = vsub.s32 5, %v2155
    %v2157 = vrot.slane %v2037, %v2156
    %v2158 = vmul.f32 %v189, %v2157
    %v2159 = vmul.f32 %v193, %v2157
    %v2160 = vmul.f32 %v197, %v2157
    %v2161 = vmul.f32 %v201, %v2157
    %v2162 = vadd.f32 %v2128, %v2158
    %v2163 = vadd.f32 %v2129, %v2159
    %v2164 = vadd.f32 %v2130, %v2160
    %v2165 = vadd.f32 %v2131, %v2161
    %v2166 = vmul.f32 %v161, %v2157
    %v2167 = vmul.f32 %v165, %v2157
    %v2168 = vmul.f32 %v169, %v2157
    %v2169 = vmul.f32 %v173, %v2157
    %v2174 = vrot.slane %v2166, 1
    %v2175 = vrot.slane %v2167, 1
    %v2176 = vsel %vm335, %v2174, %v2175
    %v2177 = vrot.slane %v2168, 1
    %v2178 = vrot.slane %v2169, 1
    %v2179 = vsel %vm335, %v2177, %v2178
    %v2184 = vadd.f32 %v2150, %v2176
    %v2185 = vadd.f32 %v2151, %v2175
    %v2186 = vadd.f32 %v2152, %v2179
    %v2187 = vadd.f32 %v2153, %v2178
    %v2188 = vlaneseq
    %v2189 = vshrl.u32 %v2188, 7
    %v2190 = vsub.s32 6, %v2189
    %v2191 = vrot.slane %v2037, %v2190
    %v2192 = vmul.f32 %v241, %v2191
    %v2193 = vmul.f32 %v245, %v2191
    %v2194 = vmul.f32 %v249, %v2191
    %v2195 = vmul.f32 %v253, %v2191
    %v2196 = vadd.f32 %v2162, %v2192
    %v2197 = vadd.f32 %v2163, %v2193
    %v2198 = vadd.f32 %v2164, %v2194
    %v2199 = vadd.f32 %v2165, %v2195
    %v2200 = vmul.f32 %v213, %v2191
    %v2201 = vmul.f32 %v217, %v2191
    %v2202 = vmul.f32 %v221, %v2191
    %v2203 = vmul.f32 %v225, %v2191
    %v2208 = vrot.slane %v2200, 1
    %v2209 = vrot.slane %v2201, 1
    %v2210 = vsel %vm335, %v2208, %v2209
    %v2211 = vrot.slane %v2202, 1
    %v2212 = vrot.slane %v2203, 1
    %v2213 = vsel %vm335, %v2211, %v2212
    %v2218 = vadd.f32 %v2184, %v2210
    %v2219 = vadd.f32 %v2185, %v2209
    %v2220 = vadd.f32 %v2186, %v2213
    %v2221 = vadd.f32 %v2187, %v2212
    %v2222 = vlaneseq
    %v2223 = vshrl.u32 %v2222, 7
    %v2224 = vsub.s32 7, %v2223
    %v2225 = vrot.slane %v2037, %v2224
    %v2226 = vmul.f32 %v293, %v2225
    %v2227 = vmul.f32 %v297, %v2225
    %v2228 = vmul.f32 %v301, %v2225
    %v2229 = vmul.f32 %v305, %v2225
    %v2230 = vadd.f32 %v2196, %v2226
    %v2231 = vadd.f32 %v2197, %v2227
    %v2232 = vadd.f32 %v2198, %v2228
    %v2233 = vadd.f32 %v2199, %v2229
    %v2234 = vmul.f32 %v265, %v2225
    %v2235 = vmul.f32 %v269, %v2225
    %v2236 = vmul.f32 %v273, %v2225
    %v2237 = vmul.f32 %v277, %v2225
    %v2242 = vrot.slane %v2234, 1
    %v2243 = vrot.slane %v2235, 1
    %v2244 = vsel %vm335, %v2242, %v2243
    %v2245 = vrot.slane %v2236, 1
    %v2246 = vrot.slane %v2237, 1
    %v2247 = vsel %vm335, %v2245, %v2246
    %v2252 = vadd.f32 %v2218, %v2244
    %v2253 = vadd.f32 %v2219, %v2243
    %v2254 = vadd.f32 %v2220, %v2247
    %v2255 = vadd.f32 %v2221, %v2246
    %v2256 = vlaneseq
    %v2257 = vshrl.u32 %v2256, 7
    %v2258 = vsub.s32 0, %v2257
    %v2259 = vrot.slane %v2038, %v2258
    %v2260 = vmul.f32 %v102, %v2259
    %v2261 = vmul.f32 %v107, %v2259
    %v2262 = vmul.f32 %v112, %v2259
    %v2263 = vmul.f32 %v117, %v2259
    %v2268 = vrot.slane %v2260, 1
    %v2269 = vrot.slane %v2261, 1
    %v2270 = vsel %vm335, %v2268, %v2269
    %v2271 = vrot.slane %v2262, 1
    %v2272 = vrot.slane %v2263, 1
    %v2273 = vsel %vm335, %v2271, %v2272
    %v2278 = vadd.f32 %v2230, %v2270
    %v2279 = vadd.f32 %v2231, %v2269
    %v2280 = vadd.f32 %v2232, %v2273
    %v2281 = vadd.f32 %v2233, %v2272
    %v2282 = vmul.f32 %v134, %v2259
    %v2283 = vmul.f32 %v139, %v2259
    %v2284 = vmul.f32 %v144, %v2259
    %v2285 = vmul.f32 %v149, %v2259
    %v2290 = vrot.slane %v2282, 1
    %v2291 = vrot.slane %v2283, 1
    %v2292 = vsel %vm335, %v2290, %v2291
    %v2293 = vrot.slane %v2284, 1
    %v2294 = vrot.slane %v2285, 1
    %v2295 = vsel %vm335, %v2293, %v2294
    %v2300 = vadd.f32 %v2252, %v2292
    %v2301 = vadd.f32 %v2253, %v2291
    %v2302 = vadd.f32 %v2254, %v2295
    %v2303 = vadd.f32 %v2255, %v2294
    %v2304 = vlaneseq
    %v2305 = vshrl.u32 %v2304, 7
    %v2306 = vsub.s32 1, %v2305
    %v2307 = vrot.slane %v2038, %v2306
    %v2308 = vmul.f32 %v161, %v2307
    %v2309 = vmul.f32 %v165, %v2307
    %v2310 = vmul.f32 %v169, %v2307
    %v2311 = vmul.f32 %v173, %v2307
    %v2316 = vrot.slane %v2308, 1
    %v2317 = vrot.slane %v2309, 1
    %v2318 = vsel %vm335, %v2316, %v2317
    %v2319 = vrot.slane %v2310, 1
    %v2320 = vrot.slane %v2311, 1
    %v2321 = vsel %vm335, %v2319, %v2320
    %v2326 = vadd.f32 %v2278, %v2318
    %v2327 = vadd.f32 %v2279, %v2317
    %v2328 = vadd.f32 %v2280, %v2321
    %v2329 = vadd.f32 %v2281, %v2320
    %v2330 = vmul.f32 %v189, %v2307
    %v2331 = vmul.f32 %v193, %v2307
    %v2332 = vmul.f32 %v197, %v2307
    %v2333 = vmul.f32 %v201, %v2307
    %v2338 = vrot.slane %v2330, 1
    %v2339 = vrot.slane %v2331, 1
    %v2340 = vsel %vm335, %v2338, %v2339
    %v2341 = vrot.slane %v2332, 1
    %v2342 = vrot.slane %v2333, 1
    %v2343 = vsel %vm335, %v2341, %v2342
    %v2348 = vadd.f32 %v2300, %v2340
    %v2349 = vadd.f32 %v2301, %v2339
    %v2350 = vadd.f32 %v2302, %v2343
    %v2351 = vadd.f32 %v2303, %v2342
    %v2352 = vlaneseq
    %v2353 = vshrl.u32 %v2352, 7
    %v2354 = vsub.s32 2, %v2353
    %v2355 = vrot.slane %v2038, %v2354
    %v2356 = vmul.f32 %v213, %v2355
    %v2357 = vmul.f32 %v217, %v2355
    %v2358 = vmul.f32 %v221, %v2355
    %v2359 = vmul.f32 %v225, %v2355
    %v2364 = vrot.slane %v2356, 1
    %v2365 = vrot.slane %v2357, 1
    %v2366 = vsel %vm335, %v2364, %v2365
    %v2367 = vrot.slane %v2358, 1
    %v2368 = vrot.slane %v2359, 1
    %v2369 = vsel %vm335, %v2367, %v2368
    %v2374 = vadd.f32 %v2326, %v2366
    %v2375 = vadd.f32 %v2327, %v2365
    %v2376 = vadd.f32 %v2328, %v2369
    %v2377 = vadd.f32 %v2329, %v2368
    %v2378 = vmul.f32 %v241, %v2355
    %v2379 = vmul.f32 %v245, %v2355
    %v2380 = vmul.f32 %v249, %v2355
    %v2381 = vmul.f32 %v253, %v2355
    %v2386 = vrot.slane %v2378, 1
    %v2387 = vrot.slane %v2379, 1
    %v2388 = vsel %vm335, %v2386, %v2387
    %v2389 = vrot.slane %v2380, 1
    %v2390 = vrot.slane %v2381, 1
    %v2391 = vsel %vm335, %v2389, %v2390
    %v2396 = vadd.f32 %v2348, %v2388
    %v2397 = vadd.f32 %v2349, %v2387
    %v2398 = vadd.f32 %v2350, %v2391
    %v2399 = vadd.f32 %v2351, %v2390
    %v2400 = vlaneseq
    %v2401 = vshrl.u32 %v2400, 7
    %v2402 = vsub.s32 3, %v2401
    %v2403 = vrot.slane %v2038, %v2402
    %v2404 = vmul.f32 %v265, %v2403
    %v2405 = vmul.f32 %v269, %v2403
    %v2406 = vmul.f32 %v273, %v2403
    %v2407 = vmul.f32 %v277, %v2403
    %v2412 = vrot.slane %v2404, 1
    %v2413 = vrot.slane %v2405, 1
    %v2414 = vsel %vm335, %v2412, %v2413
    %v2415 = vrot.slane %v2406, 1
    %v2416 = vrot.slane %v2407, 1
    %v2417 = vsel %vm335, %v2415, %v2416
    %v2422 = vadd.f32 %v2374, %v2414
    %v2423 = vadd.f32 %v2375, %v2413
    %v2424 = vadd.f32 %v2376, %v2417
    %v2425 = vadd.f32 %v2377, %v2416
    %v2426 = vmul.f32 %v293, %v2403
    %v2427 = vmul.f32 %v297, %v2403
    %v2428 = vmul.f32 %v301, %v2403
    %v2429 = vmul.f32 %v305, %v2403
    %v2434 = vrot.slane %v2426, 1
    %v2435 = vrot.slane %v2427, 1
    %v2436 = vsel %vm335, %v2434, %v2435
    %v2437 = vrot.slane %v2428, 1
    %v2438 = vrot.slane %v2429, 1
    %v2439 = vsel %vm335, %v2437, %v2438
    %v2444 = vadd.f32 %v2396, %v2436
    %v2445 = vadd.f32 %v2397, %v2435
    %v2446 = vadd.f32 %v2398, %v2439
    %v2447 = vadd.f32 %v2399, %v2438
    %v2448 = vlaneseq
    %v2449 = vshrl.u32 %v2448, 7
    %v2450 = vsub.s32 4, %v2449
    %v2451 = vrot.slane %v2038, %v2450
    %v2452 = vmul.f32 %v134, %v2451
    %v2453 = vmul.f32 %v139, %v2451
    %v2454 = vmul.f32 %v144, %v2451
    %v2455 = vmul.f32 %v149, %v2451
    %v2460 = vrot.slane %v2452, 1
    %v2461 = vrot.slane %v2453, 1
    %v2462 = vsel %vm335, %v2460, %v2461
    %v2463 = vrot.slane %v2454, 1
    %v2464 = vrot.slane %v2455, 1
    %v2465 = vsel %vm335, %v2463, %v2464
    %v2470 = vadd.f32 %v2422, %v2462
    %v2471 = vadd.f32 %v2423, %v2461
    %v2472 = vadd.f32 %v2424, %v2465
    %v2473 = vadd.f32 %v2425, %v2464
    %v2474 = vmul.f32 %v102, %v2451
    %v2475 = vmul.f32 %v107, %v2451
    %v2476 = vmul.f32 %v112, %v2451
    %v2477 = vmul.f32 %v117, %v2451
    %vm2482 = vcmask 1045504
    %v2483 = vrot.slane %v2474, 2
    %v2484 = vrot.slane %v2475, 2
    %v2485 = vsel %vm2482, %v2483, %v2484
    %v2486 = vrot.slane %v2476, 2
    %v2487 = vrot.slane %v2477, 2
    %v2488 = vsel %vm2482, %v2486, %v2487
    %v2493 = vadd.f32 %v2444, %v2485
    %v2494 = vadd.f32 %v2445, %v2484
    %v2495 = vadd.f32 %v2446, %v2488
    %v2496 = vadd.f32 %v2447, %v2487
    %v2497 = vlaneseq
    %v2498 = vshrl.u32 %v2497, 7
    %v2499 = vsub.s32 5, %v2498
    %v2500 = vrot.slane %v2038, %v2499
    %v2501 = vmul.f32 %v189, %v2500
    %v2502 = vmul.f32 %v193, %v2500
    %v2503 = vmul.f32 %v197, %v2500
    %v2504 = vmul.f32 %v201, %v2500
    %v2509 = vrot.slane %v2501, 1
    %v2510 = vrot.slane %v2502, 1
    %v2511 = vsel %vm335, %v2509, %v2510
    %v2512 = vrot.slane %v2503, 1
    %v2513 = vrot.slane %v2504, 1
    %v2514 = vsel %vm335, %v2512, %v2513
    %v2519 = vadd.f32 %v2470, %v2511
    %v2520 = vadd.f32 %v2471, %v2510
    %v2521 = vadd.f32 %v2472, %v2514
    %v2522 = vadd.f32 %v2473, %v2513
    %v2523 = vmul.f32 %v161, %v2500
    %v2524 = vmul.f32 %v165, %v2500
    %v2525 = vmul.f32 %v169, %v2500
    %v2526 = vmul.f32 %v173, %v2500
    %v2531 = vrot.slane %v2523, 2
    %v2532 = vrot.slane %v2524, 2
    %v2533 = vsel %vm2482, %v2531, %v2532
    %v2534 = vrot.slane %v2525, 2
    %v2535 = vrot.slane %v2526, 2
    %v2536 = vsel %vm2482, %v2534, %v2535
    %v2541 = vadd.f32 %v2493, %v2533
    %v2542 = vadd.f32 %v2494, %v2532
    %v2543 = vadd.f32 %v2495, %v2536
    %v2544 = vadd.f32 %v2496, %v2535
    %v2545 = vlaneseq
    %v2546 = vshrl.u32 %v2545, 7
    %v2547 = vsub.s32 6, %v2546
    %v2548 = vrot.slane %v2038, %v2547
    %v2549 = vmul.f32 %v241, %v2548
    %v2550 = vmul.f32 %v245, %v2548
    %v2551 = vmul.f32 %v249, %v2548
    %v2552 = vmul.f32 %v253, %v2548
    %v2557 = vrot.slane %v2549, 1
    %v2558 = vrot.slane %v2550, 1
    %v2559 = vsel %vm335, %v2557, %v2558
    %v2560 = vrot.slane %v2551, 1
    %v2561 = vrot.slane %v2552, 1
    %v2562 = vsel %vm335, %v2560, %v2561
    %v2567 = vadd.f32 %v2519, %v2559
    %v2568 = vadd.f32 %v2520, %v2558
    %v2569 = vadd.f32 %v2521, %v2562
    %v2570 = vadd.f32 %v2522, %v2561
    %v2571 = vmul.f32 %v213, %v2548
    %v2572 = vmul.f32 %v217, %v2548
    %v2573 = vmul.f32 %v221, %v2548
    %v2574 = vmul.f32 %v225, %v2548
    %v2579 = vrot.slane %v2571, 2
    %v2580 = vrot.slane %v2572, 2
    %v2581 = vsel %vm2482, %v2579, %v2580
    %v2582 = vrot.slane %v2573, 2
    %v2583 = vrot.slane %v2574, 2
    %v2584 = vsel %vm2482, %v2582, %v2583
    %v2589 = vadd.f32 %v2541, %v2581
    %v2590 = vadd.f32 %v2542, %v2580
    %v2591 = vadd.f32 %v2543, %v2584
    %v2592 = vadd.f32 %v2544, %v2583
    %v2593 = vlaneseq
    %v2594 = vshrl.u32 %v2593, 7
    %v2595 = vsub.s32 7, %v2594
    %v2596 = vrot.slane %v2038, %v2595
    %v2597 = vmul.f32 %v293, %v2596
    %v2598 = vmul.f32 %v297, %v2596
    %v2599 = vmul.f32 %v301, %v2596
    %v2600 = vmul.f32 %v305, %v2596
    %v2605 = vrot.slane %v2597, 1
    %v2606 = vrot.slane %v2598, 1
    %v2607 = vsel %vm335, %v2605, %v2606
    %v2608 = vrot.slane %v2599, 1
    %v2609 = vrot.slane %v2600, 1
    %v2610 = vsel %vm335, %v2608, %v2609
    %v2615 = vadd.f32 %v2567, %v2607
    %v2616 = vadd.f32 %v2568, %v2606
    %v2617 = vadd.f32 %v2569, %v2610
    %v2618 = vadd.f32 %v2570, %v2609
    %v2619 = vmul.f32 %v265, %v2596
    %v2620 = vmul.f32 %v269, %v2596
    %v2621 = vmul.f32 %v273, %v2596
    %v2622 = vmul.f32 %v277, %v2596
    %v2627 = vrot.slane %v2619, 2
    %v2628 = vrot.slane %v2620, 2
    %v2629 = vsel %vm2482, %v2627, %v2628
    %v2630 = vrot.slane %v2621, 2
    %v2631 = vrot.slane %v2622, 2
    %v2632 = vsel %vm2482, %v2630, %v2631
    %v2637 = vadd.f32 %v2589, %v2629
    %v2638 = vadd.f32 %v2590, %v2628
    %v2639 = vadd.f32 %v2591, %v2632
    %v2640 = vadd.f32 %v2592, %v2631
    %v2641 = vlaneseq
    %v2642 = vshrl.u32 %v2641, 7
    %v2643 = vsub.s32 0, %v2642
    %v2644 = vrot.slane %v2039, %v2643
    %v2645 = vmul.f32 %v102, %v2644
    %v2646 = vmul.f32 %v107, %v2644
    %v2647 = vmul.f32 %v112, %v2644
    %v2648 = vmul.f32 %v117, %v2644
    %v2653 = vrot.slane %v2645, 2
    %v2654 = vrot.slane %v2646, 2
    %v2655 = vsel %vm2482, %v2653, %v2654
    %v2656 = vrot.slane %v2647, 2
    %v2657 = vrot.slane %v2648, 2
    %v2658 = vsel %vm2482, %v2656, %v2657
    %v2663 = vadd.f32 %v2615, %v2655
    %v2664 = vadd.f32 %v2616, %v2654
    %v2665 = vadd.f32 %v2617, %v2658
    %v2666 = vadd.f32 %v2618, %v2657
    %v2667 = vmul.f32 %v134, %v2644
    %v2668 = vmul.f32 %v139, %v2644
    %v2669 = vmul.f32 %v144, %v2644
    %v2670 = vmul.f32 %v149, %v2644
    %v2675 = vrot.slane %v2667, 2
    %v2676 = vrot.slane %v2668, 2
    %v2677 = vsel %vm2482, %v2675, %v2676
    %v2678 = vrot.slane %v2669, 2
    %v2679 = vrot.slane %v2670, 2
    %v2680 = vsel %vm2482, %v2678, %v2679
    %v2685 = vadd.f32 %v2637, %v2677
    %v2686 = vadd.f32 %v2638, %v2676
    %v2687 = vadd.f32 %v2639, %v2680
    %v2688 = vadd.f32 %v2640, %v2679
    %v2689 = vlaneseq
    %v2690 = vshrl.u32 %v2689, 7
    %v2691 = vsub.s32 1, %v2690
    %v2692 = vrot.slane %v2039, %v2691
    %v2693 = vmul.f32 %v161, %v2692
    %v2694 = vmul.f32 %v165, %v2692
    %v2695 = vmul.f32 %v169, %v2692
    %v2696 = vmul.f32 %v173, %v2692
    %v2701 = vrot.slane %v2693, 2
    %v2702 = vrot.slane %v2694, 2
    %v2703 = vsel %vm2482, %v2701, %v2702
    %v2704 = vrot.slane %v2695, 2
    %v2705 = vrot.slane %v2696, 2
    %v2706 = vsel %vm2482, %v2704, %v2705
    %v2711 = vadd.f32 %v2663, %v2703
    %v2712 = vadd.f32 %v2664, %v2702
    %v2713 = vadd.f32 %v2665, %v2706
    %v2714 = vadd.f32 %v2666, %v2705
    %v2715 = vmul.f32 %v189, %v2692
    %v2716 = vmul.f32 %v193, %v2692
    %v2717 = vmul.f32 %v197, %v2692
    %v2718 = vmul.f32 %v201, %v2692
    %v2723 = vrot.slane %v2715, 2
    %v2724 = vrot.slane %v2716, 2
    %v2725 = vsel %vm2482, %v2723, %v2724
    %v2726 = vrot.slane %v2717, 2
    %v2727 = vrot.slane %v2718, 2
    %v2728 = vsel %vm2482, %v2726, %v2727
    %v2733 = vadd.f32 %v2685, %v2725
    %v2734 = vadd.f32 %v2686, %v2724
    %v2735 = vadd.f32 %v2687, %v2728
    %v2736 = vadd.f32 %v2688, %v2727
    %v2737 = vlaneseq
    %v2738 = vshrl.u32 %v2737, 7
    %v2739 = vsub.s32 2, %v2738
    %v2740 = vrot.slane %v2039, %v2739
    %v2741 = vmul.f32 %v213, %v2740
    %v2742 = vmul.f32 %v217, %v2740
    %v2743 = vmul.f32 %v221, %v2740
    %v2744 = vmul.f32 %v225, %v2740
    %v2749 = vrot.slane %v2741, 2
    %v2750 = vrot.slane %v2742, 2
    %v2751 = vsel %vm2482, %v2749, %v2750
    %v2752 = vrot.slane %v2743, 2
    %v2753 = vrot.slane %v2744, 2
    %v2754 = vsel %vm2482, %v2752, %v2753
    %v2759 = vadd.f32 %v2711, %v2751
    %v2760 = vadd.f32 %v2712, %v2750
    %v2761 = vadd.f32 %v2713, %v2754
    %v2762 = vadd.f32 %v2714, %v2753
    %v2763 = vmul.f32 %v241, %v2740
    %v2764 = vmul.f32 %v245, %v2740
    %v2765 = vmul.f32 %v249, %v2740
    %v2766 = vmul.f32 %v253, %v2740
    %v2771 = vrot.slane %v2763, 2
    %v2772 = vrot.slane %v2764, 2
    %v2773 = vsel %vm2482, %v2771, %v2772
    %v2774 = vrot.slane %v2765, 2
    %v2775 = vrot.slane %v2766, 2
    %v2776 = vsel %vm2482, %v2774, %v2775
    %v2781 = vadd.f32 %v2733, %v2773
    %v2782 = vadd.f32 %v2734, %v2772
    %v2783 = vadd.f32 %v2735, %v2776
    %v2784 = vadd.f32 %v2736, %v2775
    %v2785 = vlaneseq
    %v2786 = vshrl.u32 %v2785, 7
    %v2787 = vsub.s32 3, %v2786
    %v2788 = vrot.slane %v2039, %v2787
    %v2789 = vmul.f32 %v265, %v2788
    %v2790 = vmul.f32 %v269, %v2788
    %v2791 = vmul.f32 %v273, %v2788
    %v2792 = vmul.f32 %v277, %v2788
    %v2797 = vrot.slane %v2789, 2
    %v2798 = vrot.slane %v2790, 2
    %v2799 = vsel %vm2482, %v2797, %v2798
    %v2800 = vrot.slane %v2791, 2
    %v2801 = vrot.slane %v2792, 2
    %v2802 = vsel %vm2482, %v2800, %v2801
    %v2807 = vadd.f32 %v2759, %v2799
    %v2808 = vadd.f32 %v2760, %v2798
    %v2809 = vadd.f32 %v2761, %v2802
    %v2810 = vadd.f32 %v2762, %v2801
    %v2811 = vmul.f32 %v293, %v2788
    %v2812 = vmul.f32 %v297, %v2788
    %v2813 = vmul.f32 %v301, %v2788
    %v2814 = vmul.f32 %v305, %v2788
    %v2819 = vrot.slane %v2811, 2
    %v2820 = vrot.slane %v2812, 2
    %v2821 = vsel %vm2482, %v2819, %v2820
    %v2822 = vrot.slane %v2813, 2
    %v2823 = vrot.slane %v2814, 2
    %v2824 = vsel %vm2482, %v2822, %v2823
    %v2829 = vadd.f32 %v2781, %v2821
    %v2830 = vadd.f32 %v2782, %v2820
    %v2831 = vadd.f32 %v2783, %v2824
    %v2832 = vadd.f32 %v2784, %v2823
    %v2833 = vmax.f32 %v2807, %v2829
    %v2834 = vmax.f32 %v2808, %v2830
    %v2835 = vmax.f32 %v2809, %v2831
    %v2836 = vmax.f32 %v2810, %v2832
    %v2837 = vld [vmem:[%s5] sm:$0x1]
    %v2839 = vlaneseq
    %v2840 = vshrl.u32 %v2839, 7
    %v2841 = vsub.s32 0, %v2840
    %v2842 = vrot.slane %v2837, %v2841
    %v2844 = vadd.f32 %v2833, %v2842
    %v2845 = vadd.f32 %v2834, %v2842
    %v2846 = vadd.f32 %v2835, %v2842
    %v2847 = vadd.f32 %v2836, %v2842
    %v2848 = vld [vmem:[#allocation5] sm:$0xff]
    %v2849 = vld [vmem:[#allocation5 + $0x8] sm:$0xff]
    %v2850 = vld [vmem:[#allocation5 + $0x10] sm:$0xff]
    %v2851 = vld [vmem:[#allocation5 + $0x18] sm:$0xff]
    %v2852 = vld [vmem:[#allocation5 + $0x20] sm:$0xff]
    %v2853 = vld [vmem:[#allocation5 + $0x28] sm:$0xff]
    %v2854 = vld [vmem:[#allocation5 + $0x30] sm:$0xff]
    %v2855 = vld [vmem:[#allocation5 + $0x38] sm:$0xff]
    %v2856 = vld [vmem:[#allocation5 + $0x40] sm:$0xff]
    %v2857 = vld [vmem:[#allocation5 + $0x48] sm:$0xff]
    %v2858 = vld [vmem:[#allocation5 + $0x50] sm:$0xff]
    %v2859 = vld [vmem:[#allocation5 + $0x58] sm:$0xff]
    %v2860 = vld [vmem:[#allocation5 + $0x60] sm:$0xff]
    %v2861 = vld [vmem:[#allocation5 + $0x68] sm:$0xff]
    %v2862 = vld [vmem:[#allocation5 + $0x70] sm:$0xff]
    %v2863 = vld [vmem:[#allocation5 + $0x78] sm:$0xff]
    %v2864 = vld [vmem:[#allocation5 + $0x80] sm:$0xff]
    %v2865 = vld [vmem:[#allocation5 + $0x88] sm:$0xff]
    %v2866 = vld [vmem:[#allocation5 + $0x90] sm:$0xff]
    %v2867 = vld [vmem:[#allocation5 + $0x98] sm:$0xff]
    %v2868 = vld [vmem:[#allocation5 + $0xa0] sm:$0xff]
    %v2869 = vld [vmem:[#allocation5 + $0xa8] sm:$0xff]
    %v2870 = vld [vmem:[#allocation5 + $0xb0] sm:$0xff]
    %v2871 = vld [vmem:[#allocation5 + $0xb8] sm:$0xff]
    %v2872 = vld [vmem:[#allocation5 + $0xc0] sm:$0xff]
    %v2873 = vld [vmem:[#allocation5 + $0xc8] sm:$0xff]
    %v2874 = vld [vmem:[#allocation5 + $0xd0] sm:$0xff]
    %v2875 = vld [vmem:[#allocation5 + $0xd8] sm:$0xff]
    %v2876 = vld [vmem:[#allocation5 + $0xe0] sm:$0xff]
    %v2877 = vld [vmem:[#allocation5 + $0xe8] sm:$0xff]
    %v2878 = vld [vmem:[#allocation5 + $0xf0] sm:$0xff]
    %v2879 = vld [vmem:[#allocation5 + $0xf8] sm:$0xff]
    %v2880 = vld [vmem:[#allocation5 + $0x100] sm:$0xff]
    %v2881 = vld [vmem:[#allocation5 + $0x108] sm:$0xff]
    %v2882 = vld [vmem:[#allocation5 + $0x110] sm:$0xff]
    %v2883 = vld [vmem:[#allocation5 + $0x118] sm:$0xff]
    %v2884 = vld [vmem:[#allocation5 + $0x120] sm:$0xff]
    %v2885 = vld [vmem:[#allocation5 + $0x128] sm:$0xff]
    %v2886 = vld [vmem:[#allocation5 + $0x130] sm:$0xff]
    %v2887 = vld [vmem:[#allocation5 + $0x138] sm:$0xff]
    %v2888 = vld [vmem:[#allocation5 + $0x140] sm:$0xff]
    %v2889 = vld [vmem:[#allocation5 + $0x148] sm:$0xff]
    %v2890 = vld [vmem:[#allocation5 + $0x150] sm:$0xff]
    %v2891 = vld [vmem:[#allocation5 + $0x158] sm:$0xff]
    %v2892 = vld [vmem:[#allocation5 + $0x160] sm:$0xff]
    %v2893 = vld [vmem:[#allocation5 + $0x168] sm:$0xff]
    %v2894 = vld [vmem:[#allocation5 + $0x170] sm:$0xff]
    %v2895 = vld [vmem:[#allocation5 + $0x178] sm:$0xff]
    %v2896 = vld [vmem:[#allocation5 + $0x180] sm:$0xff]
    %v2897 = vld [vmem:[#allocation5 + $0x188] sm:$0xff]
    %v2898 = vld [vmem:[#allocation5 + $0x190] sm:$0xff]
    %v2899 = vld [vmem:[#allocation5 + $0x198] sm:$0xff]
    %v2900 = vld [vmem:[#allocation5 + $0x1a0] sm:$0xff]
    %v2901 = vld [vmem:[#allocation5 + $0x1a8] sm:$0xff]
    %v2902 = vld [vmem:[#allocation5 + $0x1b0] sm:$0xff]
    %v2903 = vld [vmem:[#allocation5 + $0x1b8] sm:$0xff]
    %v2904 = vld [vmem:[#allocation5 + $0x1c0] sm:$0xff]
    %v2905 = vld [vmem:[#allocation5 + $0x1c8] sm:$0xff]
    %v2906 = vld [vmem:[#allocation5 + $0x1d0] sm:$0xff]
    %v2907 = vld [vmem:[#allocation5 + $0x1d8] sm:$0xff]
    %v2908 = vld [vmem:[#allocation5 + $0x1e0] sm:$0xff]
    %v2909 = vld [vmem:[#allocation5 + $0x1e8] sm:$0xff]
    %v2910 = vld [vmem:[#allocation5 + $0x1f0] sm:$0xff]
    %v2911 = vld [vmem:[#allocation5 + $0x1f8] sm:$0xff]
    %v2912 = vld [vmem:[#allocation5 + $0x200] sm:$0xff]
    %v2913 = vld [vmem:[#allocation5 + $0x208] sm:$0xff]
    %v2914 = vld [vmem:[#allocation5 + $0x210] sm:$0xff]
    %v2915 = vld [vmem:[#allocation5 + $0x218] sm:$0xff]
    %v2916 = vld [vmem:[#allocation5 + $0x220] sm:$0xff]
    %v2917 = vld [vmem:[#allocation5 + $0x228] sm:$0xff]
    %v2918 = vld [vmem:[#allocation5 + $0x230] sm:$0xff]
    %v2919 = vld [vmem:[#allocation5 + $0x238] sm:$0xff]
    %v2920 = vld [vmem:[#allocation5 + $0x240] sm:$0xff]
    %v2921 = vld [vmem:[#allocation5 + $0x248] sm:$0xff]
    %v2922 = vld [vmem:[#allocation5 + $0x250] sm:$0xff]
    %v2923 = vld [vmem:[#allocation5 + $0x258] sm:$0xff]
    %v2924 = vld [vmem:[#allocation5 + $0x260] sm:$0xff]
    %v2925 = vld [vmem:[#allocation5 + $0x268] sm:$0xff]
    %v2926 = vld [vmem:[#allocation5 + $0x270] sm:$0xff]
    %v2927 = vld [vmem:[#allocation5 + $0x278] sm:$0xff]
    %v2928 = vld [vmem:[#allocation5 + $0x280] sm:$0xff]
    %v2929 = vld [vmem:[#allocation5 + $0x288] sm:$0xff]
    %v2930 = vld [vmem:[#allocation5 + $0x290] sm:$0xff]
    %v2931 = vld [vmem:[#allocation5 + $0x298] sm:$0xff]
    %v2932 = vld [vmem:[#allocation5 + $0x2a0] sm:$0xff]
    %v2933 = vld [vmem:[#allocation5 + $0x2a8] sm:$0xff]
    %v2934 = vld [vmem:[#allocation5 + $0x2b0] sm:$0xff]
    %v2935 = vld [vmem:[#allocation5 + $0x2b8] sm:$0xff]
    %v2936 = vld [vmem:[#allocation5 + $0x2c0] sm:$0xff]
    %v2937 = vld [vmem:[#allocation5 + $0x2c8] sm:$0xff]
    %v2938 = vld [vmem:[#allocation5 + $0x2d0] sm:$0xff]
    %v2939 = vld [vmem:[#allocation5 + $0x2d8] sm:$0xff]
    %v2940 = vld [vmem:[#allocation5 + $0x2e0] sm:$0xff]
    %v2941 = vld [vmem:[#allocation5 + $0x2e8] sm:$0xff]
    %v2942 = vld [vmem:[#allocation5 + $0x2f0] sm:$0xff]
    %v2943 = vld [vmem:[#allocation5 + $0x2f8] sm:$0xff]
    %v2944 = vld [vmem:[#allocation5 + $0x300] sm:$0xff]
    %v2945 = vld [vmem:[#allocation5 + $0x308] sm:$0xff]
    %v2946 = vld [vmem:[#allocation5 + $0x310] sm:$0xff]
    %v2947 = vld [vmem:[#allocation5 + $0x318] sm:$0xff]
    %v2948 = vld [vmem:[#allocation5 + $0x320] sm:$0xff]
    %v2949 = vld [vmem:[#allocation5 + $0x328] sm:$0xff]
    %v2950 = vld [vmem:[#allocation5 + $0x330] sm:$0xff]
    %v2951 = vld [vmem:[#allocation5 + $0x338] sm:$0xff]
    %v2952 = vld [vmem:[#allocation5 + $0x340] sm:$0xff]
    %v2953 = vld [vmem:[#allocation5 + $0x348] sm:$0xff]
    %v2954 = vld [vmem:[#allocation5 + $0x350] sm:$0xff]
    %v2955 = vld [vmem:[#allocation5 + $0x358] sm:$0xff]
    %v2956 = vld [vmem:[#allocation5 + $0x360] sm:$0xff]
    %v2957 = vld [vmem:[#allocation5 + $0x368] sm:$0xff]
    %v2958 = vld [vmem:[#allocation5 + $0x370] sm:$0xff]
    %v2959 = vld [vmem:[#allocation5 + $0x378] sm:$0xff]
    %v2960 = vcombine.high %v2844, 0.0
    %v2962 = vunpack.c.l.s4 1983009808
    %v2963 = vunpack.c.0.s8 %v2962
    %v2964 = vlaneseq
    %v2965 = vshrl.u32 %v2964, 7
    %v2966 = vsub.s32 %v2963, %v2965
    %v2967 = vrot.slane %v2844, %v2966
    %v2969 = vunpack.c.l.s4 1983009808
    %v2970 = vunpack.c.0.s8 %v2969
    %v2971 = vlaneseq
    %v2972 = vshrl.u32 %v2971, 7
    %v2973 = vsub.s32 %v2970, %v2972
    %v2974 = vrot.slane %v2960, %v2973
    %v2975 = vcombine.high %v2846, 0.0
    %v2977 = vunpack.c.l.s4 1983009808
    %v2978 = vunpack.c.0.s8 %v2977
    %v2979 = vlaneseq
    %v2980 = vshrl.u32 %v2979, 7
    %v2981 = vsub.s32 %v2978, %v2980
    %v2982 = vrot.slane %v2846, %v2981
    %v2984 = vunpack.c.l.s4 1983009808
    %v2985 = vunpack.c.0.s8 %v2984
    %v2986 = vlaneseq
    %v2987 = vshrl.u32 %v2986, 7
    %v2988 = vsub.s32 %v2985, %v2987
    %v2989 = vrot.slane %v2975, %v2988
    %v2990 = vcombine.low %v2967, %v2982
    %v2991 = vcombine.high %v2967, %v2982
    %v2993 = vunpack.c.l.s4 1934713408
    %v2994 = vunpack.c.0.s8 %v2993
    %v2995 = vlaneseq
    %v2996 = vshrl.u32 %v2995, 7
    %v2997 = vsub.s32 %v2994, %v2996
    %v2998 = vrot.slane %v2990, %v2997
    %v3000 = vunpack.c.l.s4 1934713408
    %v3001 = vunpack.c.0.s8 %v3000
    %v3002 = vlaneseq
    %v3003 = vshrl.u32 %v3002, 7
    %v3004 = vsub.s32 %v3001, %v3003
    %v3005 = vrot.slane %v2991, %v3004
    %v3006 = vcombine.low %v2974, %v2989
    %v3007 = vcombine.high %v2974, %v2989
    %v3009 = vunpack.c.l.s4 1934713408
    %v3010 = vunpack.c.0.s8 %v3009
    %v3011 = vlaneseq
    %v3012 = vshrl.u32 %v3011, 7
    %v3013 = vsub.s32 %v3010, %v3012
    %v3014 = vrot.slane %v3006, %v3013
    %v3016 = vunpack.c.l.s4 1934713408
    %v3017 = vunpack.c.0.s8 %v3016
    %v3018 = vlaneseq
    %v3019 = vshrl.u32 %v3018, 7
    %v3020 = vsub.s32 %v3017, %v3019
    %v3021 = vrot.slane %v3007, %v3020
    %v3022 = vcombine.high %v2998, 0.0
    %v3023 = vcombine.high %v3005, 0.0
    %v3024 = vcombine.high %v3014, 0.0
    %v3025 = vcombine.high %v3021, 0.0
    %v3027 = vunpack.c.l.s4 1983009808
    %v3028 = vunpack.c.0.s8 %v3027
    %v3029 = vlaneseq
    %v3030 = vshrl.u32 %v3029, 7
    %v3031 = vsub.s32 %v3028, %v3030
    %v3032 = vrot.slane %v2845, %v3031
    %v3033 = vcombine.high %v2845, 0.0
    %v3035 = vunpack.c.l.s4 1983009808
    %v3036 = vunpack.c.0.s8 %v3035
    %v3037 = vlaneseq
    %v3038 = vshrl.u32 %v3037, 7
    %v3039 = vsub.s32 %v3036, %v3038
    %v3040 = vrot.slane %v2847, %v3039
    %v3041 = vcombine.high %v2847, 0.0
    %v3042 = vcombine.low %v3032, %v3040
    %v3043 = vcombine.high %v3032, %v3040
    %v3045 = vunpack.c.l.s4 1934713408
    %v3046 = vunpack.c.0.s8 %v3045
    %v3047 = vlaneseq
    %v3048 = vshrl.u32 %v3047, 7
    %v3049 = vsub.s32 %v3046, %v3048
    %v3050 = vrot.slane %v3042, %v3049
    %v3052 = vunpack.c.l.s4 1934713408
    %v3053 = vunpack.c.0.s8 %v3052
    %v3054 = vlaneseq
    %v3055 = vshrl.u32 %v3054, 7
    %v3056 = vsub.s32 %v3053, %v3055
    %v3057 = vrot.slane %v3043, %v3056
    %v3058 = vcombine.low %v3033, %v3041
    %v3060 = vunpack.c.l.s4 1934713408
    %v3061 = vunpack.c.0.s8 %v3060
    %v3062 = vlaneseq
    %v3063 = vshrl.u32 %v3062, 7
    %v3064 = vsub.s32 %v3061, %v3063
    %v3065 = vrot.slane %v3058, %v3064
    %v3066 = vcombine.high %v3050, 0.0
    %v3067 = vcombine.high %v3057, 0.0
    %v3068 = vcombine.high %v3065, 0.0
    %v3070 = vsel %vm910, %v2998, 0
    %3072 = vmatprep.subr.mxu0 0.0
    %3073 = vmatpush1.msra.mxu0 0.0
    %3074 = vmatprep.subr.mxu0 0.0
    %3075 = vmatpush1.msra.mxu0 0.0
    %3076 = vmatprep.subr.mxu0 0.0
    %3077 = vmatpush1.msra.mxu0 0.0
    %3078 = vmatprep.subr.mxu0 0.0
    %3079 = vmatpush1.msra.mxu0 0.0
    %3080 = vmatprep.subr.mxu0 0.0
    %3081 = vmatpush1.msra.mxu0 0.0
    %3082 = vmatprep.subr.mxu0 0.0
    %3083 = vmatpush1.msra.mxu0 0.0
    %3084 = vmatprep.subr.mxu0 0.0
    %3085 = vmatpush1.msra.mxu0 0.0
    %3086 = vmatprep.subr.mxu0 0.0
    %3087 = vmatpush1.msra.mxu0 0.0
    %3088 = vmatprep.subr.mxu0 0.0
    %3089 = vmatpush1.msra.mxu0 %v2855
    %3090 = vmatprep.subr.mxu0 0.0
    %3091 = vmatpush1.msra.mxu0 %v2854
    %3092 = vmatprep.subr.mxu0 0.0
    %3093 = vmatpush1.msra.mxu0 %v2853
    %3094 = vmatprep.subr.mxu0 0.0
    %3095 = vmatpush1.msra.mxu0 %v2852
    %3096 = vmatprep.subr.mxu0 0.0
    %3097 = vmatpush1.msra.mxu0 %v2851
    %3098 = vmatprep.subr.mxu0 0.0
    %3099 = vmatpush1.msra.mxu0 %v2850
    %3100 = vmatprep.subr.mxu0 0.0
    %3101 = vmatpush1.msra.mxu0 %v2849
    %3102 = vmatprep.subr.mxu0 0.0
    %3103 = vmatpush1.msra.mxu0 %v2848
    %3104 = vmatprep.subr.mxu0 0.0
    %3105 = vmatpush2.msra.mxu0 0.0
    %3106 = vmatprep.subr.mxu0 0.0
    %3107 = vmatpush2.msra.mxu0 0.0
    %3108 = vmatprep.subr.mxu0 0.0
    %3109 = vmatpush2.msra.mxu0 0.0
    %3110 = vmatprep.subr.mxu0 0.0
    %3111 = vmatpush2.msra.mxu0 0.0
    %3112 = vmatprep.subr.mxu0 0.0
    %3113 = vmatpush2.msra.mxu0 0.0
    %3114 = vmatprep.subr.mxu0 0.0
    %3115 = vmatpush2.msra.mxu0 0.0
    %3116 = vmatprep.subr.mxu0 0.0
    %3117 = vmatpush2.msra.mxu0 0.0
    %3118 = vmatprep.subr.mxu0 0.0
    %3119 = vmatpush2.msra.mxu0 0.0
    %3120 = vmatprep.subr.mxu0 0.0
    %3121 = vmatpush2.msra.mxu0 0.0
    %3122 = vmatprep.subr.mxu0 0.0
    %3123 = vmatpush2.msra.mxu0 0.0
    %3124 = vmatprep.subr.mxu0 0.0
    %3125 = vmatpush2.msra.mxu0 0.0
    %3126 = vmatprep.subr.mxu0 0.0
    %3127 = vmatpush2.msra.mxu0 0.0
    %3128 = vmatprep.subr.mxu0 0.0
    %3129 = vmatpush2.msra.mxu0 0.0
    %3130 = vmatprep.subr.mxu0 0.0
    %3131 = vmatpush2.msra.mxu0 0.0
    %3132 = vmatprep.subr.mxu0 0.0
    %3133 = vmatpush2.msra.mxu0 0.0
    %3134 = vmatprep.subr.mxu0 0.0
    %3135 = vmatpush2.msra.mxu0 0.0
    %3136 = vmatprep.mubr.f32.mxu0 0.0
    %3137 = vmatmul.mubr.f32.gmra.mxu0 %v3070
    %v3138 = vpop.f32.mrf.mxu0
    %v3139 = vadd.f32 0.0, %v3138
    %v3140 = vpop.f32.mrf.mxu0
    %3141 = vdwg.mxu0
    %v3143 = vsel %vm910, %v3022, 0
    %3145 = vmatprep.subr.mxu0 0.0
    %3146 = vmatpush1.msra.mxu0 0.0
    %3147 = vmatprep.subr.mxu0 0.0
    %3148 = vmatpush1.msra.mxu0 0.0
    %3149 = vmatprep.subr.mxu0 0.0
    %3150 = vmatpush1.msra.mxu0 0.0
    %3151 = vmatprep.subr.mxu0 0.0
    %3152 = vmatpush1.msra.mxu0 0.0
    %3153 = vmatprep.subr.mxu0 0.0
    %3154 = vmatpush1.msra.mxu0 0.0
    %3155 = vmatprep.subr.mxu0 0.0
    %3156 = vmatpush1.msra.mxu0 0.0
    %3157 = vmatprep.subr.mxu0 0.0
    %3158 = vmatpush1.msra.mxu0 0.0
    %3159 = vmatprep.subr.mxu0 0.0
    %3160 = vmatpush1.msra.mxu0 0.0
    %3161 = vmatprep.subr.mxu0 0.0
    %3162 = vmatpush1.msra.mxu0 %v2863
    %3163 = vmatprep.subr.mxu0 0.0
    %3164 = vmatpush1.msra.mxu0 %v2862
    %3165 = vmatprep.subr.mxu0 0.0
    %3166 = vmatpush1.msra.mxu0 %v2861
    %3167 = vmatprep.subr.mxu0 0.0
    %3168 = vmatpush1.msra.mxu0 %v2860
    %3169 = vmatprep.subr.mxu0 0.0
    %3170 = vmatpush1.msra.mxu0 %v2859
    %3171 = vmatprep.subr.mxu0 0.0
    %3172 = vmatpush1.msra.mxu0 %v2858
    %3173 = vmatprep.subr.mxu0 0.0
    %3174 = vmatpush1.msra.mxu0 %v2857
    %3175 = vmatprep.subr.mxu0 0.0
    %3176 = vmatpush1.msra.mxu0 %v2856
    %3177 = vmatprep.subr.mxu0 0.0
    %3178 = vmatpush2.msra.mxu0 0.0
    %3179 = vmatprep.subr.mxu0 0.0
    %3180 = vmatpush2.msra.mxu0 0.0
    %3181 = vmatprep.subr.mxu0 0.0
    %3182 = vmatpush2.msra.mxu0 0.0
    %3183 = vmatprep.subr.mxu0 0.0
    %3184 = vmatpush2.msra.mxu0 0.0
    %3185 = vmatprep.subr.mxu0 0.0
    %3186 = vmatpush2.msra.mxu0 0.0
    %3187 = vmatprep.subr.mxu0 0.0
    %3188 = vmatpush2.msra.mxu0 0.0
    %3189 = vmatprep.subr.mxu0 0.0
    %3190 = vmatpush2.msra.mxu0 0.0
    %3191 = vmatprep.subr.mxu0 0.0
    %3192 = vmatpush2.msra.mxu0 0.0
    %3193 = vmatprep.subr.mxu0 0.0
    %3194 = vmatpush2.msra.mxu0 0.0
    %3195 = vmatprep.subr.mxu0 0.0
    %3196 = vmatpush2.msra.mxu0 0.0
    %3197 = vmatprep.subr.mxu0 0.0
    %3198 = vmatpush2.msra.mxu0 0.0
    %3199 = vmatprep.subr.mxu0 0.0
    %3200 = vmatpush2.msra.mxu0 0.0
    %3201 = vmatprep.subr.mxu0 0.0
    %3202 = vmatpush2.msra.mxu0 0.0
    %3203 = vmatprep.subr.mxu0 0.0
    %3204 = vmatpush2.msra.mxu0 0.0
    %3205 = vmatprep.subr.mxu0 0.0
    %3206 = vmatpush2.msra.mxu0 0.0
    %3207 = vmatprep.subr.mxu0 0.0
    %3208 = vmatpush2.msra.mxu0 0.0
    %3209 = vmatprep.mubr.f32.mxu0 0.0
    %3210 = vmatmul.mubr.f32.gmra.mxu0 %v3143
    %v3211 = vpop.f32.mrf.mxu0
    %v3212 = vadd.f32 0.0, %v3211
    %v3213 = vpop.f32.mrf.mxu0
    %3214 = vdwg.mxu0
    %v3216 = vsel %vm910, %v3005, 0
    %3218 = vmatprep.subr.mxu0 0.0
    %3219 = vmatpush1.msra.mxu0 0.0
    %3220 = vmatprep.subr.mxu0 0.0
    %3221 = vmatpush1.msra.mxu0 0.0
    %3222 = vmatprep.subr.mxu0 0.0
    %3223 = vmatpush1.msra.mxu0 0.0
    %3224 = vmatprep.subr.mxu0 0.0
    %3225 = vmatpush1.msra.mxu0 0.0
    %3226 = vmatprep.subr.mxu0 0.0
    %3227 = vmatpush1.msra.mxu0 0.0
    %3228 = vmatprep.subr.mxu0 0.0
    %3229 = vmatpush1.msra.mxu0 0.0
    %3230 = vmatprep.subr.mxu0 0.0
    %3231 = vmatpush1.msra.mxu0 0.0
    %3232 = vmatprep.subr.mxu0 0.0
    %3233 = vmatpush1.msra.mxu0 0.0
    %3234 = vmatprep.subr.mxu0 0.0
    %3235 = vmatpush1.msra.mxu0 %v2871
    %3236 = vmatprep.subr.mxu0 0.0
    %3237 = vmatpush1.msra.mxu0 %v2870
    %3238 = vmatprep.subr.mxu0 0.0
    %3239 = vmatpush1.msra.mxu0 %v2869
    %3240 = vmatprep.subr.mxu0 0.0
    %3241 = vmatpush1.msra.mxu0 %v2868
    %3242 = vmatprep.subr.mxu0 0.0
    %3243 = vmatpush1.msra.mxu0 %v2867
    %3244 = vmatprep.subr.mxu0 0.0
    %3245 = vmatpush1.msra.mxu0 %v2866
    %3246 = vmatprep.subr.mxu0 0.0
    %3247 = vmatpush1.msra.mxu0 %v2865
    %3248 = vmatprep.subr.mxu0 0.0
    %3249 = vmatpush1.msra.mxu0 %v2864
    %3250 = vmatprep.subr.mxu0 0.0
    %3251 = vmatpush2.msra.mxu0 0.0
    %3252 = vmatprep.subr.mxu0 0.0
    %3253 = vmatpush2.msra.mxu0 0.0
    %3254 = vmatprep.subr.mxu0 0.0
    %3255 = vmatpush2.msra.mxu0 0.0
    %3256 = vmatprep.subr.mxu0 0.0
    %3257 = vmatpush2.msra.mxu0 0.0
    %3258 = vmatprep.subr.mxu0 0.0
    %3259 = vmatpush2.msra.mxu0 0.0
    %3260 = vmatprep.subr.mxu0 0.0
    %3261 = vmatpush2.msra.mxu0 0.0
    %3262 = vmatprep.subr.mxu0 0.0
    %3263 = vmatpush2.msra.mxu0 0.0
    %3264 = vmatprep.subr.mxu0 0.0
    %3265 = vmatpush2.msra.mxu0 0.0
    %3266 = vmatprep.subr.mxu0 0.0
    %3267 = vmatpush2.msra.mxu0 0.0
    %3268 = vmatprep.subr.mxu0 0.0
    %3269 = vmatpush2.msra.mxu0 0.0
    %3270 = vmatprep.subr.mxu0 0.0
    %3271 = vmatpush2.msra.mxu0 0.0
    %3272 = vmatprep.subr.mxu0 0.0
    %3273 = vmatpush2.msra.mxu0 0.0
    %3274 = vmatprep.subr.mxu0 0.0
    %3275 = vmatpush2.msra.mxu0 0.0
    %3276 = vmatprep.subr.mxu0 0.0
    %3277 = vmatpush2.msra.mxu0 0.0
    %3278 = vmatprep.subr.mxu0 0.0
    %3279 = vmatpush2.msra.mxu0 0.0
    %3280 = vmatprep.subr.mxu0 0.0
    %3281 = vmatpush2.msra.mxu0 0.0
    %3282 = vmatprep.mubr.f32.mxu0 0.0
    %3283 = vmatmul.mubr.f32.gmra.mxu0 %v3216
    %v3284 = vpop.f32.mrf.mxu0
    %v3285 = vadd.f32 0.0, %v3284
    %v3286 = vpop.f32.mrf.mxu0
    %3287 = vdwg.mxu0
    %v3289 = vsel %vm910, %v3023, 0
    %3291 = vmatprep.subr.mxu0 0.0
    %3292 = vmatpush1.msra.mxu0 0.0
    %3293 = vmatprep.subr.mxu0 0.0
    %3294 = vmatpush1.msra.mxu0 0.0
    %3295 = vmatprep.subr.mxu0 0.0
    %3296 = vmatpush1.msra.mxu0 0.0
    %3297 = vmatprep.subr.mxu0 0.0
    %3298 = vmatpush1.msra.mxu0 0.0
    %3299 = vmatprep.subr.mxu0 0.0
    %3300 = vmatpush1.msra.mxu0 0.0
    %3301 = vmatprep.subr.mxu0 0.0
    %3302 = vmatpush1.msra.mxu0 0.0
    %3303 = vmatprep.subr.mxu0 0.0
    %3304 = vmatpush1.msra.mxu0 0.0
    %3305 = vmatprep.subr.mxu0 0.0
    %3306 = vmatpush1.msra.mxu0 0.0
    %3307 = vmatprep.subr.mxu0 0.0
    %3308 = vmatpush1.msra.mxu0 %v2879
    %3309 = vmatprep.subr.mxu0 0.0
    %3310 = vmatpush1.msra.mxu0 %v2878
    %3311 = vmatprep.subr.mxu0 0.0
    %3312 = vmatpush1.msra.mxu0 %v2877
    %3313 = vmatprep.subr.mxu0 0.0
    %3314 = vmatpush1.msra.mxu0 %v2876
    %3315 = vmatprep.subr.mxu0 0.0
    %3316 = vmatpush1.msra.mxu0 %v2875
    %3317 = vmatprep.subr.mxu0 0.0
    %3318 = vmatpush1.msra.mxu0 %v2874
    %3319 = vmatprep.subr.mxu0 0.0
    %3320 = vmatpush1.msra.mxu0 %v2873
    %3321 = vmatprep.subr.mxu0 0.0
    %3322 = vmatpush1.msra.mxu0 %v2872
    %3323 = vmatprep.subr.mxu0 0.0
    %3324 = vmatpush2.msra.mxu0 0.0
    %3325 = vmatprep.subr.mxu0 0.0
    %3326 = vmatpush2.msra.mxu0 0.0
    %3327 = vmatprep.subr.mxu0 0.0
    %3328 = vmatpush2.msra.mxu0 0.0
    %3329 = vmatprep.subr.mxu0 0.0
    %3330 = vmatpush2.msra.mxu0 0.0
    %3331 = vmatprep.subr.mxu0 0.0
    %3332 = vmatpush2.msra.mxu0 0.0
    %3333 = vmatprep.subr.mxu0 0.0
    %3334 = vmatpush2.msra.mxu0 0.0
    %3335 = vmatprep.subr.mxu0 0.0
    %3336 = vmatpush2.msra.mxu0 0.0
    %3337 = vmatprep.subr.mxu0 0.0
    %3338 = vmatpush2.msra.mxu0 0.0
    %3339 = vmatprep.subr.mxu0 0.0
    %3340 = vmatpush2.msra.mxu0 0.0
    %3341 = vmatprep.subr.mxu0 0.0
    %3342 = vmatpush2.msra.mxu0 0.0
    %3343 = vmatprep.subr.mxu0 0.0
    %3344 = vmatpush2.msra.mxu0 0.0
    %3345 = vmatprep.subr.mxu0 0.0
    %3346 = vmatpush2.msra.mxu0 0.0
    %3347 = vmatprep.subr.mxu0 0.0
    %3348 = vmatpush2.msra.mxu0 0.0
    %3349 = vmatprep.subr.mxu0 0.0
    %3350 = vmatpush2.msra.mxu0 0.0
    %3351 = vmatprep.subr.mxu0 0.0
    %3352 = vmatpush2.msra.mxu0 0.0
    %3353 = vmatprep.subr.mxu0 0.0
    %3354 = vmatpush2.msra.mxu0 0.0
    %3355 = vmatprep.mubr.f32.mxu0 0.0
    %3356 = vmatmul.mubr.f32.gmra.mxu0 %v3289
    %v3357 = vpop.f32.mrf.mxu0
    %v3358 = vadd.f32 0.0, %v3357
    %v3359 = vpop.f32.mrf.mxu0
    %3360 = vdwg.mxu0
    %v3362 = vsel %vm910, %v3014, 0
    %3364 = vmatprep.subr.mxu0 0.0
    %3365 = vmatpush1.msra.mxu0 0.0
    %3366 = vmatprep.subr.mxu0 0.0
    %3367 = vmatpush1.msra.mxu0 0.0
    %3368 = vmatprep.subr.mxu0 0.0
    %3369 = vmatpush1.msra.mxu0 0.0
    %3370 = vmatprep.subr.mxu0 0.0
    %3371 = vmatpush1.msra.mxu0 0.0
    %3372 = vmatprep.subr.mxu0 0.0
    %3373 = vmatpush1.msra.mxu0 0.0
    %3374 = vmatprep.subr.mxu0 0.0
    %3375 = vmatpush1.msra.mxu0 0.0
    %3376 = vmatprep.subr.mxu0 0.0
    %3377 = vmatpush1.msra.mxu0 0.0
    %3378 = vmatprep.subr.mxu0 0.0
    %3379 = vmatpush1.msra.mxu0 0.0
    %3380 = vmatprep.subr.mxu0 0.0
    %3381 = vmatpush1.msra.mxu0 %v2887
    %3382 = vmatprep.subr.mxu0 0.0
    %3383 = vmatpush1.msra.mxu0 %v2886
    %3384 = vmatprep.subr.mxu0 0.0
    %3385 = vmatpush1.msra.mxu0 %v2885
    %3386 = vmatprep.subr.mxu0 0.0
    %3387 = vmatpush1.msra.mxu0 %v2884
    %3388 = vmatprep.subr.mxu0 0.0
    %3389 = vmatpush1.msra.mxu0 %v2883
    %3390 = vmatprep.subr.mxu0 0.0
    %3391 = vmatpush1.msra.mxu0 %v2882
    %3392 = vmatprep.subr.mxu0 0.0
    %3393 = vmatpush1.msra.mxu0 %v2881
    %3394 = vmatprep.subr.mxu0 0.0
    %3395 = vmatpush1.msra.mxu0 %v2880
    %3396 = vmatprep.subr.mxu0 0.0
    %3397 = vmatpush2.msra.mxu0 0.0
    %3398 = vmatprep.subr.mxu0 0.0
    %3399 = vmatpush2.msra.mxu0 0.0
    %3400 = vmatprep.subr.mxu0 0.0
    %3401 = vmatpush2.msra.mxu0 0.0
    %3402 = vmatprep.subr.mxu0 0.0
    %3403 = vmatpush2.msra.mxu0 0.0
    %3404 = vmatprep.subr.mxu0 0.0
    %3405 = vmatpush2.msra.mxu0 0.0
    %3406 = vmatprep.subr.mxu0 0.0
    %3407 = vmatpush2.msra.mxu0 0.0
    %3408 = vmatprep.subr.mxu0 0.0
    %3409 = vmatpush2.msra.mxu0 0.0
    %3410 = vmatprep.subr.mxu0 0.0
    %3411 = vmatpush2.msra.mxu0 0.0
    %3412 = vmatprep.subr.mxu0 0.0
    %3413 = vmatpush2.msra.mxu0 0.0
    %3414 = vmatprep.subr.mxu0 0.0
    %3415 = vmatpush2.msra.mxu0 0.0
    %3416 = vmatprep.subr.mxu0 0.0
    %3417 = vmatpush2.msra.mxu0 0.0
    %3418 = vmatprep.subr.mxu0 0.0
    %3419 = vmatpush2.msra.mxu0 0.0
    %3420 = vmatprep.subr.mxu0 0.0
    %3421 = vmatpush2.msra.mxu0 0.0
    %3422 = vmatprep.subr.mxu0 0.0
    %3423 = vmatpush2.msra.mxu0 0.0
    %3424 = vmatprep.subr.mxu0 0.0
    %3425 = vmatpush2.msra.mxu0 0.0
    %3426 = vmatprep.subr.mxu0 0.0
    %3427 = vmatpush2.msra.mxu0 0.0
    %3428 = vmatprep.mubr.f32.mxu0 0.0
    %3429 = vmatmul.mubr.f32.gmra.mxu0 %v3362
    %v3430 = vpop.f32.mrf.mxu0
    %v3431 = vadd.f32 0.0, %v3430
    %v3432 = vpop.f32.mrf.mxu0
    %3433 = vdwg.mxu0
    %v3435 = vsel %vm910, %v3024, 0
    %3437 = vmatprep.subr.mxu0 0.0
    %3438 = vmatpush1.msra.mxu0 0.0
    %3439 = vmatprep.subr.mxu0 0.0
    %3440 = vmatpush1.msra.mxu0 0.0
    %3441 = vmatprep.subr.mxu0 0.0
    %3442 = vmatpush1.msra.mxu0 0.0
    %3443 = vmatprep.subr.mxu0 0.0
    %3444 = vmatpush1.msra.mxu0 0.0
    %3445 = vmatprep.subr.mxu0 0.0
    %3446 = vmatpush1.msra.mxu0 0.0
    %3447 = vmatprep.subr.mxu0 0.0
    %3448 = vmatpush1.msra.mxu0 0.0
    %3449 = vmatprep.subr.mxu0 0.0
    %3450 = vmatpush1.msra.mxu0 0.0
    %3451 = vmatprep.subr.mxu0 0.0
    %3452 = vmatpush1.msra.mxu0 0.0
    %3453 = vmatprep.subr.mxu0 0.0
    %3454 = vmatpush1.msra.mxu0 %v2895
    %3455 = vmatprep.subr.mxu0 0.0
    %3456 = vmatpush1.msra.mxu0 %v2894
    %3457 = vmatprep.subr.mxu0 0.0
    %3458 = vmatpush1.msra.mxu0 %v2893
    %3459 = vmatprep.subr.mxu0 0.0
    %3460 = vmatpush1.msra.mxu0 %v2892
    %3461 = vmatprep.subr.mxu0 0.0
    %3462 = vmatpush1.msra.mxu0 %v2891
    %3463 = vmatprep.subr.mxu0 0.0
    %3464 = vmatpush1.msra.mxu0 %v2890
    %3465 = vmatprep.subr.mxu0 0.0
    %3466 = vmatpush1.msra.mxu0 %v2889
    %3467 = vmatprep.subr.mxu0 0.0
    %3468 = vmatpush1.msra.mxu0 %v2888
    %3469 = vmatprep.subr.mxu0 0.0
    %3470 = vmatpush2.msra.mxu0 0.0
    %3471 = vmatprep.subr.mxu0 0.0
    %3472 = vmatpush2.msra.mxu0 0.0
    %3473 = vmatprep.subr.mxu0 0.0
    %3474 = vmatpush2.msra.mxu0 0.0
    %3475 = vmatprep.subr.mxu0 0.0
    %3476 = vmatpush2.msra.mxu0 0.0
    %3477 = vmatprep.subr.mxu0 0.0
    %3478 = vmatpush2.msra.mxu0 0.0
    %3479 = vmatprep.subr.mxu0 0.0
    %3480 = vmatpush2.msra.mxu0 0.0
    %3481 = vmatprep.subr.mxu0 0.0
    %3482 = vmatpush2.msra.mxu0 0.0
    %3483 = vmatprep.subr.mxu0 0.0
    %3484 = vmatpush2.msra.mxu0 0.0
    %3485 = vmatprep.subr.mxu0 0.0
    %3486 = vmatpush2.msra.mxu0 0.0
    %3487 = vmatprep.subr.mxu0 0.0
    %3488 = vmatpush2.msra.mxu0 0.0
    %3489 = vmatprep.subr.mxu0 0.0
    %3490 = vmatpush2.msra.mxu0 0.0
    %3491 = vmatprep.subr.mxu0 0.0
    %3492 = vmatpush2.msra.mxu0 0.0
    %3493 = vmatprep.subr.mxu0 0.0
    %3494 = vmatpush2.msra.mxu0 0.0
    %3495 = vmatprep.subr.mxu0 0.0
    %3496 = vmatpush2.msra.mxu0 0.0
    %3497 = vmatprep.subr.mxu0 0.0
    %3498 = vmatpush2.msra.mxu0 0.0
    %3499 = vmatprep.subr.mxu0 0.0
    %3500 = vmatpush2.msra.mxu0 0.0
    %3501 = vmatprep.mubr.f32.mxu0 0.0
    %3502 = vmatmul.mubr.f32.gmra.mxu0 %v3435
    %v3503 = vpop.f32.mrf.mxu0
    %v3504 = vadd.f32 0.0, %v3503
    %v3505 = vpop.f32.mrf.mxu0
    %3506 = vdwg.mxu0
    %v3508 = vsel %vm910, %v3021, 0
    %3510 = vmatprep.subr.mxu0 0.0
    %3511 = vmatpush1.msra.mxu0 0.0
    %3512 = vmatprep.subr.mxu0 0.0
    %3513 = vmatpush1.msra.mxu0 0.0
    %3514 = vmatprep.subr.mxu0 0.0
    %3515 = vmatpush1.msra.mxu0 0.0
    %3516 = vmatprep.subr.mxu0 0.0
    %3517 = vmatpush1.msra.mxu0 0.0
    %3518 = vmatprep.subr.mxu0 0.0
    %3519 = vmatpush1.msra.mxu0 0.0
    %3520 = vmatprep.subr.mxu0 0.0
    %3521 = vmatpush1.msra.mxu0 0.0
    %3522 = vmatprep.subr.mxu0 0.0
    %3523 = vmatpush1.msra.mxu0 0.0
    %3524 = vmatprep.subr.mxu0 0.0
    %3525 = vmatpush1.msra.mxu0 0.0
    %3526 = vmatprep.subr.mxu0 0.0
    %3527 = vmatpush1.msra.mxu0 %v2903
    %3528 = vmatprep.subr.mxu0 0.0
    %3529 = vmatpush1.msra.mxu0 %v2902
    %3530 = vmatprep.subr.mxu0 0.0
    %3531 = vmatpush1.msra.mxu0 %v2901
    %3532 = vmatprep.subr.mxu0 0.0
    %3533 = vmatpush1.msra.mxu0 %v2900
    %3534 = vmatprep.subr.mxu0 0.0
    %3535 = vmatpush1.msra.mxu0 %v2899
    %3536 = vmatprep.subr.mxu0 0.0
    %3537 = vmatpush1.msra.mxu0 %v2898
    %3538 = vmatprep.subr.mxu0 0.0
    %3539 = vmatpush1.msra.mxu0 %v2897
    %3540 = vmatprep.subr.mxu0 0.0
    %3541 = vmatpush1.msra.mxu0 %v2896
    %3542 = vmatprep.subr.mxu0 0.0
    %3543 = vmatpush2.msra.mxu0 0.0
    %3544 = vmatprep.subr.mxu0 0.0
    %3545 = vmatpush2.msra.mxu0 0.0
    %3546 = vmatprep.subr.mxu0 0.0
    %3547 = vmatpush2.msra.mxu0 0.0
    %3548 = vmatprep.subr.mxu0 0.0
    %3549 = vmatpush2.msra.mxu0 0.0
    %3550 = vmatprep.subr.mxu0 0.0
    %3551 = vmatpush2.msra.mxu0 0.0
    %3552 = vmatprep.subr.mxu0 0.0
    %3553 = vmatpush2.msra.mxu0 0.0
    %3554 = vmatprep.subr.mxu0 0.0
    %3555 = vmatpush2.msra.mxu0 0.0
    %3556 = vmatprep.subr.mxu0 0.0
    %3557 = vmatpush2.msra.mxu0 0.0
    %3558 = vmatprep.subr.mxu0 0.0
    %3559 = vmatpush2.msra.mxu0 0.0
    %3560 = vmatprep.subr.mxu0 0.0
    %3561 = vmatpush2.msra.mxu0 0.0
    %3562 = vmatprep.subr.mxu0 0.0
    %3563 = vmatpush2.msra.mxu0 0.0
    %3564 = vmatprep.subr.mxu0 0.0
    %3565 = vmatpush2.msra.mxu0 0.0
    %3566 = vmatprep.subr.mxu0 0.0
    %3567 = vmatpush2.msra.mxu0 0.0
    %3568 = vmatprep.subr.mxu0 0.0
    %3569 = vmatpush2.msra.mxu0 0.0
    %3570 = vmatprep.subr.mxu0 0.0
    %3571 = vmatpush2.msra.mxu0 0.0
    %3572 = vmatprep.subr.mxu0 0.0
    %3573 = vmatpush2.msra.mxu0 0.0
    %3574 = vmatprep.mubr.f32.mxu0 0.0
    %3575 = vmatmul.mubr.f32.gmra.mxu0 %v3508
    %v3576 = vpop.f32.mrf.mxu0
    %v3577 = vadd.f32 0.0, %v3576
    %v3578 = vpop.f32.mrf.mxu0
    %3579 = vdwg.mxu0
    %v3581 = vsel %vm910, %v3025, 0
    %3583 = vmatprep.subr.mxu0 0.0
    %3584 = vmatpush1.msra.mxu0 0.0
    %3585 = vmatprep.subr.mxu0 0.0
    %3586 = vmatpush1.msra.mxu0 0.0
    %3587 = vmatprep.subr.mxu0 0.0
    %3588 = vmatpush1.msra.mxu0 0.0
    %3589 = vmatprep.subr.mxu0 0.0
    %3590 = vmatpush1.msra.mxu0 0.0
    %3591 = vmatprep.subr.mxu0 0.0
    %3592 = vmatpush1.msra.mxu0 0.0
    %3593 = vmatprep.subr.mxu0 0.0
    %3594 = vmatpush1.msra.mxu0 0.0
    %3595 = vmatprep.subr.mxu0 0.0
    %3596 = vmatpush1.msra.mxu0 0.0
    %3597 = vmatprep.subr.mxu0 0.0
    %3598 = vmatpush1.msra.mxu0 0.0
    %3599 = vmatprep.subr.mxu0 0.0
    %3600 = vmatpush1.msra.mxu0 %v2911
    %3601 = vmatprep.subr.mxu0 0.0
    %3602 = vmatpush1.msra.mxu0 %v2910
    %3603 = vmatprep.subr.mxu0 0.0
    %3604 = vmatpush1.msra.mxu0 %v2909
    %3605 = vmatprep.subr.mxu0 0.0
    %3606 = vmatpush1.msra.mxu0 %v2908
    %3607 = vmatprep.subr.mxu0 0.0
    %3608 = vmatpush1.msra.mxu0 %v2907
    %3609 = vmatprep.subr.mxu0 0.0
    %3610 = vmatpush1.msra.mxu0 %v2906
    %3611 = vmatprep.subr.mxu0 0.0
    %3612 = vmatpush1.msra.mxu0 %v2905
    %3613 = vmatprep.subr.mxu0 0.0
    %3614 = vmatpush1.msra.mxu0 %v2904
    %3615 = vmatprep.subr.mxu0 0.0
    %3616 = vmatpush2.msra.mxu0 0.0
    %3617 = vmatprep.subr.mxu0 0.0
    %3618 = vmatpush2.msra.mxu0 0.0
    %3619 = vmatprep.subr.mxu0 0.0
    %3620 = vmatpush2.msra.mxu0 0.0
    %3621 = vmatprep.subr.mxu0 0.0
    %3622 = vmatpush2.msra.mxu0 0.0
    %3623 = vmatprep.subr.mxu0 0.0
    %3624 = vmatpush2.msra.mxu0 0.0
    %3625 = vmatprep.subr.mxu0 0.0
    %3626 = vmatpush2.msra.mxu0 0.0
    %3627 = vmatprep.subr.mxu0 0.0
    %3628 = vmatpush2.msra.mxu0 0.0
    %3629 = vmatprep.subr.mxu0 0.0
    %3630 = vmatpush2.msra.mxu0 0.0
    %3631 = vmatprep.subr.mxu0 0.0
    %3632 = vmatpush2.msra.mxu0 0.0
    %3633 = vmatprep.subr.mxu0 0.0
    %3634 = vmatpush2.msra.mxu0 0.0
    %3635 = vmatprep.subr.mxu0 0.0
    %3636 = vmatpush2.msra.mxu0 0.0
    %3637 = vmatprep.subr.mxu0 0.0
    %3638 = vmatpush2.msra.mxu0 0.0
    %3639 = vmatprep.subr.mxu0 0.0
    %3640 = vmatpush2.msra.mxu0 0.0
    %3641 = vmatprep.subr.mxu0 0.0
    %3642 = vmatpush2.msra.mxu0 0.0
    %3643 = vmatprep.subr.mxu0 0.0
    %3644 = vmatpush2.msra.mxu0 0.0
    %3645 = vmatprep.subr.mxu0 0.0
    %3646 = vmatpush2.msra.mxu0 0.0
    %3647 = vmatprep.mubr.f32.mxu0 0.0
    %3648 = vmatmul.mubr.f32.gmra.mxu0 %v3581
    %v3649 = vpop.f32.mrf.mxu0
    %v3650 = vadd.f32 0.0, %v3649
    %v3651 = vpop.f32.mrf.mxu0
    %3652 = vdwg.mxu0
    %v3654 = vsel %vm910, %v3050, 0
    %3656 = vmatprep.subr.mxu0 0.0
    %3657 = vmatpush1.msra.mxu0 0.0
    %3658 = vmatprep.subr.mxu0 0.0
    %3659 = vmatpush1.msra.mxu0 0.0
    %3660 = vmatprep.subr.mxu0 0.0
    %3661 = vmatpush1.msra.mxu0 0.0
    %3662 = vmatprep.subr.mxu0 0.0
    %3663 = vmatpush1.msra.mxu0 0.0
    %3664 = vmatprep.subr.mxu0 0.0
    %3665 = vmatpush1.msra.mxu0 0.0
    %3666 = vmatprep.subr.mxu0 0.0
    %3667 = vmatpush1.msra.mxu0 0.0
    %3668 = vmatprep.subr.mxu0 0.0
    %3669 = vmatpush1.msra.mxu0 0.0
    %3670 = vmatprep.subr.mxu0 0.0
    %3671 = vmatpush1.msra.mxu0 0.0
    %3672 = vmatprep.subr.mxu0 0.0
    %3673 = vmatpush1.msra.mxu0 %v2919
    %3674 = vmatprep.subr.mxu0 0.0
    %3675 = vmatpush1.msra.mxu0 %v2918
    %3676 = vmatprep.subr.mxu0 0.0
    %3677 = vmatpush1.msra.mxu0 %v2917
    %3678 = vmatprep.subr.mxu0 0.0
    %3679 = vmatpush1.msra.mxu0 %v2916
    %3680 = vmatprep.subr.mxu0 0.0
    %3681 = vmatpush1.msra.mxu0 %v2915
    %3682 = vmatprep.subr.mxu0 0.0
    %3683 = vmatpush1.msra.mxu0 %v2914
    %3684 = vmatprep.subr.mxu0 0.0
    %3685 = vmatpush1.msra.mxu0 %v2913
    %3686 = vmatprep.subr.mxu0 0.0
    %3687 = vmatpush1.msra.mxu0 %v2912
    %3688 = vmatprep.subr.mxu0 0.0
    %3689 = vmatpush2.msra.mxu0 0.0
    %3690 = vmatprep.subr.mxu0 0.0
    %3691 = vmatpush2.msra.mxu0 0.0
    %3692 = vmatprep.subr.mxu0 0.0
    %3693 = vmatpush2.msra.mxu0 0.0
    %3694 = vmatprep.subr.mxu0 0.0
    %3695 = vmatpush2.msra.mxu0 0.0
    %3696 = vmatprep.subr.mxu0 0.0
    %3697 = vmatpush2.msra.mxu0 0.0
    %3698 = vmatprep.subr.mxu0 0.0
    %3699 = vmatpush2.msra.mxu0 0.0
    %3700 = vmatprep.subr.mxu0 0.0
    %3701 = vmatpush2.msra.mxu0 0.0
    %3702 = vmatprep.subr.mxu0 0.0
    %3703 = vmatpush2.msra.mxu0 0.0
    %3704 = vmatprep.subr.mxu0 0.0
    %3705 = vmatpush2.msra.mxu0 0.0
    %3706 = vmatprep.subr.mxu0 0.0
    %3707 = vmatpush2.msra.mxu0 0.0
    %3708 = vmatprep.subr.mxu0 0.0
    %3709 = vmatpush2.msra.mxu0 0.0
    %3710 = vmatprep.subr.mxu0 0.0
    %3711 = vmatpush2.msra.mxu0 0.0
    %3712 = vmatprep.subr.mxu0 0.0
    %3713 = vmatpush2.msra.mxu0 0.0
    %3714 = vmatprep.subr.mxu0 0.0
    %3715 = vmatpush2.msra.mxu0 0.0
    %3716 = vmatprep.subr.mxu0 0.0
    %3717 = vmatpush2.msra.mxu0 0.0
    %3718 = vmatprep.subr.mxu0 0.0
    %3719 = vmatpush2.msra.mxu0 0.0
    %3720 = vmatprep.mubr.f32.mxu0 0.0
    %3721 = vmatmul.mubr.f32.gmra.mxu0 %v3654
    %v3722 = vpop.f32.mrf.mxu0
    %v3723 = vadd.f32 0.0, %v3722
    %v3724 = vpop.f32.mrf.mxu0
    %3725 = vdwg.mxu0
    %v3727 = vsel %vm910, %v3066, 0
    %3729 = vmatprep.subr.mxu0 0.0
    %3730 = vmatpush1.msra.mxu0 0.0
    %3731 = vmatprep.subr.mxu0 0.0
    %3732 = vmatpush1.msra.mxu0 0.0
    %3733 = vmatprep.subr.mxu0 0.0
    %3734 = vmatpush1.msra.mxu0 0.0
    %3735 = vmatprep.subr.mxu0 0.0
    %3736 = vmatpush1.msra.mxu0 0.0
    %3737 = vmatprep.subr.mxu0 0.0
    %3738 = vmatpush1.msra.mxu0 0.0
    %3739 = vmatprep.subr.mxu0 0.0
    %3740 = vmatpush1.msra.mxu0 0.0
    %3741 = vmatprep.subr.mxu0 0.0
    %3742 = vmatpush1.msra.mxu0 0.0
    %3743 = vmatprep.subr.mxu0 0.0
    %3744 = vmatpush1.msra.mxu0 0.0
    %3745 = vmatprep.subr.mxu0 0.0
    %3746 = vmatpush1.msra.mxu0 %v2927
    %3747 = vmatprep.subr.mxu0 0.0
    %3748 = vmatpush1.msra.mxu0 %v2926
    %3749 = vmatprep.subr.mxu0 0.0
    %3750 = vmatpush1.msra.mxu0 %v2925
    %3751 = vmatprep.subr.mxu0 0.0
    %3752 = vmatpush1.msra.mxu0 %v2924
    %3753 = vmatprep.subr.mxu0 0.0
    %3754 = vmatpush1.msra.mxu0 %v2923
    %3755 = vmatprep.subr.mxu0 0.0
    %3756 = vmatpush1.msra.mxu0 %v2922
    %3757 = vmatprep.subr.mxu0 0.0
    %3758 = vmatpush1.msra.mxu0 %v2921
    %3759 = vmatprep.subr.mxu0 0.0
    %3760 = vmatpush1.msra.mxu0 %v2920
    %3761 = vmatprep.subr.mxu0 0.0
    %3762 = vmatpush2.msra.mxu0 0.0
    %3763 = vmatprep.subr.mxu0 0.0
    %3764 = vmatpush2.msra.mxu0 0.0
    %3765 = vmatprep.subr.mxu0 0.0
    %3766 = vmatpush2.msra.mxu0 0.0
    %3767 = vmatprep.subr.mxu0 0.0
    %3768 = vmatpush2.msra.mxu0 0.0
    %3769 = vmatprep.subr.mxu0 0.0
    %3770 = vmatpush2.msra.mxu0 0.0
    %3771 = vmatprep.subr.mxu0 0.0
    %3772 = vmatpush2.msra.mxu0 0.0
    %3773 = vmatprep.subr.mxu0 0.0
    %3774 = vmatpush2.msra.mxu0 0.0
    %3775 = vmatprep.subr.mxu0 0.0
    %3776 = vmatpush2.msra.mxu0 0.0
    %3777 = vmatprep.subr.mxu0 0.0
    %3778 = vmatpush2.msra.mxu0 0.0
    %3779 = vmatprep.subr.mxu0 0.0
    %3780 = vmatpush2.msra.mxu0 0.0
    %3781 = vmatprep.subr.mxu0 0.0
    %3782 = vmatpush2.msra.mxu0 0.0
    %3783 = vmatprep.subr.mxu0 0.0
    %3784 = vmatpush2.msra.mxu0 0.0
    %3785 = vmatprep.subr.mxu0 0.0
    %3786 = vmatpush2.msra.mxu0 0.0
    %3787 = vmatprep.subr.mxu0 0.0
    %3788 = vmatpush2.msra.mxu0 0.0
    %3789 = vmatprep.subr.mxu0 0.0
    %3790 = vmatpush2.msra.mxu0 0.0
    %3791 = vmatprep.subr.mxu0 0.0
    %3792 = vmatpush2.msra.mxu0 0.0
    %3793 = vmatprep.mubr.f32.mxu0 0.0
    %3794 = vmatmul.mubr.f32.gmra.mxu0 %v3727
    %v3795 = vpop.f32.mrf.mxu0
    %v3796 = vadd.f32 0.0, %v3795
    %v3797 = vpop.f32.mrf.mxu0
    %3798 = vdwg.mxu0
    %v3800 = vsel %vm910, %v3057, 0
    %3802 = vmatprep.subr.mxu0 0.0
    %3803 = vmatpush1.msra.mxu0 0.0
    %3804 = vmatprep.subr.mxu0 0.0
    %3805 = vmatpush1.msra.mxu0 0.0
    %3806 = vmatprep.subr.mxu0 0.0
    %3807 = vmatpush1.msra.mxu0 0.0
    %3808 = vmatprep.subr.mxu0 0.0
    %3809 = vmatpush1.msra.mxu0 0.0
    %3810 = vmatprep.subr.mxu0 0.0
    %3811 = vmatpush1.msra.mxu0 0.0
    %3812 = vmatprep.subr.mxu0 0.0
    %3813 = vmatpush1.msra.mxu0 0.0
    %3814 = vmatprep.subr.mxu0 0.0
    %3815 = vmatpush1.msra.mxu0 0.0
    %3816 = vmatprep.subr.mxu0 0.0
    %3817 = vmatpush1.msra.mxu0 0.0
    %3818 = vmatprep.subr.mxu0 0.0
    %3819 = vmatpush1.msra.mxu0 %v2935
    %3820 = vmatprep.subr.mxu0 0.0
    %3821 = vmatpush1.msra.mxu0 %v2934
    %3822 = vmatprep.subr.mxu0 0.0
    %3823 = vmatpush1.msra.mxu0 %v2933
    %3824 = vmatprep.subr.mxu0 0.0
    %3825 = vmatpush1.msra.mxu0 %v2932
    %3826 = vmatprep.subr.mxu0 0.0
    %3827 = vmatpush1.msra.mxu0 %v2931
    %3828 = vmatprep.subr.mxu0 0.0
    %3829 = vmatpush1.msra.mxu0 %v2930
    %3830 = vmatprep.subr.mxu0 0.0
    %3831 = vmatpush1.msra.mxu0 %v2929
    %3832 = vmatprep.subr.mxu0 0.0
    %3833 = vmatpush1.msra.mxu0 %v2928
    %3834 = vmatprep.subr.mxu0 0.0
    %3835 = vmatpush2.msra.mxu0 0.0
    %3836 = vmatprep.subr.mxu0 0.0
    %3837 = vmatpush2.msra.mxu0 0.0
    %3838 = vmatprep.subr.mxu0 0.0
    %3839 = vmatpush2.msra.mxu0 0.0
    %3840 = vmatprep.subr.mxu0 0.0
    %3841 = vmatpush2.msra.mxu0 0.0
    %3842 = vmatprep.subr.mxu0 0.0
    %3843 = vmatpush2.msra.mxu0 0.0
    %3844 = vmatprep.subr.mxu0 0.0
    %3845 = vmatpush2.msra.mxu0 0.0
    %3846 = vmatprep.subr.mxu0 0.0
    %3847 = vmatpush2.msra.mxu0 0.0
    %3848 = vmatprep.subr.mxu0 0.0
    %3849 = vmatpush2.msra.mxu0 0.0
    %3850 = vmatprep.subr.mxu0 0.0
    %3851 = vmatpush2.msra.mxu0 0.0
    %3852 = vmatprep.subr.mxu0 0.0
    %3853 = vmatpush2.msra.mxu0 0.0
    %3854 = vmatprep.subr.mxu0 0.0
    %3855 = vmatpush2.msra.mxu0 0.0
    %3856 = vmatprep.subr.mxu0 0.0
    %3857 = vmatpush2.msra.mxu0 0.0
    %3858 = vmatprep.subr.mxu0 0.0
    %3859 = vmatpush2.msra.mxu0 0.0
    %3860 = vmatprep.subr.mxu0 0.0
    %3861 = vmatpush2.msra.mxu0 0.0
    %3862 = vmatprep.subr.mxu0 0.0
    %3863 = vmatpush2.msra.mxu0 0.0
    %3864 = vmatprep.subr.mxu0 0.0
    %3865 = vmatpush2.msra.mxu0 0.0
    %3866 = vmatprep.mubr.f32.mxu0 0.0
    %3867 = vmatmul.mubr.f32.gmra.mxu0 %v3800
    %v3868 = vpop.f32.mrf.mxu0
    %v3869 = vadd.f32 0.0, %v3868
    %v3870 = vpop.f32.mrf.mxu0
    %3871 = vdwg.mxu0
    %v3873 = vsel %vm910, %v3067, 0
    %3875 = vmatprep.subr.mxu0 0.0
    %3876 = vmatpush1.msra.mxu0 0.0
    %3877 = vmatprep.subr.mxu0 0.0
    %3878 = vmatpush1.msra.mxu0 0.0
    %3879 = vmatprep.subr.mxu0 0.0
    %3880 = vmatpush1.msra.mxu0 0.0
    %3881 = vmatprep.subr.mxu0 0.0
    %3882 = vmatpush1.msra.mxu0 0.0
    %3883 = vmatprep.subr.mxu0 0.0
    %3884 = vmatpush1.msra.mxu0 0.0
    %3885 = vmatprep.subr.mxu0 0.0
    %3886 = vmatpush1.msra.mxu0 0.0
    %3887 = vmatprep.subr.mxu0 0.0
    %3888 = vmatpush1.msra.mxu0 0.0
    %3889 = vmatprep.subr.mxu0 0.0
    %3890 = vmatpush1.msra.mxu0 0.0
    %3891 = vmatprep.subr.mxu0 0.0
    %3892 = vmatpush1.msra.mxu0 %v2943
    %3893 = vmatprep.subr.mxu0 0.0
    %3894 = vmatpush1.msra.mxu0 %v2942
    %3895 = vmatprep.subr.mxu0 0.0
    %3896 = vmatpush1.msra.mxu0 %v2941
    %3897 = vmatprep.subr.mxu0 0.0
    %3898 = vmatpush1.msra.mxu0 %v2940
    %3899 = vmatprep.subr.mxu0 0.0
    %3900 = vmatpush1.msra.mxu0 %v2939
    %3901 = vmatprep.subr.mxu0 0.0
    %3902 = vmatpush1.msra.mxu0 %v2938
    %3903 = vmatprep.subr.mxu0 0.0
    %3904 = vmatpush1.msra.mxu0 %v2937
    %3905 = vmatprep.subr.mxu0 0.0
    %3906 = vmatpush1.msra.mxu0 %v2936
    %3907 = vmatprep.subr.mxu0 0.0
    %3908 = vmatpush2.msra.mxu0 0.0
    %3909 = vmatprep.subr.mxu0 0.0
    %3910 = vmatpush2.msra.mxu0 0.0
    %3911 = vmatprep.subr.mxu0 0.0
    %3912 = vmatpush2.msra.mxu0 0.0
    %3913 = vmatprep.subr.mxu0 0.0
    %3914 = vmatpush2.msra.mxu0 0.0
    %3915 = vmatprep.subr.mxu0 0.0
    %3916 = vmatpush2.msra.mxu0 0.0
    %3917 = vmatprep.subr.mxu0 0.0
    %3918 = vmatpush2.msra.mxu0 0.0
    %3919 = vmatprep.subr.mxu0 0.0
    %3920 = vmatpush2.msra.mxu0 0.0
    %3921 = vmatprep.subr.mxu0 0.0
    %3922 = vmatpush2.msra.mxu0 0.0
    %3923 = vmatprep.subr.mxu0 0.0
    %3924 = vmatpush2.msra.mxu0 0.0
    %3925 = vmatprep.subr.mxu0 0.0
    %3926 = vmatpush2.msra.mxu0 0.0
    %3927 = vmatprep.subr.mxu0 0.0
    %3928 = vmatpush2.msra.mxu0 0.0
    %3929 = vmatprep.subr.mxu0 0.0
    %3930 = vmatpush2.msra.mxu0 0.0
    %3931 = vmatprep.subr.mxu0 0.0
    %3932 = vmatpush2.msra.mxu0 0.0
    %3933 = vmatprep.subr.mxu0 0.0
    %3934 = vmatpush2.msra.mxu0 0.0
    %3935 = vmatprep.subr.mxu0 0.0
    %3936 = vmatpush2.msra.mxu0 0.0
    %3937 = vmatprep.subr.mxu0 0.0
    %3938 = vmatpush2.msra.mxu0 0.0
    %3939 = vmatprep.mubr.f32.mxu0 0.0
    %3940 = vmatmul.mubr.f32.gmra.mxu0 %v3873
    %v3941 = vpop.f32.mrf.mxu0
    %v3942 = vadd.f32 0.0, %v3941
    %v3943 = vpop.f32.mrf.mxu0
    %3944 = vdwg.mxu0
    %v3946 = vsel %vm910, %v3065, 0
    %3948 = vmatprep.subr.mxu0 0.0
    %3949 = vmatpush1.msra.mxu0 0.0
    %3950 = vmatprep.subr.mxu0 0.0
    %3951 = vmatpush1.msra.mxu0 0.0
    %3952 = vmatprep.subr.mxu0 0.0
    %3953 = vmatpush1.msra.mxu0 0.0
    %3954 = vmatprep.subr.mxu0 0.0
    %3955 = vmatpush1.msra.mxu0 0.0
    %3956 = vmatprep.subr.mxu0 0.0
    %3957 = vmatpush1.msra.mxu0 0.0
    %3958 = vmatprep.subr.mxu0 0.0
    %3959 = vmatpush1.msra.mxu0 0.0
    %3960 = vmatprep.subr.mxu0 0.0
    %3961 = vmatpush1.msra.mxu0 0.0
    %3962 = vmatprep.subr.mxu0 0.0
    %3963 = vmatpush1.msra.mxu0 0.0
    %3964 = vmatprep.subr.mxu0 0.0
    %3965 = vmatpush1.msra.mxu0 %v2951
    %3966 = vmatprep.subr.mxu0 0.0
    %3967 = vmatpush1.msra.mxu0 %v2950
    %3968 = vmatprep.subr.mxu0 0.0
    %3969 = vmatpush1.msra.mxu0 %v2949
    %3970 = vmatprep.subr.mxu0 0.0
    %3971 = vmatpush1.msra.mxu0 %v2948
    %3972 = vmatprep.subr.mxu0 0.0
    %3973 = vmatpush1.msra.mxu0 %v2947
    %3974 = vmatprep.subr.mxu0 0.0
    %3975 = vmatpush1.msra.mxu0 %v2946
    %3976 = vmatprep.subr.mxu0 0.0
    %3977 = vmatpush1.msra.mxu0 %v2945
    %3978 = vmatprep.subr.mxu0 0.0
    %3979 = vmatpush1.msra.mxu0 %v2944
    %3980 = vmatprep.subr.mxu0 0.0
    %3981 = vmatpush2.msra.mxu0 0.0
    %3982 = vmatprep.subr.mxu0 0.0
    %3983 = vmatpush2.msra.mxu0 0.0
    %3984 = vmatprep.subr.mxu0 0.0
    %3985 = vmatpush2.msra.mxu0 0.0
    %3986 = vmatprep.subr.mxu0 0.0
    %3987 = vmatpush2.msra.mxu0 0.0
    %3988 = vmatprep.subr.mxu0 0.0
    %3989 = vmatpush2.msra.mxu0 0.0
    %3990 = vmatprep.subr.mxu0 0.0
    %3991 = vmatpush2.msra.mxu0 0.0
    %3992 = vmatprep.subr.mxu0 0.0
    %3993 = vmatpush2.msra.mxu0 0.0
    %3994 = vmatprep.subr.mxu0 0.0
    %3995 = vmatpush2.msra.mxu0 0.0
    %3996 = vmatprep.subr.mxu0 0.0
    %3997 = vmatpush2.msra.mxu0 0.0
    %3998 = vmatprep.subr.mxu0 0.0
    %3999 = vmatpush2.msra.mxu0 0.0
    %4000 = vmatprep.subr.mxu0 0.0
    %4001 = vmatpush2.msra.mxu0 0.0
    %4002 = vmatprep.subr.mxu0 0.0
    %4003 = vmatpush2.msra.mxu0 0.0
    %4004 = vmatprep.subr.mxu0 0.0
    %4005 = vmatpush2.msra.mxu0 0.0
    %4006 = vmatprep.subr.mxu0 0.0
    %4007 = vmatpush2.msra.mxu0 0.0
    %4008 = vmatprep.subr.mxu0 0.0
    %4009 = vmatpush2.msra.mxu0 0.0
    %4010 = vmatprep.subr.mxu0 0.0
    %4011 = vmatpush2.msra.mxu0 0.0
    %4012 = vmatprep.mubr.f32.mxu0 0.0
    %4013 = vmatmul.mubr.f32.gmra.mxu0 %v3946
    %v4014 = vpop.f32.mrf.mxu0
    %v4015 = vadd.f32 0.0, %v4014
    %v4016 = vpop.f32.mrf.mxu0
    %4017 = vdwg.mxu0
    %v4019 = vsel %vm910, %v3068, 0
    %4021 = vmatprep.subr.mxu0 0.0
    %4022 = vmatpush1.msra.mxu0 0.0
    %4023 = vmatprep.subr.mxu0 0.0
    %4024 = vmatpush1.msra.mxu0 0.0
    %4025 = vmatprep.subr.mxu0 0.0
    %4026 = vmatpush1.msra.mxu0 0.0
    %4027 = vmatprep.subr.mxu0 0.0
    %4028 = vmatpush1.msra.mxu0 0.0
    %4029 = vmatprep.subr.mxu0 0.0
    %4030 = vmatpush1.msra.mxu0 0.0
    %4031 = vmatprep.subr.mxu0 0.0
    %4032 = vmatpush1.msra.mxu0 0.0
    %4033 = vmatprep.subr.mxu0 0.0
    %4034 = vmatpush1.msra.mxu0 0.0
    %4035 = vmatprep.subr.mxu0 0.0
    %4036 = vmatpush1.msra.mxu0 0.0
    %4037 = vmatprep.subr.mxu0 0.0
    %4038 = vmatpush1.msra.mxu0 %v2959
    %4039 = vmatprep.subr.mxu0 0.0
    %4040 = vmatpush1.msra.mxu0 %v2958
    %4041 = vmatprep.subr.mxu0 0.0
    %4042 = vmatpush1.msra.mxu0 %v2957
    %4043 = vmatprep.subr.mxu0 0.0
    %4044 = vmatpush1.msra.mxu0 %v2956
    %4045 = vmatprep.subr.mxu0 0.0
    %4046 = vmatpush1.msra.mxu0 %v2955
    %4047 = vmatprep.subr.mxu0 0.0
    %4048 = vmatpush1.msra.mxu0 %v2954
    %4049 = vmatprep.subr.mxu0 0.0
    %4050 = vmatpush1.msra.mxu0 %v2953
    %4051 = vmatprep.subr.mxu0 0.0
    %4052 = vmatpush1.msra.mxu0 %v2952
    %4053 = vmatprep.subr.mxu0 0.0
    %4054 = vmatpush2.msra.mxu0 0.0
    %4055 = vmatprep.subr.mxu0 0.0
    %4056 = vmatpush2.msra.mxu0 0.0
    %4057 = vmatprep.subr.mxu0 0.0
    %4058 = vmatpush2.msra.mxu0 0.0
    %4059 = vmatprep.subr.mxu0 0.0
    %4060 = vmatpush2.msra.mxu0 0.0
    %4061 = vmatprep.subr.mxu0 0.0
    %4062 = vmatpush2.msra.mxu0 0.0
    %4063 = vmatprep.subr.mxu0 0.0
    %4064 = vmatpush2.msra.mxu0 0.0
    %4065 = vmatprep.subr.mxu0 0.0
    %4066 = vmatpush2.msra.mxu0 0.0
    %4067 = vmatprep.subr.mxu0 0.0
    %4068 = vmatpush2.msra.mxu0 0.0
    %4069 = vmatprep.subr.mxu0 0.0
    %4070 = vmatpush2.msra.mxu0 0.0
    %4071 = vmatprep.subr.mxu0 0.0
    %4072 = vmatpush2.msra.mxu0 0.0
    %4073 = vmatprep.subr.mxu0 0.0
    %4074 = vmatpush2.msra.mxu0 0.0
    %4075 = vmatprep.subr.mxu0 0.0
    %4076 = vmatpush2.msra.mxu0 0.0
    %4077 = vmatprep.subr.mxu0 0.0
    %4078 = vmatpush2.msra.mxu0 0.0
    %4079 = vmatprep.subr.mxu0 0.0
    %4080 = vmatpush2.msra.mxu0 0.0
    %4081 = vmatprep.subr.mxu0 0.0
    %4082 = vmatpush2.msra.mxu0 0.0
    %4083 = vmatprep.subr.mxu0 0.0
    %4084 = vmatpush2.msra.mxu0 0.0
    %4085 = vmatprep.mubr.f32.mxu0 0.0
    %4086 = vmatmul.mubr.f32.gmra.mxu0 %v4019
    %v4087 = vpop.f32.mrf.mxu0
    %v4088 = vadd.f32 0.0, %v4087
    %v4089 = vpop.f32.mrf.mxu0
    %4090 = vdwg.mxu0
    %v4091 = vsel %vm2006, %v3139, 0.0
    %v4092 = vsel %vm2006, %v3212, 0.0
    %v4093 = vadd.f32 %v4091, %v4092
    %v4094 = vsel %vm2006, %v3285, 0.0
    %v4095 = vadd.f32 %v4093, %v4094
    %v4096 = vsel %vm2006, %v3358, 0.0
    %v4097 = vadd.f32 %v4095, %v4096
    %v4098 = vsel %vm2006, %v3431, 0.0
    %v4099 = vadd.f32 %v4097, %v4098
    %v4100 = vsel %vm2006, %v3504, 0.0
    %v4101 = vadd.f32 %v4099, %v4100
    %v4102 = vsel %vm2006, %v3577, 0.0
    %v4103 = vadd.f32 %v4101, %v4102
    %v4104 = vsel %vm2006, %v3650, 0.0
    %v4105 = vadd.f32 %v4103, %v4104
    %v4106 = vsel %vm2006, %v3723, 0.0
    %v4107 = vadd.f32 %v4105, %v4106
    %v4108 = vsel %vm2006, %v3796, 0.0
    %v4109 = vadd.f32 %v4107, %v4108
    %v4110 = vsel %vm2006, %v3869, 0.0
    %v4111 = vadd.f32 %v4109, %v4110
    %v4112 = vsel %vm2006, %v3942, 0.0
    %v4113 = vadd.f32 %v4111, %v4112
    %v4114 = vsel %vm2006, %v4015, 0.0
    %v4115 = vadd.f32 %v4113, %v4114
    %v4116 = vsel %vm2006, %v4088, 0.0
    %v4117 = vadd.f32 %v4115, %v4116
    %v4118 = vadd.f32 %v2036, %v4117
    %v4119 = vld [vmem:[%s6] sm:$0xff]
    %v4120 = vld [vmem:[%s6 + $0x8] sm:$0xff]
    %v4121 = vld [vmem:[%s6 + $0x10] sm:$0xff]
    %v4122 = vld [vmem:[%s6 + $0x18] sm:$0xff]
    %v4123 = vld [vmem:[%s6 + $0x20] sm:$0xff]
    %v4124 = vld [vmem:[%s6 + $0x28] sm:$0xf]
    %v4125 = vlaneseq
    %v4126 = vshrl.u32 %v4125, 7
    %v4127 = vsub.s32 0, %v4126
    %v4128 = vrot.slane %v4119, %v4127
    %v4129 = vmul.f32 %v102, %v4128
    %v4130 = vmul.f32 %v107, %v4128
    %v4131 = vmul.f32 %v112, %v4128
    %v4132 = vmul.f32 %v117, %v4128
    %v4133 = vadd.f32 %v4129, 0.0
    %v4134 = vadd.f32 %v4130, 0.0
    %v4135 = vadd.f32 %v4131, 0.0
    %v4136 = vadd.f32 %v4132, 0.0
    %v4137 = vmul.f32 %v134, %v4128
    %v4138 = vmul.f32 %v139, %v4128
    %v4139 = vmul.f32 %v144, %v4128
    %v4140 = vmul.f32 %v149, %v4128
    %v4141 = vadd.f32 %v4137, 0.0
    %v4142 = vadd.f32 %v4138, 0.0
    %v4143 = vadd.f32 %v4139, 0.0
    %v4144 = vadd.f32 %v4140, 0.0
    %v4145 = vlaneseq
    %v4146 = vshrl.u32 %v4145, 7
    %v4147 = vsub.s32 1, %v4146
    %v4148 = vrot.slane %v4119, %v4147
    %v4149 = vmul.f32 %v161, %v4148
    %v4150 = vmul.f32 %v165, %v4148
    %v4151 = vmul.f32 %v169, %v4148
    %v4152 = vmul.f32 %v173, %v4148
    %v4153 = vadd.f32 %v4133, %v4149
    %v4154 = vadd.f32 %v4134, %v4150
    %v4155 = vadd.f32 %v4135, %v4151
    %v4156 = vadd.f32 %v4136, %v4152
    %v4157 = vmul.f32 %v189, %v4148
    %v4158 = vmul.f32 %v193, %v4148
    %v4159 = vmul.f32 %v197, %v4148
    %v4160 = vmul.f32 %v201, %v4148
    %v4161 = vadd.f32 %v4141, %v4157
    %v4162 = vadd.f32 %v4142, %v4158
    %v4163 = vadd.f32 %v4143, %v4159
    %v4164 = vadd.f32 %v4144, %v4160
    %v4165 = vlaneseq
    %v4166 = vshrl.u32 %v4165, 7
    %v4167 = vsub.s32 2, %v4166
    %v4168 = vrot.slane %v4119, %v4167
    %v4169 = vmul.f32 %v213, %v4168
    %v4170 = vmul.f32 %v217, %v4168
    %v4171 = vmul.f32 %v221, %v4168
    %v4172 = vmul.f32 %v225, %v4168
    %v4173 = vadd.f32 %v4153, %v4169
    %v4174 = vadd.f32 %v4154, %v4170
    %v4175 = vadd.f32 %v4155, %v4171
    %v4176 = vadd.f32 %v4156, %v4172
    %v4177 = vmul.f32 %v241, %v4168
    %v4178 = vmul.f32 %v245, %v4168
    %v4179 = vmul.f32 %v249, %v4168
    %v4180 = vmul.f32 %v253, %v4168
    %v4181 = vadd.f32 %v4161, %v4177
    %v4182 = vadd.f32 %v4162, %v4178
    %v4183 = vadd.f32 %v4163, %v4179
    %v4184 = vadd.f32 %v4164, %v4180
    %v4185 = vlaneseq
    %v4186 = vshrl.u32 %v4185, 7
    %v4187 = vsub.s32 3, %v4186
    %v4188 = vrot.slane %v4119, %v4187
    %v4189 = vmul.f32 %v265, %v4188
    %v4190 = vmul.f32 %v269, %v4188
    %v4191 = vmul.f32 %v273, %v4188
    %v4192 = vmul.f32 %v277, %v4188
    %v4193 = vadd.f32 %v4173, %v4189
    %v4194 = vadd.f32 %v4174, %v4190
    %v4195 = vadd.f32 %v4175, %v4191
    %v4196 = vadd.f32 %v4176, %v4192
    %v4197 = vmul.f32 %v293, %v4188
    %v4198 = vmul.f32 %v297, %v4188
    %v4199 = vmul.f32 %v301, %v4188
    %v4200 = vmul.f32 %v305, %v4188
    %v4201 = vadd.f32 %v4181, %v4197
    %v4202 = vadd.f32 %v4182, %v4198
    %v4203 = vadd.f32 %v4183, %v4199
    %v4204 = vadd.f32 %v4184, %v4200
    %v4205 = vlaneseq
    %v4206 = vshrl.u32 %v4205, 7
    %v4207 = vsub.s32 4, %v4206
    %v4208 = vrot.slane %v4119, %v4207
    %v4209 = vmul.f32 %v134, %v4208
    %v4210 = vmul.f32 %v139, %v4208
    %v4211 = vmul.f32 %v144, %v4208
    %v4212 = vmul.f32 %v149, %v4208
    %v4213 = vadd.f32 %v4193, %v4209
    %v4214 = vadd.f32 %v4194, %v4210
    %v4215 = vadd.f32 %v4195, %v4211
    %v4216 = vadd.f32 %v4196, %v4212
    %v4217 = vmul.f32 %v102, %v4208
    %v4218 = vmul.f32 %v107, %v4208
    %v4219 = vmul.f32 %v112, %v4208
    %v4220 = vmul.f32 %v117, %v4208
    %v4225 = vrot.slane %v4217, 1
    %v4226 = vrot.slane %v4218, 1
    %v4227 = vsel %vm335, %v4225, %v4226
    %v4228 = vrot.slane %v4219, 1
    %v4229 = vrot.slane %v4220, 1
    %v4230 = vsel %vm335, %v4228, %v4229
    %v4235 = vadd.f32 %v4201, %v4227
    %v4236 = vadd.f32 %v4202, %v4226
    %v4237 = vadd.f32 %v4203, %v4230
    %v4238 = vadd.f32 %v4204, %v4229
    %v4239 = vlaneseq
    %v4240 = vshrl.u32 %v4239, 7
    %v4241 = vsub.s32 5, %v4240
    %v4242 = vrot.slane %v4119, %v4241
    %v4243 = vmul.f32 %v189, %v4242
    %v4244 = vmul.f32 %v193, %v4242
    %v4245 = vmul.f32 %v197, %v4242
    %v4246 = vmul.f32 %v201, %v4242
    %v4247 = vadd.f32 %v4213, %v4243
    %v4248 = vadd.f32 %v4214, %v4244
    %v4249 = vadd.f32 %v4215, %v4245
    %v4250 = vadd.f32 %v4216, %v4246
    %v4251 = vmul.f32 %v161, %v4242
    %v4252 = vmul.f32 %v165, %v4242
    %v4253 = vmul.f32 %v169, %v4242
    %v4254 = vmul.f32 %v173, %v4242
    %v4259 = vrot.slane %v4251, 1
    %v4260 = vrot.slane %v4252, 1
    %v4261 = vsel %vm335, %v4259, %v4260
    %v4262 = vrot.slane %v4253, 1
    %v4263 = vrot.slane %v4254, 1
    %v4264 = vsel %vm335, %v4262, %v4263
    %v4269 = vadd.f32 %v4235, %v4261
    %v4270 = vadd.f32 %v4236, %v4260
    %v4271 = vadd.f32 %v4237, %v4264
    %v4272 = vadd.f32 %v4238, %v4263
    %v4273 = vlaneseq
    %v4274 = vshrl.u32 %v4273, 7
    %v4275 = vsub.s32 6, %v4274
    %v4276 = vrot.slane %v4119, %v4275
    %v4277 = vmul.f32 %v241, %v4276
    %v4278 = vmul.f32 %v245, %v4276
    %v4279 = vmul.f32 %v249, %v4276
    %v4280 = vmul.f32 %v253, %v4276
    %v4281 = vadd.f32 %v4247, %v4277
    %v4282 = vadd.f32 %v4248, %v4278
    %v4283 = vadd.f32 %v4249, %v4279
    %v4284 = vadd.f32 %v4250, %v4280
    %v4285 = vmul.f32 %v213, %v4276
    %v4286 = vmul.f32 %v217, %v4276
    %v4287 = vmul.f32 %v221, %v4276
    %v4288 = vmul.f32 %v225, %v4276
    %v4293 = vrot.slane %v4285, 1
    %v4294 = vrot.slane %v4286, 1
    %v4295 = vsel %vm335, %v4293, %v4294
    %v4296 = vrot.slane %v4287, 1
    %v4297 = vrot.slane %v4288, 1
    %v4298 = vsel %vm335, %v4296, %v4297
    %v4303 = vadd.f32 %v4269, %v4295
    %v4304 = vadd.f32 %v4270, %v4294
    %v4305 = vadd.f32 %v4271, %v4298
    %v4306 = vadd.f32 %v4272, %v4297
    %v4307 = vlaneseq
    %v4308 = vshrl.u32 %v4307, 7
    %v4309 = vsub.s32 7, %v4308
    %v4310 = vrot.slane %v4119, %v4309
    %v4311 = vmul.f32 %v293, %v4310
    %v4312 = vmul.f32 %v297, %v4310
    %v4313 = vmul.f32 %v301, %v4310
    %v4314 = vmul.f32 %v305, %v4310
    %v4315 = vadd.f32 %v4281, %v4311
    %v4316 = vadd.f32 %v4282, %v4312
    %v4317 = vadd.f32 %v4283, %v4313
    %v4318 = vadd.f32 %v4284, %v4314
    %v4319 = vmul.f32 %v265, %v4310
    %v4320 = vmul.f32 %v269, %v4310
    %v4321 = vmul.f32 %v273, %v4310
    %v4322 = vmul.f32 %v277, %v4310
    %v4327 = vrot.slane %v4319, 1
    %v4328 = vrot.slane %v4320, 1
    %v4329 = vsel %vm335, %v4327, %v4328
    %v4330 = vrot.slane %v4321, 1
    %v4331 = vrot.slane %v4322, 1
    %v4332 = vsel %vm335, %v4330, %v4331
    %v4337 = vadd.f32 %v4303, %v4329
    %v4338 = vadd.f32 %v4304, %v4328
    %v4339 = vadd.f32 %v4305, %v4332
    %v4340 = vadd.f32 %v4306, %v4331
    %v4341 = vlaneseq
    %v4342 = vshrl.u32 %v4341, 7
    %v4343 = vsub.s32 0, %v4342
    %v4344 = vrot.slane %v4120, %v4343
    %v4345 = vmul.f32 %v102, %v4344
    %v4346 = vmul.f32 %v107, %v4344
    %v4347 = vmul.f32 %v112, %v4344
    %v4348 = vmul.f32 %v117, %v4344
    %v4353 = vrot.slane %v4345, 1
    %v4354 = vrot.slane %v4346, 1
    %v4355 = vsel %vm335, %v4353, %v4354
    %v4356 = vrot.slane %v4347, 1
    %v4357 = vrot.slane %v4348, 1
    %v4358 = vsel %vm335, %v4356, %v4357
    %v4363 = vadd.f32 %v4315, %v4355
    %v4364 = vadd.f32 %v4316, %v4354
    %v4365 = vadd.f32 %v4317, %v4358
    %v4366 = vadd.f32 %v4318, %v4357
    %v4367 = vmul.f32 %v134, %v4344
    %v4368 = vmul.f32 %v139, %v4344
    %v4369 = vmul.f32 %v144, %v4344
    %v4370 = vmul.f32 %v149, %v4344
    %v4375 = vrot.slane %v4367, 1
    %v4376 = vrot.slane %v4368, 1
    %v4377 = vsel %vm335, %v4375, %v4376
    %v4378 = vrot.slane %v4369, 1
    %v4379 = vrot.slane %v4370, 1
    %v4380 = vsel %vm335, %v4378, %v4379
    %v4385 = vadd.f32 %v4337, %v4377
    %v4386 = vadd.f32 %v4338, %v4376
    %v4387 = vadd.f32 %v4339, %v4380
    %v4388 = vadd.f32 %v4340, %v4379
    %v4389 = vlaneseq
    %v4390 = vshrl.u32 %v4389, 7
    %v4391 = vsub.s32 1, %v4390
    %v4392 = vrot.slane %v4120, %v4391
    %v4393 = vmul.f32 %v161, %v4392
    %v4394 = vmul.f32 %v165, %v4392
    %v4395 = vmul.f32 %v169, %v4392
    %v4396 = vmul.f32 %v173, %v4392
    %v4401 = vrot.slane %v4393, 1
    %v4402 = vrot.slane %v4394, 1
    %v4403 = vsel %vm335, %v4401, %v4402
    %v4404 = vrot.slane %v4395, 1
    %v4405 = vrot.slane %v4396, 1
    %v4406 = vsel %vm335, %v4404, %v4405
    %v4411 = vadd.f32 %v4363, %v4403
    %v4412 = vadd.f32 %v4364, %v4402
    %v4413 = vadd.f32 %v4365, %v4406
    %v4414 = vadd.f32 %v4366, %v4405
    %v4415 = vmul.f32 %v189, %v4392
    %v4416 = vmul.f32 %v193, %v4392
    %v4417 = vmul.f32 %v197, %v4392
    %v4418 = vmul.f32 %v201, %v4392
    %v4423 = vrot.slane %v4415, 1
    %v4424 = vrot.slane %v4416, 1
    %v4425 = vsel %vm335, %v4423, %v4424
    %v4426 = vrot.slane %v4417, 1
    %v4427 = vrot.slane %v4418, 1
    %v4428 = vsel %vm335, %v4426, %v4427
    %v4433 = vadd.f32 %v4385, %v4425
    %v4434 = vadd.f32 %v4386, %v4424
    %v4435 = vadd.f32 %v4387, %v4428
    %v4436 = vadd.f32 %v4388, %v4427
    %v4437 = vlaneseq
    %v4438 = vshrl.u32 %v4437, 7
    %v4439 = vsub.s32 2, %v4438
    %v4440 = vrot.slane %v4120, %v4439
    %v4441 = vmul.f32 %v213, %v4440
    %v4442 = vmul.f32 %v217, %v4440
    %v4443 = vmul.f32 %v221, %v4440
    %v4444 = vmul.f32 %v225, %v4440
    %v4449 = vrot.slane %v4441, 1
    %v4450 = vrot.slane %v4442, 1
    %v4451 = vsel %vm335, %v4449, %v4450
    %v4452 = vrot.slane %v4443, 1
    %v4453 = vrot.slane %v4444, 1
    %v4454 = vsel %vm335, %v4452, %v4453
    %v4459 = vadd.f32 %v4411, %v4451
    %v4460 = vadd.f32 %v4412, %v4450
    %v4461 = vadd.f32 %v4413, %v4454
    %v4462 = vadd.f32 %v4414, %v4453
    %v4463 = vmul.f32 %v241, %v4440
    %v4464 = vmul.f32 %v245, %v4440
    %v4465 = vmul.f32 %v249, %v4440
    %v4466 = vmul.f32 %v253, %v4440
    %v4471 = vrot.slane %v4463, 1
    %v4472 = vrot.slane %v4464, 1
    %v4473 = vsel %vm335, %v4471, %v4472
    %v4474 = vrot.slane %v4465, 1
    %v4475 = vrot.slane %v4466, 1
    %v4476 = vsel %vm335, %v4474, %v4475
    %v4481 = vadd.f32 %v4433, %v4473
    %v4482 = vadd.f32 %v4434, %v4472
    %v4483 = vadd.f32 %v4435, %v4476
    %v4484 = vadd.f32 %v4436, %v4475
    %v4485 = vlaneseq
    %v4486 = vshrl.u32 %v4485, 7
    %v4487 = vsub.s32 3, %v4486
    %v4488 = vrot.slane %v4120, %v4487
    %v4489 = vmul.f32 %v265, %v4488
    %v4490 = vmul.f32 %v269, %v4488
    %v4491 = vmul.f32 %v273, %v4488
    %v4492 = vmul.f32 %v277, %v4488
    %v4497 = vrot.slane %v4489, 1
    %v4498 = vrot.slane %v4490, 1
    %v4499 = vsel %vm335, %v4497, %v4498
    %v4500 = vrot.slane %v4491, 1
    %v4501 = vrot.slane %v4492, 1
    %v4502 = vsel %vm335, %v4500, %v4501
    %v4507 = vadd.f32 %v4459, %v4499
    %v4508 = vadd.f32 %v4460, %v4498
    %v4509 = vadd.f32 %v4461, %v4502
    %v4510 = vadd.f32 %v4462, %v4501
    %v4511 = vmul.f32 %v293, %v4488
    %v4512 = vmul.f32 %v297, %v4488
    %v4513 = vmul.f32 %v301, %v4488
    %v4514 = vmul.f32 %v305, %v4488
    %v4519 = vrot.slane %v4511, 1
    %v4520 = vrot.slane %v4512, 1
    %v4521 = vsel %vm335, %v4519, %v4520
    %v4522 = vrot.slane %v4513, 1
    %v4523 = vrot.slane %v4514, 1
    %v4524 = vsel %vm335, %v4522, %v4523
    %v4529 = vadd.f32 %v4481, %v4521
    %v4530 = vadd.f32 %v4482, %v4520
    %v4531 = vadd.f32 %v4483, %v4524
    %v4532 = vadd.f32 %v4484, %v4523
    %v4533 = vlaneseq
    %v4534 = vshrl.u32 %v4533, 7
    %v4535 = vsub.s32 4, %v4534
    %v4536 = vrot.slane %v4120, %v4535
    %v4537 = vmul.f32 %v134, %v4536
    %v4538 = vmul.f32 %v139, %v4536
    %v4539 = vmul.f32 %v144, %v4536
    %v4540 = vmul.f32 %v149, %v4536
    %v4545 = vrot.slane %v4537, 1
    %v4546 = vrot.slane %v4538, 1
    %v4547 = vsel %vm335, %v4545, %v4546
    %v4548 = vrot.slane %v4539, 1
    %v4549 = vrot.slane %v4540, 1
    %v4550 = vsel %vm335, %v4548, %v4549
    %v4555 = vadd.f32 %v4507, %v4547
    %v4556 = vadd.f32 %v4508, %v4546
    %v4557 = vadd.f32 %v4509, %v4550
    %v4558 = vadd.f32 %v4510, %v4549
    %v4559 = vmul.f32 %v102, %v4536
    %v4560 = vmul.f32 %v107, %v4536
    %v4561 = vmul.f32 %v112, %v4536
    %v4562 = vmul.f32 %v117, %v4536
    %v4567 = vrot.slane %v4559, 2
    %v4568 = vrot.slane %v4560, 2
    %v4569 = vsel %vm2482, %v4567, %v4568
    %v4570 = vrot.slane %v4561, 2
    %v4571 = vrot.slane %v4562, 2
    %v4572 = vsel %vm2482, %v4570, %v4571
    %v4577 = vadd.f32 %v4529, %v4569
    %v4578 = vadd.f32 %v4530, %v4568
    %v4579 = vadd.f32 %v4531, %v4572
    %v4580 = vadd.f32 %v4532, %v4571
    %v4581 = vlaneseq
    %v4582 = vshrl.u32 %v4581, 7
    %v4583 = vsub.s32 5, %v4582
    %v4584 = vrot.slane %v4120, %v4583
    %v4585 = vmul.f32 %v189, %v4584
    %v4586 = vmul.f32 %v193, %v4584
    %v4587 = vmul.f32 %v197, %v4584
    %v4588 = vmul.f32 %v201, %v4584
    %v4593 = vrot.slane %v4585, 1
    %v4594 = vrot.slane %v4586, 1
    %v4595 = vsel %vm335, %v4593, %v4594
    %v4596 = vrot.slane %v4587, 1
    %v4597 = vrot.slane %v4588, 1
    %v4598 = vsel %vm335, %v4596, %v4597
    %v4603 = vadd.f32 %v4555, %v4595
    %v4604 = vadd.f32 %v4556, %v4594
    %v4605 = vadd.f32 %v4557, %v4598
    %v4606 = vadd.f32 %v4558, %v4597
    %v4607 = vmul.f32 %v161, %v4584
    %v4608 = vmul.f32 %v165, %v4584
    %v4609 = vmul.f32 %v169, %v4584
    %v4610 = vmul.f32 %v173, %v4584
    %v4615 = vrot.slane %v4607, 2
    %v4616 = vrot.slane %v4608, 2
    %v4617 = vsel %vm2482, %v4615, %v4616
    %v4618 = vrot.slane %v4609, 2
    %v4619 = vrot.slane %v4610, 2
    %v4620 = vsel %vm2482, %v4618, %v4619
    %v4625 = vadd.f32 %v4577, %v4617
    %v4626 = vadd.f32 %v4578, %v4616
    %v4627 = vadd.f32 %v4579, %v4620
    %v4628 = vadd.f32 %v4580, %v4619
    %v4629 = vlaneseq
    %v4630 = vshrl.u32 %v4629, 7
    %v4631 = vsub.s32 6, %v4630
    %v4632 = vrot.slane %v4120, %v4631
    %v4633 = vmul.f32 %v241, %v4632
    %v4634 = vmul.f32 %v245, %v4632
    %v4635 = vmul.f32 %v249, %v4632
    %v4636 = vmul.f32 %v253, %v4632
    %v4641 = vrot.slane %v4633, 1
    %v4642 = vrot.slane %v4634, 1
    %v4643 = vsel %vm335, %v4641, %v4642
    %v4644 = vrot.slane %v4635, 1
    %v4645 = vrot.slane %v4636, 1
    %v4646 = vsel %vm335, %v4644, %v4645
    %v4651 = vadd.f32 %v4603, %v4643
    %v4652 = vadd.f32 %v4604, %v4642
    %v4653 = vadd.f32 %v4605, %v4646
    %v4654 = vadd.f32 %v4606, %v4645
    %v4655 = vmul.f32 %v213, %v4632
    %v4656 = vmul.f32 %v217, %v4632
    %v4657 = vmul.f32 %v221, %v4632
    %v4658 = vmul.f32 %v225, %v4632
    %v4663 = vrot.slane %v4655, 2
    %v4664 = vrot.slane %v4656, 2
    %v4665 = vsel %vm2482, %v4663, %v4664
    %v4666 = vrot.slane %v4657, 2
    %v4667 = vrot.slane %v4658, 2
    %v4668 = vsel %vm2482, %v4666, %v4667
    %v4673 = vadd.f32 %v4625, %v4665
    %v4674 = vadd.f32 %v4626, %v4664
    %v4675 = vadd.f32 %v4627, %v4668
    %v4676 = vadd.f32 %v4628, %v4667
    %v4677 = vlaneseq
    %v4678 = vshrl.u32 %v4677, 7
    %v4679 = vsub.s32 7, %v4678
    %v4680 = vrot.slane %v4120, %v4679
    %v4681 = vmul.f32 %v293, %v4680
    %v4682 = vmul.f32 %v297, %v4680
    %v4683 = vmul.f32 %v301, %v4680
    %v4684 = vmul.f32 %v305, %v4680
    %v4689 = vrot.slane %v4681, 1
    %v4690 = vrot.slane %v4682, 1
    %v4691 = vsel %vm335, %v4689, %v4690
    %v4692 = vrot.slane %v4683, 1
    %v4693 = vrot.slane %v4684, 1
    %v4694 = vsel %vm335, %v4692, %v4693
    %v4699 = vadd.f32 %v4651, %v4691
    %v4700 = vadd.f32 %v4652, %v4690
    %v4701 = vadd.f32 %v4653, %v4694
    %v4702 = vadd.f32 %v4654, %v4693
    %v4703 = vmul.f32 %v265, %v4680
    %v4704 = vmul.f32 %v269, %v4680
    %v4705 = vmul.f32 %v273, %v4680
    %v4706 = vmul.f32 %v277, %v4680
    %v4711 = vrot.slane %v4703, 2
    %v4712 = vrot.slane %v4704, 2
    %v4713 = vsel %vm2482, %v4711, %v4712
    %v4714 = vrot.slane %v4705, 2
    %v4715 = vrot.slane %v4706, 2
    %v4716 = vsel %vm2482, %v4714, %v4715
    %v4721 = vadd.f32 %v4673, %v4713
    %v4722 = vadd.f32 %v4674, %v4712
    %v4723 = vadd.f32 %v4675, %v4716
    %v4724 = vadd.f32 %v4676, %v4715
    %v4725 = vlaneseq
    %v4726 = vshrl.u32 %v4725, 7
    %v4727 = vsub.s32 0, %v4726
    %v4728 = vrot.slane %v4121, %v4727
    %v4729 = vmul.f32 %v102, %v4728
    %v4730 = vmul.f32 %v107, %v4728
    %v4731 = vmul.f32 %v112, %v4728
    %v4732 = vmul.f32 %v117, %v4728
    %v4737 = vrot.slane %v4729, 2
    %v4738 = vrot.slane %v4730, 2
    %v4739 = vsel %vm2482, %v4737, %v4738
    %v4740 = vrot.slane %v4731, 2
    %v4741 = vrot.slane %v4732, 2
    %v4742 = vsel %vm2482, %v4740, %v4741
    %v4747 = vadd.f32 %v4699, %v4739
    %v4748 = vadd.f32 %v4700, %v4738
    %v4749 = vadd.f32 %v4701, %v4742
    %v4750 = vadd.f32 %v4702, %v4741
    %v4751 = vmul.f32 %v134, %v4728
    %v4752 = vmul.f32 %v139, %v4728
    %v4753 = vmul.f32 %v144, %v4728
    %v4754 = vmul.f32 %v149, %v4728
    %v4759 = vrot.slane %v4751, 2
    %v4760 = vrot.slane %v4752, 2
    %v4761 = vsel %vm2482, %v4759, %v4760
    %v4762 = vrot.slane %v4753, 2
    %v4763 = vrot.slane %v4754, 2
    %v4764 = vsel %vm2482, %v4762, %v4763
    %v4769 = vadd.f32 %v4721, %v4761
    %v4770 = vadd.f32 %v4722, %v4760
    %v4771 = vadd.f32 %v4723, %v4764
    %v4772 = vadd.f32 %v4724, %v4763
    %v4773 = vlaneseq
    %v4774 = vshrl.u32 %v4773, 7
    %v4775 = vsub.s32 1, %v4774
    %v4776 = vrot.slane %v4121, %v4775
    %v4777 = vmul.f32 %v161, %v4776
    %v4778 = vmul.f32 %v165, %v4776
    %v4779 = vmul.f32 %v169, %v4776
    %v4780 = vmul.f32 %v173, %v4776
    %v4785 = vrot.slane %v4777, 2
    %v4786 = vrot.slane %v4778, 2
    %v4787 = vsel %vm2482, %v4785, %v4786
    %v4788 = vrot.slane %v4779, 2
    %v4789 = vrot.slane %v4780, 2
    %v4790 = vsel %vm2482, %v4788, %v4789
    %v4795 = vadd.f32 %v4747, %v4787
    %v4796 = vadd.f32 %v4748, %v4786
    %v4797 = vadd.f32 %v4749, %v4790
    %v4798 = vadd.f32 %v4750, %v4789
    %v4799 = vmul.f32 %v189, %v4776
    %v4800 = vmul.f32 %v193, %v4776
    %v4801 = vmul.f32 %v197, %v4776
    %v4802 = vmul.f32 %v201, %v4776
    %v4807 = vrot.slane %v4799, 2
    %v4808 = vrot.slane %v4800, 2
    %v4809 = vsel %vm2482, %v4807, %v4808
    %v4810 = vrot.slane %v4801, 2
    %v4811 = vrot.slane %v4802, 2
    %v4812 = vsel %vm2482, %v4810, %v4811
    %v4817 = vadd.f32 %v4769, %v4809
    %v4818 = vadd.f32 %v4770, %v4808
    %v4819 = vadd.f32 %v4771, %v4812
    %v4820 = vadd.f32 %v4772, %v4811
    %v4821 = vlaneseq
    %v4822 = vshrl.u32 %v4821, 7
    %v4823 = vsub.s32 2, %v4822
    %v4824 = vrot.slane %v4121, %v4823
    %v4825 = vmul.f32 %v213, %v4824
    %v4826 = vmul.f32 %v217, %v4824
    %v4827 = vmul.f32 %v221, %v4824
    %v4828 = vmul.f32 %v225, %v4824
    %v4833 = vrot.slane %v4825, 2
    %v4834 = vrot.slane %v4826, 2
    %v4835 = vsel %vm2482, %v4833, %v4834
    %v4836 = vrot.slane %v4827, 2
    %v4837 = vrot.slane %v4828, 2
    %v4838 = vsel %vm2482, %v4836, %v4837
    %v4843 = vadd.f32 %v4795, %v4835
    %v4844 = vadd.f32 %v4796, %v4834
    %v4845 = vadd.f32 %v4797, %v4838
    %v4846 = vadd.f32 %v4798, %v4837
    %v4847 = vmul.f32 %v241, %v4824
    %v4848 = vmul.f32 %v245, %v4824
    %v4849 = vmul.f32 %v249, %v4824
    %v4850 = vmul.f32 %v253, %v4824
    %v4855 = vrot.slane %v4847, 2
    %v4856 = vrot.slane %v4848, 2
    %v4857 = vsel %vm2482, %v4855, %v4856
    %v4858 = vrot.slane %v4849, 2
    %v4859 = vrot.slane %v4850, 2
    %v4860 = vsel %vm2482, %v4858, %v4859
    %v4865 = vadd.f32 %v4817, %v4857
    %v4866 = vadd.f32 %v4818, %v4856
    %v4867 = vadd.f32 %v4819, %v4860
    %v4868 = vadd.f32 %v4820, %v4859
    %v4869 = vlaneseq
    %v4870 = vshrl.u32 %v4869, 7
    %v4871 = vsub.s32 3, %v4870
    %v4872 = vrot.slane %v4121, %v4871
    %v4873 = vmul.f32 %v265, %v4872
    %v4874 = vmul.f32 %v269, %v4872
    %v4875 = vmul.f32 %v273, %v4872
    %v4876 = vmul.f32 %v277, %v4872
    %v4881 = vrot.slane %v4873, 2
    %v4882 = vrot.slane %v4874, 2
    %v4883 = vsel %vm2482, %v4881, %v4882
    %v4884 = vrot.slane %v4875, 2
    %v4885 = vrot.slane %v4876, 2
    %v4886 = vsel %vm2482, %v4884, %v4885
    %v4891 = vadd.f32 %v4843, %v4883
    %v4892 = vadd.f32 %v4844, %v4882
    %v4893 = vadd.f32 %v4845, %v4886
    %v4894 = vadd.f32 %v4846, %v4885
    %v4895 = vmul.f32 %v293, %v4872
    %v4896 = vmul.f32 %v297, %v4872
    %v4897 = vmul.f32 %v301, %v4872
    %v4898 = vmul.f32 %v305, %v4872
    %v4903 = vrot.slane %v4895, 2
    %v4904 = vrot.slane %v4896, 2
    %v4905 = vsel %vm2482, %v4903, %v4904
    %v4906 = vrot.slane %v4897, 2
    %v4907 = vrot.slane %v4898, 2
    %v4908 = vsel %vm2482, %v4906, %v4907
    %v4913 = vadd.f32 %v4865, %v4905
    %v4914 = vadd.f32 %v4866, %v4904
    %v4915 = vadd.f32 %v4867, %v4908
    %v4916 = vadd.f32 %v4868, %v4907
    %v4917 = vlaneseq
    %v4918 = vshrl.u32 %v4917, 7
    %v4919 = vsub.s32 4, %v4918
    %v4920 = vrot.slane %v4121, %v4919
    %v4921 = vmul.f32 %v134, %v4920
    %v4922 = vmul.f32 %v139, %v4920
    %v4923 = vmul.f32 %v144, %v4920
    %v4924 = vmul.f32 %v149, %v4920
    %v4929 = vrot.slane %v4921, 2
    %v4930 = vrot.slane %v4922, 2
    %v4931 = vsel %vm2482, %v4929, %v4930
    %v4932 = vrot.slane %v4923, 2
    %v4933 = vrot.slane %v4924, 2
    %v4934 = vsel %vm2482, %v4932, %v4933
    %v4939 = vadd.f32 %v4891, %v4931
    %v4940 = vadd.f32 %v4892, %v4930
    %v4941 = vadd.f32 %v4893, %v4934
    %v4942 = vadd.f32 %v4894, %v4933
    %v4943 = vmul.f32 %v102, %v4920
    %v4944 = vmul.f32 %v107, %v4920
    %v4945 = vmul.f32 %v112, %v4920
    %v4946 = vmul.f32 %v117, %v4920
    %vm4951 = vcmask 1044480
    %v4952 = vrot.slane %v4943, 3
    %v4953 = vrot.slane %v4944, 3
    %v4954 = vsel %vm4951, %v4952, %v4953
    %v4955 = vrot.slane %v4945, 3
    %v4956 = vrot.slane %v4946, 3
    %v4957 = vsel %vm4951, %v4955, %v4956
    %v4962 = vadd.f32 %v4913, %v4954
    %v4963 = vadd.f32 %v4914, %v4953
    %v4964 = vadd.f32 %v4915, %v4957
    %v4965 = vadd.f32 %v4916, %v4956
    %v4966 = vlaneseq
    %v4967 = vshrl.u32 %v4966, 7
    %v4968 = vsub.s32 5, %v4967
    %v4969 = vrot.slane %v4121, %v4968
    %v4970 = vmul.f32 %v189, %v4969
    %v4971 = vmul.f32 %v193, %v4969
    %v4972 = vmul.f32 %v197, %v4969
    %v4973 = vmul.f32 %v201, %v4969
    %v4978 = vrot.slane %v4970, 2
    %v4979 = vrot.slane %v4971, 2
    %v4980 = vsel %vm2482, %v4978, %v4979
    %v4981 = vrot.slane %v4972, 2
    %v4982 = vrot.slane %v4973, 2
    %v4983 = vsel %vm2482, %v4981, %v4982
    %v4988 = vadd.f32 %v4939, %v4980
    %v4989 = vadd.f32 %v4940, %v4979
    %v4990 = vadd.f32 %v4941, %v4983
    %v4991 = vadd.f32 %v4942, %v4982
    %v4992 = vmul.f32 %v161, %v4969
    %v4993 = vmul.f32 %v165, %v4969
    %v4994 = vmul.f32 %v169, %v4969
    %v4995 = vmul.f32 %v173, %v4969
    %v5000 = vrot.slane %v4992, 3
    %v5001 = vrot.slane %v4993, 3
    %v5002 = vsel %vm4951, %v5000, %v5001
    %v5003 = vrot.slane %v4994, 3
    %v5004 = vrot.slane %v4995, 3
    %v5005 = vsel %vm4951, %v5003, %v5004
    %v5010 = vadd.f32 %v4962, %v5002
    %v5011 = vadd.f32 %v4963, %v5001
    %v5012 = vadd.f32 %v4964, %v5005
    %v5013 = vadd.f32 %v4965, %v5004
    %v5014 = vlaneseq
    %v5015 = vshrl.u32 %v5014, 7
    %v5016 = vsub.s32 6, %v5015
    %v5017 = vrot.slane %v4121, %v5016
    %v5018 = vmul.f32 %v241, %v5017
    %v5019 = vmul.f32 %v245, %v5017
    %v5020 = vmul.f32 %v249, %v5017
    %v5021 = vmul.f32 %v253, %v5017
    %v5026 = vrot.slane %v5018, 2
    %v5027 = vrot.slane %v5019, 2
    %v5028 = vsel %vm2482, %v5026, %v5027
    %v5029 = vrot.slane %v5020, 2
    %v5030 = vrot.slane %v5021, 2
    %v5031 = vsel %vm2482, %v5029, %v5030
    %v5036 = vadd.f32 %v4988, %v5028
    %v5037 = vadd.f32 %v4989, %v5027
    %v5038 = vadd.f32 %v4990, %v5031
    %v5039 = vadd.f32 %v4991, %v5030
    %v5040 = vmul.f32 %v213, %v5017
    %v5041 = vmul.f32 %v217, %v5017
    %v5042 = vmul.f32 %v221, %v5017
    %v5043 = vmul.f32 %v225, %v5017
    %v5048 = vrot.slane %v5040, 3
    %v5049 = vrot.slane %v5041, 3
    %v5050 = vsel %vm4951, %v5048, %v5049
    %v5051 = vrot.slane %v5042, 3
    %v5052 = vrot.slane %v5043, 3
    %v5053 = vsel %vm4951, %v5051, %v5052
    %v5058 = vadd.f32 %v5010, %v5050
    %v5059 = vadd.f32 %v5011, %v5049
    %v5060 = vadd.f32 %v5012, %v5053
    %v5061 = vadd.f32 %v5013, %v5052
    %v5062 = vlaneseq
    %v5063 = vshrl.u32 %v5062, 7
    %v5064 = vsub.s32 7, %v5063
    %v5065 = vrot.slane %v4121, %v5064
    %v5066 = vmul.f32 %v293, %v5065
    %v5067 = vmul.f32 %v297, %v5065
    %v5068 = vmul.f32 %v301, %v5065
    %v5069 = vmul.f32 %v305, %v5065
    %v5074 = vrot.slane %v5066, 2
    %v5075 = vrot.slane %v5067, 2
    %v5076 = vsel %vm2482, %v5074, %v5075
    %v5077 = vrot.slane %v5068, 2
    %v5078 = vrot.slane %v5069, 2
    %v5079 = vsel %vm2482, %v5077, %v5078
    %v5084 = vadd.f32 %v5036, %v5076
    %v5085 = vadd.f32 %v5037, %v5075
    %v5086 = vadd.f32 %v5038, %v5079
    %v5087 = vadd.f32 %v5039, %v5078
    %v5088 = vmul.f32 %v265, %v5065
    %v5089 = vmul.f32 %v269, %v5065
    %v5090 = vmul.f32 %v273, %v5065
    %v5091 = vmul.f32 %v277, %v5065
    %v5096 = vrot.slane %v5088, 3
    %v5097 = vrot.slane %v5089, 3
    %v5098 = vsel %vm4951, %v5096, %v5097
    %v5099 = vrot.slane %v5090, 3
    %v5100 = vrot.slane %v5091, 3
    %v5101 = vsel %vm4951, %v5099, %v5100
    %v5106 = vadd.f32 %v5058, %v5098
    %v5107 = vadd.f32 %v5059, %v5097
    %v5108 = vadd.f32 %v5060, %v5101
    %v5109 = vadd.f32 %v5061, %v5100
    %v5110 = vlaneseq
    %v5111 = vshrl.u32 %v5110, 7
    %v5112 = vsub.s32 0, %v5111
    %v5113 = vrot.slane %v4122, %v5112
    %v5114 = vmul.f32 %v102, %v5113
    %v5115 = vmul.f32 %v107, %v5113
    %v5116 = vmul.f32 %v112, %v5113
    %v5117 = vmul.f32 %v117, %v5113
    %v5122 = vrot.slane %v5114, 3
    %v5123 = vrot.slane %v5115, 3
    %v5124 = vsel %vm4951, %v5122, %v5123
    %v5125 = vrot.slane %v5116, 3
    %v5126 = vrot.slane %v5117, 3
    %v5127 = vsel %vm4951, %v5125, %v5126
    %v5132 = vadd.f32 %v5084, %v5124
    %v5133 = vadd.f32 %v5085, %v5123
    %v5134 = vadd.f32 %v5086, %v5127
    %v5135 = vadd.f32 %v5087, %v5126
    %v5136 = vmul.f32 %v134, %v5113
    %v5137 = vmul.f32 %v139, %v5113
    %v5138 = vmul.f32 %v144, %v5113
    %v5139 = vmul.f32 %v149, %v5113
    %v5144 = vrot.slane %v5136, 3
    %v5145 = vrot.slane %v5137, 3
    %v5146 = vsel %vm4951, %v5144, %v5145
    %v5147 = vrot.slane %v5138, 3
    %v5148 = vrot.slane %v5139, 3
    %v5149 = vsel %vm4951, %v5147, %v5148
    %v5154 = vadd.f32 %v5106, %v5146
    %v5155 = vadd.f32 %v5107, %v5145
    %v5156 = vadd.f32 %v5108, %v5149
    %v5157 = vadd.f32 %v5109, %v5148
    %v5158 = vlaneseq
    %v5159 = vshrl.u32 %v5158, 7
    %v5160 = vsub.s32 1, %v5159
    %v5161 = vrot.slane %v4122, %v5160
    %v5162 = vmul.f32 %v161, %v5161
    %v5163 = vmul.f32 %v165, %v5161
    %v5164 = vmul.f32 %v169, %v5161
    %v5165 = vmul.f32 %v173, %v5161
    %v5170 = vrot.slane %v5162, 3
    %v5171 = vrot.slane %v5163, 3
    %v5172 = vsel %vm4951, %v5170, %v5171
    %v5173 = vrot.slane %v5164, 3
    %v5174 = vrot.slane %v5165, 3
    %v5175 = vsel %vm4951, %v5173, %v5174
    %v5180 = vadd.f32 %v5132, %v5172
    %v5181 = vadd.f32 %v5133, %v5171
    %v5182 = vadd.f32 %v5134, %v5175
    %v5183 = vadd.f32 %v5135, %v5174
    %v5184 = vmul.f32 %v189, %v5161
    %v5185 = vmul.f32 %v193, %v5161
    %v5186 = vmul.f32 %v197, %v5161
    %v5187 = vmul.f32 %v201, %v5161
    %v5192 = vrot.slane %v5184, 3
    %v5193 = vrot.slane %v5185, 3
    %v5194 = vsel %vm4951, %v5192, %v5193
    %v5195 = vrot.slane %v5186, 3
    %v5196 = vrot.slane %v5187, 3
    %v5197 = vsel %vm4951, %v5195, %v5196
    %v5202 = vadd.f32 %v5154, %v5194
    %v5203 = vadd.f32 %v5155, %v5193
    %v5204 = vadd.f32 %v5156, %v5197
    %v5205 = vadd.f32 %v5157, %v5196
    %v5206 = vlaneseq
    %v5207 = vshrl.u32 %v5206, 7
    %v5208 = vsub.s32 2, %v5207
    %v5209 = vrot.slane %v4122, %v5208
    %v5210 = vmul.f32 %v213, %v5209
    %v5211 = vmul.f32 %v217, %v5209
    %v5212 = vmul.f32 %v221, %v5209
    %v5213 = vmul.f32 %v225, %v5209
    %v5218 = vrot.slane %v5210, 3
    %v5219 = vrot.slane %v5211, 3
    %v5220 = vsel %vm4951, %v5218, %v5219
    %v5221 = vrot.slane %v5212, 3
    %v5222 = vrot.slane %v5213, 3
    %v5223 = vsel %vm4951, %v5221, %v5222
    %v5228 = vadd.f32 %v5180, %v5220
    %v5229 = vadd.f32 %v5181, %v5219
    %v5230 = vadd.f32 %v5182, %v5223
    %v5231 = vadd.f32 %v5183, %v5222
    %v5232 = vmul.f32 %v241, %v5209
    %v5233 = vmul.f32 %v245, %v5209
    %v5234 = vmul.f32 %v249, %v5209
    %v5235 = vmul.f32 %v253, %v5209
    %v5240 = vrot.slane %v5232, 3
    %v5241 = vrot.slane %v5233, 3
    %v5242 = vsel %vm4951, %v5240, %v5241
    %v5243 = vrot.slane %v5234, 3
    %v5244 = vrot.slane %v5235, 3
    %v5245 = vsel %vm4951, %v5243, %v5244
    %v5250 = vadd.f32 %v5202, %v5242
    %v5251 = vadd.f32 %v5203, %v5241
    %v5252 = vadd.f32 %v5204, %v5245
    %v5253 = vadd.f32 %v5205, %v5244
    %v5254 = vlaneseq
    %v5255 = vshrl.u32 %v5254, 7
    %v5256 = vsub.s32 3, %v5255
    %v5257 = vrot.slane %v4122, %v5256
    %v5258 = vmul.f32 %v265, %v5257
    %v5259 = vmul.f32 %v269, %v5257
    %v5260 = vmul.f32 %v273, %v5257
    %v5261 = vmul.f32 %v277, %v5257
    %v5266 = vrot.slane %v5258, 3
    %v5267 = vrot.slane %v5259, 3
    %v5268 = vsel %vm4951, %v5266, %v5267
    %v5269 = vrot.slane %v5260, 3
    %v5270 = vrot.slane %v5261, 3
    %v5271 = vsel %vm4951, %v5269, %v5270
    %v5276 = vadd.f32 %v5228, %v5268
    %v5277 = vadd.f32 %v5229, %v5267
    %v5278 = vadd.f32 %v5230, %v5271
    %v5279 = vadd.f32 %v5231, %v5270
    %v5280 = vmul.f32 %v293, %v5257
    %v5281 = vmul.f32 %v297, %v5257
    %v5282 = vmul.f32 %v301, %v5257
    %v5283 = vmul.f32 %v305, %v5257
    %v5288 = vrot.slane %v5280, 3
    %v5289 = vrot.slane %v5281, 3
    %v5290 = vsel %vm4951, %v5288, %v5289
    %v5291 = vrot.slane %v5282, 3
    %v5292 = vrot.slane %v5283, 3
    %v5293 = vsel %vm4951, %v5291, %v5292
    %v5298 = vadd.f32 %v5250, %v5290
    %v5299 = vadd.f32 %v5251, %v5289
    %v5300 = vadd.f32 %v5252, %v5293
    %v5301 = vadd.f32 %v5253, %v5292
    %v5302 = vlaneseq
    %v5303 = vshrl.u32 %v5302, 7
    %v5304 = vsub.s32 4, %v5303
    %v5305 = vrot.slane %v4122, %v5304
    %v5306 = vmul.f32 %v134, %v5305
    %v5307 = vmul.f32 %v139, %v5305
    %v5308 = vmul.f32 %v144, %v5305
    %v5309 = vmul.f32 %v149, %v5305
    %v5314 = vrot.slane %v5306, 3
    %v5315 = vrot.slane %v5307, 3
    %v5316 = vsel %vm4951, %v5314, %v5315
    %v5317 = vrot.slane %v5308, 3
    %v5318 = vrot.slane %v5309, 3
    %v5319 = vsel %vm4951, %v5317, %v5318
    %v5324 = vadd.f32 %v5276, %v5316
    %v5325 = vadd.f32 %v5277, %v5315
    %v5326 = vadd.f32 %v5278, %v5319
    %v5327 = vadd.f32 %v5279, %v5318
    %v5328 = vmul.f32 %v102, %v5305
    %v5329 = vmul.f32 %v107, %v5305
    %v5330 = vmul.f32 %v112, %v5305
    %v5331 = vmul.f32 %v117, %v5305
    %vm5336 = vcmask 1043456
    %v5337 = vrot.slane %v5328, 4
    %v5338 = vrot.slane %v5329, 4
    %v5339 = vsel %vm5336, %v5337, %v5338
    %v5340 = vrot.slane %v5330, 4
    %v5341 = vrot.slane %v5331, 4
    %v5342 = vsel %vm5336, %v5340, %v5341
    %v5347 = vadd.f32 %v5298, %v5339
    %v5348 = vadd.f32 %v5299, %v5338
    %v5349 = vadd.f32 %v5300, %v5342
    %v5350 = vadd.f32 %v5301, %v5341
    %v5351 = vlaneseq
    %v5352 = vshrl.u32 %v5351, 7
    %v5353 = vsub.s32 5, %v5352
    %v5354 = vrot.slane %v4122, %v5353
    %v5355 = vmul.f32 %v189, %v5354
    %v5356 = vmul.f32 %v193, %v5354
    %v5357 = vmul.f32 %v197, %v5354
    %v5358 = vmul.f32 %v201, %v5354
    %v5363 = vrot.slane %v5355, 3
    %v5364 = vrot.slane %v5356, 3
    %v5365 = vsel %vm4951, %v5363, %v5364
    %v5366 = vrot.slane %v5357, 3
    %v5367 = vrot.slane %v5358, 3
    %v5368 = vsel %vm4951, %v5366, %v5367
    %v5373 = vadd.f32 %v5324, %v5365
    %v5374 = vadd.f32 %v5325, %v5364
    %v5375 = vadd.f32 %v5326, %v5368
    %v5376 = vadd.f32 %v5327, %v5367
    %v5377 = vmul.f32 %v161, %v5354
    %v5378 = vmul.f32 %v165, %v5354
    %v5379 = vmul.f32 %v169, %v5354
    %v5380 = vmul.f32 %v173, %v5354
    %v5385 = vrot.slane %v5377, 4
    %v5386 = vrot.slane %v5378, 4
    %v5387 = vsel %vm5336, %v5385, %v5386
    %v5388 = vrot.slane %v5379, 4
    %v5389 = vrot.slane %v5380, 4
    %v5390 = vsel %vm5336, %v5388, %v5389
    %v5395 = vadd.f32 %v5347, %v5387
    %v5396 = vadd.f32 %v5348, %v5386
    %v5397 = vadd.f32 %v5349, %v5390
    %v5398 = vadd.f32 %v5350, %v5389
    %v5399 = vlaneseq
    %v5400 = vshrl.u32 %v5399, 7
    %v5401 = vsub.s32 6, %v5400
    %v5402 = vrot.slane %v4122, %v5401
    %v5403 = vmul.f32 %v241, %v5402
    %v5404 = vmul.f32 %v245, %v5402
    %v5405 = vmul.f32 %v249, %v5402
    %v5406 = vmul.f32 %v253, %v5402
    %v5411 = vrot.slane %v5403, 3
    %v5412 = vrot.slane %v5404, 3
    %v5413 = vsel %vm4951, %v5411, %v5412
    %v5414 = vrot.slane %v5405, 3
    %v5415 = vrot.slane %v5406, 3
    %v5416 = vsel %vm4951, %v5414, %v5415
    %v5421 = vadd.f32 %v5373, %v5413
    %v5422 = vadd.f32 %v5374, %v5412
    %v5423 = vadd.f32 %v5375, %v5416
    %v5424 = vadd.f32 %v5376, %v5415
    %v5425 = vmul.f32 %v213, %v5402
    %v5426 = vmul.f32 %v217, %v5402
    %v5427 = vmul.f32 %v221, %v5402
    %v5428 = vmul.f32 %v225, %v5402
    %v5433 = vrot.slane %v5425, 4
    %v5434 = vrot.slane %v5426, 4
    %v5435 = vsel %vm5336, %v5433, %v5434
    %v5436 = vrot.slane %v5427, 4
    %v5437 = vrot.slane %v5428, 4
    %v5438 = vsel %vm5336, %v5436, %v5437
    %v5443 = vadd.f32 %v5395, %v5435
    %v5444 = vadd.f32 %v5396, %v5434
    %v5445 = vadd.f32 %v5397, %v5438
    %v5446 = vadd.f32 %v5398, %v5437
    %v5447 = vlaneseq
    %v5448 = vshrl.u32 %v5447, 7
    %v5449 = vsub.s32 7, %v5448
    %v5450 = vrot.slane %v4122, %v5449
    %v5451 = vmul.f32 %v293, %v5450
    %v5452 = vmul.f32 %v297, %v5450
    %v5453 = vmul.f32 %v301, %v5450
    %v5454 = vmul.f32 %v305, %v5450
    %v5459 = vrot.slane %v5451, 3
    %v5460 = vrot.slane %v5452, 3
    %v5461 = vsel %vm4951, %v5459, %v5460
    %v5462 = vrot.slane %v5453, 3
    %v5463 = vrot.slane %v5454, 3
    %v5464 = vsel %vm4951, %v5462, %v5463
    %v5469 = vadd.f32 %v5421, %v5461
    %v5470 = vadd.f32 %v5422, %v5460
    %v5471 = vadd.f32 %v5423, %v5464
    %v5472 = vadd.f32 %v5424, %v5463
    %v5473 = vmul.f32 %v265, %v5450
    %v5474 = vmul.f32 %v269, %v5450
    %v5475 = vmul.f32 %v273, %v5450
    %v5476 = vmul.f32 %v277, %v5450
    %v5481 = vrot.slane %v5473, 4
    %v5482 = vrot.slane %v5474, 4
    %v5483 = vsel %vm5336, %v5481, %v5482
    %v5484 = vrot.slane %v5475, 4
    %v5485 = vrot.slane %v5476, 4
    %v5486 = vsel %vm5336, %v5484, %v5485
    %v5491 = vadd.f32 %v5443, %v5483
    %v5492 = vadd.f32 %v5444, %v5482
    %v5493 = vadd.f32 %v5445, %v5486
    %v5494 = vadd.f32 %v5446, %v5485
    %v5495 = vlaneseq
    %v5496 = vshrl.u32 %v5495, 7
    %v5497 = vsub.s32 0, %v5496
    %v5498 = vrot.slane %v4123, %v5497
    %v5499 = vmul.f32 %v102, %v5498
    %v5500 = vmul.f32 %v107, %v5498
    %v5501 = vmul.f32 %v112, %v5498
    %v5502 = vmul.f32 %v117, %v5498
    %v5507 = vrot.slane %v5499, 4
    %v5508 = vrot.slane %v5500, 4
    %v5509 = vsel %vm5336, %v5507, %v5508
    %v5510 = vrot.slane %v5501, 4
    %v5511 = vrot.slane %v5502, 4
    %v5512 = vsel %vm5336, %v5510, %v5511
    %v5517 = vadd.f32 %v5469, %v5509
    %v5518 = vadd.f32 %v5470, %v5508
    %v5519 = vadd.f32 %v5471, %v5512
    %v5520 = vadd.f32 %v5472, %v5511
    %v5521 = vmul.f32 %v134, %v5498
    %v5522 = vmul.f32 %v139, %v5498
    %v5523 = vmul.f32 %v144, %v5498
    %v5524 = vmul.f32 %v149, %v5498
    %v5529 = vrot.slane %v5521, 4
    %v5530 = vrot.slane %v5522, 4
    %v5531 = vsel %vm5336, %v5529, %v5530
    %v5532 = vrot.slane %v5523, 4
    %v5533 = vrot.slane %v5524, 4
    %v5534 = vsel %vm5336, %v5532, %v5533
    %v5539 = vadd.f32 %v5491, %v5531
    %v5540 = vadd.f32 %v5492, %v5530
    %v5541 = vadd.f32 %v5493, %v5534
    %v5542 = vadd.f32 %v5494, %v5533
    %v5543 = vlaneseq
    %v5544 = vshrl.u32 %v5543, 7
    %v5545 = vsub.s32 1, %v5544
    %v5546 = vrot.slane %v4123, %v5545
    %v5547 = vmul.f32 %v161, %v5546
    %v5548 = vmul.f32 %v165, %v5546
    %v5549 = vmul.f32 %v169, %v5546
    %v5550 = vmul.f32 %v173, %v5546
    %v5555 = vrot.slane %v5547, 4
    %v5556 = vrot.slane %v5548, 4
    %v5557 = vsel %vm5336, %v5555, %v5556
    %v5558 = vrot.slane %v5549, 4
    %v5559 = vrot.slane %v5550, 4
    %v5560 = vsel %vm5336, %v5558, %v5559
    %v5565 = vadd.f32 %v5517, %v5557
    %v5566 = vadd.f32 %v5518, %v5556
    %v5567 = vadd.f32 %v5519, %v5560
    %v5568 = vadd.f32 %v5520, %v5559
    %v5569 = vmul.f32 %v189, %v5546
    %v5570 = vmul.f32 %v193, %v5546
    %v5571 = vmul.f32 %v197, %v5546
    %v5572 = vmul.f32 %v201, %v5546
    %v5577 = vrot.slane %v5569, 4
    %v5578 = vrot.slane %v5570, 4
    %v5579 = vsel %vm5336, %v5577, %v5578
    %v5580 = vrot.slane %v5571, 4
    %v5581 = vrot.slane %v5572, 4
    %v5582 = vsel %vm5336, %v5580, %v5581
    %v5587 = vadd.f32 %v5539, %v5579
    %v5588 = vadd.f32 %v5540, %v5578
    %v5589 = vadd.f32 %v5541, %v5582
    %v5590 = vadd.f32 %v5542, %v5581
    %v5591 = vlaneseq
    %v5592 = vshrl.u32 %v5591, 7
    %v5593 = vsub.s32 2, %v5592
    %v5594 = vrot.slane %v4123, %v5593
    %v5595 = vmul.f32 %v213, %v5594
    %v5596 = vmul.f32 %v217, %v5594
    %v5597 = vmul.f32 %v221, %v5594
    %v5598 = vmul.f32 %v225, %v5594
    %v5603 = vrot.slane %v5595, 4
    %v5604 = vrot.slane %v5596, 4
    %v5605 = vsel %vm5336, %v5603, %v5604
    %v5606 = vrot.slane %v5597, 4
    %v5607 = vrot.slane %v5598, 4
    %v5608 = vsel %vm5336, %v5606, %v5607
    %v5613 = vadd.f32 %v5565, %v5605
    %v5614 = vadd.f32 %v5566, %v5604
    %v5615 = vadd.f32 %v5567, %v5608
    %v5616 = vadd.f32 %v5568, %v5607
    %v5617 = vmul.f32 %v241, %v5594
    %v5618 = vmul.f32 %v245, %v5594
    %v5619 = vmul.f32 %v249, %v5594
    %v5620 = vmul.f32 %v253, %v5594
    %v5625 = vrot.slane %v5617, 4
    %v5626 = vrot.slane %v5618, 4
    %v5627 = vsel %vm5336, %v5625, %v5626
    %v5628 = vrot.slane %v5619, 4
    %v5629 = vrot.slane %v5620, 4
    %v5630 = vsel %vm5336, %v5628, %v5629
    %v5635 = vadd.f32 %v5587, %v5627
    %v5636 = vadd.f32 %v5588, %v5626
    %v5637 = vadd.f32 %v5589, %v5630
    %v5638 = vadd.f32 %v5590, %v5629
    %v5639 = vlaneseq
    %v5640 = vshrl.u32 %v5639, 7
    %v5641 = vsub.s32 3, %v5640
    %v5642 = vrot.slane %v4123, %v5641
    %v5643 = vmul.f32 %v265, %v5642
    %v5644 = vmul.f32 %v269, %v5642
    %v5645 = vmul.f32 %v273, %v5642
    %v5646 = vmul.f32 %v277, %v5642
    %v5651 = vrot.slane %v5643, 4
    %v5652 = vrot.slane %v5644, 4
    %v5653 = vsel %vm5336, %v5651, %v5652
    %v5654 = vrot.slane %v5645, 4
    %v5655 = vrot.slane %v5646, 4
    %v5656 = vsel %vm5336, %v5654, %v5655
    %v5661 = vadd.f32 %v5613, %v5653
    %v5662 = vadd.f32 %v5614, %v5652
    %v5663 = vadd.f32 %v5615, %v5656
    %v5664 = vadd.f32 %v5616, %v5655
    %v5665 = vmul.f32 %v293, %v5642
    %v5666 = vmul.f32 %v297, %v5642
    %v5667 = vmul.f32 %v301, %v5642
    %v5668 = vmul.f32 %v305, %v5642
    %v5673 = vrot.slane %v5665, 4
    %v5674 = vrot.slane %v5666, 4
    %v5675 = vsel %vm5336, %v5673, %v5674
    %v5676 = vrot.slane %v5667, 4
    %v5677 = vrot.slane %v5668, 4
    %v5678 = vsel %vm5336, %v5676, %v5677
    %v5683 = vadd.f32 %v5635, %v5675
    %v5684 = vadd.f32 %v5636, %v5674
    %v5685 = vadd.f32 %v5637, %v5678
    %v5686 = vadd.f32 %v5638, %v5677
    %v5687 = vlaneseq
    %v5688 = vshrl.u32 %v5687, 7
    %v5689 = vsub.s32 4, %v5688
    %v5690 = vrot.slane %v4123, %v5689
    %v5691 = vmul.f32 %v134, %v5690
    %v5692 = vmul.f32 %v139, %v5690
    %v5693 = vmul.f32 %v144, %v5690
    %v5694 = vmul.f32 %v149, %v5690
    %v5699 = vrot.slane %v5691, 4
    %v5700 = vrot.slane %v5692, 4
    %v5701 = vsel %vm5336, %v5699, %v5700
    %v5702 = vrot.slane %v5693, 4
    %v5703 = vrot.slane %v5694, 4
    %v5704 = vsel %vm5336, %v5702, %v5703
    %v5709 = vadd.f32 %v5661, %v5701
    %v5710 = vadd.f32 %v5662, %v5700
    %v5711 = vadd.f32 %v5663, %v5704
    %v5712 = vadd.f32 %v5664, %v5703
    %v5713 = vmul.f32 %v102, %v5690
    %v5714 = vmul.f32 %v107, %v5690
    %v5715 = vmul.f32 %v112, %v5690
    %v5716 = vmul.f32 %v117, %v5690
    %vm5721 = vcmask 1042432
    %v5722 = vrot.slane %v5713, 5
    %v5723 = vrot.slane %v5714, 5
    %v5724 = vsel %vm5721, %v5722, %v5723
    %v5725 = vrot.slane %v5715, 5
    %v5726 = vrot.slane %v5716, 5
    %v5727 = vsel %vm5721, %v5725, %v5726
    %v5732 = vadd.f32 %v5683, %v5724
    %v5733 = vadd.f32 %v5684, %v5723
    %v5734 = vadd.f32 %v5685, %v5727
    %v5735 = vadd.f32 %v5686, %v5726
    %v5736 = vlaneseq
    %v5737 = vshrl.u32 %v5736, 7
    %v5738 = vsub.s32 5, %v5737
    %v5739 = vrot.slane %v4123, %v5738
    %v5740 = vmul.f32 %v189, %v5739
    %v5741 = vmul.f32 %v193, %v5739
    %v5742 = vmul.f32 %v197, %v5739
    %v5743 = vmul.f32 %v201, %v5739
    %v5748 = vrot.slane %v5740, 4
    %v5749 = vrot.slane %v5741, 4
    %v5750 = vsel %vm5336, %v5748, %v5749
    %v5751 = vrot.slane %v5742, 4
    %v5752 = vrot.slane %v5743, 4
    %v5753 = vsel %vm5336, %v5751, %v5752
    %v5758 = vadd.f32 %v5709, %v5750
    %v5759 = vadd.f32 %v5710, %v5749
    %v5760 = vadd.f32 %v5711, %v5753
    %v5761 = vadd.f32 %v5712, %v5752
    %v5762 = vmul.f32 %v161, %v5739
    %v5763 = vmul.f32 %v165, %v5739
    %v5764 = vmul.f32 %v169, %v5739
    %v5765 = vmul.f32 %v173, %v5739
    %v5770 = vrot.slane %v5762, 5
    %v5771 = vrot.slane %v5763, 5
    %v5772 = vsel %vm5721, %v5770, %v5771
    %v5773 = vrot.slane %v5764, 5
    %v5774 = vrot.slane %v5765, 5
    %v5775 = vsel %vm5721, %v5773, %v5774
    %v5780 = vadd.f32 %v5732, %v5772
    %v5781 = vadd.f32 %v5733, %v5771
    %v5782 = vadd.f32 %v5734, %v5775
    %v5783 = vadd.f32 %v5735, %v5774
    %v5784 = vlaneseq
    %v5785 = vshrl.u32 %v5784, 7
    %v5786 = vsub.s32 6, %v5785
    %v5787 = vrot.slane %v4123, %v5786
    %v5788 = vmul.f32 %v241, %v5787
    %v5789 = vmul.f32 %v245, %v5787
    %v5790 = vmul.f32 %v249, %v5787
    %v5791 = vmul.f32 %v253, %v5787
    %v5796 = vrot.slane %v5788, 4
    %v5797 = vrot.slane %v5789, 4
    %v5798 = vsel %vm5336, %v5796, %v5797
    %v5799 = vrot.slane %v5790, 4
    %v5800 = vrot.slane %v5791, 4
    %v5801 = vsel %vm5336, %v5799, %v5800
    %v5806 = vadd.f32 %v5758, %v5798
    %v5807 = vadd.f32 %v5759, %v5797
    %v5808 = vadd.f32 %v5760, %v5801
    %v5809 = vadd.f32 %v5761, %v5800
    %v5810 = vmul.f32 %v213, %v5787
    %v5811 = vmul.f32 %v217, %v5787
    %v5812 = vmul.f32 %v221, %v5787
    %v5813 = vmul.f32 %v225, %v5787
    %v5818 = vrot.slane %v5810, 5
    %v5819 = vrot.slane %v5811, 5
    %v5820 = vsel %vm5721, %v5818, %v5819
    %v5821 = vrot.slane %v5812, 5
    %v5822 = vrot.slane %v5813, 5
    %v5823 = vsel %vm5721, %v5821, %v5822
    %v5828 = vadd.f32 %v5780, %v5820
    %v5829 = vadd.f32 %v5781, %v5819
    %v5830 = vadd.f32 %v5782, %v5823
    %v5831 = vadd.f32 %v5783, %v5822
    %v5832 = vlaneseq
    %v5833 = vshrl.u32 %v5832, 7
    %v5834 = vsub.s32 7, %v5833
    %v5835 = vrot.slane %v4123, %v5834
    %v5836 = vmul.f32 %v293, %v5835
    %v5837 = vmul.f32 %v297, %v5835
    %v5838 = vmul.f32 %v301, %v5835
    %v5839 = vmul.f32 %v305, %v5835
    %v5844 = vrot.slane %v5836, 4
    %v5845 = vrot.slane %v5837, 4
    %v5846 = vsel %vm5336, %v5844, %v5845
    %v5847 = vrot.slane %v5838, 4
    %v5848 = vrot.slane %v5839, 4
    %v5849 = vsel %vm5336, %v5847, %v5848
    %v5854 = vadd.f32 %v5806, %v5846
    %v5855 = vadd.f32 %v5807, %v5845
    %v5856 = vadd.f32 %v5808, %v5849
    %v5857 = vadd.f32 %v5809, %v5848
    %v5858 = vmul.f32 %v265, %v5835
    %v5859 = vmul.f32 %v269, %v5835
    %v5860 = vmul.f32 %v273, %v5835
    %v5861 = vmul.f32 %v277, %v5835
    %v5866 = vrot.slane %v5858, 5
    %v5867 = vrot.slane %v5859, 5
    %v5868 = vsel %vm5721, %v5866, %v5867
    %v5869 = vrot.slane %v5860, 5
    %v5870 = vrot.slane %v5861, 5
    %v5871 = vsel %vm5721, %v5869, %v5870
    %v5876 = vadd.f32 %v5828, %v5868
    %v5877 = vadd.f32 %v5829, %v5867
    %v5878 = vadd.f32 %v5830, %v5871
    %v5879 = vadd.f32 %v5831, %v5870
    %v5880 = vlaneseq
    %v5881 = vshrl.u32 %v5880, 7
    %v5882 = vsub.s32 0, %v5881
    %v5883 = vrot.slane %v4124, %v5882
    %v5884 = vmul.f32 %v102, %v5883
    %v5885 = vmul.f32 %v107, %v5883
    %v5886 = vmul.f32 %v112, %v5883
    %v5887 = vmul.f32 %v117, %v5883
    %v5892 = vrot.slane %v5884, 5
    %v5893 = vrot.slane %v5885, 5
    %v5894 = vsel %vm5721, %v5892, %v5893
    %v5895 = vrot.slane %v5886, 5
    %v5896 = vrot.slane %v5887, 5
    %v5897 = vsel %vm5721, %v5895, %v5896
    %v5902 = vadd.f32 %v5854, %v5894
    %v5903 = vadd.f32 %v5855, %v5893
    %v5904 = vadd.f32 %v5856, %v5897
    %v5905 = vadd.f32 %v5857, %v5896
    %v5906 = vmul.f32 %v134, %v5883
    %v5907 = vmul.f32 %v139, %v5883
    %v5908 = vmul.f32 %v144, %v5883
    %v5909 = vmul.f32 %v149, %v5883
    %v5914 = vrot.slane %v5906, 5
    %v5915 = vrot.slane %v5907, 5
    %v5916 = vsel %vm5721, %v5914, %v5915
    %v5917 = vrot.slane %v5908, 5
    %v5918 = vrot.slane %v5909, 5
    %v5919 = vsel %vm5721, %v5917, %v5918
    %v5924 = vadd.f32 %v5876, %v5916
    %v5925 = vadd.f32 %v5877, %v5915
    %v5926 = vadd.f32 %v5878, %v5919
    %v5927 = vadd.f32 %v5879, %v5918
    %v5928 = vlaneseq
    %v5929 = vshrl.u32 %v5928, 7
    %v5930 = vsub.s32 1, %v5929
    %v5931 = vrot.slane %v4124, %v5930
    %v5932 = vmul.f32 %v161, %v5931
    %v5933 = vmul.f32 %v165, %v5931
    %v5934 = vmul.f32 %v169, %v5931
    %v5935 = vmul.f32 %v173, %v5931
    %v5940 = vrot.slane %v5932, 5
    %v5941 = vrot.slane %v5933, 5
    %v5942 = vsel %vm5721, %v5940, %v5941
    %v5943 = vrot.slane %v5934, 5
    %v5944 = vrot.slane %v5935, 5
    %v5945 = vsel %vm5721, %v5943, %v5944
    %v5950 = vadd.f32 %v5902, %v5942
    %v5951 = vadd.f32 %v5903, %v5941
    %v5952 = vadd.f32 %v5904, %v5945
    %v5953 = vadd.f32 %v5905, %v5944
    %v5954 = vmul.f32 %v189, %v5931
    %v5955 = vmul.f32 %v193, %v5931
    %v5956 = vmul.f32 %v197, %v5931
    %v5957 = vmul.f32 %v201, %v5931
    %v5962 = vrot.slane %v5954, 5
    %v5963 = vrot.slane %v5955, 5
    %v5964 = vsel %vm5721, %v5962, %v5963
    %v5965 = vrot.slane %v5956, 5
    %v5966 = vrot.slane %v5957, 5
    %v5967 = vsel %vm5721, %v5965, %v5966
    %v5972 = vadd.f32 %v5924, %v5964
    %v5973 = vadd.f32 %v5925, %v5963
    %v5974 = vadd.f32 %v5926, %v5967
    %v5975 = vadd.f32 %v5927, %v5966
    %v5976 = vlaneseq
    %v5977 = vshrl.u32 %v5976, 7
    %v5978 = vsub.s32 2, %v5977
    %v5979 = vrot.slane %v4124, %v5978
    %v5980 = vmul.f32 %v213, %v5979
    %v5981 = vmul.f32 %v217, %v5979
    %v5982 = vmul.f32 %v221, %v5979
    %v5983 = vmul.f32 %v225, %v5979
    %v5988 = vrot.slane %v5980, 5
    %v5989 = vrot.slane %v5981, 5
    %v5990 = vsel %vm5721, %v5988, %v5989
    %v5991 = vrot.slane %v5982, 5
    %v5992 = vrot.slane %v5983, 5
    %v5993 = vsel %vm5721, %v5991, %v5992
    %v5998 = vadd.f32 %v5950, %v5990
    %v5999 = vadd.f32 %v5951, %v5989
    %v6000 = vadd.f32 %v5952, %v5993
    %v6001 = vadd.f32 %v5953, %v5992
    %v6002 = vmul.f32 %v241, %v5979
    %v6003 = vmul.f32 %v245, %v5979
    %v6004 = vmul.f32 %v249, %v5979
    %v6005 = vmul.f32 %v253, %v5979
    %v6010 = vrot.slane %v6002, 5
    %v6011 = vrot.slane %v6003, 5
    %v6012 = vsel %vm5721, %v6010, %v6011
    %v6013 = vrot.slane %v6004, 5
    %v6014 = vrot.slane %v6005, 5
    %v6015 = vsel %vm5721, %v6013, %v6014
    %v6020 = vadd.f32 %v5972, %v6012
    %v6021 = vadd.f32 %v5973, %v6011
    %v6022 = vadd.f32 %v5974, %v6015
    %v6023 = vadd.f32 %v5975, %v6014
    %v6024 = vlaneseq
    %v6025 = vshrl.u32 %v6024, 7
    %v6026 = vsub.s32 3, %v6025
    %v6027 = vrot.slane %v4124, %v6026
    %v6028 = vmul.f32 %v265, %v6027
    %v6029 = vmul.f32 %v269, %v6027
    %v6030 = vmul.f32 %v273, %v6027
    %v6031 = vmul.f32 %v277, %v6027
    %v6036 = vrot.slane %v6028, 5
    %v6037 = vrot.slane %v6029, 5
    %v6038 = vsel %vm5721, %v6036, %v6037
    %v6039 = vrot.slane %v6030, 5
    %v6040 = vrot.slane %v6031, 5
    %v6041 = vsel %vm5721, %v6039, %v6040
    %v6046 = vadd.f32 %v5998, %v6038
    %v6047 = vadd.f32 %v5999, %v6037
    %v6048 = vadd.f32 %v6000, %v6041
    %v6049 = vadd.f32 %v6001, %v6040
    %v6050 = vmul.f32 %v293, %v6027
    %v6051 = vmul.f32 %v297, %v6027
    %v6052 = vmul.f32 %v301, %v6027
    %v6053 = vmul.f32 %v305, %v6027
    %v6058 = vrot.slane %v6050, 5
    %v6059 = vrot.slane %v6051, 5
    %v6060 = vsel %vm5721, %v6058, %v6059
    %v6061 = vrot.slane %v6052, 5
    %v6062 = vrot.slane %v6053, 5
    %v6063 = vsel %vm5721, %v6061, %v6062
    %v6068 = vadd.f32 %v6020, %v6060
    %v6069 = vadd.f32 %v6021, %v6059
    %v6070 = vadd.f32 %v6022, %v6063
    %v6071 = vadd.f32 %v6023, %v6062
    %v6072 = vmax.f32 %v6046, %v6068
    %v6073 = vmax.f32 %v6047, %v6069
    %v6074 = vmax.f32 %v6048, %v6070
    %v6075 = vmax.f32 %v6049, %v6071
    %v6076 = vld [vmem:[%s7] sm:$0x1]
    %v6078 = vlaneseq
    %v6079 = vshrl.u32 %v6078, 7
    %v6080 = vsub.s32 0, %v6079
    %v6081 = vrot.slane %v6076, %v6080
    %v6083 = vadd.f32 %v6072, %v6081
    %v6084 = vadd.f32 %v6074, %v6081
    %v6085 = vld [vmem:[#allocation7] sm:$0xff]
    %v6086 = vld [vmem:[#allocation7 + $0x8] sm:$0xff]
    %v6087 = vld [vmem:[#allocation7 + $0x10] sm:$0xff]
    %v6088 = vld [vmem:[#allocation7 + $0x18] sm:$0xff]
    %v6089 = vld [vmem:[#allocation7 + $0x20] sm:$0xff]
    %v6090 = vld [vmem:[#allocation7 + $0x28] sm:$0xff]
    %v6091 = vld [vmem:[#allocation7 + $0x30] sm:$0xff]
    %v6092 = vld [vmem:[#allocation7 + $0x38] sm:$0xff]
    %v6093 = vld [vmem:[#allocation7 + $0x40] sm:$0xff]
    %v6094 = vld [vmem:[#allocation7 + $0x48] sm:$0xff]
    %v6095 = vld [vmem:[#allocation7 + $0x50] sm:$0xff]
    %v6096 = vld [vmem:[#allocation7 + $0x58] sm:$0xff]
    %v6097 = vld [vmem:[#allocation7 + $0x60] sm:$0xff]
    %v6098 = vld [vmem:[#allocation7 + $0x68] sm:$0xff]
    %v6099 = vld [vmem:[#allocation7 + $0x70] sm:$0xff]
    %v6100 = vld [vmem:[#allocation7 + $0x78] sm:$0xff]
    %v6101 = vld [vmem:[#allocation7 + $0x80] sm:$0xff]
    %v6102 = vld [vmem:[#allocation7 + $0x88] sm:$0xff]
    %v6103 = vld [vmem:[#allocation7 + $0x90] sm:$0xff]
    %v6104 = vld [vmem:[#allocation7 + $0x98] sm:$0xff]
    %v6105 = vld [vmem:[#allocation7 + $0xa0] sm:$0xff]
    %v6106 = vld [vmem:[#allocation7 + $0xa8] sm:$0xff]
    %v6107 = vld [vmem:[#allocation7 + $0xb0] sm:$0xff]
    %v6108 = vld [vmem:[#allocation7 + $0xb8] sm:$0xff]
    %v6109 = vld [vmem:[#allocation7 + $0xc0] sm:$0xff]
    %v6110 = vld [vmem:[#allocation7 + $0xc8] sm:$0xff]
    %v6111 = vld [vmem:[#allocation7 + $0xd0] sm:$0xff]
    %v6112 = vld [vmem:[#allocation7 + $0xd8] sm:$0xff]
    %v6113 = vld [vmem:[#allocation7 + $0xe0] sm:$0xff]
    %v6114 = vld [vmem:[#allocation7 + $0xe8] sm:$0xff]
    %v6115 = vld [vmem:[#allocation7 + $0xf0] sm:$0xff]
    %v6116 = vld [vmem:[#allocation7 + $0xf8] sm:$0xff]
    %v6117 = vld [vmem:[#allocation7 + $0x100] sm:$0xff]
    %v6118 = vld [vmem:[#allocation7 + $0x108] sm:$0xff]
    %v6119 = vld [vmem:[#allocation7 + $0x110] sm:$0xff]
    %v6120 = vld [vmem:[#allocation7 + $0x118] sm:$0xff]
    %v6121 = vld [vmem:[#allocation7 + $0x120] sm:$0xff]
    %v6122 = vld [vmem:[#allocation7 + $0x128] sm:$0xff]
    %v6123 = vld [vmem:[#allocation7 + $0x130] sm:$0xff]
    %v6124 = vld [vmem:[#allocation7 + $0x138] sm:$0xff]
    %v6125 = vld [vmem:[#allocation7 + $0x140] sm:$0xff]
    %v6126 = vld [vmem:[#allocation7 + $0x148] sm:$0xff]
    %v6127 = vld [vmem:[#allocation7 + $0x150] sm:$0xff]
    %v6128 = vld [vmem:[#allocation7 + $0x158] sm:$0xff]
    %v6129 = vld [vmem:[#allocation7 + $0x160] sm:$0xff]
    %v6130 = vld [vmem:[#allocation7 + $0x168] sm:$0xff]
    %v6131 = vld [vmem:[#allocation7 + $0x170] sm:$0xff]
    %v6132 = vld [vmem:[#allocation7 + $0x178] sm:$0xff]
    %v6133 = vld [vmem:[#allocation7 + $0x180] sm:$0xff]
    %v6134 = vld [vmem:[#allocation7 + $0x188] sm:$0xff]
    %v6135 = vld [vmem:[#allocation7 + $0x190] sm:$0xff]
    %v6136 = vld [vmem:[#allocation7 + $0x198] sm:$0xff]
    %v6137 = vld [vmem:[#allocation7 + $0x1a0] sm:$0xff]
    %v6138 = vld [vmem:[#allocation7 + $0x1a8] sm:$0xff]
    %v6139 = vld [vmem:[#allocation7 + $0x1b0] sm:$0xff]
    %v6140 = vld [vmem:[#allocation7 + $0x1b8] sm:$0xff]
    %v6141 = vld [vmem:[#allocation7 + $0x1c0] sm:$0xff]
    %v6142 = vld [vmem:[#allocation7 + $0x1c8] sm:$0xff]
    %v6143 = vld [vmem:[#allocation7 + $0x1d0] sm:$0xff]
    %v6144 = vld [vmem:[#allocation7 + $0x1d8] sm:$0xff]
    %v6145 = vld [vmem:[#allocation7 + $0x1e0] sm:$0xff]
    %v6146 = vld [vmem:[#allocation7 + $0x1e8] sm:$0xff]
    %v6147 = vld [vmem:[#allocation7 + $0x1f0] sm:$0xff]
    %v6148 = vld [vmem:[#allocation7 + $0x1f8] sm:$0xff]
    %v6149 = vld [vmem:[#allocation7 + $0x200] sm:$0xff]
    %v6150 = vld [vmem:[#allocation7 + $0x208] sm:$0xff]
    %v6151 = vld [vmem:[#allocation7 + $0x210] sm:$0xff]
    %v6152 = vld [vmem:[#allocation7 + $0x218] sm:$0xff]
    %v6153 = vld [vmem:[#allocation7 + $0x220] sm:$0xff]
    %v6154 = vld [vmem:[#allocation7 + $0x228] sm:$0xff]
    %v6155 = vld [vmem:[#allocation7 + $0x230] sm:$0xff]
    %v6156 = vld [vmem:[#allocation7 + $0x238] sm:$0xff]
    %v6157 = vld [vmem:[#allocation7 + $0x240] sm:$0xff]
    %v6158 = vld [vmem:[#allocation7 + $0x248] sm:$0xff]
    %v6159 = vld [vmem:[#allocation7 + $0x250] sm:$0xff]
    %v6160 = vld [vmem:[#allocation7 + $0x258] sm:$0xff]
    %v6161 = vld [vmem:[#allocation7 + $0x260] sm:$0xff]
    %v6162 = vld [vmem:[#allocation7 + $0x268] sm:$0xff]
    %v6163 = vld [vmem:[#allocation7 + $0x270] sm:$0xff]
    %v6164 = vld [vmem:[#allocation7 + $0x278] sm:$0xff]
    %v6165 = vld [vmem:[#allocation7 + $0x280] sm:$0xff]
    %v6166 = vld [vmem:[#allocation7 + $0x288] sm:$0xff]
    %v6167 = vld [vmem:[#allocation7 + $0x290] sm:$0xff]
    %v6168 = vld [vmem:[#allocation7 + $0x298] sm:$0xff]
    %v6169 = vld [vmem:[#allocation7 + $0x2a0] sm:$0xff]
    %v6170 = vld [vmem:[#allocation7 + $0x2a8] sm:$0xff]
    %v6171 = vld [vmem:[#allocation7 + $0x2b0] sm:$0xff]
    %v6172 = vld [vmem:[#allocation7 + $0x2b8] sm:$0xff]
    %v6173 = vcombine.high %v6083, 0.0
    %v6175 = vunpack.c.l.s4 1983009808
    %v6176 = vunpack.c.0.s8 %v6175
    %v6177 = vlaneseq
    %v6178 = vshrl.u32 %v6177, 7
    %v6179 = vsub.s32 %v6176, %v6178
    %v6180 = vrot.slane %v6083, %v6179
    %v6182 = vunpack.c.l.s4 1983009808
    %v6183 = vunpack.c.0.s8 %v6182
    %v6184 = vlaneseq
    %v6185 = vshrl.u32 %v6184, 7
    %v6186 = vsub.s32 %v6183, %v6185
    %v6187 = vrot.slane %v6173, %v6186
    %v6188 = vcombine.high %v6084, 0.0
    %v6190 = vunpack.c.l.s4 1983009808
    %v6191 = vunpack.c.0.s8 %v6190
    %v6192 = vlaneseq
    %v6193 = vshrl.u32 %v6192, 7
    %v6194 = vsub.s32 %v6191, %v6193
    %v6195 = vrot.slane %v6084, %v6194
    %v6197 = vunpack.c.l.s4 1983009808
    %v6198 = vunpack.c.0.s8 %v6197
    %v6199 = vlaneseq
    %v6200 = vshrl.u32 %v6199, 7
    %v6201 = vsub.s32 %v6198, %v6200
    %v6202 = vrot.slane %v6188, %v6201
    %v6203 = vcombine.low %v6180, %v6195
    %v6204 = vcombine.high %v6180, %v6195
    %v6206 = vunpack.c.l.s4 1934713408
    %v6207 = vunpack.c.0.s8 %v6206
    %v6208 = vlaneseq
    %v6209 = vshrl.u32 %v6208, 7
    %v6210 = vsub.s32 %v6207, %v6209
    %v6211 = vrot.slane %v6203, %v6210
    %v6213 = vunpack.c.l.s4 1934713408
    %v6214 = vunpack.c.0.s8 %v6213
    %v6215 = vlaneseq
    %v6216 = vshrl.u32 %v6215, 7
    %v6217 = vsub.s32 %v6214, %v6216
    %v6218 = vrot.slane %v6204, %v6217
    %v6219 = vcombine.low %v6187, %v6202
    %v6220 = vcombine.high %v6187, %v6202
    %v6222 = vunpack.c.l.s4 1934713408
    %v6223 = vunpack.c.0.s8 %v6222
    %v6224 = vlaneseq
    %v6225 = vshrl.u32 %v6224, 7
    %v6226 = vsub.s32 %v6223, %v6225
    %v6227 = vrot.slane %v6219, %v6226
    %v6229 = vunpack.c.l.s4 1934713408
    %v6230 = vunpack.c.0.s8 %v6229
    %v6231 = vlaneseq
    %v6232 = vshrl.u32 %v6231, 7
    %v6233 = vsub.s32 %v6230, %v6232
    %v6234 = vrot.slane %v6220, %v6233
    %v6235 = vcombine.high %v6211, 0.0
    %v6236 = vcombine.high %v6218, 0.0
    %v6237 = vcombine.high %v6227, 0.0
    %v6238 = vcombine.high %v6234, 0.0
    %v6239 = vadd.f32 %v6073, %v6081
    %v6241 = vunpack.c.l.s4 1983009808
    %v6242 = vunpack.c.0.s8 %v6241
    %v6243 = vlaneseq
    %v6244 = vshrl.u32 %v6243, 7
    %v6245 = vsub.s32 %v6242, %v6244
    %v6246 = vrot.slane %v6239, %v6245
    %v6247 = vadd.f32 %v6075, %v6081
    %v6249 = vunpack.c.l.s4 1983009808
    %v6250 = vunpack.c.0.s8 %v6249
    %v6251 = vlaneseq
    %v6252 = vshrl.u32 %v6251, 7
    %v6253 = vsub.s32 %v6250, %v6252
    %v6254 = vrot.slane %v6247, %v6253
    %v6255 = vcombine.low %v6246, %v6254
    %v6256 = vcombine.high %v6246, %v6254
    %v6258 = vunpack.c.l.s4 1934713408
    %v6259 = vunpack.c.0.s8 %v6258
    %v6260 = vlaneseq
    %v6261 = vshrl.u32 %v6260, 7
    %v6262 = vsub.s32 %v6259, %v6261
    %v6263 = vrot.slane %v6255, %v6262
    %v6264 = vcombine.high %v6263, 0.0
    %v6266 = vunpack.c.l.s4 1934713408
    %v6267 = vunpack.c.0.s8 %v6266
    %v6268 = vlaneseq
    %v6269 = vshrl.u32 %v6268, 7
    %v6270 = vsub.s32 %v6267, %v6269
    %v6271 = vrot.slane %v6256, %v6270
    %v6273 = vsel %vm910, %v6211, 0
    %6275 = vmatprep.subr.mxu0 0.0
    %6276 = vmatpush1.msra.mxu0 0.0
    %6277 = vmatprep.subr.mxu0 0.0
    %6278 = vmatpush1.msra.mxu0 0.0
    %6279 = vmatprep.subr.mxu0 0.0
    %6280 = vmatpush1.msra.mxu0 0.0
    %6281 = vmatprep.subr.mxu0 0.0
    %6282 = vmatpush1.msra.mxu0 0.0
    %6283 = vmatprep.subr.mxu0 0.0
    %6284 = vmatpush1.msra.mxu0 0.0
    %6285 = vmatprep.subr.mxu0 0.0
    %6286 = vmatpush1.msra.mxu0 0.0
    %6287 = vmatprep.subr.mxu0 0.0
    %6288 = vmatpush1.msra.mxu0 0.0
    %6289 = vmatprep.subr.mxu0 0.0
    %6290 = vmatpush1.msra.mxu0 0.0
    %6291 = vmatprep.subr.mxu0 0.0
    %6292 = vmatpush1.msra.mxu0 %v6092
    %6293 = vmatprep.subr.mxu0 0.0
    %6294 = vmatpush1.msra.mxu0 %v6091
    %6295 = vmatprep.subr.mxu0 0.0
    %6296 = vmatpush1.msra.mxu0 %v6090
    %6297 = vmatprep.subr.mxu0 0.0
    %6298 = vmatpush1.msra.mxu0 %v6089
    %6299 = vmatprep.subr.mxu0 0.0
    %6300 = vmatpush1.msra.mxu0 %v6088
    %6301 = vmatprep.subr.mxu0 0.0
    %6302 = vmatpush1.msra.mxu0 %v6087
    %6303 = vmatprep.subr.mxu0 0.0
    %6304 = vmatpush1.msra.mxu0 %v6086
    %6305 = vmatprep.subr.mxu0 0.0
    %6306 = vmatpush1.msra.mxu0 %v6085
    %6307 = vmatprep.subr.mxu0 0.0
    %6308 = vmatpush2.msra.mxu0 0.0
    %6309 = vmatprep.subr.mxu0 0.0
    %6310 = vmatpush2.msra.mxu0 0.0
    %6311 = vmatprep.subr.mxu0 0.0
    %6312 = vmatpush2.msra.mxu0 0.0
    %6313 = vmatprep.subr.mxu0 0.0
    %6314 = vmatpush2.msra.mxu0 0.0
    %6315 = vmatprep.subr.mxu0 0.0
    %6316 = vmatpush2.msra.mxu0 0.0
    %6317 = vmatprep.subr.mxu0 0.0
    %6318 = vmatpush2.msra.mxu0 0.0
    %6319 = vmatprep.subr.mxu0 0.0
    %6320 = vmatpush2.msra.mxu0 0.0
    %6321 = vmatprep.subr.mxu0 0.0
    %6322 = vmatpush2.msra.mxu0 0.0
    %6323 = vmatprep.subr.mxu0 0.0
    %6324 = vmatpush2.msra.mxu0 0.0
    %6325 = vmatprep.subr.mxu0 0.0
    %6326 = vmatpush2.msra.mxu0 0.0
    %6327 = vmatprep.subr.mxu0 0.0
    %6328 = vmatpush2.msra.mxu0 0.0
    %6329 = vmatprep.subr.mxu0 0.0
    %6330 = vmatpush2.msra.mxu0 0.0
    %6331 = vmatprep.subr.mxu0 0.0
    %6332 = vmatpush2.msra.mxu0 0.0
    %6333 = vmatprep.subr.mxu0 0.0
    %6334 = vmatpush2.msra.mxu0 0.0
    %6335 = vmatprep.subr.mxu0 0.0
    %6336 = vmatpush2.msra.mxu0 0.0
    %6337 = vmatprep.subr.mxu0 0.0
    %6338 = vmatpush2.msra.mxu0 0.0
    %6339 = vmatprep.mubr.f32.mxu0 0.0
    %6340 = vmatmul.mubr.f32.gmra.mxu0 %v6273
    %v6341 = vpop.f32.mrf.mxu0
    %v6342 = vadd.f32 0.0, %v6341
    %v6343 = vpop.f32.mrf.mxu0
    %6344 = vdwg.mxu0
    %v6346 = vsel %vm910, %v6235, 0
    %6348 = vmatprep.subr.mxu0 0.0
    %6349 = vmatpush1.msra.mxu0 0.0
    %6350 = vmatprep.subr.mxu0 0.0
    %6351 = vmatpush1.msra.mxu0 0.0
    %6352 = vmatprep.subr.mxu0 0.0
    %6353 = vmatpush1.msra.mxu0 0.0
    %6354 = vmatprep.subr.mxu0 0.0
    %6355 = vmatpush1.msra.mxu0 0.0
    %6356 = vmatprep.subr.mxu0 0.0
    %6357 = vmatpush1.msra.mxu0 0.0
    %6358 = vmatprep.subr.mxu0 0.0
    %6359 = vmatpush1.msra.mxu0 0.0
    %6360 = vmatprep.subr.mxu0 0.0
    %6361 = vmatpush1.msra.mxu0 0.0
    %6362 = vmatprep.subr.mxu0 0.0
    %6363 = vmatpush1.msra.mxu0 0.0
    %6364 = vmatprep.subr.mxu0 0.0
    %6365 = vmatpush1.msra.mxu0 %v6100
    %6366 = vmatprep.subr.mxu0 0.0
    %6367 = vmatpush1.msra.mxu0 %v6099
    %6368 = vmatprep.subr.mxu0 0.0
    %6369 = vmatpush1.msra.mxu0 %v6098
    %6370 = vmatprep.subr.mxu0 0.0
    %6371 = vmatpush1.msra.mxu0 %v6097
    %6372 = vmatprep.subr.mxu0 0.0
    %6373 = vmatpush1.msra.mxu0 %v6096
    %6374 = vmatprep.subr.mxu0 0.0
    %6375 = vmatpush1.msra.mxu0 %v6095
    %6376 = vmatprep.subr.mxu0 0.0
    %6377 = vmatpush1.msra.mxu0 %v6094
    %6378 = vmatprep.subr.mxu0 0.0
    %6379 = vmatpush1.msra.mxu0 %v6093
    %6380 = vmatprep.subr.mxu0 0.0
    %6381 = vmatpush2.msra.mxu0 0.0
    %6382 = vmatprep.subr.mxu0 0.0
    %6383 = vmatpush2.msra.mxu0 0.0
    %6384 = vmatprep.subr.mxu0 0.0
    %6385 = vmatpush2.msra.mxu0 0.0
    %6386 = vmatprep.subr.mxu0 0.0
    %6387 = vmatpush2.msra.mxu0 0.0
    %6388 = vmatprep.subr.mxu0 0.0
    %6389 = vmatpush2.msra.mxu0 0.0
    %6390 = vmatprep.subr.mxu0 0.0
    %6391 = vmatpush2.msra.mxu0 0.0
    %6392 = vmatprep.subr.mxu0 0.0
    %6393 = vmatpush2.msra.mxu0 0.0
    %6394 = vmatprep.subr.mxu0 0.0
    %6395 = vmatpush2.msra.mxu0 0.0
    %6396 = vmatprep.subr.mxu0 0.0
    %6397 = vmatpush2.msra.mxu0 0.0
    %6398 = vmatprep.subr.mxu0 0.0
    %6399 = vmatpush2.msra.mxu0 0.0
    %6400 = vmatprep.subr.mxu0 0.0
    %6401 = vmatpush2.msra.mxu0 0.0
    %6402 = vmatprep.subr.mxu0 0.0
    %6403 = vmatpush2.msra.mxu0 0.0
    %6404 = vmatprep.subr.mxu0 0.0
    %6405 = vmatpush2.msra.mxu0 0.0
    %6406 = vmatprep.subr.mxu0 0.0
    %6407 = vmatpush2.msra.mxu0 0.0
    %6408 = vmatprep.subr.mxu0 0.0
    %6409 = vmatpush2.msra.mxu0 0.0
    %6410 = vmatprep.subr.mxu0 0.0
    %6411 = vmatpush2.msra.mxu0 0.0
    %6412 = vmatprep.mubr.f32.mxu0 0.0
    %6413 = vmatmul.mubr.f32.gmra.mxu0 %v6346
    %v6414 = vpop.f32.mrf.mxu0
    %v6415 = vadd.f32 0.0, %v6414
    %v6416 = vpop.f32.mrf.mxu0
    %6417 = vdwg.mxu0
    %v6419 = vsel %vm910, %v6218, 0
    %6421 = vmatprep.subr.mxu0 0.0
    %6422 = vmatpush1.msra.mxu0 0.0
    %6423 = vmatprep.subr.mxu0 0.0
    %6424 = vmatpush1.msra.mxu0 0.0
    %6425 = vmatprep.subr.mxu0 0.0
    %6426 = vmatpush1.msra.mxu0 0.0
    %6427 = vmatprep.subr.mxu0 0.0
    %6428 = vmatpush1.msra.mxu0 0.0
    %6429 = vmatprep.subr.mxu0 0.0
    %6430 = vmatpush1.msra.mxu0 0.0
    %6431 = vmatprep.subr.mxu0 0.0
    %6432 = vmatpush1.msra.mxu0 0.0
    %6433 = vmatprep.subr.mxu0 0.0
    %6434 = vmatpush1.msra.mxu0 0.0
    %6435 = vmatprep.subr.mxu0 0.0
    %6436 = vmatpush1.msra.mxu0 0.0
    %6437 = vmatprep.subr.mxu0 0.0
    %6438 = vmatpush1.msra.mxu0 %v6108
    %6439 = vmatprep.subr.mxu0 0.0
    %6440 = vmatpush1.msra.mxu0 %v6107
    %6441 = vmatprep.subr.mxu0 0.0
    %6442 = vmatpush1.msra.mxu0 %v6106
    %6443 = vmatprep.subr.mxu0 0.0
    %6444 = vmatpush1.msra.mxu0 %v6105
    %6445 = vmatprep.subr.mxu0 0.0
    %6446 = vmatpush1.msra.mxu0 %v6104
    %6447 = vmatprep.subr.mxu0 0.0
    %6448 = vmatpush1.msra.mxu0 %v6103
    %6449 = vmatprep.subr.mxu0 0.0
    %6450 = vmatpush1.msra.mxu0 %v6102
    %6451 = vmatprep.subr.mxu0 0.0
    %6452 = vmatpush1.msra.mxu0 %v6101
    %6453 = vmatprep.subr.mxu0 0.0
    %6454 = vmatpush2.msra.mxu0 0.0
    %6455 = vmatprep.subr.mxu0 0.0
    %6456 = vmatpush2.msra.mxu0 0.0
    %6457 = vmatprep.subr.mxu0 0.0
    %6458 = vmatpush2.msra.mxu0 0.0
    %6459 = vmatprep.subr.mxu0 0.0
    %6460 = vmatpush2.msra.mxu0 0.0
    %6461 = vmatprep.subr.mxu0 0.0
    %6462 = vmatpush2.msra.mxu0 0.0
    %6463 = vmatprep.subr.mxu0 0.0
    %6464 = vmatpush2.msra.mxu0 0.0
    %6465 = vmatprep.subr.mxu0 0.0
    %6466 = vmatpush2.msra.mxu0 0.0
    %6467 = vmatprep.subr.mxu0 0.0
    %6468 = vmatpush2.msra.mxu0 0.0
    %6469 = vmatprep.subr.mxu0 0.0
    %6470 = vmatpush2.msra.mxu0 0.0
    %6471 = vmatprep.subr.mxu0 0.0
    %6472 = vmatpush2.msra.mxu0 0.0
    %6473 = vmatprep.subr.mxu0 0.0
    %6474 = vmatpush2.msra.mxu0 0.0
    %6475 = vmatprep.subr.mxu0 0.0
    %6476 = vmatpush2.msra.mxu0 0.0
    %6477 = vmatprep.subr.mxu0 0.0
    %6478 = vmatpush2.msra.mxu0 0.0
    %6479 = vmatprep.subr.mxu0 0.0
    %6480 = vmatpush2.msra.mxu0 0.0
    %6481 = vmatprep.subr.mxu0 0.0
    %6482 = vmatpush2.msra.mxu0 0.0
    %6483 = vmatprep.subr.mxu0 0.0
    %6484 = vmatpush2.msra.mxu0 0.0
    %6485 = vmatprep.mubr.f32.mxu0 0.0
    %6486 = vmatmul.mubr.f32.gmra.mxu0 %v6419
    %v6487 = vpop.f32.mrf.mxu0
    %v6488 = vadd.f32 0.0, %v6487
    %v6489 = vpop.f32.mrf.mxu0
    %6490 = vdwg.mxu0
    %v6492 = vsel %vm910, %v6236, 0
    %6494 = vmatprep.subr.mxu0 0.0
    %6495 = vmatpush1.msra.mxu0 0.0
    %6496 = vmatprep.subr.mxu0 0.0
    %6497 = vmatpush1.msra.mxu0 0.0
    %6498 = vmatprep.subr.mxu0 0.0
    %6499 = vmatpush1.msra.mxu0 0.0
    %6500 = vmatprep.subr.mxu0 0.0
    %6501 = vmatpush1.msra.mxu0 0.0
    %6502 = vmatprep.subr.mxu0 0.0
    %6503 = vmatpush1.msra.mxu0 0.0
    %6504 = vmatprep.subr.mxu0 0.0
    %6505 = vmatpush1.msra.mxu0 0.0
    %6506 = vmatprep.subr.mxu0 0.0
    %6507 = vmatpush1.msra.mxu0 0.0
    %6508 = vmatprep.subr.mxu0 0.0
    %6509 = vmatpush1.msra.mxu0 0.0
    %6510 = vmatprep.subr.mxu0 0.0
    %6511 = vmatpush1.msra.mxu0 %v6116
    %6512 = vmatprep.subr.mxu0 0.0
    %6513 = vmatpush1.msra.mxu0 %v6115
    %6514 = vmatprep.subr.mxu0 0.0
    %6515 = vmatpush1.msra.mxu0 %v6114
    %6516 = vmatprep.subr.mxu0 0.0
    %6517 = vmatpush1.msra.mxu0 %v6113
    %6518 = vmatprep.subr.mxu0 0.0
    %6519 = vmatpush1.msra.mxu0 %v6112
    %6520 = vmatprep.subr.mxu0 0.0
    %6521 = vmatpush1.msra.mxu0 %v6111
    %6522 = vmatprep.subr.mxu0 0.0
    %6523 = vmatpush1.msra.mxu0 %v6110
    %6524 = vmatprep.subr.mxu0 0.0
    %6525 = vmatpush1.msra.mxu0 %v6109
    %6526 = vmatprep.subr.mxu0 0.0
    %6527 = vmatpush2.msra.mxu0 0.0
    %6528 = vmatprep.subr.mxu0 0.0
    %6529 = vmatpush2.msra.mxu0 0.0
    %6530 = vmatprep.subr.mxu0 0.0
    %6531 = vmatpush2.msra.mxu0 0.0
    %6532 = vmatprep.subr.mxu0 0.0
    %6533 = vmatpush2.msra.mxu0 0.0
    %6534 = vmatprep.subr.mxu0 0.0
    %6535 = vmatpush2.msra.mxu0 0.0
    %6536 = vmatprep.subr.mxu0 0.0
    %6537 = vmatpush2.msra.mxu0 0.0
    %6538 = vmatprep.subr.mxu0 0.0
    %6539 = vmatpush2.msra.mxu0 0.0
    %6540 = vmatprep.subr.mxu0 0.0
    %6541 = vmatpush2.msra.mxu0 0.0
    %6542 = vmatprep.subr.mxu0 0.0
    %6543 = vmatpush2.msra.mxu0 0.0
    %6544 = vmatprep.subr.mxu0 0.0
    %6545 = vmatpush2.msra.mxu0 0.0
    %6546 = vmatprep.subr.mxu0 0.0
    %6547 = vmatpush2.msra.mxu0 0.0
    %6548 = vmatprep.subr.mxu0 0.0
    %6549 = vmatpush2.msra.mxu0 0.0
    %6550 = vmatprep.subr.mxu0 0.0
    %6551 = vmatpush2.msra.mxu0 0.0
    %6552 = vmatprep.subr.mxu0 0.0
    %6553 = vmatpush2.msra.mxu0 0.0
    %6554 = vmatprep.subr.mxu0 0.0
    %6555 = vmatpush2.msra.mxu0 0.0
    %6556 = vmatprep.subr.mxu0 0.0
    %6557 = vmatpush2.msra.mxu0 0.0
    %6558 = vmatprep.mubr.f32.mxu0 0.0
    %6559 = vmatmul.mubr.f32.gmra.mxu0 %v6492
    %v6560 = vpop.f32.mrf.mxu0
    %v6561 = vadd.f32 0.0, %v6560
    %v6562 = vpop.f32.mrf.mxu0
    %6563 = vdwg.mxu0
    %v6565 = vsel %vm910, %v6227, 0
    %6567 = vmatprep.subr.mxu0 0.0
    %6568 = vmatpush1.msra.mxu0 0.0
    %6569 = vmatprep.subr.mxu0 0.0
    %6570 = vmatpush1.msra.mxu0 0.0
    %6571 = vmatprep.subr.mxu0 0.0
    %6572 = vmatpush1.msra.mxu0 0.0
    %6573 = vmatprep.subr.mxu0 0.0
    %6574 = vmatpush1.msra.mxu0 0.0
    %6575 = vmatprep.subr.mxu0 0.0
    %6576 = vmatpush1.msra.mxu0 0.0
    %6577 = vmatprep.subr.mxu0 0.0
    %6578 = vmatpush1.msra.mxu0 0.0
    %6579 = vmatprep.subr.mxu0 0.0
    %6580 = vmatpush1.msra.mxu0 0.0
    %6581 = vmatprep.subr.mxu0 0.0
    %6582 = vmatpush1.msra.mxu0 0.0
    %6583 = vmatprep.subr.mxu0 0.0
    %6584 = vmatpush1.msra.mxu0 %v6124
    %6585 = vmatprep.subr.mxu0 0.0
    %6586 = vmatpush1.msra.mxu0 %v6123
    %6587 = vmatprep.subr.mxu0 0.0
    %6588 = vmatpush1.msra.mxu0 %v6122
    %6589 = vmatprep.subr.mxu0 0.0
    %6590 = vmatpush1.msra.mxu0 %v6121
    %6591 = vmatprep.subr.mxu0 0.0
    %6592 = vmatpush1.msra.mxu0 %v6120
    %6593 = vmatprep.subr.mxu0 0.0
    %6594 = vmatpush1.msra.mxu0 %v6119
    %6595 = vmatprep.subr.mxu0 0.0
    %6596 = vmatpush1.msra.mxu0 %v6118
    %6597 = vmatprep.subr.mxu0 0.0
    %6598 = vmatpush1.msra.mxu0 %v6117
    %6599 = vmatprep.subr.mxu0 0.0
    %6600 = vmatpush2.msra.mxu0 0.0
    %6601 = vmatprep.subr.mxu0 0.0
    %6602 = vmatpush2.msra.mxu0 0.0
    %6603 = vmatprep.subr.mxu0 0.0
    %6604 = vmatpush2.msra.mxu0 0.0
    %6605 = vmatprep.subr.mxu0 0.0
    %6606 = vmatpush2.msra.mxu0 0.0
    %6607 = vmatprep.subr.mxu0 0.0
    %6608 = vmatpush2.msra.mxu0 0.0
    %6609 = vmatprep.subr.mxu0 0.0
    %6610 = vmatpush2.msra.mxu0 0.0
    %6611 = vmatprep.subr.mxu0 0.0
    %6612 = vmatpush2.msra.mxu0 0.0
    %6613 = vmatprep.subr.mxu0 0.0
    %6614 = vmatpush2.msra.mxu0 0.0
    %6615 = vmatprep.subr.mxu0 0.0
    %6616 = vmatpush2.msra.mxu0 0.0
    %6617 = vmatprep.subr.mxu0 0.0
    %6618 = vmatpush2.msra.mxu0 0.0
    %6619 = vmatprep.subr.mxu0 0.0
    %6620 = vmatpush2.msra.mxu0 0.0
    %6621 = vmatprep.subr.mxu0 0.0
    %6622 = vmatpush2.msra.mxu0 0.0
    %6623 = vmatprep.subr.mxu0 0.0
    %6624 = vmatpush2.msra.mxu0 0.0
    %6625 = vmatprep.subr.mxu0 0.0
    %6626 = vmatpush2.msra.mxu0 0.0
    %6627 = vmatprep.subr.mxu0 0.0
    %6628 = vmatpush2.msra.mxu0 0.0
    %6629 = vmatprep.subr.mxu0 0.0
    %6630 = vmatpush2.msra.mxu0 0.0
    %6631 = vmatprep.mubr.f32.mxu0 0.0
    %6632 = vmatmul.mubr.f32.gmra.mxu0 %v6565
    %v6633 = vpop.f32.mrf.mxu0
    %v6634 = vadd.f32 0.0, %v6633
    %v6635 = vpop.f32.mrf.mxu0
    %6636 = vdwg.mxu0
    %v6638 = vsel %vm910, %v6237, 0
    %6640 = vmatprep.subr.mxu0 0.0
    %6641 = vmatpush1.msra.mxu0 0.0
    %6642 = vmatprep.subr.mxu0 0.0
    %6643 = vmatpush1.msra.mxu0 0.0
    %6644 = vmatprep.subr.mxu0 0.0
    %6645 = vmatpush1.msra.mxu0 0.0
    %6646 = vmatprep.subr.mxu0 0.0
    %6647 = vmatpush1.msra.mxu0 0.0
    %6648 = vmatprep.subr.mxu0 0.0
    %6649 = vmatpush1.msra.mxu0 0.0
    %6650 = vmatprep.subr.mxu0 0.0
    %6651 = vmatpush1.msra.mxu0 0.0
    %6652 = vmatprep.subr.mxu0 0.0
    %6653 = vmatpush1.msra.mxu0 0.0
    %6654 = vmatprep.subr.mxu0 0.0
    %6655 = vmatpush1.msra.mxu0 0.0
    %6656 = vmatprep.subr.mxu0 0.0
    %6657 = vmatpush1.msra.mxu0 %v6132
    %6658 = vmatprep.subr.mxu0 0.0
    %6659 = vmatpush1.msra.mxu0 %v6131
    %6660 = vmatprep.subr.mxu0 0.0
    %6661 = vmatpush1.msra.mxu0 %v6130
    %6662 = vmatprep.subr.mxu0 0.0
    %6663 = vmatpush1.msra.mxu0 %v6129
    %6664 = vmatprep.subr.mxu0 0.0
    %6665 = vmatpush1.msra.mxu0 %v6128
    %6666 = vmatprep.subr.mxu0 0.0
    %6667 = vmatpush1.msra.mxu0 %v6127
    %6668 = vmatprep.subr.mxu0 0.0
    %6669 = vmatpush1.msra.mxu0 %v6126
    %6670 = vmatprep.subr.mxu0 0.0
    %6671 = vmatpush1.msra.mxu0 %v6125
    %6672 = vmatprep.subr.mxu0 0.0
    %6673 = vmatpush2.msra.mxu0 0.0
    %6674 = vmatprep.subr.mxu0 0.0
    %6675 = vmatpush2.msra.mxu0 0.0
    %6676 = vmatprep.subr.mxu0 0.0
    %6677 = vmatpush2.msra.mxu0 0.0
    %6678 = vmatprep.subr.mxu0 0.0
    %6679 = vmatpush2.msra.mxu0 0.0
    %6680 = vmatprep.subr.mxu0 0.0
    %6681 = vmatpush2.msra.mxu0 0.0
    %6682 = vmatprep.subr.mxu0 0.0
    %6683 = vmatpush2.msra.mxu0 0.0
    %6684 = vmatprep.subr.mxu0 0.0
    %6685 = vmatpush2.msra.mxu0 0.0
    %6686 = vmatprep.subr.mxu0 0.0
    %6687 = vmatpush2.msra.mxu0 0.0
    %6688 = vmatprep.subr.mxu0 0.0
    %6689 = vmatpush2.msra.mxu0 0.0
    %6690 = vmatprep.subr.mxu0 0.0
    %6691 = vmatpush2.msra.mxu0 0.0
    %6692 = vmatprep.subr.mxu0 0.0
    %6693 = vmatpush2.msra.mxu0 0.0
    %6694 = vmatprep.subr.mxu0 0.0
    %6695 = vmatpush2.msra.mxu0 0.0
    %6696 = vmatprep.subr.mxu0 0.0
    %6697 = vmatpush2.msra.mxu0 0.0
    %6698 = vmatprep.subr.mxu0 0.0
    %6699 = vmatpush2.msra.mxu0 0.0
    %6700 = vmatprep.subr.mxu0 0.0
    %6701 = vmatpush2.msra.mxu0 0.0
    %6702 = vmatprep.subr.mxu0 0.0
    %6703 = vmatpush2.msra.mxu0 0.0
    %6704 = vmatprep.mubr.f32.mxu0 0.0
    %6705 = vmatmul.mubr.f32.gmra.mxu0 %v6638
    %v6706 = vpop.f32.mrf.mxu0
    %v6707 = vadd.f32 0.0, %v6706
    %v6708 = vpop.f32.mrf.mxu0
    %6709 = vdwg.mxu0
    %v6711 = vsel %vm910, %v6234, 0
    %6713 = vmatprep.subr.mxu0 0.0
    %6714 = vmatpush1.msra.mxu0 0.0
    %6715 = vmatprep.subr.mxu0 0.0
    %6716 = vmatpush1.msra.mxu0 0.0
    %6717 = vmatprep.subr.mxu0 0.0
    %6718 = vmatpush1.msra.mxu0 0.0
    %6719 = vmatprep.subr.mxu0 0.0
    %6720 = vmatpush1.msra.mxu0 0.0
    %6721 = vmatprep.subr.mxu0 0.0
    %6722 = vmatpush1.msra.mxu0 0.0
    %6723 = vmatprep.subr.mxu0 0.0
    %6724 = vmatpush1.msra.mxu0 0.0
    %6725 = vmatprep.subr.mxu0 0.0
    %6726 = vmatpush1.msra.mxu0 0.0
    %6727 = vmatprep.subr.mxu0 0.0
    %6728 = vmatpush1.msra.mxu0 0.0
    %6729 = vmatprep.subr.mxu0 0.0
    %6730 = vmatpush1.msra.mxu0 %v6140
    %6731 = vmatprep.subr.mxu0 0.0
    %6732 = vmatpush1.msra.mxu0 %v6139
    %6733 = vmatprep.subr.mxu0 0.0
    %6734 = vmatpush1.msra.mxu0 %v6138
    %6735 = vmatprep.subr.mxu0 0.0
    %6736 = vmatpush1.msra.mxu0 %v6137
    %6737 = vmatprep.subr.mxu0 0.0
    %6738 = vmatpush1.msra.mxu0 %v6136
    %6739 = vmatprep.subr.mxu0 0.0
    %6740 = vmatpush1.msra.mxu0 %v6135
    %6741 = vmatprep.subr.mxu0 0.0
    %6742 = vmatpush1.msra.mxu0 %v6134
    %6743 = vmatprep.subr.mxu0 0.0
    %6744 = vmatpush1.msra.mxu0 %v6133
    %6745 = vmatprep.subr.mxu0 0.0
    %6746 = vmatpush2.msra.mxu0 0.0
    %6747 = vmatprep.subr.mxu0 0.0
    %6748 = vmatpush2.msra.mxu0 0.0
    %6749 = vmatprep.subr.mxu0 0.0
    %6750 = vmatpush2.msra.mxu0 0.0
    %6751 = vmatprep.subr.mxu0 0.0
    %6752 = vmatpush2.msra.mxu0 0.0
    %6753 = vmatprep.subr.mxu0 0.0
    %6754 = vmatpush2.msra.mxu0 0.0
    %6755 = vmatprep.subr.mxu0 0.0
    %6756 = vmatpush2.msra.mxu0 0.0
    %6757 = vmatprep.subr.mxu0 0.0
    %6758 = vmatpush2.msra.mxu0 0.0
    %6759 = vmatprep.subr.mxu0 0.0
    %6760 = vmatpush2.msra.mxu0 0.0
    %6761 = vmatprep.subr.mxu0 0.0
    %6762 = vmatpush2.msra.mxu0 0.0
    %6763 = vmatprep.subr.mxu0 0.0
    %6764 = vmatpush2.msra.mxu0 0.0
    %6765 = vmatprep.subr.mxu0 0.0
    %6766 = vmatpush2.msra.mxu0 0.0
    %6767 = vmatprep.subr.mxu0 0.0
    %6768 = vmatpush2.msra.mxu0 0.0
    %6769 = vmatprep.subr.mxu0 0.0
    %6770 = vmatpush2.msra.mxu0 0.0
    %6771 = vmatprep.subr.mxu0 0.0
    %6772 = vmatpush2.msra.mxu0 0.0
    %6773 = vmatprep.subr.mxu0 0.0
    %6774 = vmatpush2.msra.mxu0 0.0
    %6775 = vmatprep.subr.mxu0 0.0
    %6776 = vmatpush2.msra.mxu0 0.0
    %6777 = vmatprep.mubr.f32.mxu0 0.0
    %6778 = vmatmul.mubr.f32.gmra.mxu0 %v6711
    %v6779 = vpop.f32.mrf.mxu0
    %v6780 = vadd.f32 0.0, %v6779
    %v6781 = vpop.f32.mrf.mxu0
    %6782 = vdwg.mxu0
    %v6784 = vsel %vm910, %v6238, 0
    %6786 = vmatprep.subr.mxu0 0.0
    %6787 = vmatpush1.msra.mxu0 0.0
    %6788 = vmatprep.subr.mxu0 0.0
    %6789 = vmatpush1.msra.mxu0 0.0
    %6790 = vmatprep.subr.mxu0 0.0
    %6791 = vmatpush1.msra.mxu0 0.0
    %6792 = vmatprep.subr.mxu0 0.0
    %6793 = vmatpush1.msra.mxu0 0.0
    %6794 = vmatprep.subr.mxu0 0.0
    %6795 = vmatpush1.msra.mxu0 0.0
    %6796 = vmatprep.subr.mxu0 0.0
    %6797 = vmatpush1.msra.mxu0 0.0
    %6798 = vmatprep.subr.mxu0 0.0
    %6799 = vmatpush1.msra.mxu0 0.0
    %6800 = vmatprep.subr.mxu0 0.0
    %6801 = vmatpush1.msra.mxu0 0.0
    %6802 = vmatprep.subr.mxu0 0.0
    %6803 = vmatpush1.msra.mxu0 %v6148
    %6804 = vmatprep.subr.mxu0 0.0
    %6805 = vmatpush1.msra.mxu0 %v6147
    %6806 = vmatprep.subr.mxu0 0.0
    %6807 = vmatpush1.msra.mxu0 %v6146
    %6808 = vmatprep.subr.mxu0 0.0
    %6809 = vmatpush1.msra.mxu0 %v6145
    %6810 = vmatprep.subr.mxu0 0.0
    %6811 = vmatpush1.msra.mxu0 %v6144
    %6812 = vmatprep.subr.mxu0 0.0
    %6813 = vmatpush1.msra.mxu0 %v6143
    %6814 = vmatprep.subr.mxu0 0.0
    %6815 = vmatpush1.msra.mxu0 %v6142
    %6816 = vmatprep.subr.mxu0 0.0
    %6817 = vmatpush1.msra.mxu0 %v6141
    %6818 = vmatprep.subr.mxu0 0.0
    %6819 = vmatpush2.msra.mxu0 0.0
    %6820 = vmatprep.subr.mxu0 0.0
    %6821 = vmatpush2.msra.mxu0 0.0
    %6822 = vmatprep.subr.mxu0 0.0
    %6823 = vmatpush2.msra.mxu0 0.0
    %6824 = vmatprep.subr.mxu0 0.0
    %6825 = vmatpush2.msra.mxu0 0.0
    %6826 = vmatprep.subr.mxu0 0.0
    %6827 = vmatpush2.msra.mxu0 0.0
    %6828 = vmatprep.subr.mxu0 0.0
    %6829 = vmatpush2.msra.mxu0 0.0
    %6830 = vmatprep.subr.mxu0 0.0
    %6831 = vmatpush2.msra.mxu0 0.0
    %6832 = vmatprep.subr.mxu0 0.0
    %6833 = vmatpush2.msra.mxu0 0.0
    %6834 = vmatprep.subr.mxu0 0.0
    %6835 = vmatpush2.msra.mxu0 0.0
    %6836 = vmatprep.subr.mxu0 0.0
    %6837 = vmatpush2.msra.mxu0 0.0
    %6838 = vmatprep.subr.mxu0 0.0
    %6839 = vmatpush2.msra.mxu0 0.0
    %6840 = vmatprep.subr.mxu0 0.0
    %6841 = vmatpush2.msra.mxu0 0.0
    %6842 = vmatprep.subr.mxu0 0.0
    %6843 = vmatpush2.msra.mxu0 0.0
    %6844 = vmatprep.subr.mxu0 0.0
    %6845 = vmatpush2.msra.mxu0 0.0
    %6846 = vmatprep.subr.mxu0 0.0
    %6847 = vmatpush2.msra.mxu0 0.0
    %6848 = vmatprep.subr.mxu0 0.0
    %6849 = vmatpush2.msra.mxu0 0.0
    %6850 = vmatprep.mubr.f32.mxu0 0.0
    %6851 = vmatmul.mubr.f32.gmra.mxu0 %v6784
    %v6852 = vpop.f32.mrf.mxu0
    %v6853 = vadd.f32 0.0, %v6852
    %v6854 = vpop.f32.mrf.mxu0
    %6855 = vdwg.mxu0
    %v6857 = vsel %vm910, %v6263, 0
    %6859 = vmatprep.subr.mxu0 0.0
    %6860 = vmatpush1.msra.mxu0 0.0
    %6861 = vmatprep.subr.mxu0 0.0
    %6862 = vmatpush1.msra.mxu0 0.0
    %6863 = vmatprep.subr.mxu0 0.0
    %6864 = vmatpush1.msra.mxu0 0.0
    %6865 = vmatprep.subr.mxu0 0.0
    %6866 = vmatpush1.msra.mxu0 0.0
    %6867 = vmatprep.subr.mxu0 0.0
    %6868 = vmatpush1.msra.mxu0 0.0
    %6869 = vmatprep.subr.mxu0 0.0
    %6870 = vmatpush1.msra.mxu0 0.0
    %6871 = vmatprep.subr.mxu0 0.0
    %6872 = vmatpush1.msra.mxu0 0.0
    %6873 = vmatprep.subr.mxu0 0.0
    %6874 = vmatpush1.msra.mxu0 0.0
    %6875 = vmatprep.subr.mxu0 0.0
    %6876 = vmatpush1.msra.mxu0 %v6156
    %6877 = vmatprep.subr.mxu0 0.0
    %6878 = vmatpush1.msra.mxu0 %v6155
    %6879 = vmatprep.subr.mxu0 0.0
    %6880 = vmatpush1.msra.mxu0 %v6154
    %6881 = vmatprep.subr.mxu0 0.0
    %6882 = vmatpush1.msra.mxu0 %v6153
    %6883 = vmatprep.subr.mxu0 0.0
    %6884 = vmatpush1.msra.mxu0 %v6152
    %6885 = vmatprep.subr.mxu0 0.0
    %6886 = vmatpush1.msra.mxu0 %v6151
    %6887 = vmatprep.subr.mxu0 0.0
    %6888 = vmatpush1.msra.mxu0 %v6150
    %6889 = vmatprep.subr.mxu0 0.0
    %6890 = vmatpush1.msra.mxu0 %v6149
    %6891 = vmatprep.subr.mxu0 0.0
    %6892 = vmatpush2.msra.mxu0 0.0
    %6893 = vmatprep.subr.mxu0 0.0
    %6894 = vmatpush2.msra.mxu0 0.0
    %6895 = vmatprep.subr.mxu0 0.0
    %6896 = vmatpush2.msra.mxu0 0.0
    %6897 = vmatprep.subr.mxu0 0.0
    %6898 = vmatpush2.msra.mxu0 0.0
    %6899 = vmatprep.subr.mxu0 0.0
    %6900 = vmatpush2.msra.mxu0 0.0
    %6901 = vmatprep.subr.mxu0 0.0
    %6902 = vmatpush2.msra.mxu0 0.0
    %6903 = vmatprep.subr.mxu0 0.0
    %6904 = vmatpush2.msra.mxu0 0.0
    %6905 = vmatprep.subr.mxu0 0.0
    %6906 = vmatpush2.msra.mxu0 0.0
    %6907 = vmatprep.subr.mxu0 0.0
    %6908 = vmatpush2.msra.mxu0 0.0
    %6909 = vmatprep.subr.mxu0 0.0
    %6910 = vmatpush2.msra.mxu0 0.0
    %6911 = vmatprep.subr.mxu0 0.0
    %6912 = vmatpush2.msra.mxu0 0.0
    %6913 = vmatprep.subr.mxu0 0.0
    %6914 = vmatpush2.msra.mxu0 0.0
    %6915 = vmatprep.subr.mxu0 0.0
    %6916 = vmatpush2.msra.mxu0 0.0
    %6917 = vmatprep.subr.mxu0 0.0
    %6918 = vmatpush2.msra.mxu0 0.0
    %6919 = vmatprep.subr.mxu0 0.0
    %6920 = vmatpush2.msra.mxu0 0.0
    %6921 = vmatprep.subr.mxu0 0.0
    %6922 = vmatpush2.msra.mxu0 0.0
    %6923 = vmatprep.mubr.f32.mxu0 0.0
    %6924 = vmatmul.mubr.f32.gmra.mxu0 %v6857
    %v6925 = vpop.f32.mrf.mxu0
    %v6926 = vadd.f32 0.0, %v6925
    %v6927 = vpop.f32.mrf.mxu0
    %6928 = vdwg.mxu0
    %v6930 = vsel %vm910, %v6264, 0
    %6932 = vmatprep.subr.mxu0 0.0
    %6933 = vmatpush1.msra.mxu0 0.0
    %6934 = vmatprep.subr.mxu0 0.0
    %6935 = vmatpush1.msra.mxu0 0.0
    %6936 = vmatprep.subr.mxu0 0.0
    %6937 = vmatpush1.msra.mxu0 0.0
    %6938 = vmatprep.subr.mxu0 0.0
    %6939 = vmatpush1.msra.mxu0 0.0
    %6940 = vmatprep.subr.mxu0 0.0
    %6941 = vmatpush1.msra.mxu0 0.0
    %6942 = vmatprep.subr.mxu0 0.0
    %6943 = vmatpush1.msra.mxu0 0.0
    %6944 = vmatprep.subr.mxu0 0.0
    %6945 = vmatpush1.msra.mxu0 0.0
    %6946 = vmatprep.subr.mxu0 0.0
    %6947 = vmatpush1.msra.mxu0 0.0
    %6948 = vmatprep.subr.mxu0 0.0
    %6949 = vmatpush1.msra.mxu0 %v6164
    %6950 = vmatprep.subr.mxu0 0.0
    %6951 = vmatpush1.msra.mxu0 %v6163
    %6952 = vmatprep.subr.mxu0 0.0
    %6953 = vmatpush1.msra.mxu0 %v6162
    %6954 = vmatprep.subr.mxu0 0.0
    %6955 = vmatpush1.msra.mxu0 %v6161
    %6956 = vmatprep.subr.mxu0 0.0
    %6957 = vmatpush1.msra.mxu0 %v6160
    %6958 = vmatprep.subr.mxu0 0.0
    %6959 = vmatpush1.msra.mxu0 %v6159
    %6960 = vmatprep.subr.mxu0 0.0
    %6961 = vmatpush1.msra.mxu0 %v6158
    %6962 = vmatprep.subr.mxu0 0.0
    %6963 = vmatpush1.msra.mxu0 %v6157
    %6964 = vmatprep.subr.mxu0 0.0
    %6965 = vmatpush2.msra.mxu0 0.0
    %6966 = vmatprep.subr.mxu0 0.0
    %6967 = vmatpush2.msra.mxu0 0.0
    %6968 = vmatprep.subr.mxu0 0.0
    %6969 = vmatpush2.msra.mxu0 0.0
    %6970 = vmatprep.subr.mxu0 0.0
    %6971 = vmatpush2.msra.mxu0 0.0
    %6972 = vmatprep.subr.mxu0 0.0
    %6973 = vmatpush2.msra.mxu0 0.0
    %6974 = vmatprep.subr.mxu0 0.0
    %6975 = vmatpush2.msra.mxu0 0.0
    %6976 = vmatprep.subr.mxu0 0.0
    %6977 = vmatpush2.msra.mxu0 0.0
    %6978 = vmatprep.subr.mxu0 0.0
    %6979 = vmatpush2.msra.mxu0 0.0
    %6980 = vmatprep.subr.mxu0 0.0
    %6981 = vmatpush2.msra.mxu0 0.0
    %6982 = vmatprep.subr.mxu0 0.0
    %6983 = vmatpush2.msra.mxu0 0.0
    %6984 = vmatprep.subr.mxu0 0.0
    %6985 = vmatpush2.msra.mxu0 0.0
    %6986 = vmatprep.subr.mxu0 0.0
    %6987 = vmatpush2.msra.mxu0 0.0
    %6988 = vmatprep.subr.mxu0 0.0
    %6989 = vmatpush2.msra.mxu0 0.0
    %6990 = vmatprep.subr.mxu0 0.0
    %6991 = vmatpush2.msra.mxu0 0.0
    %6992 = vmatprep.subr.mxu0 0.0
    %6993 = vmatpush2.msra.mxu0 0.0
    %6994 = vmatprep.subr.mxu0 0.0
    %6995 = vmatpush2.msra.mxu0 0.0
    %6996 = vmatprep.mubr.f32.mxu0 0.0
    %6997 = vmatmul.mubr.f32.gmra.mxu0 %v6930
    %v6998 = vpop.f32.mrf.mxu0
    %v6999 = vadd.f32 0.0, %v6998
    %v7000 = vpop.f32.mrf.mxu0
    %7001 = vdwg.mxu0
    %v7003 = vsel %vm910, %v6271, 0
    %7005 = vmatprep.subr.mxu0 0.0
    %7006 = vmatpush1.msra.mxu0 0.0
    %7007 = vmatprep.subr.mxu0 0.0
    %7008 = vmatpush1.msra.mxu0 0.0
    %7009 = vmatprep.subr.mxu0 0.0
    %7010 = vmatpush1.msra.mxu0 0.0
    %7011 = vmatprep.subr.mxu0 0.0
    %7012 = vmatpush1.msra.mxu0 0.0
    %7013 = vmatprep.subr.mxu0 0.0
    %7014 = vmatpush1.msra.mxu0 0.0
    %7015 = vmatprep.subr.mxu0 0.0
    %7016 = vmatpush1.msra.mxu0 0.0
    %7017 = vmatprep.subr.mxu0 0.0
    %7018 = vmatpush1.msra.mxu0 0.0
    %7019 = vmatprep.subr.mxu0 0.0
    %7020 = vmatpush1.msra.mxu0 0.0
    %7021 = vmatprep.subr.mxu0 0.0
    %7022 = vmatpush1.msra.mxu0 %v6172
    %7023 = vmatprep.subr.mxu0 0.0
    %7024 = vmatpush1.msra.mxu0 %v6171
    %7025 = vmatprep.subr.mxu0 0.0
    %7026 = vmatpush1.msra.mxu0 %v6170
    %7027 = vmatprep.subr.mxu0 0.0
    %7028 = vmatpush1.msra.mxu0 %v6169
    %7029 = vmatprep.subr.mxu0 0.0
    %7030 = vmatpush1.msra.mxu0 %v6168
    %7031 = vmatprep.subr.mxu0 0.0
    %7032 = vmatpush1.msra.mxu0 %v6167
    %7033 = vmatprep.subr.mxu0 0.0
    %7034 = vmatpush1.msra.mxu0 %v6166
    %7035 = vmatprep.subr.mxu0 0.0
    %7036 = vmatpush1.msra.mxu0 %v6165
    %7037 = vmatprep.subr.mxu0 0.0
    %7038 = vmatpush2.msra.mxu0 0.0
    %7039 = vmatprep.subr.mxu0 0.0
    %7040 = vmatpush2.msra.mxu0 0.0
    %7041 = vmatprep.subr.mxu0 0.0
    %7042 = vmatpush2.msra.mxu0 0.0
    %7043 = vmatprep.subr.mxu0 0.0
    %7044 = vmatpush2.msra.mxu0 0.0
    %7045 = vmatprep.subr.mxu0 0.0
    %7046 = vmatpush2.msra.mxu0 0.0
    %7047 = vmatprep.subr.mxu0 0.0
    %7048 = vmatpush2.msra.mxu0 0.0
    %7049 = vmatprep.subr.mxu0 0.0
    %7050 = vmatpush2.msra.mxu0 0.0
    %7051 = vmatprep.subr.mxu0 0.0
    %7052 = vmatpush2.msra.mxu0 0.0
    %7053 = vmatprep.subr.mxu0 0.0
    %7054 = vmatpush2.msra.mxu0 0.0
    %7055 = vmatprep.subr.mxu0 0.0
    %7056 = vmatpush2.msra.mxu0 0.0
    %7057 = vmatprep.subr.mxu0 0.0
    %7058 = vmatpush2.msra.mxu0 0.0
    %7059 = vmatprep.subr.mxu0 0.0
    %7060 = vmatpush2.msra.mxu0 0.0
    %7061 = vmatprep.subr.mxu0 0.0
    %7062 = vmatpush2.msra.mxu0 0.0
    %7063 = vmatprep.subr.mxu0 0.0
    %7064 = vmatpush2.msra.mxu0 0.0
    %7065 = vmatprep.subr.mxu0 0.0
    %7066 = vmatpush2.msra.mxu0 0.0
    %7067 = vmatprep.subr.mxu0 0.0
    %7068 = vmatpush2.msra.mxu0 0.0
    %7069 = vmatprep.mubr.f32.mxu0 0.0
    %7070 = vmatmul.mubr.f32.gmra.mxu0 %v7003
    %v7071 = vpop.f32.mrf.mxu0
    %v7072 = vadd.f32 0.0, %v7071
    %v7073 = vpop.f32.mrf.mxu0
    %7074 = vdwg.mxu0
    %v7075 = vsel %vm2006, %v6342, 0.0
    %v7076 = vsel %vm2006, %v6415, 0.0
    %v7077 = vadd.f32 %v7075, %v7076
    %v7078 = vsel %vm2006, %v6488, 0.0
    %v7079 = vadd.f32 %v7077, %v7078
    %v7080 = vsel %vm2006, %v6561, 0.0
    %v7081 = vadd.f32 %v7079, %v7080
    %v7082 = vsel %vm2006, %v6634, 0.0
    %v7083 = vadd.f32 %v7081, %v7082
    %v7084 = vsel %vm2006, %v6707, 0.0
    %v7085 = vadd.f32 %v7083, %v7084
    %v7086 = vsel %vm2006, %v6780, 0.0
    %v7087 = vadd.f32 %v7085, %v7086
    %v7088 = vsel %vm2006, %v6853, 0.0
    %v7089 = vadd.f32 %v7087, %v7088
    %v7090 = vsel %vm2006, %v6926, 0.0
    %v7091 = vadd.f32 %v7089, %v7090
    %v7092 = vsel %vm2006, %v6999, 0.0
    %v7093 = vadd.f32 %v7091, %v7092
    %v7094 = vsel %vm2006, %v7072, 0.0
    %v7095 = vadd.f32 %v7093, %v7094
    %v7096 = vadd.f32 %v4118, %v7095
    %v7097 = vld [vmem:[%s11] sm:$0x1]
    %v7099 = vlaneseq
    %v7100 = vshrl.u32 %v7099, 7
    %v7101 = vsub.s32 0, %v7100
    %v7102 = vrot.slane %v7097, %v7101
    %v7104 = vadd.f32 %v7096, %v7102
    %v7105 = vmax.f32 %v7104, 0.0
    %v7106 = vld [vmem:[%s12] sm:$0xff]
    %v7107 = vld [vmem:[%s12 + $0x8] sm:$0xff]
    %v7108 = vld [vmem:[%s12 + $0x10] sm:$0xff]
    %v7109 = vld [vmem:[%s12 + $0x18] sm:$0xff]
    %v7110 = vld [vmem:[%s12 + $0x20] sm:$0xff]
    %v7111 = vld [vmem:[%s12 + $0x28] sm:$0xff]
    %v7112 = vld [vmem:[%s12 + $0x30] sm:$0xff]
    %v7113 = vld [vmem:[%s12 + $0x38] sm:$0xff]
    %v7114 = vld [vmem:[%s12 + $0x40] sm:$0xff]
    %v7115 = vld [vmem:[%s12 + $0x48] sm:$0xff]
    %v7116 = vld [vmem:[%s12 + $0x50] sm:$0xff]
    %v7117 = vld [vmem:[%s12 + $0x58] sm:$0xff]
    %v7118 = vld [vmem:[%s12 + $0x60] sm:$0xff]
    %v7119 = vld [vmem:[%s12 + $0x68] sm:$0xff]
    %v7120 = vld [vmem:[%s12 + $0x70] sm:$0xff]
    %v7121 = vld [vmem:[%s12 + $0x78] sm:$0xff]
    %v7122 = vld [vmem:[%s13] sm:$0x1]
    %v7124 = vlaneseq
    %v7125 = vshrl.u32 %v7124, 7
    %v7126 = vsub.s32 0, %v7125
    %v7127 = vrot.slane %v7122, %v7126
    %7129 = vmatprep.subr.mxu0 0.0
    %7130 = vmatpush1.msra.mxu0 %v7121
    %7131 = vmatprep.subr.mxu0 0.0
    %7132 = vmatpush1.msra.mxu0 %v7120
    %7133 = vmatprep.subr.mxu0 0.0
    %7134 = vmatpush1.msra.mxu0 %v7119
    %7135 = vmatprep.subr.mxu0 0.0
    %7136 = vmatpush1.msra.mxu0 %v7118
    %7137 = vmatprep.subr.mxu0 0.0
    %7138 = vmatpush1.msra.mxu0 %v7117
    %7139 = vmatprep.subr.mxu0 0.0
    %7140 = vmatpush1.msra.mxu0 %v7116
    %7141 = vmatprep.subr.mxu0 0.0
    %7142 = vmatpush1.msra.mxu0 %v7115
    %7143 = vmatprep.subr.mxu0 0.0
    %7144 = vmatpush1.msra.mxu0 %v7114
    %7145 = vmatprep.subr.mxu0 0.0
    %7146 = vmatpush1.msra.mxu0 %v7113
    %7147 = vmatprep.subr.mxu0 0.0
    %7148 = vmatpush1.msra.mxu0 %v7112
    %7149 = vmatprep.subr.mxu0 0.0
    %7150 = vmatpush1.msra.mxu0 %v7111
    %7151 = vmatprep.subr.mxu0 0.0
    %7152 = vmatpush1.msra.mxu0 %v7110
    %7153 = vmatprep.subr.mxu0 0.0
    %7154 = vmatpush1.msra.mxu0 %v7109
    %7155 = vmatprep.subr.mxu0 0.0
    %7156 = vmatpush1.msra.mxu0 %v7108
    %7157 = vmatprep.subr.mxu0 0.0
    %7158 = vmatpush1.msra.mxu0 %v7107
    %7159 = vmatprep.subr.mxu0 0.0
    %7160 = vmatpush1.msra.mxu0 %v7106
    %7161 = vmatprep.subr.mxu0 0.0
    %7162 = vmatpush2.msra.mxu0 0.0
    %7163 = vmatprep.subr.mxu0 0.0
    %7164 = vmatpush2.msra.mxu0 0.0
    %7165 = vmatprep.subr.mxu0 0.0
    %7166 = vmatpush2.msra.mxu0 0.0
    %7167 = vmatprep.subr.mxu0 0.0
    %7168 = vmatpush2.msra.mxu0 0.0
    %7169 = vmatprep.subr.mxu0 0.0
    %7170 = vmatpush2.msra.mxu0 0.0
    %7171 = vmatprep.subr.mxu0 0.0
    %7172 = vmatpush2.msra.mxu0 0.0
    %7173 = vmatprep.subr.mxu0 0.0
    %7174 = vmatpush2.msra.mxu0 0.0
    %7175 = vmatprep.subr.mxu0 0.0
    %7176 = vmatpush2.msra.mxu0 0.0
    %7177 = vmatprep.subr.mxu0 0.0
    %7178 = vmatpush2.msra.mxu0 0.0
    %7179 = vmatprep.subr.mxu0 0.0
    %7180 = vmatpush2.msra.mxu0 0.0
    %7181 = vmatprep.subr.mxu0 0.0
    %7182 = vmatpush2.msra.mxu0 0.0
    %7183 = vmatprep.subr.mxu0 0.0
    %7184 = vmatpush2.msra.mxu0 0.0
    %7185 = vmatprep.subr.mxu0 0.0
    %7186 = vmatpush2.msra.mxu0 0.0
    %7187 = vmatprep.subr.mxu0 0.0
    %7188 = vmatpush2.msra.mxu0 0.0
    %7189 = vmatprep.subr.mxu0 0.0
    %7190 = vmatpush2.msra.mxu0 0.0
    %7191 = vmatprep.subr.mxu0 0.0
    %7192 = vmatpush2.msra.mxu0 0.0
    %7193 = vmatprep.mubr.f32.mxu0 0.0
    %7194 = vmatmul.mubr.f32.gmra.mxu0 %v7105
    %v7195 = vpop.f32.mrf.mxu0
    %v7196 = vadd.f32 %v7127, %v7195
    %v7197 = vpop.f32.mrf.mxu0
    %7198 = vdwg.mxu0
    %vm7199 = vcmask 33792
    %7200 = vst.msk [vmem:[#allocation8] sm:$0x3] %vm7199, %v7196
    // Predicated region
    $region70: #{cnn_forward.1} parent=1 // pred_check
      _
    $region71: #{cnn_forward.1} parent=1 // pred_check_branch
      %7202 = sbr.rel (0) target = $region73
    $region72: #{cnn_forward.1} parent=1 // pred_region
      %s7204 = ssub.s32 32, 32
      %7205 = vsyncadd [#allocation4], %s7204
      %s7207 = sshll.u32 [#allocation8], 4
      %s7208 = int_to_ptr.vmem [resolvable:$true] %s7207
      %7210 = dma.vmem_to_hbm [thread:$0]  %s7208, 32, %s14, [#allocation4]
    $region73: #{cnn_forward.1} parent=1 // pred_fallthru
      _
    // Predicated region
    $region74: #{cnn_forward.1} parent=1 // pred_check
      _
    $region75: #{cnn_forward.1} parent=1 // pred_check_branch
      %7212 = sbr.rel (0) target = $region77
    $region76: #{cnn_forward.1} parent=1 // pred_region
      %7213 = dma.done [#allocation4], 32
    $region77: #{cnn_forward.1} parent=1 // pred_fallthru
      _
    %7214 = vsyncpa [#allocation3], 1
    %7215 = vsyncpa [#allocation6], 1
    %7216 = vsyncpa [#allocation4], 1

</llo_original>
